<compile_context>
chip_gen: v6e
topology: v6e:2x2x1
jax: 0.10.0
libtpu: 0.0.40
codegen_flags: <defaults>
</compile_context>

<pallas_src>
import functools
import math

import jax
import jax.numpy as jnp
from jax import lax
from jax.experimental import pallas as pl
from jax.experimental.pallas import tpu as pltpu


def _round_up(a, b):
    return (a + b - 1) // b * b


# --------------------------------------------------------------------------- #
# Kernels
# --------------------------------------------------------------------------- #
def _conv3x3_bn_stats_core(a, w_ref, b_ref, out_ref, stats_ref, xpad_ref, patch_ref,
                           *, H, W, C, Cpad, Cout):
    """3x3 SAME conv (+bias) of one (H, W, C) activation as a single im2col matmul.

    Also emits per-tile BatchNorm partial statistics (sum, sum of squares) and
    stores the pre-BN conv output.
    """
    a = a.astype(xpad_ref.dtype)                       # bf16 operands for the MXU

    # ---- halo-only zero padding into VMEM scratch (interior written once) ----
    zrow = jnp.zeros((1, W + 2, C), xpad_ref.dtype)
    zcol = jnp.zeros((H, 1, C), xpad_ref.dtype)
    xpad_ref[0:1, :, :] = zrow
    xpad_ref[H + 1:H + 2, :, :] = zrow
    xpad_ref[1:H + 1, 0:1, :] = zcol
    xpad_ref[1:H + 1, W + 1:W + 2, :] = zcol
    xpad_ref[1:H + 1, 1:W + 1, :] = a

    # ---- im2col: 9 shifted windows -> (H*W, 9*Cpad) patch matrix -------------
    # Column blocks start at 128-aligned offsets k*Cpad (aligned stores).  When C
    # is not lane-aligned the padded tail columns must be zero (their weight rows
    # are zero, but uninitialized VMEM may hold NaNs); zero only those tails.
    for k in range(9):
        dy, dx = divmod(k, 3)
        tap = xpad_ref[dy:dy + H, dx:dx + W, :]        # (H, W, C)
        patch_ref[:, k * Cpad:k * Cpad + C] = tap.reshape(H * W, C)
        if Cpad != C:
            patch_ref[:, k * Cpad + C:(k + 1) * Cpad] = jnp.zeros(
                (H * W, Cpad - C), patch_ref.dtype)

    # ---- single fused MXU matmul over all 9 taps (K = 9*Cpad), f32 acc -------
    acc = jnp.dot(patch_ref[...], w_ref[...], preferred_element_type=jnp.float32)
    acc = acc + b_ref[...]                             # (1, Cout) bias row

    # ---- per-tile partial BN statistics (single pass: sum & sum of squares) --
    stats_ref[0:1, 0:1, :] = jnp.sum(acc, axis=0, keepdims=True).reshape(1, 1, Cout)
    stats_ref[0:1, 1:2, :] = jnp.sum(acc * acc, axis=0, keepdims=True).reshape(1, 1, Cout)

    out_ref[0] = acc.reshape(H, W, Cout).astype(out_ref.dtype)


def _conv1_kernel(x_ref, w_ref, b_ref, y_ref, stats_ref, xpad_ref, patch_ref,
                  *, H, W, C, Cpad, Cout):
    _conv3x3_bn_stats_core(x_ref[0], w_ref, b_ref, y_ref, stats_ref,
                           xpad_ref, patch_ref, H=H, W=W, C=C, Cpad=Cpad, Cout=Cout)


def _bn_relu_conv2_kernel(y_ref, scale_ref, shift_ref, w_ref, b_ref,
                          z_ref, stats_ref, xpad_ref, patch_ref,
                          *, H, W, C, Cpad, Cout):
    # BN1 folded affine + ReLU (f32), then conv2 on the result.
    s = scale_ref[...].reshape(1, 1, C)
    t = shift_ref[...].reshape(1, 1, C)
    a = jnp.maximum(y_ref[0] * s + t, 0.0)
    _conv3x3_bn_stats_core(a, w_ref, b_ref, z_ref, stats_ref,
                           xpad_ref, patch_ref, H=H, W=W, C=C, Cpad=Cpad, Cout=Cout)


def _bn_affine_act_kernel(z_ref, scale_ref, shift_ref, o_ref, *, use_act):
    out = z_ref[...] * scale_ref[...] + shift_ref[...]
    if use_act:
        out = jnp.maximum(out, 0.0)
    o_ref[...] = out.astype(o_ref.dtype)


# --------------------------------------------------------------------------- #
# Wrapper
# --------------------------------------------------------------------------- #
def _im2col_weight(w_oihw, c_pad):
    """OIHW (Cout, Cin, 3, 3) -> (9*c_pad, Cout) bf16 im2col weight.

    Rows ordered (dy, dx, cin); each tap's cin block is padded to a 128-aligned
    column stride (zero rows) to match the kernel's patch-matrix layout.
    """
    cout, cin = w_oihw.shape[0], w_oihw.shape[1]
    w = jnp.transpose(w_oihw, (2, 3, 1, 0)).reshape(9, cin, cout)   # (tap, cin, cout)
    w = jnp.pad(w, ((0, 0), (0, c_pad - cin), (0, 0)))
    return w.reshape(9 * c_pad, cout).astype(jnp.bfloat16)


def _bn_affine(stats, count, gamma, beta, eps):
    """Fold training-mode BatchNorm into per-channel (scale, shift) from partial sums."""
    s = jnp.sum(stats[:, 0, :], axis=0)
    q = jnp.sum(stats[:, 1, :], axis=0)
    mean = s / count
    # Single-pass biased variance E[x^2] - mean^2 (fine in f32 at these magnitudes).
    var = jnp.maximum(q / count - mean * mean, 0.0)
    scale = gamma.astype(jnp.float32) * lax.rsqrt(var + eps)
    shift = beta.astype(jnp.float32) - mean * scale
    return scale, shift


def _vmem_limit(*bufs):
    total = 0
    for shape, dtype in bufs:
        total += math.prod(shape) * jnp.dtype(dtype).itemsize
    # 3x for double-buffered pipeline stages + headroom; floor 8 MiB, cap 64 MiB
    # (v7x physical VMEM per TensorCore).
    return int(min(max(3 * total, 8 * 2 ** 20), 64 * 2 ** 20))


def double_conv_block(x_nchw, params, *, use_act=True, eps=1e-5):
    """Pallas implementation of DoubleConvBlock.forward (stride=1)."""
    # TODO(synk): stride > 1 for conv1 not implemented (module default stride=1).
    # TODO(synk): for very large H*W, add H-tiling with a 1-row halo in the grid;
    #             here each grid step processes one full image (fits VMEM easily).
    # TODO(synk): the NCHW<->NHWC boundary transposes are left to XLA.
    w1, b1, g1, bt1, w2, b2, g2, bt2 = params          # conv weights in PyTorch OIHW
    N, Cin, H, W = x_nchw.shape
    Cmid = w1.shape[0]
    Cout = w2.shape[0]

    x = jnp.transpose(x_nchw, (0, 2, 3, 1)).astype(jnp.bfloat16)    # NCHW -> NHWC, bf16

    cin_p = _round_up(Cin, 128)                        # lane-aligned patch-column stride
    cmid_p = _round_up(Cmid, 128)
    w1_k = _im2col_weight(w1, cin_p)                   # (9*cin_p, Cmid) bf16
    w2_k = _im2col_weight(w2, cmid_p)                  # (9*cmid_p, Cout) bf16

    def frow(v):
        return v.reshape(1, -1).astype(jnp.float32)

    cnt = jnp.float32(N * H * W)

    # ---------------- phase 1: conv1 + bias, BN1 partial stats ---------------- #
    y1, st1 = pl.pallas_call(
        functools.partial(_conv1_kernel, H=H, W=W, C=Cin, Cpad=cin_p, Cout=Cmid),
        grid=(N,),
        in_specs=[
            pl.BlockSpec((1, H, W, Cin), lambda n: (n, 0, 0, 0)),
            pl.BlockSpec((9 * cin_p, Cmid), lambda n: (0, 0)),
            pl.BlockSpec((1, Cmid), lambda n: (0, 0)),
        ],
        out_specs=[
            pl.BlockSpec((1, H, W, Cmid), lambda n: (n, 0, 0, 0)),
            pl.BlockSpec((1, 2, Cmid), lambda n: (n, 0, 0)),
        ],
        out_shape=[
            jax.ShapeDtypeStruct((N, H, W, Cmid), jnp.float32),
            jax.ShapeDtypeStruct((N, 2, Cmid), jnp.float32),
        ],
        scratch_shapes=[
            pltpu.VMEM((H + 2, W + 2, Cin), jnp.bfloat16),
            pltpu.VMEM((H * W, 9 * cin_p), jnp.bfloat16),
        ],
        compiler_params=pltpu.CompilerParams(
            dimension_semantics=("parallel",),
            vmem_limit_bytes=_vmem_limit(
                ((1, H, W, Cin), jnp.bfloat16), ((9 * cin_p, Cmid), jnp.bfloat16),
                ((1, H, W, Cmid), jnp.float32), ((H + 2, W + 2, Cin), jnp.bfloat16),
                ((H * W, 9 * cin_p), jnp.bfloat16)),
        ),
    )(x, w1_k, frow(b1))

    # finalize BN1 -> per-channel affine (tiny C-element math)
    sc1, sh1 = _bn_affine(st1, cnt, g1, bt1, eps)

    # -------- phase 2: BN1 affine + ReLU + conv2 + bias, BN2 partial stats ---- #
    z2, st2 = pl.pallas_call(
        functools.partial(_bn_relu_conv2_kernel, H=H, W=W, C=Cmid, Cpad=cmid_p, Cout=Cout),
        grid=(N,),
        in_specs=[
            pl.BlockSpec((1, H, W, Cmid), lambda n: (n, 0, 0, 0)),
            pl.BlockSpec((1, Cmid), lambda n: (0, 0)),
            pl.BlockSpec((1, Cmid), lambda n: (0, 0)),
            pl.BlockSpec((9 * cmid_p, Cout), lambda n: (0, 0)),
            pl.BlockSpec((1, Cout), lambda n: (0, 0)),
        ],
        out_specs=[
            pl.BlockSpec((1, H, W, Cout), lambda n: (n, 0, 0, 0)),
            pl.BlockSpec((1, 2, Cout), lambda n: (n, 0, 0)),
        ],
        out_shape=[
            jax.ShapeDtypeStruct((N, H, W, Cout), jnp.float32),
            jax.ShapeDtypeStruct((N, 2, Cout), jnp.float32),
        ],
        scratch_shapes=[
            pltpu.VMEM((H + 2, W + 2, Cmid), jnp.bfloat16),
            pltpu.VMEM((H * W, 9 * cmid_p), jnp.bfloat16),
        ],
        compiler_params=pltpu.CompilerParams(
            dimension_semantics=("parallel",),
            vmem_limit_bytes=_vmem_limit(
                ((1, H, W, Cmid), jnp.float32), ((9 * cmid_p, Cout), jnp.bfloat16),
                ((1, H, W, Cout), jnp.float32), ((H + 2, W + 2, Cmid), jnp.bfloat16),
                ((H * W, 9 * cmid_p), jnp.bfloat16)),
        ),
    )(y1, frow(sc1), frow(sh1), w2_k, frow(b2))

    # ----------- phase 3: BN2 affine (+ReLU), lane-dense elementwise ----------- #
    sc2, sh2 = _bn_affine(st2, cnt, g2, bt2, eps)
    rows = N * H * W
    z_flat = z2.reshape(rows, Cout)                    # free row-major reshape in HBM
    tr = 256 if rows % 256 == 0 else rows
    out_flat = pl.pallas_call(
        functools.partial(_bn_affine_act_kernel, use_act=use_act),
        grid=(rows // tr,),
        in_specs=[
            pl.BlockSpec((tr, Cout), lambda i: (i, 0)),
            pl.BlockSpec((1, Cout), lambda i: (0, 0)),
            pl.BlockSpec((1, Cout), lambda i: (0, 0)),
        ],
        out_specs=pl.BlockSpec((tr, Cout), lambda i: (i, 0)),
        out_shape=jax.ShapeDtypeStruct((rows, Cout), jnp.float32),
        compiler_params=pltpu.CompilerParams(
            dimension_semantics=("parallel",),
            vmem_limit_bytes=_vmem_limit(((tr, Cout), jnp.float32),
                                         ((tr, Cout), jnp.float32)),
        ),
    )(z_flat, frow(sc2), frow(sh2))

    out = out_flat.reshape(N, H, W, Cout)
    return jnp.transpose(out, (0, 3, 1, 2))            # NHWC -> NCHW


# --------------------------------------------------------------------------- #
# Pure-JAX reference (mirrors the kernel's bf16 matmul-operand rounding)
# --------------------------------------------------------------------------- #
def reference(x_nchw, params, *, use_act=True, eps=1e-5):
    w1, b1, g1, bt1, w2, b2, g2, bt2 = params

    def bf16(a):
        return a.astype(jnp.bfloat16).astype(jnp.float32)

    def conv(a, w_oihw, b):
        w_hwio = jnp.transpose(w_oihw, (2, 3, 1, 0))
        y = lax.conv_general_dilated(bf16(a), bf16(w_hwio), (1, 1), "SAME",
                                     dimension_numbers=("NHWC", "HWIO", "NHWC"))
        return y + b[None, None, None, :]

    def bn(y, g, beta):
        m = jnp.mean(y, axis=(0, 1, 2), keepdims=True)
        v = jnp.mean((y - m) ** 2, axis=(0, 1, 2), keepdims=True)
        return (y - m) * lax.rsqrt(v + eps) * g[None, None, None, :] + beta[None, None, None, :]

    x = jnp.transpose(x_nchw, (0, 2, 3, 1)).astype(jnp.float32)
    a1 = jnp.maximum(bn(conv(x, w1, b1), g1, bt1), 0.0)
    z = bn(conv(a1, w2, b2), g2, bt2)
    if use_act:
        z = jnp.maximum(z, 0.0)
    return jnp.transpose(z, (0, 3, 1, 2))


if __name__ == "__main__":
    # DoubleConvBlock(in_features=128, mid_features=128) -> out_features=128,
    # stride=1, use_act=True, batch=2, spatial 16x16.  Channels are a multiple of
    # 128 (lane-friendly); the kernels also support other channel counts via the
    # padded patch-column stride.
    N, Cin, H, W = 2, 128, 16, 16
    Cmid, Cout = 128, 128

    key = jax.random.PRNGKey(0)
    ks = jax.random.split(key, 9)
    w1 = 0.05 * jax.random.normal(ks[0], (Cmid, Cin, 3, 3), jnp.float32)   # OIHW
    b1 = 0.1 * jax.random.normal(ks[1], (Cmid,), jnp.float32)
    g1 = 1.0 + 0.1 * jax.random.normal(ks[2], (Cmid,), jnp.float32)
    bt1 = 0.1 * jax.random.normal(ks[3], (Cmid,), jnp.float32)
    w2 = 0.05 * jax.random.normal(ks[4], (Cout, Cmid, 3, 3), jnp.float32)  # OIHW
    b2 = 0.1 * jax.random.normal(ks[5], (Cout,), jnp.float32)
    g2 = 1.0 + 0.1 * jax.random.normal(ks[6], (Cout,), jnp.float32)
    bt2 = 0.1 * jax.random.normal(ks[7], (Cout,), jnp.float32)
    params = (w1, b1, g1, bt1, w2, b2, g2, bt2)

    x = jax.random.normal(ks[8], (N, Cin, H, W), jnp.float32)

    fwd = jax.jit(functools.partial(double_conv_block, use_act=True))
    out = jax.block_until_ready(fwd(x, params))

    ref = jax.block_until_ready(reference(x, params, use_act=True))
    max_err = float(jnp.max(jnp.abs(out - ref)))
    assert out.shape == (N, Cout, H, W), out.shape
    assert max_err < 5e-3, f"max abs error {max_err}"

    print("KERNEL_OK")
</pallas_src>

<mosaic_0001>
module attributes {stable_mosaic.version = 11 : i64} {
  func.func @_conv1_kernel(%arg0: i32, %arg1: memref<1x16x16x128xbf16, #tpu.memory_space<vmem>>, %arg2: memref<1152x128xbf16, #tpu.memory_space<vmem>>, %arg3: memref<1x128xf32, #tpu.memory_space<vmem>>, %arg4: memref<1x16x16x128xf32, #tpu.memory_space<vmem>>, %arg5: memref<1x2x128xf32, #tpu.memory_space<vmem>>, %arg6: memref<18x18x128xbf16, #tpu.memory_space<vmem>>, %arg7: memref<256x1152xbf16, #tpu.memory_space<vmem>>) attributes {dimension_semantics = [#tpu.dimension_semantics<parallel>], iteration_bounds = array<i64: 2>, scalar_prefetch = 0 : i64, scratch_operands = 2 : i64, tpu.core_type = #tpu.core_type<tc>, window_params = [{transform_indices = @transform_0, window_bounds = array<i64: 1, 16, 16, 128>}, {pipeline_mode = #tpu.pipeline_mode<synchronous>, transform_indices = @transform_1, window_bounds = array<i64: 1152, 128>}, {pipeline_mode = #tpu.pipeline_mode<synchronous>, transform_indices = @transform_2, window_bounds = array<i64: 1, 128>}, {transform_indices = @transform_3, window_bounds = array<i64: 1, 16, 16, 128>}, {transform_indices = @transform_4, window_bounds = array<i64: 1, 2, 128>}]} {
    %c0 = arith.constant 0 : index
    %c0_0 = arith.constant 0 : index
    %c0_1 = arith.constant 0 : index
    %c0_2 = arith.constant 0 : index
    %0 = vector.load %arg1[%c0, %c0_0, %c0_1, %c0_2] : memref<1x16x16x128xbf16, #tpu.memory_space<vmem>>, vector<1x16x16x128xbf16>
    %1 = vector.shape_cast %0 : vector<1x16x16x128xbf16> to vector<16x16x128xbf16>
    %cst = arith.constant 0.000000e+00 : bf16
    %2 = vector.broadcast %cst : bf16 to vector<1x18x128xbf16>
    %cst_3 = arith.constant 0.000000e+00 : bf16
    %3 = vector.broadcast %cst_3 : bf16 to vector<16x1x128xbf16>
    %c0_4 = arith.constant 0 : index
    %c0_5 = arith.constant 0 : index
    %c0_6 = arith.constant 0 : index
    %4 = vector.load %arg6[%c0_4, %c0_5, %c0_6] : memref<18x18x128xbf16, #tpu.memory_space<vmem>>, vector<1x18x128xbf16>
    tpu.vector_store %arg6[%c0_4, %c0_5, %c0_6], %2 {strides = array<i32>} : memref<18x18x128xbf16, #tpu.memory_space<vmem>>, vector<1x18x128xbf16>,
    %c17 = arith.constant 17 : index
    %c0_7 = arith.constant 0 : index
    %c0_8 = arith.constant 0 : index
    %5 = vector.load %arg6[%c17, %c0_7, %c0_8] : memref<18x18x128xbf16, #tpu.memory_space<vmem>>, vector<1x18x128xbf16>
    tpu.vector_store %arg6[%c17, %c0_7, %c0_8], %2 {strides = array<i32>} : memref<18x18x128xbf16, #tpu.memory_space<vmem>>, vector<1x18x128xbf16>,
    %c1 = arith.constant 1 : index
    %c0_9 = arith.constant 0 : index
    %c0_10 = arith.constant 0 : index
    %6 = vector.load %arg6[%c1, %c0_9, %c0_10] : memref<18x18x128xbf16, #tpu.memory_space<vmem>>, vector<16x1x128xbf16>
    tpu.vector_store %arg6[%c1, %c0_9, %c0_10], %3 {strides = array<i32>} : memref<18x18x128xbf16, #tpu.memory_space<vmem>>, vector<16x1x128xbf16>,
    %c1_11 = arith.constant 1 : index
    %c17_12 = arith.constant 17 : index
    %c0_13 = arith.constant 0 : index
    %7 = vector.load %arg6[%c1_11, %c17_12, %c0_13] : memref<18x18x128xbf16, #tpu.memory_space<vmem>>, vector<16x1x128xbf16>
    tpu.vector_store %arg6[%c1_11, %c17_12, %c0_13], %3 {strides = array<i32>} : memref<18x18x128xbf16, #tpu.memory_space<vmem>>, vector<16x1x128xbf16>,
    %c1_14 = arith.constant 1 : index
    %c1_15 = arith.constant 1 : index
    %c0_16 = arith.constant 0 : index
    %8 = vector.load %arg6[%c1_14, %c1_15, %c0_16] : memref<18x18x128xbf16, #tpu.memory_space<vmem>>, vector<16x16x128xbf16>
    tpu.vector_store %arg6[%c1_14, %c1_15, %c0_16], %1 {strides = array<i32>} : memref<18x18x128xbf16, #tpu.memory_space<vmem>>, vector<16x16x128xbf16>,
    %c0_17 = arith.constant 0 : index
    %c0_18 = arith.constant 0 : index
    %c0_19 = arith.constant 0 : index
    %9 = vector.load %arg6[%c0_17, %c0_18, %c0_19] : memref<18x18x128xbf16, #tpu.memory_space<vmem>>, vector<16x16x128xbf16>
    %10 = vector.shape_cast %9 : vector<16x16x128xbf16> to vector<256x128xbf16>
    %c0_20 = arith.constant 0 : index
    %c0_21 = arith.constant 0 : index
    %11 = vector.load %arg7[%c0_20, %c0_21] : memref<256x1152xbf16, #tpu.memory_space<vmem>>, vector<256x128xbf16>
    tpu.vector_store %arg7[%c0_20, %c0_21], %10 {strides = array<i32>} : memref<256x1152xbf16, #tpu.memory_space<vmem>>, vector<256x128xbf16>,
    %c0_22 = arith.constant 0 : index
    %c1_23 = arith.constant 1 : index
    %c0_24 = arith.constant 0 : index
    %12 = vector.load %arg6[%c0_22, %c1_23, %c0_24] : memref<18x18x128xbf16, #tpu.memory_space<vmem>>, vector<16x16x128xbf16>
    %13 = vector.shape_cast %12 : vector<16x16x128xbf16> to vector<256x128xbf16>
    %c0_25 = arith.constant 0 : index
    %c128 = arith.constant 128 : index
    %14 = vector.load %arg7[%c0_25, %c128] : memref<256x1152xbf16, #tpu.memory_space<vmem>>, vector<256x128xbf16>
    tpu.vector_store %arg7[%c0_25, %c128], %13 {strides = array<i32>} : memref<256x1152xbf16, #tpu.memory_space<vmem>>, vector<256x128xbf16>,
    %c0_26 = arith.constant 0 : index
    %c2 = arith.constant 2 : index
    %c0_27 = arith.constant 0 : index
    %15 = vector.load %arg6[%c0_26, %c2, %c0_27] : memref<18x18x128xbf16, #tpu.memory_space<vmem>>, vector<16x16x128xbf16>
    %16 = vector.shape_cast %15 : vector<16x16x128xbf16> to vector<256x128xbf16>
    %c0_28 = arith.constant 0 : index
    %c256 = arith.constant 256 : index
    %17 = vector.load %arg7[%c0_28, %c256] : memref<256x1152xbf16, #tpu.memory_space<vmem>>, vector<256x128xbf16>
    tpu.vector_store %arg7[%c0_28, %c256], %16 {strides = array<i32>} : memref<256x1152xbf16, #tpu.memory_space<vmem>>, vector<256x128xbf16>,
    %c1_29 = arith.constant 1 : index
    %c0_30 = arith.constant 0 : index
    %c0_31 = arith.constant 0 : index
    %18 = vector.load %arg6[%c1_29, %c0_30, %c0_31] : memref<18x18x128xbf16, #tpu.memory_space<vmem>>, vector<16x16x128xbf16>
    %19 = vector.shape_cast %18 : vector<16x16x128xbf16> to vector<256x128xbf16>
    %c0_32 = arith.constant 0 : index
    %c384 = arith.constant 384 : index
    %20 = vector.load %arg7[%c0_32, %c384] : memref<256x1152xbf16, #tpu.memory_space<vmem>>, vector<256x128xbf16>
    tpu.vector_store %arg7[%c0_32, %c384], %19 {strides = array<i32>} : memref<256x1152xbf16, #tpu.memory_space<vmem>>, vector<256x128xbf16>,
    %c1_33 = arith.constant 1 : index
    %c1_34 = arith.constant 1 : index
    %c0_35 = arith.constant 0 : index
    %21 = vector.load %arg6[%c1_33, %c1_34, %c0_35] : memref<18x18x128xbf16, #tpu.memory_space<vmem>>, vector<16x16x128xbf16>
    %22 = vector.shape_cast %21 : vector<16x16x128xbf16> to vector<256x128xbf16>
    %c0_36 = arith.constant 0 : index
    %c512 = arith.constant 512 : index
    %23 = vector.load %arg7[%c0_36, %c512] : memref<256x1152xbf16, #tpu.memory_space<vmem>>, vector<256x128xbf16>
    tpu.vector_store %arg7[%c0_36, %c512], %22 {strides = array<i32>} : memref<256x1152xbf16, #tpu.memory_space<vmem>>, vector<256x128xbf16>,
    %c1_37 = arith.constant 1 : index
    %c2_38 = arith.constant 2 : index
    %c0_39 = arith.constant 0 : index
    %24 = vector.load %arg6[%c1_37, %c2_38, %c0_39] : memref<18x18x128xbf16, #tpu.memory_space<vmem>>, vector<16x16x128xbf16>
    %25 = vector.shape_cast %24 : vector<16x16x128xbf16> to vector<256x128xbf16>
    %c0_40 = arith.constant 0 : index
    %c640 = arith.constant 640 : index
    %26 = vector.load %arg7[%c0_40, %c640] : memref<256x1152xbf16, #tpu.memory_space<vmem>>, vector<256x128xbf16>
    tpu.vector_store %arg7[%c0_40, %c640], %25 {strides = array<i32>} : memref<256x1152xbf16, #tpu.memory_space<vmem>>, vector<256x128xbf16>,
    %c2_41 = arith.constant 2 : index
    %c0_42 = arith.constant 0 : index
    %c0_43 = arith.constant 0 : index
    %27 = vector.load %arg6[%c2_41, %c0_42, %c0_43] : memref<18x18x128xbf16, #tpu.memory_space<vmem>>, vector<16x16x128xbf16>
    %28 = vector.shape_cast %27 : vector<16x16x128xbf16> to vector<256x128xbf16>
    %c0_44 = arith.constant 0 : index
    %c768 = arith.constant 768 : index
    %29 = vector.load %arg7[%c0_44, %c768] : memref<256x1152xbf16, #tpu.memory_space<vmem>>, vector<256x128xbf16>
    tpu.vector_store %arg7[%c0_44, %c768], %28 {strides = array<i32>} : memref<256x1152xbf16, #tpu.memory_space<vmem>>, vector<256x128xbf16>,
    %c2_45 = arith.constant 2 : index
    %c1_46 = arith.constant 1 : index
    %c0_47 = arith.constant 0 : index
    %30 = vector.load %arg6[%c2_45, %c1_46, %c0_47] : memref<18x18x128xbf16, #tpu.memory_space<vmem>>, vector<16x16x128xbf16>
    %31 = vector.shape_cast %30 : vector<16x16x128xbf16> to vector<256x128xbf16>
    %c0_48 = arith.constant 0 : index
    %c896 = arith.constant 896 : index
    %32 = vector.load %arg7[%c0_48, %c896] : memref<256x1152xbf16, #tpu.memory_space<vmem>>, vector<256x128xbf16>
    tpu.vector_store %arg7[%c0_48, %c896], %31 {strides = array<i32>} : memref<256x1152xbf16, #tpu.memory_space<vmem>>, vector<256x128xbf16>,
    %c2_49 = arith.constant 2 : index
    %c2_50 = arith.constant 2 : index
    %c0_51 = arith.constant 0 : index
    %33 = vector.load %arg6[%c2_49, %c2_50, %c0_51] : memref<18x18x128xbf16, #tpu.memory_space<vmem>>, vector<16x16x128xbf16>
    %34 = vector.shape_cast %33 : vector<16x16x128xbf16> to vector<256x128xbf16>
    %c0_52 = arith.constant 0 : index
    %c1024 = arith.constant 1024 : index
    %35 = vector.load %arg7[%c0_52, %c1024] : memref<256x1152xbf16, #tpu.memory_space<vmem>>, vector<256x128xbf16>
    tpu.vector_store %arg7[%c0_52, %c1024], %34 {strides = array<i32>} : memref<256x1152xbf16, #tpu.memory_space<vmem>>, vector<256x128xbf16>,
    %c0_53 = arith.constant 0 : index
    %c0_54 = arith.constant 0 : index
    %36 = vector.load %arg7[%c0_53, %c0_54] : memref<256x1152xbf16, #tpu.memory_space<vmem>>, vector<256x1152xbf16>
    %c0_55 = arith.constant 0 : index
    %c0_56 = arith.constant 0 : index
    %37 = vector.load %arg2[%c0_55, %c0_56] : memref<1152x128xbf16, #tpu.memory_space<vmem>>, vector<1152x128xbf16>
    %cst_57 = arith.constant dense<0.000000e+00> : vector<256x128xf32>
    %38 = tpu.matmul %36, %37, %cst_57 {dimension_numbers = #tpu.dot_dimension_numbers<[1], [0], [0], [1], [0, 0, 1, 1], [], []>} : vector<256x1152xbf16>, vector<1152x128xbf16>, vector<256x128xf32> -> vector<256x128xf32>
    %c0_58 = arith.constant 0 : index
    %c0_59 = arith.constant 0 : index
    %39 = vector.load %arg3[%c0_58, %c0_59] : memref<1x128xf32, #tpu.memory_space<vmem>>, vector<1x128xf32>
    %40 = vector.broadcast %39 : vector<1x128xf32> to vector<256x128xf32>
    %41 = arith.addf %38, %40 : vector<256x128xf32>
    %cst_60 = arith.constant dense<0.000000e+00> : vector<128xf32>
    %42 = vector.multi_reduction <add>, %41, %cst_60 [0] : vector<256x128xf32> to vector<128xf32>
    %43 = vector.shape_cast %42 : vector<128xf32> to vector<1x128xf32>
    %44 = vector.shape_cast %43 : vector<1x128xf32> to vector<1x1x128xf32>
    %c0_61 = arith.constant 0 : index
    %c0_62 = arith.constant 0 : index
    %c0_63 = arith.constant 0 : index
    %45 = vector.load %arg5[%c0_61, %c0_62, %c0_63] : memref<1x2x128xf32, #tpu.memory_space<vmem>>, vector<1x1x128xf32>
    tpu.vector_store %arg5[%c0_61, %c0_62, %c0_63], %44 {strides = array<i32>} : memref<1x2x128xf32, #tpu.memory_space<vmem>>, vector<1x1x128xf32>,
    %46 = arith.mulf %41, %41 : vector<256x128xf32>
    %cst_64 = arith.constant dense<0.000000e+00> : vector<128xf32>
    %47 = vector.multi_reduction <add>, %46, %cst_64 [0] : vector<256x128xf32> to vector<128xf32>
    %48 = vector.shape_cast %47 : vector<128xf32> to vector<1x128xf32>
    %49 = vector.shape_cast %48 : vector<1x128xf32> to vector<1x1x128xf32>
    %c0_65 = arith.constant 0 : index
    %c1_66 = arith.constant 1 : index
    %c0_67 = arith.constant 0 : index
    %50 = vector.load %arg5[%c0_65, %c1_66, %c0_67] : memref<1x2x128xf32, #tpu.memory_space<vmem>>, vector<1x1x128xf32>
    tpu.vector_store %arg5[%c0_65, %c1_66, %c0_67], %49 {strides = array<i32>} : memref<1x2x128xf32, #tpu.memory_space<vmem>>, vector<1x1x128xf32>,
    %51 = vector.shape_cast %41 : vector<256x128xf32> to vector<16x16x128xf32>
    %c0_68 = arith.constant 0 : index
    %c0_69 = arith.constant 0 : index
    %c0_70 = arith.constant 0 : index
    %c0_71 = arith.constant 0 : index
    %52 = vector.load %arg4[%c0_68, %c0_69, %c0_70, %c0_71] : memref<1x16x16x128xf32, #tpu.memory_space<vmem>>, vector<1x16x16x128xf32>
    %53 = vector.shape_cast %52 : vector<1x16x16x128xf32> to vector<16x16x128xf32>
    %54 = vector.shape_cast %51 : vector<16x16x128xf32> to vector<1x16x16x128xf32>
    tpu.vector_store %arg4[%c0_68, %c0_69, %c0_70, %c0_71], %54 {strides = array<i32>} : memref<1x16x16x128xf32, #tpu.memory_space<vmem>>, vector<1x16x16x128xf32>,
    return
  }
  func.func @transform_0(%arg0: i32) -> (i32, i32, i32, i32) {
    %c0_i32 = arith.constant 0 : i32
    %c0_i32_0 = arith.constant 0 : i32
    %c0_i32_1 = arith.constant 0 : i32
    %c0_i32_2 = arith.constant 0 : i32
    return %arg0, %c0_i32, %c0_i32_0, %c0_i32_1 : i32, i32, i32, i32
  }
  func.func @transform_1(%arg0: i32) -> (i32, i32) {
    %c0_i32 = arith.constant 0 : i32
    %c0_i32_0 = arith.constant 0 : i32
    %c0_i32_1 = arith.constant 0 : i32
    return %c0_i32, %c0_i32_0 : i32, i32
  }
  func.func @transform_2(%arg0: i32) -> (i32, i32) {
    %c0_i32 = arith.constant 0 : i32
    %c0_i32_0 = arith.constant 0 : i32
    %c0_i32_1 = arith.constant 0 : i32
    return %c0_i32, %c0_i32_0 : i32, i32
  }
  func.func @transform_3(%arg0: i32) -> (i32, i32, i32, i32) {
    %c0_i32 = arith.constant 0 : i32
    %c0_i32_0 = arith.constant 0 : i32
    %c0_i32_1 = arith.constant 0 : i32
    %c0_i32_2 = arith.constant 0 : i32
    return %arg0, %c0_i32, %c0_i32_0, %c0_i32_1 : i32, i32, i32, i32
  }
  func.func @transform_4(%arg0: i32) -> (i32, i32, i32) {
    %c0_i32 = arith.constant 0 : i32
    %c0_i32_0 = arith.constant 0 : i32
    %c0_i32_1 = arith.constant 0 : i32
    return %arg0, %c0_i32, %c0_i32_0 : i32, i32, i32
  }
}

module attributes {stable_mosaic.version = 11 : i64} {
  func.func @_bn_relu_conv2_kernel(%arg0: i32, %arg1: memref<1x16x16x128xf32, #tpu.memory_space<vmem>>, %arg2: memref<1x128xf32, #tpu.memory_space<vmem>>, %arg3: memref<1x128xf32, #tpu.memory_space<vmem>>, %arg4: memref<1152x128xbf16, #tpu.memory_space<vmem>>, %arg5: memref<1x128xf32, #tpu.memory_space<vmem>>, %arg6: memref<1x16x16x128xf32, #tpu.memory_space<vmem>>, %arg7: memref<1x2x128xf32, #tpu.memory_space<vmem>>, %arg8: memref<18x18x128xbf16, #tpu.memory_space<vmem>>, %arg9: memref<256x1152xbf16, #tpu.memory_space<vmem>>) attributes {dimension_semantics = [#tpu.dimension_semantics<parallel>], iteration_bounds = array<i64: 2>, scalar_prefetch = 0 : i64, scratch_operands = 2 : i64, tpu.core_type = #tpu.core_type<tc>, window_params = [{transform_indices = @transform_0, window_bounds = array<i64: 1, 16, 16, 128>}, {pipeline_mode = #tpu.pipeline_mode<synchronous>, transform_indices = @transform_1, window_bounds = array<i64: 1, 128>}, {pipeline_mode = #tpu.pipeline_mode<synchronous>, transform_indices = @transform_2, window_bounds = array<i64: 1, 128>}, {pipeline_mode = #tpu.pipeline_mode<synchronous>, transform_indices = @transform_3, window_bounds = array<i64: 1152, 128>}, {pipeline_mode = #tpu.pipeline_mode<synchronous>, transform_indices = @transform_4, window_bounds = array<i64: 1, 128>}, {transform_indices = @transform_5, window_bounds = array<i64: 1, 16, 16, 128>}, {transform_indices = @transform_6, window_bounds = array<i64: 1, 2, 128>}]} {
    %c0 = arith.constant 0 : index
    %c0_0 = arith.constant 0 : index
    %0 = vector.load %arg2[%c0, %c0_0] : memref<1x128xf32, #tpu.memory_space<vmem>>, vector<1x128xf32>
    %1 = vector.shape_cast %0 : vector<1x128xf32> to vector<1x1x128xf32>
    %c0_1 = arith.constant 0 : index
    %c0_2 = arith.constant 0 : index
    %2 = vector.load %arg3[%c0_1, %c0_2] : memref<1x128xf32, #tpu.memory_space<vmem>>, vector<1x128xf32>
    %3 = vector.shape_cast %2 : vector<1x128xf32> to vector<1x1x128xf32>
    %c0_3 = arith.constant 0 : index
    %c0_4 = arith.constant 0 : index
    %c0_5 = arith.constant 0 : index
    %c0_6 = arith.constant 0 : index
    %4 = vector.load %arg1[%c0_3, %c0_4, %c0_5, %c0_6] : memref<1x16x16x128xf32, #tpu.memory_space<vmem>>, vector<1x16x16x128xf32>
    %5 = vector.shape_cast %4 : vector<1x16x16x128xf32> to vector<16x16x128xf32>
    %6 = vector.broadcast %1 : vector<1x1x128xf32> to vector<16x16x128xf32>
    %7 = arith.mulf %5, %6 : vector<16x16x128xf32>
    %8 = vector.broadcast %3 : vector<1x1x128xf32> to vector<16x16x128xf32>
    %9 = arith.addf %7, %8 : vector<16x16x128xf32>
    %cst = arith.constant 0.000000e+00 : f32
    %10 = vector.broadcast %cst : f32 to vector<16x16x128xf32>
    %11 = arith.maximumf %9, %10 : vector<16x16x128xf32>
    %12 = arith.truncf %11 : vector<16x16x128xf32> to vector<16x16x128xbf16>
    %cst_7 = arith.constant 0.000000e+00 : bf16
    %13 = vector.broadcast %cst_7 : bf16 to vector<1x18x128xbf16>
    %cst_8 = arith.constant 0.000000e+00 : bf16
    %14 = vector.broadcast %cst_8 : bf16 to vector<16x1x128xbf16>
    %c0_9 = arith.constant 0 : index
    %c0_10 = arith.constant 0 : index
    %c0_11 = arith.constant 0 : index
    %15 = vector.load %arg8[%c0_9, %c0_10, %c0_11] : memref<18x18x128xbf16, #tpu.memory_space<vmem>>, vector<1x18x128xbf16>
    tpu.vector_store %arg8[%c0_9, %c0_10, %c0_11], %13 {strides = array<i32>} : memref<18x18x128xbf16, #tpu.memory_space<vmem>>, vector<1x18x128xbf16>,
    %c17 = arith.constant 17 : index
    %c0_12 = arith.constant 0 : index
    %c0_13 = arith.constant 0 : index
    %16 = vector.load %arg8[%c17, %c0_12, %c0_13] : memref<18x18x128xbf16, #tpu.memory_space<vmem>>, vector<1x18x128xbf16>
    tpu.vector_store %arg8[%c17, %c0_12, %c0_13], %13 {strides = array<i32>} : memref<18x18x128xbf16, #tpu.memory_space<vmem>>, vector<1x18x128xbf16>,
    %c1 = arith.constant 1 : index
    %c0_14 = arith.constant 0 : index
    %c0_15 = arith.constant 0 : index
    %17 = vector.load %arg8[%c1, %c0_14, %c0_15] : memref<18x18x128xbf16, #tpu.memory_space<vmem>>, vector<16x1x128xbf16>
    tpu.vector_store %arg8[%c1, %c0_14, %c0_15], %14 {strides = array<i32>} : memref<18x18x128xbf16, #tpu.memory_space<vmem>>, vector<16x1x128xbf16>,
    %c1_16 = arith.constant 1 : index
    %c17_17 = arith.constant 17 : index
    %c0_18 = arith.constant 0 : index
    %18 = vector.load %arg8[%c1_16, %c17_17, %c0_18] : memref<18x18x128xbf16, #tpu.memory_space<vmem>>, vector<16x1x128xbf16>
    tpu.vector_store %arg8[%c1_16, %c17_17, %c0_18], %14 {strides = array<i32>} : memref<18x18x128xbf16, #tpu.memory_space<vmem>>, vector<16x1x128xbf16>,
    %c1_19 = arith.constant 1 : index
    %c1_20 = arith.constant 1 : index
    %c0_21 = arith.constant 0 : index
    %19 = vector.load %arg8[%c1_19, %c1_20, %c0_21] : memref<18x18x128xbf16, #tpu.memory_space<vmem>>, vector<16x16x128xbf16>
    tpu.vector_store %arg8[%c1_19, %c1_20, %c0_21], %12 {strides = array<i32>} : memref<18x18x128xbf16, #tpu.memory_space<vmem>>, vector<16x16x128xbf16>,
    %c0_22 = arith.constant 0 : index
    %c0_23 = arith.constant 0 : index
    %c0_24 = arith.constant 0 : index
    %20 = vector.load %arg8[%c0_22, %c0_23, %c0_24] : memref<18x18x128xbf16, #tpu.memory_space<vmem>>, vector<16x16x128xbf16>
    %21 = vector.shape_cast %20 : vector<16x16x128xbf16> to vector<256x128xbf16>
    %c0_25 = arith.constant 0 : index
    %c0_26 = arith.constant 0 : index
    %22 = vector.load %arg9[%c0_25, %c0_26] : memref<256x1152xbf16, #tpu.memory_space<vmem>>, vector<256x128xbf16>
    tpu.vector_store %arg9[%c0_25, %c0_26], %21 {strides = array<i32>} : memref<256x1152xbf16, #tpu.memory_space<vmem>>, vector<256x128xbf16>,
    %c0_27 = arith.constant 0 : index
    %c1_28 = arith.constant 1 : index
    %c0_29 = arith.constant 0 : index
    %23 = vector.load %arg8[%c0_27, %c1_28, %c0_29] : memref<18x18x128xbf16, #tpu.memory_space<vmem>>, vector<16x16x128xbf16>
    %24 = vector.shape_cast %23 : vector<16x16x128xbf16> to vector<256x128xbf16>
    %c0_30 = arith.constant 0 : index
    %c128 = arith.constant 128 : index
    %25 = vector.load %arg9[%c0_30, %c128] : memref<256x1152xbf16, #tpu.memory_space<vmem>>, vector<256x128xbf16>
    tpu.vector_store %arg9[%c0_30, %c128], %24 {strides = array<i32>} : memref<256x1152xbf16, #tpu.memory_space<vmem>>, vector<256x128xbf16>,
    %c0_31 = arith.constant 0 : index
    %c2 = arith.constant 2 : index
    %c0_32 = arith.constant 0 : index
    %26 = vector.load %arg8[%c0_31, %c2, %c0_32] : memref<18x18x128xbf16, #tpu.memory_space<vmem>>, vector<16x16x128xbf16>
    %27 = vector.shape_cast %26 : vector<16x16x128xbf16> to vector<256x128xbf16>
    %c0_33 = arith.constant 0 : index
    %c256 = arith.constant 256 : index
    %28 = vector.load %arg9[%c0_33, %c256] : memref<256x1152xbf16, #tpu.memory_space<vmem>>, vector<256x128xbf16>
    tpu.vector_store %arg9[%c0_33, %c256], %27 {strides = array<i32>} : memref<256x1152xbf16, #tpu.memory_space<vmem>>, vector<256x128xbf16>,
    %c1_34 = arith.constant 1 : index
    %c0_35 = arith.constant 0 : index
    %c0_36 = arith.constant 0 : index
    %29 = vector.load %arg8[%c1_34, %c0_35, %c0_36] : memref<18x18x128xbf16, #tpu.memory_space<vmem>>, vector<16x16x128xbf16>
    %30 = vector.shape_cast %29 : vector<16x16x128xbf16> to vector<256x128xbf16>
    %c0_37 = arith.constant 0 : index
    %c384 = arith.constant 384 : index
    %31 = vector.load %arg9[%c0_37, %c384] : memref<256x1152xbf16, #tpu.memory_space<vmem>>, vector<256x128xbf16>
    tpu.vector_store %arg9[%c0_37, %c384], %30 {strides = array<i32>} : memref<256x1152xbf16, #tpu.memory_space<vmem>>, vector<256x128xbf16>,
    %c1_38 = arith.constant 1 : index
    %c1_39 = arith.constant 1 : index
    %c0_40 = arith.constant 0 : index
    %32 = vector.load %arg8[%c1_38, %c1_39, %c0_40] : memref<18x18x128xbf16, #tpu.memory_space<vmem>>, vector<16x16x128xbf16>
    %33 = vector.shape_cast %32 : vector<16x16x128xbf16> to vector<256x128xbf16>
    %c0_41 = arith.constant 0 : index
    %c512 = arith.constant 512 : index
    %34 = vector.load %arg9[%c0_41, %c512] : memref<256x1152xbf16, #tpu.memory_space<vmem>>, vector<256x128xbf16>
    tpu.vector_store %arg9[%c0_41, %c512], %33 {strides = array<i32>} : memref<256x1152xbf16, #tpu.memory_space<vmem>>, vector<256x128xbf16>,
    %c1_42 = arith.constant 1 : index
    %c2_43 = arith.constant 2 : index
    %c0_44 = arith.constant 0 : index
    %35 = vector.load %arg8[%c1_42, %c2_43, %c0_44] : memref<18x18x128xbf16, #tpu.memory_space<vmem>>, vector<16x16x128xbf16>
    %36 = vector.shape_cast %35 : vector<16x16x128xbf16> to vector<256x128xbf16>
    %c0_45 = arith.constant 0 : index
    %c640 = arith.constant 640 : index
    %37 = vector.load %arg9[%c0_45, %c640] : memref<256x1152xbf16, #tpu.memory_space<vmem>>, vector<256x128xbf16>
    tpu.vector_store %arg9[%c0_45, %c640], %36 {strides = array<i32>} : memref<256x1152xbf16, #tpu.memory_space<vmem>>, vector<256x128xbf16>,
    %c2_46 = arith.constant 2 : index
    %c0_47 = arith.constant 0 : index
    %c0_48 = arith.constant 0 : index
    %38 = vector.load %arg8[%c2_46, %c0_47, %c0_48] : memref<18x18x128xbf16, #tpu.memory_space<vmem>>, vector<16x16x128xbf16>
    %39 = vector.shape_cast %38 : vector<16x16x128xbf16> to vector<256x128xbf16>
    %c0_49 = arith.constant 0 : index
    %c768 = arith.constant 768 : index
    %40 = vector.load %arg9[%c0_49, %c768] : memref<256x1152xbf16, #tpu.memory_space<vmem>>, vector<256x128xbf16>
    tpu.vector_store %arg9[%c0_49, %c768], %39 {strides = array<i32>} : memref<256x1152xbf16, #tpu.memory_space<vmem>>, vector<256x128xbf16>,
    %c2_50 = arith.constant 2 : index
    %c1_51 = arith.constant 1 : index
    %c0_52 = arith.constant 0 : index
    %41 = vector.load %arg8[%c2_50, %c1_51, %c0_52] : memref<18x18x128xbf16, #tpu.memory_space<vmem>>, vector<16x16x128xbf16>
    %42 = vector.shape_cast %41 : vector<16x16x128xbf16> to vector<256x128xbf16>
    %c0_53 = arith.constant 0 : index
    %c896 = arith.constant 896 : index
    %43 = vector.load %arg9[%c0_53, %c896] : memref<256x1152xbf16, #tpu.memory_space<vmem>>, vector<256x128xbf16>
    tpu.vector_store %arg9[%c0_53, %c896], %42 {strides = array<i32>} : memref<256x1152xbf16, #tpu.memory_space<vmem>>, vector<256x128xbf16>,
    %c2_54 = arith.constant 2 : index
    %c2_55 = arith.constant 2 : index
    %c0_56 = arith.constant 0 : index
    %44 = vector.load %arg8[%c2_54, %c2_55, %c0_56] : memref<18x18x128xbf16, #tpu.memory_space<vmem>>, vector<16x16x128xbf16>
    %45 = vector.shape_cast %44 : vector<16x16x128xbf16> to vector<256x128xbf16>
    %c0_57 = arith.constant 0 : index
    %c1024 = arith.constant 1024 : index
    %46 = vector.load %arg9[%c0_57, %c1024] : memref<256x1152xbf16, #tpu.memory_space<vmem>>, vector<256x128xbf16>
    tpu.vector_store %arg9[%c0_57, %c1024], %45 {strides = array<i32>} : memref<256x1152xbf16, #tpu.memory_space<vmem>>, vector<256x128xbf16>,
    %c0_58 = arith.constant 0 : index
    %c0_59 = arith.constant 0 : index
    %47 = vector.load %arg9[%c0_58, %c0_59] : memref<256x1152xbf16, #tpu.memory_space<vmem>>, vector<256x1152xbf16>
    %c0_60 = arith.constant 0 : index
    %c0_61 = arith.constant 0 : index
    %48 = vector.load %arg4[%c0_60, %c0_61] : memref<1152x128xbf16, #tpu.memory_space<vmem>>, vector<1152x128xbf16>
    %cst_62 = arith.constant dense<0.000000e+00> : vector<256x128xf32>
    %49 = tpu.matmul %47, %48, %cst_62 {dimension_numbers = #tpu.dot_dimension_numbers<[1], [0], [0], [1], [0, 0, 1, 1], [], []>} : vector<256x1152xbf16>, vector<1152x128xbf16>, vector<256x128xf32> -> vector<256x128xf32>
    %c0_63 = arith.constant 0 : index
    %c0_64 = arith.constant 0 : index
    %50 = vector.load %arg5[%c0_63, %c0_64] : memref<1x128xf32, #tpu.memory_space<vmem>>, vector<1x128xf32>
    %51 = vector.broadcast %50 : vector<1x128xf32> to vector<256x128xf32>
    %52 = arith.addf %49, %51 : vector<256x128xf32>
    %cst_65 = arith.constant dense<0.000000e+00> : vector<128xf32>
    %53 = vector.multi_reduction <add>, %52, %cst_65 [0] : vector<256x128xf32> to vector<128xf32>
    %54 = vector.shape_cast %53 : vector<128xf32> to vector<1x128xf32>
    %55 = vector.shape_cast %54 : vector<1x128xf32> to vector<1x1x128xf32>
    %c0_66 = arith.constant 0 : index
    %c0_67 = arith.constant 0 : index
    %c0_68 = arith.constant 0 : index
    %56 = vector.load %arg7[%c0_66, %c0_67, %c0_68] : memref<1x2x128xf32, #tpu.memory_space<vmem>>, vector<1x1x128xf32>
    tpu.vector_store %arg7[%c0_66, %c0_67, %c0_68], %55 {strides = array<i32>} : memref<1x2x128xf32, #tpu.memory_space<vmem>>, vector<1x1x128xf32>,
    %57 = arith.mulf %52, %52 : vector<256x128xf32>
    %cst_69 = arith.constant dense<0.000000e+00> : vector<128xf32>
    %58 = vector.multi_reduction <add>, %57, %cst_69 [0] : vector<256x128xf32> to vector<128xf32>
    %59 = vector.shape_cast %58 : vector<128xf32> to vector<1x128xf32>
    %60 = vector.shape_cast %59 : vector<1x128xf32> to vector<1x1x128xf32>
    %c0_70 = arith.constant 0 : index
    %c1_71 = arith.constant 1 : index
    %c0_72 = arith.constant 0 : index
    %61 = vector.load %arg7[%c0_70, %c1_71, %c0_72] : memref<1x2x128xf32, #tpu.memory_space<vmem>>, vector<1x1x128xf32>
    tpu.vector_store %arg7[%c0_70, %c1_71, %c0_72], %60 {strides = array<i32>} : memref<1x2x128xf32, #tpu.memory_space<vmem>>, vector<1x1x128xf32>,
    %62 = vector.shape_cast %52 : vector<256x128xf32> to vector<16x16x128xf32>
    %c0_73 = arith.constant 0 : index
    %c0_74 = arith.constant 0 : index
    %c0_75 = arith.constant 0 : index
    %c0_76 = arith.constant 0 : index
    %63 = vector.load %arg6[%c0_73, %c0_74, %c0_75, %c0_76] : memref<1x16x16x128xf32, #tpu.memory_space<vmem>>, vector<1x16x16x128xf32>
    %64 = vector.shape_cast %63 : vector<1x16x16x128xf32> to vector<16x16x128xf32>
    %65 = vector.shape_cast %62 : vector<16x16x128xf32> to vector<1x16x16x128xf32>
    tpu.vector_store %arg6[%c0_73, %c0_74, %c0_75, %c0_76], %65 {strides = array<i32>} : memref<1x16x16x128xf32, #tpu.memory_space<vmem>>, vector<1x16x16x128xf32>,
    return
  }
  func.func @transform_0(%arg0: i32) -> (i32, i32, i32, i32) {
    %c0_i32 = arith.constant 0 : i32
    %c0_i32_0 = arith.constant 0 : i32
    %c0_i32_1 = arith.constant 0 : i32
    %c0_i32_2 = arith.constant 0 : i32
    return %arg0, %c0_i32, %c0_i32_0, %c0_i32_1 : i32, i32, i32, i32
  }
  func.func @transform_1(%arg0: i32) -> (i32, i32) {
    %c0_i32 = arith.constant 0 : i32
    %c0_i32_0 = arith.constant 0 : i32
    %c0_i32_1 = arith.constant 0 : i32
    return %c0_i32, %c0_i32_0 : i32, i32
  }
  func.func @transform_2(%arg0: i32) -> (i32, i32) {
    %c0_i32 = arith.constant 0 : i32
    %c0_i32_0 = arith.constant 0 : i32
    %c0_i32_1 = arith.constant 0 : i32
    return %c0_i32, %c0_i32_0 : i32, i32
  }
  func.func @transform_3(%arg0: i32) -> (i32, i32) {
    %c0_i32 = arith.constant 0 : i32
    %c0_i32_0 = arith.constant 0 : i32
    %c0_i32_1 = arith.constant 0 : i32
    return %c0_i32, %c0_i32_0 : i32, i32
  }
  func.func @transform_4(%arg0: i32) -> (i32, i32) {
    %c0_i32 = arith.constant 0 : i32
    %c0_i32_0 = arith.constant 0 : i32
    %c0_i32_1 = arith.constant 0 : i32
    return %c0_i32, %c0_i32_0 : i32, i32
  }
  func.func @transform_5(%arg0: i32) -> (i32, i32, i32, i32) {
    %c0_i32 = arith.constant 0 : i32
    %c0_i32_0 = arith.constant 0 : i32
    %c0_i32_1 = arith.constant 0 : i32
    %c0_i32_2 = arith.constant 0 : i32
    return %arg0, %c0_i32, %c0_i32_0, %c0_i32_1 : i32, i32, i32, i32
  }
  func.func @transform_6(%arg0: i32) -> (i32, i32, i32) {
    %c0_i32 = arith.constant 0 : i32
    %c0_i32_0 = arith.constant 0 : i32
    %c0_i32_1 = arith.constant 0 : i32
    return %arg0, %c0_i32, %c0_i32_0 : i32, i32, i32
  }
}

module attributes {stable_mosaic.version = 11 : i64} {
  func.func @_bn_affine_act_kernel(%arg0: i32, %arg1: memref<256x128xf32, #tpu.memory_space<vmem>>, %arg2: memref<1x128xf32, #tpu.memory_space<vmem>>, %arg3: memref<1x128xf32, #tpu.memory_space<vmem>>, %arg4: memref<256x128xf32, #tpu.memory_space<vmem>>) attributes {dimension_semantics = [#tpu.dimension_semantics<parallel>], iteration_bounds = array<i64: 2>, scalar_prefetch = 0 : i64, scratch_operands = 0 : i64, tpu.core_type = #tpu.core_type<tc>, window_params = [{transform_indices = @transform_0, window_bounds = array<i64: 256, 128>}, {pipeline_mode = #tpu.pipeline_mode<synchronous>, transform_indices = @transform_1, window_bounds = array<i64: 1, 128>}, {pipeline_mode = #tpu.pipeline_mode<synchronous>, transform_indices = @transform_2, window_bounds = array<i64: 1, 128>}, {transform_indices = @transform_3, window_bounds = array<i64: 256, 128>}]} {
    %c0 = arith.constant 0 : index
    %c0_0 = arith.constant 0 : index
    %0 = vector.load %arg1[%c0, %c0_0] : memref<256x128xf32, #tpu.memory_space<vmem>>, vector<256x128xf32>
    %c0_1 = arith.constant 0 : index
    %c0_2 = arith.constant 0 : index
    %1 = vector.load %arg2[%c0_1, %c0_2] : memref<1x128xf32, #tpu.memory_space<vmem>>, vector<1x128xf32>
    %2 = vector.broadcast %1 : vector<1x128xf32> to vector<256x128xf32>
    %3 = arith.mulf %0, %2 : vector<256x128xf32>
    %c0_3 = arith.constant 0 : index
    %c0_4 = arith.constant 0 : index
    %4 = vector.load %arg3[%c0_3, %c0_4] : memref<1x128xf32, #tpu.memory_space<vmem>>, vector<1x128xf32>
    %5 = vector.broadcast %4 : vector<1x128xf32> to vector<256x128xf32>
    %6 = arith.addf %3, %5 : vector<256x128xf32>
    %cst = arith.constant 0.000000e+00 : f32
    %7 = vector.broadcast %cst : f32 to vector<256x128xf32>
    %8 = arith.maximumf %6, %7 : vector<256x128xf32>
    %c0_5 = arith.constant 0 : index
    %c0_6 = arith.constant 0 : index
    %9 = vector.load %arg4[%c0_5, %c0_6] : memref<256x128xf32, #tpu.memory_space<vmem>>, vector<256x128xf32>
    tpu.vector_store %arg4[%c0_5, %c0_6], %8 {strides = array<i32>} : memref<256x128xf32, #tpu.memory_space<vmem>>, vector<256x128xf32>,
    return
  }
  func.func @transform_0(%arg0: i32) -> (i32, i32) {
    %c0_i32 = arith.constant 0 : i32
    %c0_i32_0 = arith.constant 0 : i32
    return %arg0, %c0_i32 : i32, i32
  }
  func.func @transform_1(%arg0: i32) -> (i32, i32) {
    %c0_i32 = arith.constant 0 : i32
    %c0_i32_0 = arith.constant 0 : i32
    %c0_i32_1 = arith.constant 0 : i32
    return %c0_i32, %c0_i32_0 : i32, i32
  }
  func.func @transform_2(%arg0: i32) -> (i32, i32) {
    %c0_i32 = arith.constant 0 : i32
    %c0_i32_0 = arith.constant 0 : i32
    %c0_i32_1 = arith.constant 0 : i32
    return %c0_i32, %c0_i32_0 : i32, i32
  }
  func.func @transform_3(%arg0: i32) -> (i32, i32) {
    %c0_i32 = arith.constant 0 : i32
    %c0_i32_0 = arith.constant 0 : i32
    return %arg0, %c0_i32 : i32, i32
  }
}

</mosaic_0001>

<llo_original>
// kernel: double_conv_block.5
$region0: #{double_conv_block.5}
  #allocation0 [shape = 'u32[]', space=smem, size = 0x4, offset = 0x4, fixed_abs, tag = 'smem constant byte address 0x4 - core index']
  #allocation1 [shape = 'u32[144,128]{1,0:T(1,128)}', space=vmem, size = 0x12000, scoped, tag = 'internal scratch']
  %s0 = inlined_call_operand.vmem [shape: f32[512,128], index: 0, kind: input, shape index: {}]
  %s1 = inlined_call_operand.vmem [shape: f32[1,128], index: 1, kind: input, shape index: {}]
  %s2 = inlined_call_operand.vmem [shape: f32[1,128], index: 2, kind: input, shape index: {}]
  %s3 = inlined_call_operand.hbm [shape: f32[512,128], index: 3, kind: output, shape index: {}]
  %s4 = sld [smem:[#allocation0]]
  $region45: #{double_conv_block.5} parent=0
    _
  %s6 = ssub.s32 1, %s4
  %s7 = scalar_select 0, %s6, %s4
  $region1: #{double_conv_block.5} parent=0
    #allocation2 [shape = 'u8[262144]{0}', space=vmem, size = 0x40000, scoped, tag = 'output window, operand 0']
    #allocation3 [shape = 's32[2]{0}', space=sflag, size = 0x8, scoped, tag = 'scoped memory for double_conv_block.5']
    %8 = vsyncpa [#allocation3], 0
    %s9 = scalar_lea.sflag [#allocation3], 1
    %10 = vsyncpa %s9, 0
    loop: start=0, step=1, limit=4
    $region2: #{double_conv_block.5} parent=1 // loop_pre_header
      _
    $region3: #{double_conv_block.5} parent=1 // loop_header
      %s12 = sphi 0, %s16
      %p13 = scmp.ge.s32.totalorder %s12, 4
      %s22 = sphi 0, %s24
      %s25 = sphi 0, %s22
      %s26 = sphi 0, %s25
      %s42 = sphi 0, %s26
      %s46 = sphi 0, %s46
      %s48 = sphi 0, %s46
      %s49 = sphi 0, %s48
      %s63 = sphi 0, %s49
      %s67 = sphi 0, %s67
      %s69 = sphi 0, %s67
      %s70 = sphi 0, %s69
      %s84 = sphi 0, %s70
      %s90 = sphi 0, %s92
      %s93 = sphi 0, %s90
      %s94 = sphi 0, %s93
      %s110 = sphi 0, %s94
    $region4: #{double_conv_block.5} parent=1 // loop_header_branch
      %15 = sbr.rel (%p13) target = $region8
    $region5: #{double_conv_block.5} parent=1 // loop_body
      %s17 = ssub.s32 %s12, 1
      %s18 = ssub.s32 %s12, 2
      %s19 = sadd.s32 %s12, 1
      %s20 = ssub.s32 %s12, %s19
      %p21 = scmp.eq.s32.totalorder %s20, 0
      %s23 = sadd.s32 %s22, 1
      %s24 = scalar_select %p21, %s22, %s23
      %p27 = pneg %p21
      %p28 = scmp.eq.s32.totalorder %s12, 1
      %p29 = por %p27, %p28
      %p30 = scmp.ne.s32.totalorder %s22, %s25
      %p31 = scmp.eq.s32.totalorder %s12, 0
      %p32 = por %p30, %p31
      %p33 = scmp.ne.s32.totalorder %s22, %s25
      %p34 = scmp.eq.s32.totalorder %s17, 1
      %p35 = por %p33, %p34
      %p36 = scmp.ne.s32.totalorder %s25, %s26
      %p37 = scmp.eq.s32.totalorder %s17, 0
      %p38 = por %p36, %p37
      %p39 = scmp.ne.s32.totalorder %s25, %s26
      %p40 = scmp.eq.s32.totalorder %s18, 1
      %p41 = por %p39, %p40
      %p43 = scmp.ne.s32.totalorder %s26, %s42
      %p44 = scmp.eq.s32.totalorder %s18, 0
      %p45 = por %p43, %p44
      %s47 = sadd.s32 %s46, 1
      %p50 = scmp.eq.s32.totalorder %s12, 1
      %p51 = scmp.ne.s32.totalorder %s46, %s48
      %p52 = scmp.eq.s32.totalorder %s12, 0
      %p53 = por %p51, %p52
      %p54 = scmp.ne.s32.totalorder %s46, %s48
      %p55 = scmp.eq.s32.totalorder %s17, 1
      %p56 = por %p54, %p55
      %p57 = scmp.ne.s32.totalorder %s48, %s49
      %p58 = scmp.eq.s32.totalorder %s17, 0
      %p59 = por %p57, %p58
      %p60 = scmp.ne.s32.totalorder %s48, %s49
      %p61 = scmp.eq.s32.totalorder %s18, 1
      %p62 = por %p60, %p61
      %p64 = scmp.ne.s32.totalorder %s49, %s63
      %p65 = scmp.eq.s32.totalorder %s18, 0
      %p66 = por %p64, %p65
      %s68 = sadd.s32 %s67, 1
      %p71 = scmp.eq.s32.totalorder %s12, 1
      %p72 = scmp.ne.s32.totalorder %s67, %s69
      %p73 = scmp.eq.s32.totalorder %s12, 0
      %p74 = por %p72, %p73
      %p75 = scmp.ne.s32.totalorder %s67, %s69
      %p76 = scmp.eq.s32.totalorder %s17, 1
      %p77 = por %p75, %p76
      %p78 = scmp.ne.s32.totalorder %s69, %s70
      %p79 = scmp.eq.s32.totalorder %s17, 0
      %p80 = por %p78, %p79
      %p81 = scmp.ne.s32.totalorder %s69, %s70
      %p82 = scmp.eq.s32.totalorder %s18, 1
      %p83 = por %p81, %p82
      %p85 = scmp.ne.s32.totalorder %s70, %s84
      %p86 = scmp.eq.s32.totalorder %s18, 0
      %p87 = por %p85, %p86
      %s88 = ssub.s32 %s12, %s19
      %p89 = scmp.eq.s32.totalorder %s88, 0
      %s91 = sadd.s32 %s90, 1
      %s92 = scalar_select %p89, %s90, %s91
      %p95 = pneg %p89
      %p96 = scmp.eq.s32.totalorder %s12, 1
      %p97 = por %p95, %p96
      %p98 = scmp.ne.s32.totalorder %s90, %s93
      %p99 = scmp.eq.s32.totalorder %s12, 0
      %p100 = por %p98, %p99
      %p101 = scmp.ne.s32.totalorder %s90, %s93
      %p102 = scmp.eq.s32.totalorder %s17, 1
      %p103 = por %p101, %p102
      %p104 = scmp.ne.s32.totalorder %s93, %s94
      %p105 = scmp.eq.s32.totalorder %s17, 0
      %p106 = por %p104, %p105
      %p107 = scmp.ne.s32.totalorder %s93, %s94
      %p108 = scmp.eq.s32.totalorder %s18, 1
      %p109 = por %p107, %p108
      %p111 = scmp.ne.s32.totalorder %s94, %s110
      %p112 = scmp.eq.s32.totalorder %s18, 0
      %p113 = por %p111, %p112
      %p114 = scmp.le.s32.totalorder 1, %s12
      %p115 = scmp.lt.s32.totalorder %s12, 3
      %p116 = pnand %p114, %p115
      %p117 = pneg %p116
      // Predicated region
      $region9: #{double_conv_block.5} parent=5 // pred_check
        _
      $region10: #{double_conv_block.5} parent=5 // pred_check_branch
        %119 = sbr.rel (%p116) target = $region12
      $region11: #{double_conv_block.5} parent=5 // pred_region
        %s120 = ssub.s32 %s12, 1
        // Predicated region
        $region13: #{double_conv_block.5} parent=11 // pred_check
          %p121 = pneg %p59
        $region14: #{double_conv_block.5} parent=11 // pred_check_branch
          %123 = sbr.rel (%p121) target = $region16
        $region15: #{double_conv_block.5} parent=11 // pred_region
          _
        $region16: #{double_conv_block.5} parent=11 // pred_fallthru
          _
        // Predicated region
        $region17: #{double_conv_block.5} parent=11 // pred_check
          %p124 = pneg %p80
        $region18: #{double_conv_block.5} parent=11 // pred_check_branch
          %126 = sbr.rel (%p124) target = $region20
        $region19: #{double_conv_block.5} parent=11 // pred_region
          _
        $region20: #{double_conv_block.5} parent=11 // pred_fallthru
          _
      $region12: #{double_conv_block.5} parent=5 // pred_fallthru
        _
      %p127 = scmp.lt.s32.totalorder %s12, 2
      // Predicated region
      $region21: #{double_conv_block.5} parent=5 // pred_check
        %p128 = pneg %p127
      $region22: #{double_conv_block.5} parent=5 // pred_check_branch
        %130 = sbr.rel (%p128) target = $region24
      $region23: #{double_conv_block.5} parent=5 // pred_region
        // Predicated region
        $region25: #{double_conv_block.5} parent=23 // pred_check
          %p131 = pneg %p32
        $region26: #{double_conv_block.5} parent=23 // pred_check_branch
          %133 = sbr.rel (%p131) target = $region28
        $region27: #{double_conv_block.5} parent=23 // pred_region
          %s134 = smul.u32 32, %s12
          %p135 = scmp.lt.s32.totalorder %s134, 63
          %s136 = scalar_select %p135, %s134, 63
          %s137 = smul.addr %s136, 8
          %s138 = scalar_lea.vmem %s0, %s137
          %s139 = smul.u32 32, %s12
        $region28: #{double_conv_block.5} parent=23 // pred_fallthru
          _
      $region24: #{double_conv_block.5} parent=5 // pred_fallthru
        _
      %p140 = scmp.le.s32.totalorder 1, %s12
      %p141 = scmp.lt.s32.totalorder %s12, 3
      %p142 = pnand %p140, %p141
      %p143 = pneg %p142
      // Predicated region
      $region29: #{double_conv_block.5} parent=5 // pred_check
        _
      $region30: #{double_conv_block.5} parent=5 // pred_check_branch
        %145 = sbr.rel (%p142) target = $region32
      $region31: #{double_conv_block.5} parent=5 // pred_region
        %s146 = ssub.s32 %s12, 1
        %s147 = smul.u32 32, %s17
        %p148 = scmp.lt.s32.totalorder %s147, 63
        %s149 = scalar_select %p148, %s147, 63
        %s150 = smul.addr %s149, 8
        %s151 = scalar_lea.vmem %s0, %s150
        %p152 = pneg %p38
        %p153 = pneg %p35
        %p154 = pneg %p59
        %p155 = pneg %p56
        %p156 = pneg %p80
        %p157 = pneg %p77
        %p158 = pneg %p106
        %p159 = pneg %p103
        %s160 = sand.u32 %s93, 1
        %s161 = scalar_lea.sflag [#allocation3], %s160
        %s162 = sand.u32 %s93, 1
        %s163 = smul.addr %s162, 256
        %s164 = scalar_lea.vmem [#allocation2], %s163
        %s165 = smul.u32 32, %s17
        %p166 = scmp.lt.s32.totalorder %s165, 63
        %s167 = scalar_select %p166, %s165, 63
        %s168 = smul.addr %s167, 8
        %s169 = scalar_lea.vmem %s0, %s168
        %s170 = smul.u32 32, %s17
        %s171 = smul.u32 32, %s17
        %v172 = vld [vmem:[%s169] sm:$0xff]
        %v173 = vld [vmem:[%s169 + $0x8] sm:$0xff]
        %v174 = vld [vmem:[%s169 + $0x10] sm:$0xff]
        %v175 = vld [vmem:[%s169 + $0x18] sm:$0xff]
        %v176 = vld [vmem:[%s169 + $0x20] sm:$0xff]
        %v177 = vld [vmem:[%s169 + $0x28] sm:$0xff]
        %v178 = vld [vmem:[%s169 + $0x30] sm:$0xff]
        %v179 = vld [vmem:[%s169 + $0x38] sm:$0xff]
        %v180 = vld [vmem:[%s169 + $0x40] sm:$0xff]
        %v181 = vld [vmem:[%s169 + $0x48] sm:$0xff]
        %v182 = vld [vmem:[%s169 + $0x50] sm:$0xff]
        %v183 = vld [vmem:[%s169 + $0x58] sm:$0xff]
        %v184 = vld [vmem:[%s169 + $0x60] sm:$0xff]
        %v185 = vld [vmem:[%s169 + $0x68] sm:$0xff]
        %v186 = vld [vmem:[%s169 + $0x70] sm:$0xff]
        %v187 = vld [vmem:[%s169 + $0x78] sm:$0xff]
        %v188 = vld [vmem:[%s169 + $0x80] sm:$0xff]
        %v189 = vld [vmem:[%s169 + $0x88] sm:$0xff]
        %v190 = vld [vmem:[%s169 + $0x90] sm:$0xff]
        %v191 = vld [vmem:[%s169 + $0x98] sm:$0xff]
        %v192 = vld [vmem:[%s169 + $0xa0] sm:$0xff]
        %v193 = vld [vmem:[%s169 + $0xa8] sm:$0xff]
        %v194 = vld [vmem:[%s169 + $0xb0] sm:$0xff]
        %v195 = vld [vmem:[%s169 + $0xb8] sm:$0xff]
        %v196 = vld [vmem:[%s169 + $0xc0] sm:$0xff]
        %v197 = vld [vmem:[%s169 + $0xc8] sm:$0xff]
        %v198 = vld [vmem:[%s169 + $0xd0] sm:$0xff]
        %v199 = vld [vmem:[%s169 + $0xd8] sm:$0xff]
        %v200 = vld [vmem:[%s169 + $0xe0] sm:$0xff]
        %v201 = vld [vmem:[%s169 + $0xe8] sm:$0xff]
        %v202 = vld [vmem:[%s169 + $0xf0] sm:$0xff]
        %v203 = vld [vmem:[%s169 + $0xf8] sm:$0xff]
        %v204 = vld [vmem:[%s1] sm:$0x1]
        %v206 = vlaneseq
        %v207 = vshrl.u32 %v206, 7
        %v208 = vsub.s32 0, %v207
        %v209 = vrot.slane %v204, %v208
        %v211 = vmul.f32 %v172, %v209
        %v212 = vmul.f32 %v173, %v209
        %v213 = vmul.f32 %v174, %v209
        %v214 = vmul.f32 %v175, %v209
        %v215 = vmul.f32 %v176, %v209
        %v216 = vmul.f32 %v177, %v209
        %v217 = vmul.f32 %v178, %v209
        %v218 = vmul.f32 %v179, %v209
        %v219 = vmul.f32 %v180, %v209
        %v220 = vmul.f32 %v181, %v209
        %v221 = vmul.f32 %v182, %v209
        %v222 = vmul.f32 %v183, %v209
        %v223 = vmul.f32 %v184, %v209
        %v224 = vmul.f32 %v185, %v209
        %v225 = vmul.f32 %v186, %v209
        %v226 = vmul.f32 %v187, %v209
        %v227 = vmul.f32 %v188, %v209
        %v228 = vmul.f32 %v189, %v209
        %v229 = vmul.f32 %v190, %v209
        %v230 = vmul.f32 %v191, %v209
        %v231 = vmul.f32 %v192, %v209
        %v232 = vmul.f32 %v193, %v209
        %v233 = vmul.f32 %v194, %v209
        %v234 = vmul.f32 %v195, %v209
        %v235 = vmul.f32 %v196, %v209
        %v236 = vmul.f32 %v197, %v209
        %v237 = vmul.f32 %v198, %v209
        %v238 = vmul.f32 %v199, %v209
        %v239 = vmul.f32 %v200, %v209
        %v240 = vmul.f32 %v201, %v209
        %v241 = vmul.f32 %v202, %v209
        %v242 = vmul.f32 %v203, %v209
        %v243 = vld [vmem:[%s2] sm:$0x1]
        %v245 = vlaneseq
        %v246 = vshrl.u32 %v245, 7
        %v247 = vsub.s32 0, %v246
        %v248 = vrot.slane %v243, %v247
        %v250 = vadd.f32 %v211, %v248
        %v251 = vadd.f32 %v212, %v248
        %v252 = vadd.f32 %v213, %v248
        %v253 = vadd.f32 %v214, %v248
        %v254 = vadd.f32 %v215, %v248
        %v255 = vadd.f32 %v216, %v248
        %v256 = vadd.f32 %v217, %v248
        %v257 = vadd.f32 %v218, %v248
        %v258 = vadd.f32 %v219, %v248
        %v259 = vadd.f32 %v220, %v248
        %v260 = vadd.f32 %v221, %v248
        %v261 = vadd.f32 %v222, %v248
        %v262 = vadd.f32 %v223, %v248
        %v263 = vadd.f32 %v224, %v248
        %v264 = vadd.f32 %v225, %v248
        %v265 = vadd.f32 %v226, %v248
        %v266 = vadd.f32 %v227, %v248
        %v267 = vadd.f32 %v228, %v248
        %v268 = vadd.f32 %v229, %v248
        %v269 = vadd.f32 %v230, %v248
        %v270 = vadd.f32 %v231, %v248
        %v271 = vadd.f32 %v232, %v248
        %v272 = vadd.f32 %v233, %v248
        %v273 = vadd.f32 %v234, %v248
        %v274 = vadd.f32 %v235, %v248
        %v275 = vadd.f32 %v236, %v248
        %v276 = vadd.f32 %v237, %v248
        %v277 = vadd.f32 %v238, %v248
        %v278 = vadd.f32 %v239, %v248
        %v279 = vadd.f32 %v240, %v248
        %v280 = vadd.f32 %v241, %v248
        %v281 = vadd.f32 %v242, %v248
        %v282 = vmax.f32 %v250, 0.0
        %v283 = vmax.f32 %v251, 0.0
        %v284 = vmax.f32 %v252, 0.0
        %v285 = vmax.f32 %v253, 0.0
        %v286 = vmax.f32 %v254, 0.0
        %v287 = vmax.f32 %v255, 0.0
        %v288 = vmax.f32 %v256, 0.0
        %v289 = vmax.f32 %v257, 0.0
        %v290 = vmax.f32 %v258, 0.0
        %v291 = vmax.f32 %v259, 0.0
        %v292 = vmax.f32 %v260, 0.0
        %v293 = vmax.f32 %v261, 0.0
        %v294 = vmax.f32 %v262, 0.0
        %v295 = vmax.f32 %v263, 0.0
        %v296 = vmax.f32 %v264, 0.0
        %v297 = vmax.f32 %v265, 0.0
        %v298 = vmax.f32 %v266, 0.0
        %v299 = vmax.f32 %v267, 0.0
        %v300 = vmax.f32 %v268, 0.0
        %v301 = vmax.f32 %v269, 0.0
        %v302 = vmax.f32 %v270, 0.0
        %v303 = vmax.f32 %v271, 0.0
        %v304 = vmax.f32 %v272, 0.0
        %v305 = vmax.f32 %v273, 0.0
        %v306 = vmax.f32 %v274, 0.0
        %v307 = vmax.f32 %v275, 0.0
        %v308 = vmax.f32 %v276, 0.0
        %v309 = vmax.f32 %v277, 0.0
        %v310 = vmax.f32 %v278, 0.0
        %v311 = vmax.f32 %v279, 0.0
        %v312 = vmax.f32 %v280, 0.0
        %v313 = vmax.f32 %v281, 0.0
        %314 = vst [vmem:[%s164] sm:$0xff] %v282
        %315 = vst [vmem:[%s164 + $0x8] sm:$0xff] %v283
        %316 = vst [vmem:[%s164 + $0x10] sm:$0xff] %v284
        %317 = vst [vmem:[%s164 + $0x18] sm:$0xff] %v285
        %318 = vst [vmem:[%s164 + $0x20] sm:$0xff] %v286
        %319 = vst [vmem:[%s164 + $0x28] sm:$0xff] %v287
        %320 = vst [vmem:[%s164 + $0x30] sm:$0xff] %v288
        %321 = vst [vmem:[%s164 + $0x38] sm:$0xff] %v289
        %322 = vst [vmem:[%s164 + $0x40] sm:$0xff] %v290
        %323 = vst [vmem:[%s164 + $0x48] sm:$0xff] %v291
        %324 = vst [vmem:[%s164 + $0x50] sm:$0xff] %v292
        %325 = vst [vmem:[%s164 + $0x58] sm:$0xff] %v293
        %326 = vst [vmem:[%s164 + $0x60] sm:$0xff] %v294
        %327 = vst [vmem:[%s164 + $0x68] sm:$0xff] %v295
        %328 = vst [vmem:[%s164 + $0x70] sm:$0xff] %v296
        %329 = vst [vmem:[%s164 + $0x78] sm:$0xff] %v297
        %330 = vst [vmem:[%s164 + $0x80] sm:$0xff] %v298
        %331 = vst [vmem:[%s164 + $0x88] sm:$0xff] %v299
        %332 = vst [vmem:[%s164 + $0x90] sm:$0xff] %v300
        %333 = vst [vmem:[%s164 + $0x98] sm:$0xff] %v301
        %334 = vst [vmem:[%s164 + $0xa0] sm:$0xff] %v302
        %335 = vst [vmem:[%s164 + $0xa8] sm:$0xff] %v303
        %336 = vst [vmem:[%s164 + $0xb0] sm:$0xff] %v304
        %337 = vst [vmem:[%s164 + $0xb8] sm:$0xff] %v305
        %338 = vst [vmem:[%s164 + $0xc0] sm:$0xff] %v306
        %339 = vst [vmem:[%s164 + $0xc8] sm:$0xff] %v307
        %340 = vst [vmem:[%s164 + $0xd0] sm:$0xff] %v308
        %341 = vst [vmem:[%s164 + $0xd8] sm:$0xff] %v309
        %342 = vst [vmem:[%s164 + $0xe0] sm:$0xff] %v310
        %343 = vst [vmem:[%s164 + $0xe8] sm:$0xff] %v311
        %344 = vst [vmem:[%s164 + $0xf0] sm:$0xff] %v312
        %345 = vst [vmem:[%s164 + $0xf8] sm:$0xff] %v313
        %s346 = sand.u32 %s93, 1
        %s347 = scalar_lea.sflag [#allocation3], %s346
        %s348 = sand.u32 %s93, 1
        %s349 = smul.addr %s348, 256
        %s350 = scalar_lea.vmem [#allocation2], %s349
        // Predicated region
        $region33: #{double_conv_block.5} parent=31 // pred_check
          %p351 = pneg %p103
        $region34: #{double_conv_block.5} parent=31 // pred_check_branch
          %353 = sbr.rel (%p351) target = $region36
        $region35: #{double_conv_block.5} parent=31 // pred_region
          %s354 = smul.u32 32, %s17
          %s356 = ssub.s32 4096, 4096
          %357 = vsyncadd %s347, %s356
          %s358 = smul.addr %s354, 128
          %s359 = scalar_lea.hbm %s3, %s358
          %s360 = sshll.u32 %s350, 4
          %s361 = int_to_ptr.vmem [resolvable:$true] %s360
          %366 = dma.vmem_to_hbm [thread:$0]  %s361, 4096, %s359, %s347, 128, 128, 8
        $region36: #{double_conv_block.5} parent=31 // pred_fallthru
          _
      $region32: #{double_conv_block.5} parent=5 // pred_fallthru
        _
      %p367 = scmp.le.s32.totalorder 2, %s12
      // Predicated region
      $region37: #{double_conv_block.5} parent=5 // pred_check
        %p368 = pneg %p367
      $region38: #{double_conv_block.5} parent=5 // pred_check_branch
        %370 = sbr.rel (%p368) target = $region40
      $region39: #{double_conv_block.5} parent=5 // pred_region
        %s371 = ssub.s32 %s12, 2
        // Predicated region
        $region41: #{double_conv_block.5} parent=39 // pred_check
          %p372 = pneg %p109
        $region42: #{double_conv_block.5} parent=39 // pred_check_branch
          %374 = sbr.rel (%p372) target = $region44
        $region43: #{double_conv_block.5} parent=39 // pred_region
          %s375 = sand.u32 %s94, 1
          %s376 = scalar_lea.sflag [#allocation3], %s375
          %s377 = sand.u32 %s94, 1
          %s378 = smul.addr %s377, 256
          %s379 = scalar_lea.vmem [#allocation2], %s378
          %380 = dma.done %s376, 4096
        $region44: #{double_conv_block.5} parent=39 // pred_fallthru
          _
      $region40: #{double_conv_block.5} parent=5 // pred_fallthru
        _
    $region6: #{double_conv_block.5} parent=1 // loop_footer
      %s16 = sadd.s32 1, %s12
    $region7: #{double_conv_block.5} parent=1 // loop_footer_branch
      %11 = sbr.rel target = $region3
    $region8: #{double_conv_block.5} parent=1 // loop_exit
      _
    %381 = vsyncpa [#allocation3], 1
    %s382 = scalar_lea.sflag [#allocation3], 1
    %383 = vsyncpa %s382, 1

// kernel: double_conv_block.3
$region0: #{double_conv_block.3}
  #allocation0 [shape = 'u32[]', space=smem, size = 0x4, offset = 0x4, fixed_abs, tag = 'smem constant byte address 0x4 - core index']
  #allocation1 [shape = 'u32[144,128]{1,0:T(1,128)}', space=vmem, size = 0x12000, scoped, tag = 'internal scratch']
  #allocation2 [shape = 'bf16[18,18,128]{2,1,0:T(8,128)(2,1)}', space=vmem, size = 0x1b000, scoped, tag = 'scratch operand']
  #allocation3 [shape = 'bf16[256,1152]{1,0:T(8,128)(2,1)}', space=vmem, size = 0x90000, scoped, tag = 'scratch operand']
  %s0 = inlined_call_operand.vmem [shape: bf16[2,16,16,128], index: 0, kind: input, shape index: {}]
  %s1 = inlined_call_operand.vmem [shape: bf16[1152,128], index: 1, kind: input, shape index: {}]
  %s2 = inlined_call_operand.vmem [shape: f32[1,128], index: 2, kind: input, shape index: {}]
  %s3 = inlined_call_operand.vmem [shape: f32[2,16,16,128], index: 3, kind: output, shape index: {0}]
  %s4 = inlined_call_operand.vmem [shape: f32[2,2,128], index: 4, kind: output, shape index: {1}]
  %5 = xla_tuple %s3, %s4
  %s6 = sld [smem:[#allocation0]]
  $region53: #{double_conv_block.3} parent=0
    _
  %s8 = ssub.s32 1, %s6
  %s9 = scalar_select 0, %s8, %s6
  loop: start=0, step=1, limit=4
  $region2: #{double_conv_block.3} parent=0 // loop_pre_header
    _
  $region3: #{double_conv_block.3} parent=0 // loop_header
    %s11 = sphi 0, %s15
    %p12 = scmp.ge.s32.totalorder %s11, 4
    %s21 = sphi 0, %s23
    %s24 = sphi 0, %s21
    %s25 = sphi 0, %s24
    %s41 = sphi 0, %s25
    %s45 = sphi 0, %s45
    %s47 = sphi 0, %s45
    %s48 = sphi 0, %s47
    %s62 = sphi 0, %s48
    %s66 = sphi 0, %s66
    %s68 = sphi 0, %s66
    %s69 = sphi 0, %s68
    %s83 = sphi 0, %s69
    %s89 = sphi 0, %s91
    %s92 = sphi 0, %s89
    %s93 = sphi 0, %s92
    %s109 = sphi 0, %s93
    %s115 = sphi 0, %s117
    %s118 = sphi 0, %s115
    %s119 = sphi 0, %s118
    %s135 = sphi 0, %s119
  $region4: #{double_conv_block.3} parent=0 // loop_header_branch
    %14 = sbr.rel (%p12) target = $region8
  $region5: #{double_conv_block.3} parent=0 // loop_body
    %s16 = ssub.s32 %s11, 1
    %s17 = ssub.s32 %s11, 2
    %s18 = sadd.s32 %s11, 1
    %s19 = ssub.s32 %s11, %s18
    %p20 = scmp.eq.s32.totalorder %s19, 0
    %s22 = sadd.s32 %s21, 1
    %s23 = scalar_select %p20, %s21, %s22
    %p26 = pneg %p20
    %p27 = scmp.eq.s32.totalorder %s11, 1
    %p28 = por %p26, %p27
    %p29 = scmp.ne.s32.totalorder %s21, %s24
    %p30 = scmp.eq.s32.totalorder %s11, 0
    %p31 = por %p29, %p30
    %p32 = scmp.ne.s32.totalorder %s21, %s24
    %p33 = scmp.eq.s32.totalorder %s16, 1
    %p34 = por %p32, %p33
    %p35 = scmp.ne.s32.totalorder %s24, %s25
    %p36 = scmp.eq.s32.totalorder %s16, 0
    %p37 = por %p35, %p36
    %p38 = scmp.ne.s32.totalorder %s24, %s25
    %p39 = scmp.eq.s32.totalorder %s17, 1
    %p40 = por %p38, %p39
    %p42 = scmp.ne.s32.totalorder %s25, %s41
    %p43 = scmp.eq.s32.totalorder %s17, 0
    %p44 = por %p42, %p43
    %s46 = sadd.s32 %s45, 1
    %p49 = scmp.eq.s32.totalorder %s11, 1
    %p50 = scmp.ne.s32.totalorder %s45, %s47
    %p51 = scmp.eq.s32.totalorder %s11, 0
    %p52 = por %p50, %p51
    %p53 = scmp.ne.s32.totalorder %s45, %s47
    %p54 = scmp.eq.s32.totalorder %s16, 1
    %p55 = por %p53, %p54
    %p56 = scmp.ne.s32.totalorder %s47, %s48
    %p57 = scmp.eq.s32.totalorder %s16, 0
    %p58 = por %p56, %p57
    %p59 = scmp.ne.s32.totalorder %s47, %s48
    %p60 = scmp.eq.s32.totalorder %s17, 1
    %p61 = por %p59, %p60
    %p63 = scmp.ne.s32.totalorder %s48, %s62
    %p64 = scmp.eq.s32.totalorder %s17, 0
    %p65 = por %p63, %p64
    %s67 = sadd.s32 %s66, 1
    %p70 = scmp.eq.s32.totalorder %s11, 1
    %p71 = scmp.ne.s32.totalorder %s66, %s68
    %p72 = scmp.eq.s32.totalorder %s11, 0
    %p73 = por %p71, %p72
    %p74 = scmp.ne.s32.totalorder %s66, %s68
    %p75 = scmp.eq.s32.totalorder %s16, 1
    %p76 = por %p74, %p75
    %p77 = scmp.ne.s32.totalorder %s68, %s69
    %p78 = scmp.eq.s32.totalorder %s16, 0
    %p79 = por %p77, %p78
    %p80 = scmp.ne.s32.totalorder %s68, %s69
    %p81 = scmp.eq.s32.totalorder %s17, 1
    %p82 = por %p80, %p81
    %p84 = scmp.ne.s32.totalorder %s69, %s83
    %p85 = scmp.eq.s32.totalorder %s17, 0
    %p86 = por %p84, %p85
    %s87 = ssub.s32 %s11, %s18
    %p88 = scmp.eq.s32.totalorder %s87, 0
    %s90 = sadd.s32 %s89, 1
    %s91 = scalar_select %p88, %s89, %s90
    %p94 = pneg %p88
    %p95 = scmp.eq.s32.totalorder %s11, 1
    %p96 = por %p94, %p95
    %p97 = scmp.ne.s32.totalorder %s89, %s92
    %p98 = scmp.eq.s32.totalorder %s11, 0
    %p99 = por %p97, %p98
    %p100 = scmp.ne.s32.totalorder %s89, %s92
    %p101 = scmp.eq.s32.totalorder %s16, 1
    %p102 = por %p100, %p101
    %p103 = scmp.ne.s32.totalorder %s92, %s93
    %p104 = scmp.eq.s32.totalorder %s16, 0
    %p105 = por %p103, %p104
    %p106 = scmp.ne.s32.totalorder %s92, %s93
    %p107 = scmp.eq.s32.totalorder %s17, 1
    %p108 = por %p106, %p107
    %p110 = scmp.ne.s32.totalorder %s93, %s109
    %p111 = scmp.eq.s32.totalorder %s17, 0
    %p112 = por %p110, %p111
    %s113 = ssub.s32 %s11, %s18
    %p114 = scmp.eq.s32.totalorder %s113, 0
    %s116 = sadd.s32 %s115, 1
    %s117 = scalar_select %p114, %s115, %s116
    %p120 = pneg %p114
    %p121 = scmp.eq.s32.totalorder %s11, 1
    %p122 = por %p120, %p121
    %p123 = scmp.ne.s32.totalorder %s115, %s118
    %p124 = scmp.eq.s32.totalorder %s11, 0
    %p125 = por %p123, %p124
    %p126 = scmp.ne.s32.totalorder %s115, %s118
    %p127 = scmp.eq.s32.totalorder %s16, 1
    %p128 = por %p126, %p127
    %p129 = scmp.ne.s32.totalorder %s118, %s119
    %p130 = scmp.eq.s32.totalorder %s16, 0
    %p131 = por %p129, %p130
    %p132 = scmp.ne.s32.totalorder %s118, %s119
    %p133 = scmp.eq.s32.totalorder %s17, 1
    %p134 = por %p132, %p133
    %p136 = scmp.ne.s32.totalorder %s119, %s135
    %p137 = scmp.eq.s32.totalorder %s17, 0
    %p138 = por %p136, %p137
    %p139 = scmp.le.s32.totalorder 1, %s11
    %p140 = scmp.lt.s32.totalorder %s11, 3
    %p141 = pnand %p139, %p140
    %p142 = pneg %p141
    // Predicated region
    $region9: #{double_conv_block.3} parent=5 // pred_check
      _
    $region10: #{double_conv_block.3} parent=5 // pred_check_branch
      %144 = sbr.rel (%p141) target = $region12
    $region11: #{double_conv_block.3} parent=5 // pred_region
      %s145 = ssub.s32 %s11, 1
      // Predicated region
      $region13: #{double_conv_block.3} parent=11 // pred_check
        %p146 = pneg %p58
      $region14: #{double_conv_block.3} parent=11 // pred_check_branch
        %148 = sbr.rel (%p146) target = $region16
      $region15: #{double_conv_block.3} parent=11 // pred_region
        _
      $region16: #{double_conv_block.3} parent=11 // pred_fallthru
        _
      // Predicated region
      $region17: #{double_conv_block.3} parent=11 // pred_check
        %p149 = pneg %p79
      $region18: #{double_conv_block.3} parent=11 // pred_check_branch
        %151 = sbr.rel (%p149) target = $region20
      $region19: #{double_conv_block.3} parent=11 // pred_region
        _
      $region20: #{double_conv_block.3} parent=11 // pred_fallthru
        _
    $region12: #{double_conv_block.3} parent=5 // pred_fallthru
      _
    %p152 = scmp.lt.s32.totalorder %s11, 2
    // Predicated region
    $region21: #{double_conv_block.3} parent=5 // pred_check
      %p153 = pneg %p152
    $region22: #{double_conv_block.3} parent=5 // pred_check_branch
      %155 = sbr.rel (%p153) target = $region24
    $region23: #{double_conv_block.3} parent=5 // pred_region
      // Predicated region
      $region25: #{double_conv_block.3} parent=23 // pred_check
        %p156 = pneg %p31
      $region26: #{double_conv_block.3} parent=23 // pred_check_branch
        %158 = sbr.rel (%p156) target = $region28
      $region27: #{double_conv_block.3} parent=23 // pred_region
        %p159 = scmp.lt.s32.totalorder %s11, 1
        %s160 = scalar_select %p159, %s11, 1
        %s161 = smul.addr %s160, 32
        %s162 = smul.addr %s161, 4
        %s163 = scalar_lea.vmem %s0, %s162
      $region28: #{double_conv_block.3} parent=23 // pred_fallthru
        _
    $region24: #{double_conv_block.3} parent=5 // pred_fallthru
      _
    %p164 = scmp.le.s32.totalorder 1, %s11
    %p165 = scmp.lt.s32.totalorder %s11, 3
    %p166 = pnand %p164, %p165
    %p167 = pneg %p166
    // Predicated region
    $region29: #{double_conv_block.3} parent=5 // pred_check
      _
    $region30: #{double_conv_block.3} parent=5 // pred_check_branch
      %169 = sbr.rel (%p166) target = $region32
    $region31: #{double_conv_block.3} parent=5 // pred_region
      %s170 = ssub.s32 %s11, 1
      %p171 = scmp.lt.s32.totalorder %s16, 1
      %s172 = scalar_select %p171, %s16, 1
      %s173 = smul.addr %s172, 32
      %s174 = smul.addr %s173, 4
      %s175 = scalar_lea.vmem %s0, %s174
      %p176 = pneg %p37
      %p177 = pneg %p34
      %p178 = pneg %p58
      %p179 = pneg %p55
      %p180 = pneg %p79
      %p181 = pneg %p76
      %p182 = pneg %p105
      %p183 = pneg %p102
      %p184 = scmp.lt.s32.totalorder %s16, 1
      %s185 = scalar_select %p184, %s16, 1
      %s186 = smul.addr %s185, 32
      %s187 = smul.addr %s186, 8
      %s188 = scalar_lea.vmem %s3, %s187
      %p189 = pneg %p131
      %p190 = pneg %p128
      %p191 = scmp.lt.s32.totalorder %s16, 1
      %s192 = scalar_select %p191, %s16, 1
      %s193 = smul.addr %s192, 2
      %s194 = scalar_lea.vmem %s4, %s193
      %p195 = scmp.lt.s32.totalorder %s16, 1
      %s196 = scalar_select %p195, %s16, 1
      %s197 = smul.addr %s196, 32
      %s198 = smul.addr %s197, 4
      %s199 = scalar_lea.vmem %s0, %s198
      %p200 = scmp.lt.s32.totalorder %s16, 1
      %s201 = scalar_select %p200, %s16, 1
      %s202 = smul.addr %s201, 32
      %s203 = smul.addr %s202, 8
      %s204 = scalar_lea.vmem %s3, %s203
      %p205 = scmp.lt.s32.totalorder %s16, 1
      %s206 = scalar_select %p205, %s16, 1
      %s207 = smul.addr %s206, 2
      %s208 = scalar_lea.vmem %s4, %s207
      %v210 = vld [vmem:[%s199] sm:$0xf]
      %v211 = vld [vmem:[%s199 + $0x4] sm:$0xf]
      %v212 = vld [vmem:[%s199 + $0x8] sm:$0xf]
      %v213 = vld [vmem:[%s199 + $0xc] sm:$0xf]
      %v214 = vld [vmem:[%s199 + $0x10] sm:$0xf]
      %v215 = vld [vmem:[%s199 + $0x14] sm:$0xf]
      %v216 = vld [vmem:[%s199 + $0x18] sm:$0xf]
      %v217 = vld [vmem:[%s199 + $0x1c] sm:$0xf]
      %v218 = vld [vmem:[%s199 + $0x20] sm:$0xf]
      %v219 = vld [vmem:[%s199 + $0x24] sm:$0xf]
      %v220 = vld [vmem:[%s199 + $0x28] sm:$0xf]
      %v221 = vld [vmem:[%s199 + $0x2c] sm:$0xf]
      %v222 = vld [vmem:[%s199 + $0x30] sm:$0xf]
      %v223 = vld [vmem:[%s199 + $0x34] sm:$0xf]
      %v224 = vld [vmem:[%s199 + $0x38] sm:$0xf]
      %v225 = vld [vmem:[%s199 + $0x3c] sm:$0xf]
      %v226 = vld [vmem:[%s199 + $0x40] sm:$0xf]
      %v227 = vld [vmem:[%s199 + $0x44] sm:$0xf]
      %v228 = vld [vmem:[%s199 + $0x48] sm:$0xf]
      %v229 = vld [vmem:[%s199 + $0x4c] sm:$0xf]
      %v230 = vld [vmem:[%s199 + $0x50] sm:$0xf]
      %v231 = vld [vmem:[%s199 + $0x54] sm:$0xf]
      %v232 = vld [vmem:[%s199 + $0x58] sm:$0xf]
      %v233 = vld [vmem:[%s199 + $0x5c] sm:$0xf]
      %v234 = vld [vmem:[%s199 + $0x60] sm:$0xf]
      %v235 = vld [vmem:[%s199 + $0x64] sm:$0xf]
      %v236 = vld [vmem:[%s199 + $0x68] sm:$0xf]
      %v237 = vld [vmem:[%s199 + $0x6c] sm:$0xf]
      %v238 = vld [vmem:[%s199 + $0x70] sm:$0xf]
      %v239 = vld [vmem:[%s199 + $0x74] sm:$0xf]
      %v240 = vld [vmem:[%s199 + $0x78] sm:$0xf]
      %v241 = vld [vmem:[%s199 + $0x7c] sm:$0xf]
      %242 = vst [vmem:[#allocation2] sm:$0xf] 0
      %243 = vst [vmem:[#allocation2 + $0x4] sm:$0xf] 0
      %244 = vst [vmem:[#allocation2 + $0x8] sm:$0x1] 0
      %s245 = scalar_lea.vmem [#allocation2], 204
      %246 = vst [vmem:[%s245] sm:$0xf] 0
      %247 = vst [vmem:[%s245 + $0x4] sm:$0xf] 0
      %248 = vst [vmem:[%s245 + $0x8] sm:$0x1] 0
      %s249 = scalar_lea.vmem [#allocation2], 12
      %vm250 = vcmask 1040384
      %vm251 = vsmask.f32 256
      %vm252 = vmand %vm250, %vm251
      %v253 = vld [vmem:[%s249] sm:$0x1]
      %v254 = vsel %vm252, 0, %v253
      %255 = vst [vmem:[%s249] sm:$0x1] %v254
      %v256 = vld [vmem:[%s249 + $0xc] sm:$0x1]
      %v257 = vsel %vm252, 0, %v256
      %258 = vst [vmem:[%s249 + $0xc] sm:$0x1] %v257
      %v259 = vld [vmem:[%s249 + $0x18] sm:$0x1]
      %v260 = vsel %vm252, 0, %v259
      %261 = vst [vmem:[%s249 + $0x18] sm:$0x1] %v260
      %v262 = vld [vmem:[%s249 + $0x24] sm:$0x1]
      %v263 = vsel %vm252, 0, %v262
      %264 = vst [vmem:[%s249 + $0x24] sm:$0x1] %v263
      %v265 = vld [vmem:[%s249 + $0x30] sm:$0x1]
      %v266 = vsel %vm252, 0, %v265
      %267 = vst [vmem:[%s249 + $0x30] sm:$0x1] %v266
      %v268 = vld [vmem:[%s249 + $0x3c] sm:$0x1]
      %v269 = vsel %vm252, 0, %v268
      %270 = vst [vmem:[%s249 + $0x3c] sm:$0x1] %v269
      %v271 = vld [vmem:[%s249 + $0x48] sm:$0x1]
      %v272 = vsel %vm252, 0, %v271
      %273 = vst [vmem:[%s249 + $0x48] sm:$0x1] %v272
      %v274 = vld [vmem:[%s249 + $0x54] sm:$0x1]
      %v275 = vsel %vm252, 0, %v274
      %276 = vst [vmem:[%s249 + $0x54] sm:$0x1] %v275
      %v277 = vld [vmem:[%s249 + $0x60] sm:$0x1]
      %v278 = vsel %vm252, 0, %v277
      %279 = vst [vmem:[%s249 + $0x60] sm:$0x1] %v278
      %v280 = vld [vmem:[%s249 + $0x6c] sm:$0x1]
      %v281 = vsel %vm252, 0, %v280
      %282 = vst [vmem:[%s249 + $0x6c] sm:$0x1] %v281
      %v283 = vld [vmem:[%s249 + $0x78] sm:$0x1]
      %v284 = vsel %vm252, 0, %v283
      %285 = vst [vmem:[%s249 + $0x78] sm:$0x1] %v284
      %v286 = vld [vmem:[%s249 + $0x84] sm:$0x1]
      %v287 = vsel %vm252, 0, %v286
      %288 = vst [vmem:[%s249 + $0x84] sm:$0x1] %v287
      %v289 = vld [vmem:[%s249 + $0x90] sm:$0x1]
      %v290 = vsel %vm252, 0, %v289
      %291 = vst [vmem:[%s249 + $0x90] sm:$0x1] %v290
      %v292 = vld [vmem:[%s249 + $0x9c] sm:$0x1]
      %v293 = vsel %vm252, 0, %v292
      %294 = vst [vmem:[%s249 + $0x9c] sm:$0x1] %v293
      %v295 = vld [vmem:[%s249 + $0xa8] sm:$0x1]
      %v296 = vsel %vm252, 0, %v295
      %297 = vst [vmem:[%s249 + $0xa8] sm:$0x1] %v296
      %v298 = vld [vmem:[%s249 + $0xb4] sm:$0x1]
      %v299 = vsel %vm252, 0, %v298
      %300 = vst [vmem:[%s249 + $0xb4] sm:$0x1] %v299
      %vm301 = vsmask.f32 7938
      %vm302 = vmand %vm250, %vm301
      %v303 = vld [vmem:[%s249 + $0x8] sm:$0x1]
      %v304 = vsel %vm302, 0, %v303
      %305 = vst [vmem:[%s249 + $0x8] sm:$0x1] %v304
      %v306 = vld [vmem:[%s249 + $0x14] sm:$0x1]
      %v307 = vsel %vm302, 0, %v306
      %308 = vst [vmem:[%s249 + $0x14] sm:$0x1] %v307
      %v309 = vld [vmem:[%s249 + $0x20] sm:$0x1]
      %v310 = vsel %vm302, 0, %v309
      %311 = vst [vmem:[%s249 + $0x20] sm:$0x1] %v310
      %v312 = vld [vmem:[%s249 + $0x2c] sm:$0x1]
      %v313 = vsel %vm302, 0, %v312
      %314 = vst [vmem:[%s249 + $0x2c] sm:$0x1] %v313
      %v315 = vld [vmem:[%s249 + $0x38] sm:$0x1]
      %v316 = vsel %vm302, 0, %v315
      %317 = vst [vmem:[%s249 + $0x38] sm:$0x1] %v316
      %v318 = vld [vmem:[%s249 + $0x44] sm:$0x1]
      %v319 = vsel %vm302, 0, %v318
      %320 = vst [vmem:[%s249 + $0x44] sm:$0x1] %v319
      %v321 = vld [vmem:[%s249 + $0x50] sm:$0x1]
      %v322 = vsel %vm302, 0, %v321
      %323 = vst [vmem:[%s249 + $0x50] sm:$0x1] %v322
      %v324 = vld [vmem:[%s249 + $0x5c] sm:$0x1]
      %v325 = vsel %vm302, 0, %v324
      %326 = vst [vmem:[%s249 + $0x5c] sm:$0x1] %v325
      %v327 = vld [vmem:[%s249 + $0x68] sm:$0x1]
      %v328 = vsel %vm302, 0, %v327
      %329 = vst [vmem:[%s249 + $0x68] sm:$0x1] %v328
      %v330 = vld [vmem:[%s249 + $0x74] sm:$0x1]
      %v331 = vsel %vm302, 0, %v330
      %332 = vst [vmem:[%s249 + $0x74] sm:$0x1] %v331
      %v333 = vld [vmem:[%s249 + $0x80] sm:$0x1]
      %v334 = vsel %vm302, 0, %v333
      %335 = vst [vmem:[%s249 + $0x80] sm:$0x1] %v334
      %v336 = vld [vmem:[%s249 + $0x8c] sm:$0x1]
      %v337 = vsel %vm302, 0, %v336
      %338 = vst [vmem:[%s249 + $0x8c] sm:$0x1] %v337
      %v339 = vld [vmem:[%s249 + $0x98] sm:$0x1]
      %v340 = vsel %vm302, 0, %v339
      %341 = vst [vmem:[%s249 + $0x98] sm:$0x1] %v340
      %v342 = vld [vmem:[%s249 + $0xa4] sm:$0x1]
      %v343 = vsel %vm302, 0, %v342
      %344 = vst [vmem:[%s249 + $0xa4] sm:$0x1] %v343
      %v345 = vld [vmem:[%s249 + $0xb0] sm:$0x1]
      %v346 = vsel %vm302, 0, %v345
      %347 = vst [vmem:[%s249 + $0xb0] sm:$0x1] %v346
      %v348 = vld [vmem:[%s249 + $0xbc] sm:$0x1]
      %v349 = vsel %vm302, 0, %v348
      %350 = vst [vmem:[%s249 + $0xbc] sm:$0x1] %v349
      %vm351 = vsmask.f32 4368
      %vm352 = vmor %vm251, %vm351
      %v354 = vshrl.u32 %v210, 16
      %v356 = vrot.slane %v354, 7
      %v357 = vshll.u32 %v210, 16
      %v359 = vor.u32 %v356, %v357
      %v360 = vrot.slane %v356, 4
      %v362 = vshrl.u32 %v211, 16
      %v364 = vrot.slane %v362, 7
      %v365 = vshll.u32 %v211, 16
      %v367 = vor.u32 %v364, %v365
      %v368 = vsel %vm352, %v360, %v367
      %v369 = vrot.slane %v364, 4
      %v371 = vshrl.u32 %v212, 16
      %v373 = vrot.slane %v371, 7
      %v374 = vshll.u32 %v212, 16
      %v376 = vor.u32 %v373, %v374
      %v377 = vrot.slane %v373, 4
      %v379 = vshrl.u32 %v213, 16
      %v381 = vrot.slane %v379, 7
      %v382 = vshll.u32 %v213, 16
      %v384 = vor.u32 %v381, %v382
      %v385 = vsel %vm352, %v377, %v384
      %v386 = vrot.slane %v381, 4
      %v388 = vshrl.u32 %v214, 16
      %v390 = vrot.slane %v388, 7
      %v391 = vshll.u32 %v214, 16
      %v393 = vor.u32 %v390, %v391
      %v394 = vrot.slane %v390, 4
      %v396 = vshrl.u32 %v215, 16
      %v398 = vrot.slane %v396, 7
      %v399 = vshll.u32 %v215, 16
      %v401 = vor.u32 %v398, %v399
      %v402 = vsel %vm352, %v394, %v401
      %v403 = vrot.slane %v398, 4
      %v405 = vshrl.u32 %v216, 16
      %v407 = vrot.slane %v405, 7
      %v408 = vshll.u32 %v216, 16
      %v410 = vor.u32 %v407, %v408
      %v411 = vrot.slane %v407, 4
      %v413 = vshrl.u32 %v217, 16
      %v415 = vrot.slane %v413, 7
      %v416 = vshll.u32 %v217, 16
      %v418 = vor.u32 %v415, %v416
      %v419 = vsel %vm352, %v411, %v418
      %v420 = vrot.slane %v415, 4
      %v422 = vshrl.u32 %v218, 16
      %v424 = vrot.slane %v422, 7
      %v425 = vshll.u32 %v218, 16
      %v427 = vor.u32 %v424, %v425
      %v428 = vrot.slane %v424, 4
      %v430 = vshrl.u32 %v219, 16
      %v432 = vrot.slane %v430, 7
      %v433 = vshll.u32 %v219, 16
      %v435 = vor.u32 %v432, %v433
      %v436 = vsel %vm352, %v428, %v435
      %v437 = vrot.slane %v432, 4
      %v439 = vshrl.u32 %v220, 16
      %v441 = vrot.slane %v439, 7
      %v442 = vshll.u32 %v220, 16
      %v444 = vor.u32 %v441, %v442
      %v445 = vrot.slane %v441, 4
      %v447 = vshrl.u32 %v221, 16
      %v449 = vrot.slane %v447, 7
      %v450 = vshll.u32 %v221, 16
      %v452 = vor.u32 %v449, %v450
      %v453 = vsel %vm352, %v445, %v452
      %v454 = vrot.slane %v449, 4
      %v456 = vshrl.u32 %v222, 16
      %v458 = vrot.slane %v456, 7
      %v459 = vshll.u32 %v222, 16
      %v461 = vor.u32 %v458, %v459
      %v462 = vrot.slane %v458, 4
      %v464 = vshrl.u32 %v223, 16
      %v466 = vrot.slane %v464, 7
      %v467 = vshll.u32 %v223, 16
      %v469 = vor.u32 %v466, %v467
      %v470 = vsel %vm352, %v462, %v469
      %v471 = vrot.slane %v466, 4
      %v473 = vshrl.u32 %v224, 16
      %v475 = vrot.slane %v473, 7
      %v476 = vshll.u32 %v224, 16
      %v478 = vor.u32 %v475, %v476
      %v479 = vrot.slane %v475, 4
      %v481 = vshrl.u32 %v225, 16
      %v483 = vrot.slane %v481, 7
      %v484 = vshll.u32 %v225, 16
      %v486 = vor.u32 %v483, %v484
      %v487 = vsel %vm352, %v479, %v486
      %v488 = vrot.slane %v483, 4
      %v490 = vshrl.u32 %v226, 16
      %v492 = vrot.slane %v490, 7
      %v493 = vshll.u32 %v226, 16
      %v495 = vor.u32 %v492, %v493
      %v496 = vrot.slane %v492, 4
      %v498 = vshrl.u32 %v227, 16
      %v500 = vrot.slane %v498, 7
      %v501 = vshll.u32 %v227, 16
      %v503 = vor.u32 %v500, %v501
      %v504 = vsel %vm352, %v496, %v503
      %v505 = vrot.slane %v500, 4
      %v507 = vshrl.u32 %v228, 16
      %v509 = vrot.slane %v507, 7
      %v510 = vshll.u32 %v228, 16
      %v512 = vor.u32 %v509, %v510
      %v513 = vrot.slane %v509, 4
      %v515 = vshrl.u32 %v229, 16
      %v517 = vrot.slane %v515, 7
      %v518 = vshll.u32 %v229, 16
      %v520 = vor.u32 %v517, %v518
      %v521 = vsel %vm352, %v513, %v520
      %v522 = vrot.slane %v517, 4
      %v524 = vshrl.u32 %v230, 16
      %v526 = vrot.slane %v524, 7
      %v527 = vshll.u32 %v230, 16
      %v529 = vor.u32 %v526, %v527
      %v530 = vrot.slane %v526, 4
      %v532 = vshrl.u32 %v231, 16
      %v534 = vrot.slane %v532, 7
      %v535 = vshll.u32 %v231, 16
      %v537 = vor.u32 %v534, %v535
      %v538 = vsel %vm352, %v530, %v537
      %v539 = vrot.slane %v534, 4
      %v541 = vshrl.u32 %v232, 16
      %v543 = vrot.slane %v541, 7
      %v544 = vshll.u32 %v232, 16
      %v546 = vor.u32 %v543, %v544
      %v547 = vrot.slane %v543, 4
      %v549 = vshrl.u32 %v233, 16
      %v551 = vrot.slane %v549, 7
      %v552 = vshll.u32 %v233, 16
      %v554 = vor.u32 %v551, %v552
      %v555 = vsel %vm352, %v547, %v554
      %v556 = vrot.slane %v551, 4
      %v558 = vshrl.u32 %v234, 16
      %v560 = vrot.slane %v558, 7
      %v561 = vshll.u32 %v234, 16
      %v563 = vor.u32 %v560, %v561
      %v564 = vrot.slane %v560, 4
      %v566 = vshrl.u32 %v235, 16
      %v568 = vrot.slane %v566, 7
      %v569 = vshll.u32 %v235, 16
      %v571 = vor.u32 %v568, %v569
      %v572 = vsel %vm352, %v564, %v571
      %v573 = vrot.slane %v568, 4
      %v575 = vshrl.u32 %v236, 16
      %v577 = vrot.slane %v575, 7
      %v578 = vshll.u32 %v236, 16
      %v580 = vor.u32 %v577, %v578
      %v581 = vrot.slane %v577, 4
      %v583 = vshrl.u32 %v237, 16
      %v585 = vrot.slane %v583, 7
      %v586 = vshll.u32 %v237, 16
      %v588 = vor.u32 %v585, %v586
      %v589 = vsel %vm352, %v581, %v588
      %v590 = vrot.slane %v585, 4
      %v592 = vshrl.u32 %v238, 16
      %v594 = vrot.slane %v592, 7
      %v595 = vshll.u32 %v238, 16
      %v597 = vor.u32 %v594, %v595
      %v598 = vrot.slane %v594, 4
      %v600 = vshrl.u32 %v239, 16
      %v602 = vrot.slane %v600, 7
      %v603 = vshll.u32 %v239, 16
      %v605 = vor.u32 %v602, %v603
      %v606 = vsel %vm352, %v598, %v605
      %v607 = vrot.slane %v602, 4
      %v609 = vshrl.u32 %v240, 16
      %v611 = vrot.slane %v609, 7
      %v612 = vshll.u32 %v240, 16
      %v614 = vor.u32 %v611, %v612
      %v615 = vrot.slane %v611, 4
      %v617 = vshrl.u32 %v241, 16
      %v619 = vrot.slane %v617, 7
      %v620 = vshll.u32 %v241, 16
      %v622 = vor.u32 %v619, %v620
      %v623 = vsel %vm352, %v615, %v622
      %v624 = vrot.slane %v619, 4
      %vm673 = vcmask 1043456
      %vm674 = vmand %vm673, %vm301
      %v675 = vld [vmem:[%s249] sm:$0xf]
      %v676 = vsel %vm674, %v359, %v675
      %677 = vst [vmem:[%s249] sm:$0xf] %v676
      %678 = vst [vmem:[%s249 + $0x4] sm:$0xf] %v368
      %v679 = vld [vmem:[%s249 + $0x8] sm:$0x1]
      %v680 = vsel %vm252, %v369, %v679
      %681 = vst [vmem:[%s249 + $0x8] sm:$0x1] %v680
      %v682 = vld [vmem:[%s249 + $0xc] sm:$0xf]
      %v683 = vsel %vm674, %v376, %v682
      %684 = vst [vmem:[%s249 + $0xc] sm:$0xf] %v683
      %685 = vst [vmem:[%s249 + $0x10] sm:$0xf] %v385
      %v686 = vld [vmem:[%s249 + $0x14] sm:$0x1]
      %v687 = vsel %vm252, %v386, %v686
      %688 = vst [vmem:[%s249 + $0x14] sm:$0x1] %v687
      %v689 = vld [vmem:[%s249 + $0x18] sm:$0xf]
      %v690 = vsel %vm674, %v393, %v689
      %691 = vst [vmem:[%s249 + $0x18] sm:$0xf] %v690
      %692 = vst [vmem:[%s249 + $0x1c] sm:$0xf] %v402
      %v693 = vld [vmem:[%s249 + $0x20] sm:$0x1]
      %v694 = vsel %vm252, %v403, %v693
      %695 = vst [vmem:[%s249 + $0x20] sm:$0x1] %v694
      %v696 = vld [vmem:[%s249 + $0x24] sm:$0xf]
      %v697 = vsel %vm674, %v410, %v696
      %698 = vst [vmem:[%s249 + $0x24] sm:$0xf] %v697
      %699 = vst [vmem:[%s249 + $0x28] sm:$0xf] %v419
      %v700 = vld [vmem:[%s249 + $0x2c] sm:$0x1]
      %v701 = vsel %vm252, %v420, %v700
      %702 = vst [vmem:[%s249 + $0x2c] sm:$0x1] %v701
      %v703 = vld [vmem:[%s249 + $0x30] sm:$0xf]
      %v704 = vsel %vm674, %v427, %v703
      %705 = vst [vmem:[%s249 + $0x30] sm:$0xf] %v704
      %706 = vst [vmem:[%s249 + $0x34] sm:$0xf] %v436
      %v707 = vld [vmem:[%s249 + $0x38] sm:$0x1]
      %v708 = vsel %vm252, %v437, %v707
      %709 = vst [vmem:[%s249 + $0x38] sm:$0x1] %v708
      %v710 = vld [vmem:[%s249 + $0x3c] sm:$0xf]
      %v711 = vsel %vm674, %v444, %v710
      %712 = vst [vmem:[%s249 + $0x3c] sm:$0xf] %v711
      %713 = vst [vmem:[%s249 + $0x40] sm:$0xf] %v453
      %v714 = vld [vmem:[%s249 + $0x44] sm:$0x1]
      %v715 = vsel %vm252, %v454, %v714
      %716 = vst [vmem:[%s249 + $0x44] sm:$0x1] %v715
      %v717 = vld [vmem:[%s249 + $0x48] sm:$0xf]
      %v718 = vsel %vm674, %v461, %v717
      %719 = vst [vmem:[%s249 + $0x48] sm:$0xf] %v718
      %720 = vst [vmem:[%s249 + $0x4c] sm:$0xf] %v470
      %v721 = vld [vmem:[%s249 + $0x50] sm:$0x1]
      %v722 = vsel %vm252, %v471, %v721
      %723 = vst [vmem:[%s249 + $0x50] sm:$0x1] %v722
      %v724 = vld [vmem:[%s249 + $0x54] sm:$0xf]
      %v725 = vsel %vm674, %v478, %v724
      %726 = vst [vmem:[%s249 + $0x54] sm:$0xf] %v725
      %727 = vst [vmem:[%s249 + $0x58] sm:$0xf] %v487
      %v728 = vld [vmem:[%s249 + $0x5c] sm:$0x1]
      %v729 = vsel %vm252, %v488, %v728
      %730 = vst [vmem:[%s249 + $0x5c] sm:$0x1] %v729
      %v731 = vld [vmem:[%s249 + $0x60] sm:$0xf]
      %v732 = vsel %vm674, %v495, %v731
      %733 = vst [vmem:[%s249 + $0x60] sm:$0xf] %v732
      %734 = vst [vmem:[%s249 + $0x64] sm:$0xf] %v504
      %v735 = vld [vmem:[%s249 + $0x68] sm:$0x1]
      %v736 = vsel %vm252, %v505, %v735
      %737 = vst [vmem:[%s249 + $0x68] sm:$0x1] %v736
      %v738 = vld [vmem:[%s249 + $0x6c] sm:$0xf]
      %v739 = vsel %vm674, %v512, %v738
      %740 = vst [vmem:[%s249 + $0x6c] sm:$0xf] %v739
      %741 = vst [vmem:[%s249 + $0x70] sm:$0xf] %v521
      %v742 = vld [vmem:[%s249 + $0x74] sm:$0x1]
      %v743 = vsel %vm252, %v522, %v742
      %744 = vst [vmem:[%s249 + $0x74] sm:$0x1] %v743
      %v745 = vld [vmem:[%s249 + $0x78] sm:$0xf]
      %v746 = vsel %vm674, %v529, %v745
      %747 = vst [vmem:[%s249 + $0x78] sm:$0xf] %v746
      %748 = vst [vmem:[%s249 + $0x7c] sm:$0xf] %v538
      %v749 = vld [vmem:[%s249 + $0x80] sm:$0x1]
      %v750 = vsel %vm252, %v539, %v749
      %751 = vst [vmem:[%s249 + $0x80] sm:$0x1] %v750
      %v752 = vld [vmem:[%s249 + $0x84] sm:$0xf]
      %v753 = vsel %vm674, %v546, %v752
      %754 = vst [vmem:[%s249 + $0x84] sm:$0xf] %v753
      %755 = vst [vmem:[%s249 + $0x88] sm:$0xf] %v555
      %v756 = vld [vmem:[%s249 + $0x8c] sm:$0x1]
      %v757 = vsel %vm252, %v556, %v756
      %758 = vst [vmem:[%s249 + $0x8c] sm:$0x1] %v757
      %v759 = vld [vmem:[%s249 + $0x90] sm:$0xf]
      %v760 = vsel %vm674, %v563, %v759
      %761 = vst [vmem:[%s249 + $0x90] sm:$0xf] %v760
      %762 = vst [vmem:[%s249 + $0x94] sm:$0xf] %v572
      %v763 = vld [vmem:[%s249 + $0x98] sm:$0x1]
      %v764 = vsel %vm252, %v573, %v763
      %765 = vst [vmem:[%s249 + $0x98] sm:$0x1] %v764
      %v766 = vld [vmem:[%s249 + $0x9c] sm:$0xf]
      %v767 = vsel %vm674, %v580, %v766
      %768 = vst [vmem:[%s249 + $0x9c] sm:$0xf] %v767
      %769 = vst [vmem:[%s249 + $0xa0] sm:$0xf] %v589
      %v770 = vld [vmem:[%s249 + $0xa4] sm:$0x1]
      %v771 = vsel %vm252, %v590, %v770
      %772 = vst [vmem:[%s249 + $0xa4] sm:$0x1] %v771
      %v773 = vld [vmem:[%s249 + $0xa8] sm:$0xf]
      %v774 = vsel %vm674, %v597, %v773
      %775 = vst [vmem:[%s249 + $0xa8] sm:$0xf] %v774
      %776 = vst [vmem:[%s249 + $0xac] sm:$0xf] %v606
      %v777 = vld [vmem:[%s249 + $0xb0] sm:$0x1]
      %v778 = vsel %vm252, %v607, %v777
      %779 = vst [vmem:[%s249 + $0xb0] sm:$0x1] %v778
      %v780 = vld [vmem:[%s249 + $0xb4] sm:$0xf]
      %v781 = vsel %vm674, %v614, %v780
      %782 = vst [vmem:[%s249 + $0xb4] sm:$0xf] %v781
      %783 = vst [vmem:[%s249 + $0xb8] sm:$0xf] %v623
      %v784 = vld [vmem:[%s249 + $0xbc] sm:$0x1]
      %v785 = vsel %vm252, %v624, %v784
      %786 = vst [vmem:[%s249 + $0xbc] sm:$0x1] %v785
      %v787 = vld [vmem:[#allocation2] sm:$0xf]
      %v788 = vld [vmem:[#allocation2 + $0x4] sm:$0xf]
      %v789 = vld [vmem:[#allocation2 + $0xc] sm:$0xf]
      %v790 = vld [vmem:[#allocation2 + $0x10] sm:$0xf]
      %v791 = vld [vmem:[#allocation2 + $0x18] sm:$0xf]
      %v792 = vld [vmem:[#allocation2 + $0x1c] sm:$0xf]
      %v793 = vld [vmem:[#allocation2 + $0x24] sm:$0xf]
      %v794 = vld [vmem:[#allocation2 + $0x28] sm:$0xf]
      %v795 = vld [vmem:[#allocation2 + $0x30] sm:$0xf]
      %v796 = vld [vmem:[#allocation2 + $0x34] sm:$0xf]
      %v797 = vld [vmem:[#allocation2 + $0x3c] sm:$0xf]
      %v798 = vld [vmem:[#allocation2 + $0x40] sm:$0xf]
      %v799 = vld [vmem:[#allocation2 + $0x48] sm:$0xf]
      %v800 = vld [vmem:[#allocation2 + $0x4c] sm:$0xf]
      %v801 = vld [vmem:[#allocation2 + $0x54] sm:$0xf]
      %v802 = vld [vmem:[#allocation2 + $0x58] sm:$0xf]
      %v803 = vld [vmem:[#allocation2 + $0x60] sm:$0xf]
      %v804 = vld [vmem:[#allocation2 + $0x64] sm:$0xf]
      %v805 = vld [vmem:[#allocation2 + $0x6c] sm:$0xf]
      %v806 = vld [vmem:[#allocation2 + $0x70] sm:$0xf]
      %v807 = vld [vmem:[#allocation2 + $0x78] sm:$0xf]
      %v808 = vld [vmem:[#allocation2 + $0x7c] sm:$0xf]
      %v809 = vld [vmem:[#allocation2 + $0x84] sm:$0xf]
      %v810 = vld [vmem:[#allocation2 + $0x88] sm:$0xf]
      %v811 = vld [vmem:[#allocation2 + $0x90] sm:$0xf]
      %v812 = vld [vmem:[#allocation2 + $0x94] sm:$0xf]
      %v813 = vld [vmem:[#allocation2 + $0x9c] sm:$0xf]
      %v814 = vld [vmem:[#allocation2 + $0xa0] sm:$0xf]
      %v815 = vld [vmem:[#allocation2 + $0xa8] sm:$0xf]
      %v816 = vld [vmem:[#allocation2 + $0xac] sm:$0xf]
      %v817 = vld [vmem:[#allocation2 + $0xb4] sm:$0xf]
      %v818 = vld [vmem:[#allocation2 + $0xb8] sm:$0xf]
      %819 = vst [vmem:[#allocation3] sm:$0xf] %v787
      %820 = vst [vmem:[#allocation3 + $0x24] sm:$0xf] %v788
      %821 = vst [vmem:[#allocation3 + $0x48] sm:$0xf] %v789
      %822 = vst [vmem:[#allocation3 + $0x6c] sm:$0xf] %v790
      %823 = vst [vmem:[#allocation3 + $0x90] sm:$0xf] %v791
      %824 = vst [vmem:[#allocation3 + $0xb4] sm:$0xf] %v792
      %825 = vst [vmem:[#allocation3 + $0xd8] sm:$0xf] %v793
      %826 = vst [vmem:[#allocation3 + $0xfc] sm:$0xf] %v794
      %827 = vst [vmem:[#allocation3 + $0x120] sm:$0xf] %v795
      %828 = vst [vmem:[#allocation3 + $0x144] sm:$0xf] %v796
      %829 = vst [vmem:[#allocation3 + $0x168] sm:$0xf] %v797
      %830 = vst [vmem:[#allocation3 + $0x18c] sm:$0xf] %v798
      %831 = vst [vmem:[#allocation3 + $0x1b0] sm:$0xf] %v799
      %832 = vst [vmem:[#allocation3 + $0x1d4] sm:$0xf] %v800
      %833 = vst [vmem:[#allocation3 + $0x1f8] sm:$0xf] %v801
      %834 = vst [vmem:[#allocation3 + $0x21c] sm:$0xf] %v802
      %835 = vst [vmem:[#allocation3 + $0x240] sm:$0xf] %v803
      %836 = vst [vmem:[#allocation3 + $0x264] sm:$0xf] %v804
      %837 = vst [vmem:[#allocation3 + $0x288] sm:$0xf] %v805
      %838 = vst [vmem:[#allocation3 + $0x2ac] sm:$0xf] %v806
      %839 = vst [vmem:[#allocation3 + $0x2d0] sm:$0xf] %v807
      %840 = vst [vmem:[#allocation3 + $0x2f4] sm:$0xf] %v808
      %841 = vst [vmem:[#allocation3 + $0x318] sm:$0xf] %v809
      %842 = vst [vmem:[#allocation3 + $0x33c] sm:$0xf] %v810
      %843 = vst [vmem:[#allocation3 + $0x360] sm:$0xf] %v811
      %844 = vst [vmem:[#allocation3 + $0x384] sm:$0xf] %v812
      %845 = vst [vmem:[#allocation3 + $0x3a8] sm:$0xf] %v813
      %846 = vst [vmem:[#allocation3 + $0x3cc] sm:$0xf] %v814
      %847 = vst [vmem:[#allocation3 + $0x3f0] sm:$0xf] %v815
      %848 = vst [vmem:[#allocation3 + $0x414] sm:$0xf] %v816
      %849 = vst [vmem:[#allocation3 + $0x438] sm:$0xf] %v817
      %850 = vst [vmem:[#allocation3 + $0x45c] sm:$0xf] %v818
      %v851 = vld [vmem:[#allocation2] sm:$0xf]
      %v852 = vld [vmem:[#allocation2 + $0x4] sm:$0xf]
      %v853 = vld [vmem:[#allocation2 + $0x8] sm:$0x1]
      %v854 = vld [vmem:[#allocation2 + $0xc] sm:$0xf]
      %v855 = vld [vmem:[#allocation2 + $0x10] sm:$0xf]
      %v856 = vld [vmem:[#allocation2 + $0x14] sm:$0x1]
      %v857 = vld [vmem:[#allocation2 + $0x18] sm:$0xf]
      %v858 = vld [vmem:[#allocation2 + $0x1c] sm:$0xf]
      %v859 = vld [vmem:[#allocation2 + $0x20] sm:$0x1]
      %v860 = vld [vmem:[#allocation2 + $0x24] sm:$0xf]
      %v861 = vld [vmem:[#allocation2 + $0x28] sm:$0xf]
      %v862 = vld [vmem:[#allocation2 + $0x2c] sm:$0x1]
      %v863 = vld [vmem:[#allocation2 + $0x30] sm:$0xf]
      %v864 = vld [vmem:[#allocation2 + $0x34] sm:$0xf]
      %v865 = vld [vmem:[#allocation2 + $0x38] sm:$0x1]
      %v866 = vld [vmem:[#allocation2 + $0x3c] sm:$0xf]
      %v867 = vld [vmem:[#allocation2 + $0x40] sm:$0xf]
      %v868 = vld [vmem:[#allocation2 + $0x44] sm:$0x1]
      %v869 = vld [vmem:[#allocation2 + $0x48] sm:$0xf]
      %v870 = vld [vmem:[#allocation2 + $0x4c] sm:$0xf]
      %v871 = vld [vmem:[#allocation2 + $0x50] sm:$0x1]
      %v872 = vld [vmem:[#allocation2 + $0x54] sm:$0xf]
      %v873 = vld [vmem:[#allocation2 + $0x58] sm:$0xf]
      %v874 = vld [vmem:[#allocation2 + $0x5c] sm:$0x1]
      %v875 = vld [vmem:[#allocation2 + $0x60] sm:$0xf]
      %v876 = vld [vmem:[#allocation2 + $0x64] sm:$0xf]
      %v877 = vld [vmem:[#allocation2 + $0x68] sm:$0x1]
      %v878 = vld [vmem:[#allocation2 + $0x6c] sm:$0xf]
      %v879 = vld [vmem:[#allocation2 + $0x70] sm:$0xf]
      %v880 = vld [vmem:[#allocation2 + $0x74] sm:$0x1]
      %v881 = vld [vmem:[#allocation2 + $0x78] sm:$0xf]
      %v882 = vld [vmem:[#allocation2 + $0x7c] sm:$0xf]
      %v883 = vld [vmem:[#allocation2 + $0x80] sm:$0x1]
      %v884 = vld [vmem:[#allocation2 + $0x84] sm:$0xf]
      %v885 = vld [vmem:[#allocation2 + $0x88] sm:$0xf]
      %v886 = vld [vmem:[#allocation2 + $0x8c] sm:$0x1]
      %v887 = vld [vmem:[#allocation2 + $0x90] sm:$0xf]
      %v888 = vld [vmem:[#allocation2 + $0x94] sm:$0xf]
      %v889 = vld [vmem:[#allocation2 + $0x98] sm:$0x1]
      %v890 = vld [vmem:[#allocation2 + $0x9c] sm:$0xf]
      %v891 = vld [vmem:[#allocation2 + $0xa0] sm:$0xf]
      %v892 = vld [vmem:[#allocation2 + $0xa4] sm:$0x1]
      %v893 = vld [vmem:[#allocation2 + $0xa8] sm:$0xf]
      %v894 = vld [vmem:[#allocation2 + $0xac] sm:$0xf]
      %v895 = vld [vmem:[#allocation2 + $0xb0] sm:$0x1]
      %v896 = vld [vmem:[#allocation2 + $0xb4] sm:$0xf]
      %v897 = vld [vmem:[#allocation2 + $0xb8] sm:$0xf]
      %v898 = vld [vmem:[#allocation2 + $0xbc] sm:$0x1]
      %vm899 = vsmask.f32 3328
      %vm900 = vsmask.f32 7440
      %vm901 = vmor %vm899, %vm900
      %v903 = vshrl.u32 %v851, 16
      %v905 = vrot.slane %v903, 4
      %v906 = vshll.u32 %v851, 16
      %v908 = vrot.slane %v906, 5
      %v909 = vor.u32 %v905, %v908
      %v910 = vrot.slane %v909, 4
      %v912 = vshll.u32 %v852, 16
      %v914 = vrot.slane %v912, 5
      %v915 = vsel %vm901, %v910, %v914
      %v916 = vshrl.u32 %v852, 16
      %v918 = vrot.slane %v916, 4
      %v919 = vor.u32 %v918, %v914
      %v920 = vrot.slane %v919, 4
      %v922 = vshll.u32 %v853, 16
      %v924 = vrot.slane %v922, 5
      %v925 = vsel %vm901, %v920, %v924
      %v927 = vshrl.u32 %v854, 16
      %v929 = vrot.slane %v927, 4
      %v930 = vshll.u32 %v854, 16
      %v932 = vrot.slane %v930, 5
      %v933 = vor.u32 %v929, %v932
      %v934 = vrot.slane %v933, 4
      %v936 = vshll.u32 %v855, 16
      %v938 = vrot.slane %v936, 5
      %v939 = vsel %vm901, %v934, %v938
      %v940 = vshrl.u32 %v855, 16
      %v942 = vrot.slane %v940, 4
      %v943 = vor.u32 %v942, %v938
      %v944 = vrot.slane %v943, 4
      %v946 = vshll.u32 %v856, 16
      %v948 = vrot.slane %v946, 5
      %v949 = vsel %vm901, %v944, %v948
      %v951 = vshrl.u32 %v857, 16
      %v953 = vrot.slane %v951, 4
      %v954 = vshll.u32 %v857, 16
      %v956 = vrot.slane %v954, 5
      %v957 = vor.u32 %v953, %v956
      %v958 = vrot.slane %v957, 4
      %v960 = vshll.u32 %v858, 16
      %v962 = vrot.slane %v960, 5
      %v963 = vsel %vm901, %v958, %v962
      %v964 = vshrl.u32 %v858, 16
      %v966 = vrot.slane %v964, 4
      %v967 = vor.u32 %v966, %v962
      %v968 = vrot.slane %v967, 4
      %v970 = vshll.u32 %v859, 16
      %v972 = vrot.slane %v970, 5
      %v973 = vsel %vm901, %v968, %v972
      %v975 = vshrl.u32 %v860, 16
      %v977 = vrot.slane %v975, 4
      %v978 = vshll.u32 %v860, 16
      %v980 = vrot.slane %v978, 5
      %v981 = vor.u32 %v977, %v980
      %v982 = vrot.slane %v981, 4
      %v984 = vshll.u32 %v861, 16
      %v986 = vrot.slane %v984, 5
      %v987 = vsel %vm901, %v982, %v986
      %v988 = vshrl.u32 %v861, 16
      %v990 = vrot.slane %v988, 4
      %v991 = vor.u32 %v990, %v986
      %v992 = vrot.slane %v991, 4
      %v994 = vshll.u32 %v862, 16
      %v996 = vrot.slane %v994, 5
      %v997 = vsel %vm901, %v992, %v996
      %v999 = vshrl.u32 %v863, 16
      %v1001 = vrot.slane %v999, 4
      %v1002 = vshll.u32 %v863, 16
      %v1004 = vrot.slane %v1002, 5
      %v1005 = vor.u32 %v1001, %v1004
      %v1006 = vrot.slane %v1005, 4
      %v1008 = vshll.u32 %v864, 16
      %v1010 = vrot.slane %v1008, 5
      %v1011 = vsel %vm901, %v1006, %v1010
      %v1012 = vshrl.u32 %v864, 16
      %v1014 = vrot.slane %v1012, 4
      %v1015 = vor.u32 %v1014, %v1010
      %v1016 = vrot.slane %v1015, 4
      %v1018 = vshll.u32 %v865, 16
      %v1020 = vrot.slane %v1018, 5
      %v1021 = vsel %vm901, %v1016, %v1020
      %v1023 = vshrl.u32 %v866, 16
      %v1025 = vrot.slane %v1023, 4
      %v1026 = vshll.u32 %v866, 16
      %v1028 = vrot.slane %v1026, 5
      %v1029 = vor.u32 %v1025, %v1028
      %v1030 = vrot.slane %v1029, 4
      %v1032 = vshll.u32 %v867, 16
      %v1034 = vrot.slane %v1032, 5
      %v1035 = vsel %vm901, %v1030, %v1034
      %v1036 = vshrl.u32 %v867, 16
      %v1038 = vrot.slane %v1036, 4
      %v1039 = vor.u32 %v1038, %v1034
      %v1040 = vrot.slane %v1039, 4
      %v1042 = vshll.u32 %v868, 16
      %v1044 = vrot.slane %v1042, 5
      %v1045 = vsel %vm901, %v1040, %v1044
      %v1047 = vshrl.u32 %v869, 16
      %v1049 = vrot.slane %v1047, 4
      %v1050 = vshll.u32 %v869, 16
      %v1052 = vrot.slane %v1050, 5
      %v1053 = vor.u32 %v1049, %v1052
      %v1054 = vrot.slane %v1053, 4
      %v1056 = vshll.u32 %v870, 16
      %v1058 = vrot.slane %v1056, 5
      %v1059 = vsel %vm901, %v1054, %v1058
      %v1060 = vshrl.u32 %v870, 16
      %v1062 = vrot.slane %v1060, 4
      %v1063 = vor.u32 %v1062, %v1058
      %v1064 = vrot.slane %v1063, 4
      %v1066 = vshll.u32 %v871, 16
      %v1068 = vrot.slane %v1066, 5
      %v1069 = vsel %vm901, %v1064, %v1068
      %v1071 = vshrl.u32 %v872, 16
      %v1073 = vrot.slane %v1071, 4
      %v1074 = vshll.u32 %v872, 16
      %v1076 = vrot.slane %v1074, 5
      %v1077 = vor.u32 %v1073, %v1076
      %v1078 = vrot.slane %v1077, 4
      %v1080 = vshll.u32 %v873, 16
      %v1082 = vrot.slane %v1080, 5
      %v1083 = vsel %vm901, %v1078, %v1082
      %v1084 = vshrl.u32 %v873, 16
      %v1086 = vrot.slane %v1084, 4
      %v1087 = vor.u32 %v1086, %v1082
      %v1088 = vrot.slane %v1087, 4
      %v1090 = vshll.u32 %v874, 16
      %v1092 = vrot.slane %v1090, 5
      %v1093 = vsel %vm901, %v1088, %v1092
      %v1095 = vshrl.u32 %v875, 16
      %v1097 = vrot.slane %v1095, 4
      %v1098 = vshll.u32 %v875, 16
      %v1100 = vrot.slane %v1098, 5
      %v1101 = vor.u32 %v1097, %v1100
      %v1102 = vrot.slane %v1101, 4
      %v1104 = vshll.u32 %v876, 16
      %v1106 = vrot.slane %v1104, 5
      %v1107 = vsel %vm901, %v1102, %v1106
      %v1108 = vshrl.u32 %v876, 16
      %v1110 = vrot.slane %v1108, 4
      %v1111 = vor.u32 %v1110, %v1106
      %v1112 = vrot.slane %v1111, 4
      %v1114 = vshll.u32 %v877, 16
      %v1116 = vrot.slane %v1114, 5
      %v1117 = vsel %vm901, %v1112, %v1116
      %v1119 = vshrl.u32 %v878, 16
      %v1121 = vrot.slane %v1119, 4
      %v1122 = vshll.u32 %v878, 16
      %v1124 = vrot.slane %v1122, 5
      %v1125 = vor.u32 %v1121, %v1124
      %v1126 = vrot.slane %v1125, 4
      %v1128 = vshll.u32 %v879, 16
      %v1130 = vrot.slane %v1128, 5
      %v1131 = vsel %vm901, %v1126, %v1130
      %v1132 = vshrl.u32 %v879, 16
      %v1134 = vrot.slane %v1132, 4
      %v1135 = vor.u32 %v1134, %v1130
      %v1136 = vrot.slane %v1135, 4
      %v1138 = vshll.u32 %v880, 16
      %v1140 = vrot.slane %v1138, 5
      %v1141 = vsel %vm901, %v1136, %v1140
      %v1143 = vshrl.u32 %v881, 16
      %v1145 = vrot.slane %v1143, 4
      %v1146 = vshll.u32 %v881, 16
      %v1148 = vrot.slane %v1146, 5
      %v1149 = vor.u32 %v1145, %v1148
      %v1150 = vrot.slane %v1149, 4
      %v1152 = vshll.u32 %v882, 16
      %v1154 = vrot.slane %v1152, 5
      %v1155 = vsel %vm901, %v1150, %v1154
      %v1156 = vshrl.u32 %v882, 16
      %v1158 = vrot.slane %v1156, 4
      %v1159 = vor.u32 %v1158, %v1154
      %v1160 = vrot.slane %v1159, 4
      %v1162 = vshll.u32 %v883, 16
      %v1164 = vrot.slane %v1162, 5
      %v1165 = vsel %vm901, %v1160, %v1164
      %v1167 = vshrl.u32 %v884, 16
      %v1169 = vrot.slane %v1167, 4
      %v1170 = vshll.u32 %v884, 16
      %v1172 = vrot.slane %v1170, 5
      %v1173 = vor.u32 %v1169, %v1172
      %v1174 = vrot.slane %v1173, 4
      %v1176 = vshll.u32 %v885, 16
      %v1178 = vrot.slane %v1176, 5
      %v1179 = vsel %vm901, %v1174, %v1178
      %v1180 = vshrl.u32 %v885, 16
      %v1182 = vrot.slane %v1180, 4
      %v1183 = vor.u32 %v1182, %v1178
      %v1184 = vrot.slane %v1183, 4
      %v1186 = vshll.u32 %v886, 16
      %v1188 = vrot.slane %v1186, 5
      %v1189 = vsel %vm901, %v1184, %v1188
      %v1191 = vshrl.u32 %v887, 16
      %v1193 = vrot.slane %v1191, 4
      %v1194 = vshll.u32 %v887, 16
      %v1196 = vrot.slane %v1194, 5
      %v1197 = vor.u32 %v1193, %v1196
      %v1198 = vrot.slane %v1197, 4
      %v1200 = vshll.u32 %v888, 16
      %v1202 = vrot.slane %v1200, 5
      %v1203 = vsel %vm901, %v1198, %v1202
      %v1204 = vshrl.u32 %v888, 16
      %v1206 = vrot.slane %v1204, 4
      %v1207 = vor.u32 %v1206, %v1202
      %v1208 = vrot.slane %v1207, 4
      %v1210 = vshll.u32 %v889, 16
      %v1212 = vrot.slane %v1210, 5
      %v1213 = vsel %vm901, %v1208, %v1212
      %v1215 = vshrl.u32 %v890, 16
      %v1217 = vrot.slane %v1215, 4
      %v1218 = vshll.u32 %v890, 16
      %v1220 = vrot.slane %v1218, 5
      %v1221 = vor.u32 %v1217, %v1220
      %v1222 = vrot.slane %v1221, 4
      %v1224 = vshll.u32 %v891, 16
      %v1226 = vrot.slane %v1224, 5
      %v1227 = vsel %vm901, %v1222, %v1226
      %v1228 = vshrl.u32 %v891, 16
      %v1230 = vrot.slane %v1228, 4
      %v1231 = vor.u32 %v1230, %v1226
      %v1232 = vrot.slane %v1231, 4
      %v1234 = vshll.u32 %v892, 16
      %v1236 = vrot.slane %v1234, 5
      %v1237 = vsel %vm901, %v1232, %v1236
      %v1239 = vshrl.u32 %v893, 16
      %v1241 = vrot.slane %v1239, 4
      %v1242 = vshll.u32 %v893, 16
      %v1244 = vrot.slane %v1242, 5
      %v1245 = vor.u32 %v1241, %v1244
      %v1246 = vrot.slane %v1245, 4
      %v1248 = vshll.u32 %v894, 16
      %v1250 = vrot.slane %v1248, 5
      %v1251 = vsel %vm901, %v1246, %v1250
      %v1252 = vshrl.u32 %v894, 16
      %v1254 = vrot.slane %v1252, 4
      %v1255 = vor.u32 %v1254, %v1250
      %v1256 = vrot.slane %v1255, 4
      %v1258 = vshll.u32 %v895, 16
      %v1260 = vrot.slane %v1258, 5
      %v1261 = vsel %vm901, %v1256, %v1260
      %v1263 = vshrl.u32 %v896, 16
      %v1265 = vrot.slane %v1263, 4
      %v1266 = vshll.u32 %v896, 16
      %v1268 = vrot.slane %v1266, 5
      %v1269 = vor.u32 %v1265, %v1268
      %v1270 = vrot.slane %v1269, 4
      %v1272 = vshll.u32 %v897, 16
      %v1274 = vrot.slane %v1272, 5
      %v1275 = vsel %vm901, %v1270, %v1274
      %v1276 = vshrl.u32 %v897, 16
      %v1278 = vrot.slane %v1276, 4
      %v1279 = vor.u32 %v1278, %v1274
      %v1280 = vrot.slane %v1279, 4
      %v1282 = vshll.u32 %v898, 16
      %v1284 = vrot.slane %v1282, 5
      %v1285 = vsel %vm901, %v1280, %v1284
      %1318 = vst [vmem:[#allocation3 + $0x4] sm:$0xf] %v915
      %1319 = vst [vmem:[#allocation3 + $0x28] sm:$0xf] %v925
      %1320 = vst [vmem:[#allocation3 + $0x4c] sm:$0xf] %v939
      %1321 = vst [vmem:[#allocation3 + $0x70] sm:$0xf] %v949
      %1322 = vst [vmem:[#allocation3 + $0x94] sm:$0xf] %v963
      %1323 = vst [vmem:[#allocation3 + $0xb8] sm:$0xf] %v973
      %1324 = vst [vmem:[#allocation3 + $0xdc] sm:$0xf] %v987
      %1325 = vst [vmem:[#allocation3 + $0x100] sm:$0xf] %v997
      %1326 = vst [vmem:[#allocation3 + $0x124] sm:$0xf] %v1011
      %1327 = vst [vmem:[#allocation3 + $0x148] sm:$0xf] %v1021
      %1328 = vst [vmem:[#allocation3 + $0x16c] sm:$0xf] %v1035
      %1329 = vst [vmem:[#allocation3 + $0x190] sm:$0xf] %v1045
      %1330 = vst [vmem:[#allocation3 + $0x1b4] sm:$0xf] %v1059
      %1331 = vst [vmem:[#allocation3 + $0x1d8] sm:$0xf] %v1069
      %1332 = vst [vmem:[#allocation3 + $0x1fc] sm:$0xf] %v1083
      %1333 = vst [vmem:[#allocation3 + $0x220] sm:$0xf] %v1093
      %1334 = vst [vmem:[#allocation3 + $0x244] sm:$0xf] %v1107
      %1335 = vst [vmem:[#allocation3 + $0x268] sm:$0xf] %v1117
      %1336 = vst [vmem:[#allocation3 + $0x28c] sm:$0xf] %v1131
      %1337 = vst [vmem:[#allocation3 + $0x2b0] sm:$0xf] %v1141
      %1338 = vst [vmem:[#allocation3 + $0x2d4] sm:$0xf] %v1155
      %1339 = vst [vmem:[#allocation3 + $0x2f8] sm:$0xf] %v1165
      %1340 = vst [vmem:[#allocation3 + $0x31c] sm:$0xf] %v1179
      %1341 = vst [vmem:[#allocation3 + $0x340] sm:$0xf] %v1189
      %1342 = vst [vmem:[#allocation3 + $0x364] sm:$0xf] %v1203
      %1343 = vst [vmem:[#allocation3 + $0x388] sm:$0xf] %v1213
      %1344 = vst [vmem:[#allocation3 + $0x3ac] sm:$0xf] %v1227
      %1345 = vst [vmem:[#allocation3 + $0x3d0] sm:$0xf] %v1237
      %1346 = vst [vmem:[#allocation3 + $0x3f4] sm:$0xf] %v1251
      %1347 = vst [vmem:[#allocation3 + $0x418] sm:$0xf] %v1261
      %1348 = vst [vmem:[#allocation3 + $0x43c] sm:$0xf] %v1275
      %1349 = vst [vmem:[#allocation3 + $0x460] sm:$0xf] %v1285
      %v1350 = vld [vmem:[#allocation2] sm:$0xe]
      %v1351 = vld [vmem:[#allocation2 + $0x4] sm:$0xf]
      %v1352 = vld [vmem:[#allocation2 + $0x8] sm:$0x1]
      %v1353 = vld [vmem:[#allocation2 + $0xc] sm:$0xe]
      %v1354 = vld [vmem:[#allocation2 + $0x10] sm:$0xf]
      %v1355 = vld [vmem:[#allocation2 + $0x14] sm:$0x1]
      %v1356 = vld [vmem:[#allocation2 + $0x18] sm:$0xe]
      %v1357 = vld [vmem:[#allocation2 + $0x1c] sm:$0xf]
      %v1358 = vld [vmem:[#allocation2 + $0x20] sm:$0x1]
      %v1359 = vld [vmem:[#allocation2 + $0x24] sm:$0xe]
      %v1360 = vld [vmem:[#allocation2 + $0x28] sm:$0xf]
      %v1361 = vld [vmem:[#allocation2 + $0x2c] sm:$0x1]
      %v1362 = vld [vmem:[#allocation2 + $0x30] sm:$0xe]
      %v1363 = vld [vmem:[#allocation2 + $0x34] sm:$0xf]
      %v1364 = vld [vmem:[#allocation2 + $0x38] sm:$0x1]
      %v1365 = vld [vmem:[#allocation2 + $0x3c] sm:$0xe]
      %v1366 = vld [vmem:[#allocation2 + $0x40] sm:$0xf]
      %v1367 = vld [vmem:[#allocation2 + $0x44] sm:$0x1]
      %v1368 = vld [vmem:[#allocation2 + $0x48] sm:$0xe]
      %v1369 = vld [vmem:[#allocation2 + $0x4c] sm:$0xf]
      %v1370 = vld [vmem:[#allocation2 + $0x50] sm:$0x1]
      %v1371 = vld [vmem:[#allocation2 + $0x54] sm:$0xe]
      %v1372 = vld [vmem:[#allocation2 + $0x58] sm:$0xf]
      %v1373 = vld [vmem:[#allocation2 + $0x5c] sm:$0x1]
      %v1374 = vld [vmem:[#allocation2 + $0x60] sm:$0xe]
      %v1375 = vld [vmem:[#allocation2 + $0x64] sm:$0xf]
      %v1376 = vld [vmem:[#allocation2 + $0x68] sm:$0x1]
      %v1377 = vld [vmem:[#allocation2 + $0x6c] sm:$0xe]
      %v1378 = vld [vmem:[#allocation2 + $0x70] sm:$0xf]
      %v1379 = vld [vmem:[#allocation2 + $0x74] sm:$0x1]
      %v1380 = vld [vmem:[#allocation2 + $0x78] sm:$0xe]
      %v1381 = vld [vmem:[#allocation2 + $0x7c] sm:$0xf]
      %v1382 = vld [vmem:[#allocation2 + $0x80] sm:$0x1]
      %v1383 = vld [vmem:[#allocation2 + $0x84] sm:$0xe]
      %v1384 = vld [vmem:[#allocation2 + $0x88] sm:$0xf]
      %v1385 = vld [vmem:[#allocation2 + $0x8c] sm:$0x1]
      %v1386 = vld [vmem:[#allocation2 + $0x90] sm:$0xe]
      %v1387 = vld [vmem:[#allocation2 + $0x94] sm:$0xf]
      %v1388 = vld [vmem:[#allocation2 + $0x98] sm:$0x1]
      %v1389 = vld [vmem:[#allocation2 + $0x9c] sm:$0xe]
      %v1390 = vld [vmem:[#allocation2 + $0xa0] sm:$0xf]
      %v1391 = vld [vmem:[#allocation2 + $0xa4] sm:$0x1]
      %v1392 = vld [vmem:[#allocation2 + $0xa8] sm:$0xe]
      %v1393 = vld [vmem:[#allocation2 + $0xac] sm:$0xf]
      %v1394 = vld [vmem:[#allocation2 + $0xb0] sm:$0x1]
      %v1395 = vld [vmem:[#allocation2 + $0xb4] sm:$0xe]
      %v1396 = vld [vmem:[#allocation2 + $0xb8] sm:$0xf]
      %v1397 = vld [vmem:[#allocation2 + $0xbc] sm:$0x1]
      %vm1446 = vcmask 1042432
      %vm1447 = vcmask 1046532
      %vm1448 = vmor %vm1446, %vm1447
      %v1449 = vrot.slane %v1350, 5
      %v1450 = vrot.slane %v1449, 4
      %v1451 = vrot.slane %v1351, 5
      %v1452 = vsel %vm1448, %v1450, %v1451
      %v1453 = vrot.slane %v1451, 4
      %v1454 = vrot.slane %v1352, 5
      %v1455 = vsel %vm1448, %v1453, %v1454
      %v1456 = vrot.slane %v1353, 5
      %v1457 = vrot.slane %v1456, 4
      %v1458 = vrot.slane %v1354, 5
      %v1459 = vsel %vm1448, %v1457, %v1458
      %v1460 = vrot.slane %v1458, 4
      %v1461 = vrot.slane %v1355, 5
      %v1462 = vsel %vm1448, %v1460, %v1461
      %v1463 = vrot.slane %v1356, 5
      %v1464 = vrot.slane %v1463, 4
      %v1465 = vrot.slane %v1357, 5
      %v1466 = vsel %vm1448, %v1464, %v1465
      %v1467 = vrot.slane %v1465, 4
      %v1468 = vrot.slane %v1358, 5
      %v1469 = vsel %vm1448, %v1467, %v1468
      %v1470 = vrot.slane %v1359, 5
      %v1471 = vrot.slane %v1470, 4
      %v1472 = vrot.slane %v1360, 5
      %v1473 = vsel %vm1448, %v1471, %v1472
      %v1474 = vrot.slane %v1472, 4
      %v1475 = vrot.slane %v1361, 5
      %v1476 = vsel %vm1448, %v1474, %v1475
      %v1477 = vrot.slane %v1362, 5
      %v1478 = vrot.slane %v1477, 4
      %v1479 = vrot.slane %v1363, 5
      %v1480 = vsel %vm1448, %v1478, %v1479
      %v1481 = vrot.slane %v1479, 4
      %v1482 = vrot.slane %v1364, 5
      %v1483 = vsel %vm1448, %v1481, %v1482
      %v1484 = vrot.slane %v1365, 5
      %v1485 = vrot.slane %v1484, 4
      %v1486 = vrot.slane %v1366, 5
      %v1487 = vsel %vm1448, %v1485, %v1486
      %v1488 = vrot.slane %v1486, 4
      %v1489 = vrot.slane %v1367, 5
      %v1490 = vsel %vm1448, %v1488, %v1489
      %v1491 = vrot.slane %v1368, 5
      %v1492 = vrot.slane %v1491, 4
      %v1493 = vrot.slane %v1369, 5
      %v1494 = vsel %vm1448, %v1492, %v1493
      %v1495 = vrot.slane %v1493, 4
      %v1496 = vrot.slane %v1370, 5
      %v1497 = vsel %vm1448, %v1495, %v1496
      %v1498 = vrot.slane %v1371, 5
      %v1499 = vrot.slane %v1498, 4
      %v1500 = vrot.slane %v1372, 5
      %v1501 = vsel %vm1448, %v1499, %v1500
      %v1502 = vrot.slane %v1500, 4
      %v1503 = vrot.slane %v1373, 5
      %v1504 = vsel %vm1448, %v1502, %v1503
      %v1505 = vrot.slane %v1374, 5
      %v1506 = vrot.slane %v1505, 4
      %v1507 = vrot.slane %v1375, 5
      %v1508 = vsel %vm1448, %v1506, %v1507
      %v1509 = vrot.slane %v1507, 4
      %v1510 = vrot.slane %v1376, 5
      %v1511 = vsel %vm1448, %v1509, %v1510
      %v1512 = vrot.slane %v1377, 5
      %v1513 = vrot.slane %v1512, 4
      %v1514 = vrot.slane %v1378, 5
      %v1515 = vsel %vm1448, %v1513, %v1514
      %v1516 = vrot.slane %v1514, 4
      %v1517 = vrot.slane %v1379, 5
      %v1518 = vsel %vm1448, %v1516, %v1517
      %v1519 = vrot.slane %v1380, 5
      %v1520 = vrot.slane %v1519, 4
      %v1521 = vrot.slane %v1381, 5
      %v1522 = vsel %vm1448, %v1520, %v1521
      %v1523 = vrot.slane %v1521, 4
      %v1524 = vrot.slane %v1382, 5
      %v1525 = vsel %vm1448, %v1523, %v1524
      %v1526 = vrot.slane %v1383, 5
      %v1527 = vrot.slane %v1526, 4
      %v1528 = vrot.slane %v1384, 5
      %v1529 = vsel %vm1448, %v1527, %v1528
      %v1530 = vrot.slane %v1528, 4
      %v1531 = vrot.slane %v1385, 5
      %v1532 = vsel %vm1448, %v1530, %v1531
      %v1533 = vrot.slane %v1386, 5
      %v1534 = vrot.slane %v1533, 4
      %v1535 = vrot.slane %v1387, 5
      %v1536 = vsel %vm1448, %v1534, %v1535
      %v1537 = vrot.slane %v1535, 4
      %v1538 = vrot.slane %v1388, 5
      %v1539 = vsel %vm1448, %v1537, %v1538
      %v1540 = vrot.slane %v1389, 5
      %v1541 = vrot.slane %v1540, 4
      %v1542 = vrot.slane %v1390, 5
      %v1543 = vsel %vm1448, %v1541, %v1542
      %v1544 = vrot.slane %v1542, 4
      %v1545 = vrot.slane %v1391, 5
      %v1546 = vsel %vm1448, %v1544, %v1545
      %v1547 = vrot.slane %v1392, 5
      %v1548 = vrot.slane %v1547, 4
      %v1549 = vrot.slane %v1393, 5
      %v1550 = vsel %vm1448, %v1548, %v1549
      %v1551 = vrot.slane %v1549, 4
      %v1552 = vrot.slane %v1394, 5
      %v1553 = vsel %vm1448, %v1551, %v1552
      %v1554 = vrot.slane %v1395, 5
      %v1555 = vrot.slane %v1554, 4
      %v1556 = vrot.slane %v1396, 5
      %v1557 = vsel %vm1448, %v1555, %v1556
      %v1558 = vrot.slane %v1556, 4
      %v1559 = vrot.slane %v1397, 5
      %v1560 = vsel %vm1448, %v1558, %v1559
      %1593 = vst [vmem:[#allocation3 + $0x8] sm:$0xf] %v1452
      %1594 = vst [vmem:[#allocation3 + $0x2c] sm:$0xf] %v1455
      %1595 = vst [vmem:[#allocation3 + $0x50] sm:$0xf] %v1459
      %1596 = vst [vmem:[#allocation3 + $0x74] sm:$0xf] %v1462
      %1597 = vst [vmem:[#allocation3 + $0x98] sm:$0xf] %v1466
      %1598 = vst [vmem:[#allocation3 + $0xbc] sm:$0xf] %v1469
      %1599 = vst [vmem:[#allocation3 + $0xe0] sm:$0xf] %v1473
      %1600 = vst [vmem:[#allocation3 + $0x104] sm:$0xf] %v1476
      %1601 = vst [vmem:[#allocation3 + $0x128] sm:$0xf] %v1480
      %1602 = vst [vmem:[#allocation3 + $0x14c] sm:$0xf] %v1483
      %1603 = vst [vmem:[#allocation3 + $0x170] sm:$0xf] %v1487
      %1604 = vst [vmem:[#allocation3 + $0x194] sm:$0xf] %v1490
      %1605 = vst [vmem:[#allocation3 + $0x1b8] sm:$0xf] %v1494
      %1606 = vst [vmem:[#allocation3 + $0x1dc] sm:$0xf] %v1497
      %1607 = vst [vmem:[#allocation3 + $0x200] sm:$0xf] %v1501
      %1608 = vst [vmem:[#allocation3 + $0x224] sm:$0xf] %v1504
      %1609 = vst [vmem:[#allocation3 + $0x248] sm:$0xf] %v1508
      %1610 = vst [vmem:[#allocation3 + $0x26c] sm:$0xf] %v1511
      %1611 = vst [vmem:[#allocation3 + $0x290] sm:$0xf] %v1515
      %1612 = vst [vmem:[#allocation3 + $0x2b4] sm:$0xf] %v1518
      %1613 = vst [vmem:[#allocation3 + $0x2d8] sm:$0xf] %v1522
      %1614 = vst [vmem:[#allocation3 + $0x2fc] sm:$0xf] %v1525
      %1615 = vst [vmem:[#allocation3 + $0x320] sm:$0xf] %v1529
      %1616 = vst [vmem:[#allocation3 + $0x344] sm:$0xf] %v1532
      %1617 = vst [vmem:[#allocation3 + $0x368] sm:$0xf] %v1536
      %1618 = vst [vmem:[#allocation3 + $0x38c] sm:$0xf] %v1539
      %1619 = vst [vmem:[#allocation3 + $0x3b0] sm:$0xf] %v1543
      %1620 = vst [vmem:[#allocation3 + $0x3d4] sm:$0xf] %v1546
      %1621 = vst [vmem:[#allocation3 + $0x3f8] sm:$0xf] %v1550
      %1622 = vst [vmem:[#allocation3 + $0x41c] sm:$0xf] %v1553
      %1623 = vst [vmem:[#allocation3 + $0x440] sm:$0xf] %v1557
      %1624 = vst [vmem:[#allocation3 + $0x464] sm:$0xf] %v1560
      %v1625 = vld [vmem:[%s249] sm:$0xf]
      %v1626 = vld [vmem:[%s249 + $0x4] sm:$0xf]
      %v1627 = vld [vmem:[%s249 + $0xc] sm:$0xf]
      %v1628 = vld [vmem:[%s249 + $0x10] sm:$0xf]
      %v1629 = vld [vmem:[%s249 + $0x18] sm:$0xf]
      %v1630 = vld [vmem:[%s249 + $0x1c] sm:$0xf]
      %v1631 = vld [vmem:[%s249 + $0x24] sm:$0xf]
      %v1632 = vld [vmem:[%s249 + $0x28] sm:$0xf]
      %v1633 = vld [vmem:[%s249 + $0x30] sm:$0xf]
      %v1634 = vld [vmem:[%s249 + $0x34] sm:$0xf]
      %v1635 = vld [vmem:[%s249 + $0x3c] sm:$0xf]
      %v1636 = vld [vmem:[%s249 + $0x40] sm:$0xf]
      %v1637 = vld [vmem:[%s249 + $0x48] sm:$0xf]
      %v1638 = vld [vmem:[%s249 + $0x4c] sm:$0xf]
      %v1639 = vld [vmem:[%s249 + $0x54] sm:$0xf]
      %v1640 = vld [vmem:[%s249 + $0x58] sm:$0xf]
      %v1641 = vld [vmem:[%s249 + $0x60] sm:$0xf]
      %v1642 = vld [vmem:[%s249 + $0x64] sm:$0xf]
      %v1643 = vld [vmem:[%s249 + $0x6c] sm:$0xf]
      %v1644 = vld [vmem:[%s249 + $0x70] sm:$0xf]
      %v1645 = vld [vmem:[%s249 + $0x78] sm:$0xf]
      %v1646 = vld [vmem:[%s249 + $0x7c] sm:$0xf]
      %v1647 = vld [vmem:[%s249 + $0x84] sm:$0xf]
      %v1648 = vld [vmem:[%s249 + $0x88] sm:$0xf]
      %v1649 = vld [vmem:[%s249 + $0x90] sm:$0xf]
      %v1650 = vld [vmem:[%s249 + $0x94] sm:$0xf]
      %v1651 = vld [vmem:[%s249 + $0x9c] sm:$0xf]
      %v1652 = vld [vmem:[%s249 + $0xa0] sm:$0xf]
      %v1653 = vld [vmem:[%s249 + $0xa8] sm:$0xf]
      %v1654 = vld [vmem:[%s249 + $0xac] sm:$0xf]
      %v1655 = vld [vmem:[%s249 + $0xb4] sm:$0xf]
      %v1656 = vld [vmem:[%s249 + $0xb8] sm:$0xf]
      %1657 = vst [vmem:[#allocation3 + $0xc] sm:$0xf] %v1625
      %1658 = vst [vmem:[#allocation3 + $0x30] sm:$0xf] %v1626
      %1659 = vst [vmem:[#allocation3 + $0x54] sm:$0xf] %v1627
      %1660 = vst [vmem:[#allocation3 + $0x78] sm:$0xf] %v1628
      %1661 = vst [vmem:[#allocation3 + $0x9c] sm:$0xf] %v1629
      %1662 = vst [vmem:[#allocation3 + $0xc0] sm:$0xf] %v1630
      %1663 = vst [vmem:[#allocation3 + $0xe4] sm:$0xf] %v1631
      %1664 = vst [vmem:[#allocation3 + $0x108] sm:$0xf] %v1632
      %1665 = vst [vmem:[#allocation3 + $0x12c] sm:$0xf] %v1633
      %1666 = vst [vmem:[#allocation3 + $0x150] sm:$0xf] %v1634
      %1667 = vst [vmem:[#allocation3 + $0x174] sm:$0xf] %v1635
      %1668 = vst [vmem:[#allocation3 + $0x198] sm:$0xf] %v1636
      %1669 = vst [vmem:[#allocation3 + $0x1bc] sm:$0xf] %v1637
      %1670 = vst [vmem:[#allocation3 + $0x1e0] sm:$0xf] %v1638
      %1671 = vst [vmem:[#allocation3 + $0x204] sm:$0xf] %v1639
      %1672 = vst [vmem:[#allocation3 + $0x228] sm:$0xf] %v1640
      %1673 = vst [vmem:[#allocation3 + $0x24c] sm:$0xf] %v1641
      %1674 = vst [vmem:[#allocation3 + $0x270] sm:$0xf] %v1642
      %1675 = vst [vmem:[#allocation3 + $0x294] sm:$0xf] %v1643
      %1676 = vst [vmem:[#allocation3 + $0x2b8] sm:$0xf] %v1644
      %1677 = vst [vmem:[#allocation3 + $0x2dc] sm:$0xf] %v1645
      %1678 = vst [vmem:[#allocation3 + $0x300] sm:$0xf] %v1646
      %1679 = vst [vmem:[#allocation3 + $0x324] sm:$0xf] %v1647
      %1680 = vst [vmem:[#allocation3 + $0x348] sm:$0xf] %v1648
      %1681 = vst [vmem:[#allocation3 + $0x36c] sm:$0xf] %v1649
      %1682 = vst [vmem:[#allocation3 + $0x390] sm:$0xf] %v1650
      %1683 = vst [vmem:[#allocation3 + $0x3b4] sm:$0xf] %v1651
      %1684 = vst [vmem:[#allocation3 + $0x3d8] sm:$0xf] %v1652
      %1685 = vst [vmem:[#allocation3 + $0x3fc] sm:$0xf] %v1653
      %1686 = vst [vmem:[#allocation3 + $0x420] sm:$0xf] %v1654
      %1687 = vst [vmem:[#allocation3 + $0x444] sm:$0xf] %v1655
      %1688 = vst [vmem:[#allocation3 + $0x468] sm:$0xf] %v1656
      %v1689 = vld [vmem:[%s249] sm:$0xf]
      %v1690 = vld [vmem:[%s249 + $0x4] sm:$0xf]
      %v1691 = vld [vmem:[%s249 + $0x8] sm:$0x1]
      %v1692 = vld [vmem:[%s249 + $0xc] sm:$0xf]
      %v1693 = vld [vmem:[%s249 + $0x10] sm:$0xf]
      %v1694 = vld [vmem:[%s249 + $0x14] sm:$0x1]
      %v1695 = vld [vmem:[%s249 + $0x18] sm:$0xf]
      %v1696 = vld [vmem:[%s249 + $0x1c] sm:$0xf]
      %v1697 = vld [vmem:[%s249 + $0x20] sm:$0x1]
      %v1698 = vld [vmem:[%s249 + $0x24] sm:$0xf]
      %v1699 = vld [vmem:[%s249 + $0x28] sm:$0xf]
      %v1700 = vld [vmem:[%s249 + $0x2c] sm:$0x1]
      %v1701 = vld [vmem:[%s249 + $0x30] sm:$0xf]
      %v1702 = vld [vmem:[%s249 + $0x34] sm:$0xf]
      %v1703 = vld [vmem:[%s249 + $0x38] sm:$0x1]
      %v1704 = vld [vmem:[%s249 + $0x3c] sm:$0xf]
      %v1705 = vld [vmem:[%s249 + $0x40] sm:$0xf]
      %v1706 = vld [vmem:[%s249 + $0x44] sm:$0x1]
      %v1707 = vld [vmem:[%s249 + $0x48] sm:$0xf]
      %v1708 = vld [vmem:[%s249 + $0x4c] sm:$0xf]
      %v1709 = vld [vmem:[%s249 + $0x50] sm:$0x1]
      %v1710 = vld [vmem:[%s249 + $0x54] sm:$0xf]
      %v1711 = vld [vmem:[%s249 + $0x58] sm:$0xf]
      %v1712 = vld [vmem:[%s249 + $0x5c] sm:$0x1]
      %v1713 = vld [vmem:[%s249 + $0x60] sm:$0xf]
      %v1714 = vld [vmem:[%s249 + $0x64] sm:$0xf]
      %v1715 = vld [vmem:[%s249 + $0x68] sm:$0x1]
      %v1716 = vld [vmem:[%s249 + $0x6c] sm:$0xf]
      %v1717 = vld [vmem:[%s249 + $0x70] sm:$0xf]
      %v1718 = vld [vmem:[%s249 + $0x74] sm:$0x1]
      %v1719 = vld [vmem:[%s249 + $0x78] sm:$0xf]
      %v1720 = vld [vmem:[%s249 + $0x7c] sm:$0xf]
      %v1721 = vld [vmem:[%s249 + $0x80] sm:$0x1]
      %v1722 = vld [vmem:[%s249 + $0x84] sm:$0xf]
      %v1723 = vld [vmem:[%s249 + $0x88] sm:$0xf]
      %v1724 = vld [vmem:[%s249 + $0x8c] sm:$0x1]
      %v1725 = vld [vmem:[%s249 + $0x90] sm:$0xf]
      %v1726 = vld [vmem:[%s249 + $0x94] sm:$0xf]
      %v1727 = vld [vmem:[%s249 + $0x98] sm:$0x1]
      %v1728 = vld [vmem:[%s249 + $0x9c] sm:$0xf]
      %v1729 = vld [vmem:[%s249 + $0xa0] sm:$0xf]
      %v1730 = vld [vmem:[%s249 + $0xa4] sm:$0x1]
      %v1731 = vld [vmem:[%s249 + $0xa8] sm:$0xf]
      %v1732 = vld [vmem:[%s249 + $0xac] sm:$0xf]
      %v1733 = vld [vmem:[%s249 + $0xb0] sm:$0x1]
      %v1734 = vld [vmem:[%s249 + $0xb4] sm:$0xf]
      %v1735 = vld [vmem:[%s249 + $0xb8] sm:$0xf]
      %v1736 = vld [vmem:[%s249 + $0xbc] sm:$0x1]
      %v1738 = vshrl.u32 %v1689, 16
      %v1740 = vrot.slane %v1738, 4
      %v1741 = vshll.u32 %v1689, 16
      %v1743 = vrot.slane %v1741, 5
      %v1744 = vor.u32 %v1740, %v1743
      %v1745 = vrot.slane %v1744, 4
      %v1747 = vshll.u32 %v1690, 16
      %v1749 = vrot.slane %v1747, 5
      %v1750 = vsel %vm901, %v1745, %v1749
      %v1751 = vshrl.u32 %v1690, 16
      %v1753 = vrot.slane %v1751, 4
      %v1754 = vor.u32 %v1753, %v1749
      %v1755 = vrot.slane %v1754, 4
      %v1757 = vshll.u32 %v1691, 16
      %v1759 = vrot.slane %v1757, 5
      %v1760 = vsel %vm901, %v1755, %v1759
      %v1762 = vshrl.u32 %v1692, 16
      %v1764 = vrot.slane %v1762, 4
      %v1765 = vshll.u32 %v1692, 16
      %v1767 = vrot.slane %v1765, 5
      %v1768 = vor.u32 %v1764, %v1767
      %v1769 = vrot.slane %v1768, 4
      %v1771 = vshll.u32 %v1693, 16
      %v1773 = vrot.slane %v1771, 5
      %v1774 = vsel %vm901, %v1769, %v1773
      %v1775 = vshrl.u32 %v1693, 16
      %v1777 = vrot.slane %v1775, 4
      %v1778 = vor.u32 %v1777, %v1773
      %v1779 = vrot.slane %v1778, 4
      %v1781 = vshll.u32 %v1694, 16
      %v1783 = vrot.slane %v1781, 5
      %v1784 = vsel %vm901, %v1779, %v1783
      %v1786 = vshrl.u32 %v1695, 16
      %v1788 = vrot.slane %v1786, 4
      %v1789 = vshll.u32 %v1695, 16
      %v1791 = vrot.slane %v1789, 5
      %v1792 = vor.u32 %v1788, %v1791
      %v1793 = vrot.slane %v1792, 4
      %v1795 = vshll.u32 %v1696, 16
      %v1797 = vrot.slane %v1795, 5
      %v1798 = vsel %vm901, %v1793, %v1797
      %v1799 = vshrl.u32 %v1696, 16
      %v1801 = vrot.slane %v1799, 4
      %v1802 = vor.u32 %v1801, %v1797
      %v1803 = vrot.slane %v1802, 4
      %v1805 = vshll.u32 %v1697, 16
      %v1807 = vrot.slane %v1805, 5
      %v1808 = vsel %vm901, %v1803, %v1807
      %v1810 = vshrl.u32 %v1698, 16
      %v1812 = vrot.slane %v1810, 4
      %v1813 = vshll.u32 %v1698, 16
      %v1815 = vrot.slane %v1813, 5
      %v1816 = vor.u32 %v1812, %v1815
      %v1817 = vrot.slane %v1816, 4
      %v1819 = vshll.u32 %v1699, 16
      %v1821 = vrot.slane %v1819, 5
      %v1822 = vsel %vm901, %v1817, %v1821
      %v1823 = vshrl.u32 %v1699, 16
      %v1825 = vrot.slane %v1823, 4
      %v1826 = vor.u32 %v1825, %v1821
      %v1827 = vrot.slane %v1826, 4
      %v1829 = vshll.u32 %v1700, 16
      %v1831 = vrot.slane %v1829, 5
      %v1832 = vsel %vm901, %v1827, %v1831
      %v1834 = vshrl.u32 %v1701, 16
      %v1836 = vrot.slane %v1834, 4
      %v1837 = vshll.u32 %v1701, 16
      %v1839 = vrot.slane %v1837, 5
      %v1840 = vor.u32 %v1836, %v1839
      %v1841 = vrot.slane %v1840, 4
      %v1843 = vshll.u32 %v1702, 16
      %v1845 = vrot.slane %v1843, 5
      %v1846 = vsel %vm901, %v1841, %v1845
      %v1847 = vshrl.u32 %v1702, 16
      %v1849 = vrot.slane %v1847, 4
      %v1850 = vor.u32 %v1849, %v1845
      %v1851 = vrot.slane %v1850, 4
      %v1853 = vshll.u32 %v1703, 16
      %v1855 = vrot.slane %v1853, 5
      %v1856 = vsel %vm901, %v1851, %v1855
      %v1858 = vshrl.u32 %v1704, 16
      %v1860 = vrot.slane %v1858, 4
      %v1861 = vshll.u32 %v1704, 16
      %v1863 = vrot.slane %v1861, 5
      %v1864 = vor.u32 %v1860, %v1863
      %v1865 = vrot.slane %v1864, 4
      %v1867 = vshll.u32 %v1705, 16
      %v1869 = vrot.slane %v1867, 5
      %v1870 = vsel %vm901, %v1865, %v1869
      %v1871 = vshrl.u32 %v1705, 16
      %v1873 = vrot.slane %v1871, 4
      %v1874 = vor.u32 %v1873, %v1869
      %v1875 = vrot.slane %v1874, 4
      %v1877 = vshll.u32 %v1706, 16
      %v1879 = vrot.slane %v1877, 5
      %v1880 = vsel %vm901, %v1875, %v1879
      %v1882 = vshrl.u32 %v1707, 16
      %v1884 = vrot.slane %v1882, 4
      %v1885 = vshll.u32 %v1707, 16
      %v1887 = vrot.slane %v1885, 5
      %v1888 = vor.u32 %v1884, %v1887
      %v1889 = vrot.slane %v1888, 4
      %v1891 = vshll.u32 %v1708, 16
      %v1893 = vrot.slane %v1891, 5
      %v1894 = vsel %vm901, %v1889, %v1893
      %v1895 = vshrl.u32 %v1708, 16
      %v1897 = vrot.slane %v1895, 4
      %v1898 = vor.u32 %v1897, %v1893
      %v1899 = vrot.slane %v1898, 4
      %v1901 = vshll.u32 %v1709, 16
      %v1903 = vrot.slane %v1901, 5
      %v1904 = vsel %vm901, %v1899, %v1903
      %v1906 = vshrl.u32 %v1710, 16
      %v1908 = vrot.slane %v1906, 4
      %v1909 = vshll.u32 %v1710, 16
      %v1911 = vrot.slane %v1909, 5
      %v1912 = vor.u32 %v1908, %v1911
      %v1913 = vrot.slane %v1912, 4
      %v1915 = vshll.u32 %v1711, 16
      %v1917 = vrot.slane %v1915, 5
      %v1918 = vsel %vm901, %v1913, %v1917
      %v1919 = vshrl.u32 %v1711, 16
      %v1921 = vrot.slane %v1919, 4
      %v1922 = vor.u32 %v1921, %v1917
      %v1923 = vrot.slane %v1922, 4
      %v1925 = vshll.u32 %v1712, 16
      %v1927 = vrot.slane %v1925, 5
      %v1928 = vsel %vm901, %v1923, %v1927
      %v1930 = vshrl.u32 %v1713, 16
      %v1932 = vrot.slane %v1930, 4
      %v1933 = vshll.u32 %v1713, 16
      %v1935 = vrot.slane %v1933, 5
      %v1936 = vor.u32 %v1932, %v1935
      %v1937 = vrot.slane %v1936, 4
      %v1939 = vshll.u32 %v1714, 16
      %v1941 = vrot.slane %v1939, 5
      %v1942 = vsel %vm901, %v1937, %v1941
      %v1943 = vshrl.u32 %v1714, 16
      %v1945 = vrot.slane %v1943, 4
      %v1946 = vor.u32 %v1945, %v1941
      %v1947 = vrot.slane %v1946, 4
      %v1949 = vshll.u32 %v1715, 16
      %v1951 = vrot.slane %v1949, 5
      %v1952 = vsel %vm901, %v1947, %v1951
      %v1954 = vshrl.u32 %v1716, 16
      %v1956 = vrot.slane %v1954, 4
      %v1957 = vshll.u32 %v1716, 16
      %v1959 = vrot.slane %v1957, 5
      %v1960 = vor.u32 %v1956, %v1959
      %v1961 = vrot.slane %v1960, 4
      %v1963 = vshll.u32 %v1717, 16
      %v1965 = vrot.slane %v1963, 5
      %v1966 = vsel %vm901, %v1961, %v1965
      %v1967 = vshrl.u32 %v1717, 16
      %v1969 = vrot.slane %v1967, 4
      %v1970 = vor.u32 %v1969, %v1965
      %v1971 = vrot.slane %v1970, 4
      %v1973 = vshll.u32 %v1718, 16
      %v1975 = vrot.slane %v1973, 5
      %v1976 = vsel %vm901, %v1971, %v1975
      %v1978 = vshrl.u32 %v1719, 16
      %v1980 = vrot.slane %v1978, 4
      %v1981 = vshll.u32 %v1719, 16
      %v1983 = vrot.slane %v1981, 5
      %v1984 = vor.u32 %v1980, %v1983
      %v1985 = vrot.slane %v1984, 4
      %v1987 = vshll.u32 %v1720, 16
      %v1989 = vrot.slane %v1987, 5
      %v1990 = vsel %vm901, %v1985, %v1989
      %v1991 = vshrl.u32 %v1720, 16
      %v1993 = vrot.slane %v1991, 4
      %v1994 = vor.u32 %v1993, %v1989
      %v1995 = vrot.slane %v1994, 4
      %v1997 = vshll.u32 %v1721, 16
      %v1999 = vrot.slane %v1997, 5
      %v2000 = vsel %vm901, %v1995, %v1999
      %v2002 = vshrl.u32 %v1722, 16
      %v2004 = vrot.slane %v2002, 4
      %v2005 = vshll.u32 %v1722, 16
      %v2007 = vrot.slane %v2005, 5
      %v2008 = vor.u32 %v2004, %v2007
      %v2009 = vrot.slane %v2008, 4
      %v2011 = vshll.u32 %v1723, 16
      %v2013 = vrot.slane %v2011, 5
      %v2014 = vsel %vm901, %v2009, %v2013
      %v2015 = vshrl.u32 %v1723, 16
      %v2017 = vrot.slane %v2015, 4
      %v2018 = vor.u32 %v2017, %v2013
      %v2019 = vrot.slane %v2018, 4
      %v2021 = vshll.u32 %v1724, 16
      %v2023 = vrot.slane %v2021, 5
      %v2024 = vsel %vm901, %v2019, %v2023
      %v2026 = vshrl.u32 %v1725, 16
      %v2028 = vrot.slane %v2026, 4
      %v2029 = vshll.u32 %v1725, 16
      %v2031 = vrot.slane %v2029, 5
      %v2032 = vor.u32 %v2028, %v2031
      %v2033 = vrot.slane %v2032, 4
      %v2035 = vshll.u32 %v1726, 16
      %v2037 = vrot.slane %v2035, 5
      %v2038 = vsel %vm901, %v2033, %v2037
      %v2039 = vshrl.u32 %v1726, 16
      %v2041 = vrot.slane %v2039, 4
      %v2042 = vor.u32 %v2041, %v2037
      %v2043 = vrot.slane %v2042, 4
      %v2045 = vshll.u32 %v1727, 16
      %v2047 = vrot.slane %v2045, 5
      %v2048 = vsel %vm901, %v2043, %v2047
      %v2050 = vshrl.u32 %v1728, 16
      %v2052 = vrot.slane %v2050, 4
      %v2053 = vshll.u32 %v1728, 16
      %v2055 = vrot.slane %v2053, 5
      %v2056 = vor.u32 %v2052, %v2055
      %v2057 = vrot.slane %v2056, 4
      %v2059 = vshll.u32 %v1729, 16
      %v2061 = vrot.slane %v2059, 5
      %v2062 = vsel %vm901, %v2057, %v2061
      %v2063 = vshrl.u32 %v1729, 16
      %v2065 = vrot.slane %v2063, 4
      %v2066 = vor.u32 %v2065, %v2061
      %v2067 = vrot.slane %v2066, 4
      %v2069 = vshll.u32 %v1730, 16
      %v2071 = vrot.slane %v2069, 5
      %v2072 = vsel %vm901, %v2067, %v2071
      %v2074 = vshrl.u32 %v1731, 16
      %v2076 = vrot.slane %v2074, 4
      %v2077 = vshll.u32 %v1731, 16
      %v2079 = vrot.slane %v2077, 5
      %v2080 = vor.u32 %v2076, %v2079
      %v2081 = vrot.slane %v2080, 4
      %v2083 = vshll.u32 %v1732, 16
      %v2085 = vrot.slane %v2083, 5
      %v2086 = vsel %vm901, %v2081, %v2085
      %v2087 = vshrl.u32 %v1732, 16
      %v2089 = vrot.slane %v2087, 4
      %v2090 = vor.u32 %v2089, %v2085
      %v2091 = vrot.slane %v2090, 4
      %v2093 = vshll.u32 %v1733, 16
      %v2095 = vrot.slane %v2093, 5
      %v2096 = vsel %vm901, %v2091, %v2095
      %v2098 = vshrl.u32 %v1734, 16
      %v2100 = vrot.slane %v2098, 4
      %v2101 = vshll.u32 %v1734, 16
      %v2103 = vrot.slane %v2101, 5
      %v2104 = vor.u32 %v2100, %v2103
      %v2105 = vrot.slane %v2104, 4
      %v2107 = vshll.u32 %v1735, 16
      %v2109 = vrot.slane %v2107, 5
      %v2110 = vsel %vm901, %v2105, %v2109
      %v2111 = vshrl.u32 %v1735, 16
      %v2113 = vrot.slane %v2111, 4
      %v2114 = vor.u32 %v2113, %v2109
      %v2115 = vrot.slane %v2114, 4
      %v2117 = vshll.u32 %v1736, 16
      %v2119 = vrot.slane %v2117, 5
      %v2120 = vsel %vm901, %v2115, %v2119
      %2153 = vst [vmem:[#allocation3 + $0x10] sm:$0xf] %v1750
      %2154 = vst [vmem:[#allocation3 + $0x34] sm:$0xf] %v1760
      %2155 = vst [vmem:[#allocation3 + $0x58] sm:$0xf] %v1774
      %2156 = vst [vmem:[#allocation3 + $0x7c] sm:$0xf] %v1784
      %2157 = vst [vmem:[#allocation3 + $0xa0] sm:$0xf] %v1798
      %2158 = vst [vmem:[#allocation3 + $0xc4] sm:$0xf] %v1808
      %2159 = vst [vmem:[#allocation3 + $0xe8] sm:$0xf] %v1822
      %2160 = vst [vmem:[#allocation3 + $0x10c] sm:$0xf] %v1832
      %2161 = vst [vmem:[#allocation3 + $0x130] sm:$0xf] %v1846
      %2162 = vst [vmem:[#allocation3 + $0x154] sm:$0xf] %v1856
      %2163 = vst [vmem:[#allocation3 + $0x178] sm:$0xf] %v1870
      %2164 = vst [vmem:[#allocation3 + $0x19c] sm:$0xf] %v1880
      %2165 = vst [vmem:[#allocation3 + $0x1c0] sm:$0xf] %v1894
      %2166 = vst [vmem:[#allocation3 + $0x1e4] sm:$0xf] %v1904
      %2167 = vst [vmem:[#allocation3 + $0x208] sm:$0xf] %v1918
      %2168 = vst [vmem:[#allocation3 + $0x22c] sm:$0xf] %v1928
      %2169 = vst [vmem:[#allocation3 + $0x250] sm:$0xf] %v1942
      %2170 = vst [vmem:[#allocation3 + $0x274] sm:$0xf] %v1952
      %2171 = vst [vmem:[#allocation3 + $0x298] sm:$0xf] %v1966
      %2172 = vst [vmem:[#allocation3 + $0x2bc] sm:$0xf] %v1976
      %2173 = vst [vmem:[#allocation3 + $0x2e0] sm:$0xf] %v1990
      %2174 = vst [vmem:[#allocation3 + $0x304] sm:$0xf] %v2000
      %2175 = vst [vmem:[#allocation3 + $0x328] sm:$0xf] %v2014
      %2176 = vst [vmem:[#allocation3 + $0x34c] sm:$0xf] %v2024
      %2177 = vst [vmem:[#allocation3 + $0x370] sm:$0xf] %v2038
      %2178 = vst [vmem:[#allocation3 + $0x394] sm:$0xf] %v2048
      %2179 = vst [vmem:[#allocation3 + $0x3b8] sm:$0xf] %v2062
      %2180 = vst [vmem:[#allocation3 + $0x3dc] sm:$0xf] %v2072
      %2181 = vst [vmem:[#allocation3 + $0x400] sm:$0xf] %v2086
      %2182 = vst [vmem:[#allocation3 + $0x424] sm:$0xf] %v2096
      %2183 = vst [vmem:[#allocation3 + $0x448] sm:$0xf] %v2110
      %2184 = vst [vmem:[#allocation3 + $0x46c] sm:$0xf] %v2120
      %v2185 = vld [vmem:[%s249] sm:$0xe]
      %v2186 = vld [vmem:[%s249 + $0x4] sm:$0xf]
      %v2187 = vld [vmem:[%s249 + $0x8] sm:$0x1]
      %v2188 = vld [vmem:[%s249 + $0xc] sm:$0xe]
      %v2189 = vld [vmem:[%s249 + $0x10] sm:$0xf]
      %v2190 = vld [vmem:[%s249 + $0x14] sm:$0x1]
      %v2191 = vld [vmem:[%s249 + $0x18] sm:$0xe]
      %v2192 = vld [vmem:[%s249 + $0x1c] sm:$0xf]
      %v2193 = vld [vmem:[%s249 + $0x20] sm:$0x1]
      %v2194 = vld [vmem:[%s249 + $0x24] sm:$0xe]
      %v2195 = vld [vmem:[%s249 + $0x28] sm:$0xf]
      %v2196 = vld [vmem:[%s249 + $0x2c] sm:$0x1]
      %v2197 = vld [vmem:[%s249 + $0x30] sm:$0xe]
      %v2198 = vld [vmem:[%s249 + $0x34] sm:$0xf]
      %v2199 = vld [vmem:[%s249 + $0x38] sm:$0x1]
      %v2200 = vld [vmem:[%s249 + $0x3c] sm:$0xe]
      %v2201 = vld [vmem:[%s249 + $0x40] sm:$0xf]
      %v2202 = vld [vmem:[%s249 + $0x44] sm:$0x1]
      %v2203 = vld [vmem:[%s249 + $0x48] sm:$0xe]
      %v2204 = vld [vmem:[%s249 + $0x4c] sm:$0xf]
      %v2205 = vld [vmem:[%s249 + $0x50] sm:$0x1]
      %v2206 = vld [vmem:[%s249 + $0x54] sm:$0xe]
      %v2207 = vld [vmem:[%s249 + $0x58] sm:$0xf]
      %v2208 = vld [vmem:[%s249 + $0x5c] sm:$0x1]
      %v2209 = vld [vmem:[%s249 + $0x60] sm:$0xe]
      %v2210 = vld [vmem:[%s249 + $0x64] sm:$0xf]
      %v2211 = vld [vmem:[%s249 + $0x68] sm:$0x1]
      %v2212 = vld [vmem:[%s249 + $0x6c] sm:$0xe]
      %v2213 = vld [vmem:[%s249 + $0x70] sm:$0xf]
      %v2214 = vld [vmem:[%s249 + $0x74] sm:$0x1]
      %v2215 = vld [vmem:[%s249 + $0x78] sm:$0xe]
      %v2216 = vld [vmem:[%s249 + $0x7c] sm:$0xf]
      %v2217 = vld [vmem:[%s249 + $0x80] sm:$0x1]
      %v2218 = vld [vmem:[%s249 + $0x84] sm:$0xe]
      %v2219 = vld [vmem:[%s249 + $0x88] sm:$0xf]
      %v2220 = vld [vmem:[%s249 + $0x8c] sm:$0x1]
      %v2221 = vld [vmem:[%s249 + $0x90] sm:$0xe]
      %v2222 = vld [vmem:[%s249 + $0x94] sm:$0xf]
      %v2223 = vld [vmem:[%s249 + $0x98] sm:$0x1]
      %v2224 = vld [vmem:[%s249 + $0x9c] sm:$0xe]
      %v2225 = vld [vmem:[%s249 + $0xa0] sm:$0xf]
      %v2226 = vld [vmem:[%s249 + $0xa4] sm:$0x1]
      %v2227 = vld [vmem:[%s249 + $0xa8] sm:$0xe]
      %v2228 = vld [vmem:[%s249 + $0xac] sm:$0xf]
      %v2229 = vld [vmem:[%s249 + $0xb0] sm:$0x1]
      %v2230 = vld [vmem:[%s249 + $0xb4] sm:$0xe]
      %v2231 = vld [vmem:[%s249 + $0xb8] sm:$0xf]
      %v2232 = vld [vmem:[%s249 + $0xbc] sm:$0x1]
      %v2281 = vrot.slane %v2185, 5
      %v2282 = vrot.slane %v2281, 4
      %v2283 = vrot.slane %v2186, 5
      %v2284 = vsel %vm1448, %v2282, %v2283
      %v2285 = vrot.slane %v2283, 4
      %v2286 = vrot.slane %v2187, 5
      %v2287 = vsel %vm1448, %v2285, %v2286
      %v2288 = vrot.slane %v2188, 5
      %v2289 = vrot.slane %v2288, 4
      %v2290 = vrot.slane %v2189, 5
      %v2291 = vsel %vm1448, %v2289, %v2290
      %v2292 = vrot.slane %v2290, 4
      %v2293 = vrot.slane %v2190, 5
      %v2294 = vsel %vm1448, %v2292, %v2293
      %v2295 = vrot.slane %v2191, 5
      %v2296 = vrot.slane %v2295, 4
      %v2297 = vrot.slane %v2192, 5
      %v2298 = vsel %vm1448, %v2296, %v2297
      %v2299 = vrot.slane %v2297, 4
      %v2300 = vrot.slane %v2193, 5
      %v2301 = vsel %vm1448, %v2299, %v2300
      %v2302 = vrot.slane %v2194, 5
      %v2303 = vrot.slane %v2302, 4
      %v2304 = vrot.slane %v2195, 5
      %v2305 = vsel %vm1448, %v2303, %v2304
      %v2306 = vrot.slane %v2304, 4
      %v2307 = vrot.slane %v2196, 5
      %v2308 = vsel %vm1448, %v2306, %v2307
      %v2309 = vrot.slane %v2197, 5
      %v2310 = vrot.slane %v2309, 4
      %v2311 = vrot.slane %v2198, 5
      %v2312 = vsel %vm1448, %v2310, %v2311
      %v2313 = vrot.slane %v2311, 4
      %v2314 = vrot.slane %v2199, 5
      %v2315 = vsel %vm1448, %v2313, %v2314
      %v2316 = vrot.slane %v2200, 5
      %v2317 = vrot.slane %v2316, 4
      %v2318 = vrot.slane %v2201, 5
      %v2319 = vsel %vm1448, %v2317, %v2318
      %v2320 = vrot.slane %v2318, 4
      %v2321 = vrot.slane %v2202, 5
      %v2322 = vsel %vm1448, %v2320, %v2321
      %v2323 = vrot.slane %v2203, 5
      %v2324 = vrot.slane %v2323, 4
      %v2325 = vrot.slane %v2204, 5
      %v2326 = vsel %vm1448, %v2324, %v2325
      %v2327 = vrot.slane %v2325, 4
      %v2328 = vrot.slane %v2205, 5
      %v2329 = vsel %vm1448, %v2327, %v2328
      %v2330 = vrot.slane %v2206, 5
      %v2331 = vrot.slane %v2330, 4
      %v2332 = vrot.slane %v2207, 5
      %v2333 = vsel %vm1448, %v2331, %v2332
      %v2334 = vrot.slane %v2332, 4
      %v2335 = vrot.slane %v2208, 5
      %v2336 = vsel %vm1448, %v2334, %v2335
      %v2337 = vrot.slane %v2209, 5
      %v2338 = vrot.slane %v2337, 4
      %v2339 = vrot.slane %v2210, 5
      %v2340 = vsel %vm1448, %v2338, %v2339
      %v2341 = vrot.slane %v2339, 4
      %v2342 = vrot.slane %v2211, 5
      %v2343 = vsel %vm1448, %v2341, %v2342
      %v2344 = vrot.slane %v2212, 5
      %v2345 = vrot.slane %v2344, 4
      %v2346 = vrot.slane %v2213, 5
      %v2347 = vsel %vm1448, %v2345, %v2346
      %v2348 = vrot.slane %v2346, 4
      %v2349 = vrot.slane %v2214, 5
      %v2350 = vsel %vm1448, %v2348, %v2349
      %v2351 = vrot.slane %v2215, 5
      %v2352 = vrot.slane %v2351, 4
      %v2353 = vrot.slane %v2216, 5
      %v2354 = vsel %vm1448, %v2352, %v2353
      %v2355 = vrot.slane %v2353, 4
      %v2356 = vrot.slane %v2217, 5
      %v2357 = vsel %vm1448, %v2355, %v2356
      %v2358 = vrot.slane %v2218, 5
      %v2359 = vrot.slane %v2358, 4
      %v2360 = vrot.slane %v2219, 5
      %v2361 = vsel %vm1448, %v2359, %v2360
      %v2362 = vrot.slane %v2360, 4
      %v2363 = vrot.slane %v2220, 5
      %v2364 = vsel %vm1448, %v2362, %v2363
      %v2365 = vrot.slane %v2221, 5
      %v2366 = vrot.slane %v2365, 4
      %v2367 = vrot.slane %v2222, 5
      %v2368 = vsel %vm1448, %v2366, %v2367
      %v2369 = vrot.slane %v2367, 4
      %v2370 = vrot.slane %v2223, 5
      %v2371 = vsel %vm1448, %v2369, %v2370
      %v2372 = vrot.slane %v2224, 5
      %v2373 = vrot.slane %v2372, 4
      %v2374 = vrot.slane %v2225, 5
      %v2375 = vsel %vm1448, %v2373, %v2374
      %v2376 = vrot.slane %v2374, 4
      %v2377 = vrot.slane %v2226, 5
      %v2378 = vsel %vm1448, %v2376, %v2377
      %v2379 = vrot.slane %v2227, 5
      %v2380 = vrot.slane %v2379, 4
      %v2381 = vrot.slane %v2228, 5
      %v2382 = vsel %vm1448, %v2380, %v2381
      %v2383 = vrot.slane %v2381, 4
      %v2384 = vrot.slane %v2229, 5
      %v2385 = vsel %vm1448, %v2383, %v2384
      %v2386 = vrot.slane %v2230, 5
      %v2387 = vrot.slane %v2386, 4
      %v2388 = vrot.slane %v2231, 5
      %v2389 = vsel %vm1448, %v2387, %v2388
      %v2390 = vrot.slane %v2388, 4
      %v2391 = vrot.slane %v2232, 5
      %v2392 = vsel %vm1448, %v2390, %v2391
      %2425 = vst [vmem:[#allocation3 + $0x14] sm:$0xf] %v2284
      %2426 = vst [vmem:[#allocation3 + $0x38] sm:$0xf] %v2287
      %2427 = vst [vmem:[#allocation3 + $0x5c] sm:$0xf] %v2291
      %2428 = vst [vmem:[#allocation3 + $0x80] sm:$0xf] %v2294
      %2429 = vst [vmem:[#allocation3 + $0xa4] sm:$0xf] %v2298
      %2430 = vst [vmem:[#allocation3 + $0xc8] sm:$0xf] %v2301
      %2431 = vst [vmem:[#allocation3 + $0xec] sm:$0xf] %v2305
      %2432 = vst [vmem:[#allocation3 + $0x110] sm:$0xf] %v2308
      %2433 = vst [vmem:[#allocation3 + $0x134] sm:$0xf] %v2312
      %2434 = vst [vmem:[#allocation3 + $0x158] sm:$0xf] %v2315
      %2435 = vst [vmem:[#allocation3 + $0x17c] sm:$0xf] %v2319
      %2436 = vst [vmem:[#allocation3 + $0x1a0] sm:$0xf] %v2322
      %2437 = vst [vmem:[#allocation3 + $0x1c4] sm:$0xf] %v2326
      %2438 = vst [vmem:[#allocation3 + $0x1e8] sm:$0xf] %v2329
      %2439 = vst [vmem:[#allocation3 + $0x20c] sm:$0xf] %v2333
      %2440 = vst [vmem:[#allocation3 + $0x230] sm:$0xf] %v2336
      %2441 = vst [vmem:[#allocation3 + $0x254] sm:$0xf] %v2340
      %2442 = vst [vmem:[#allocation3 + $0x278] sm:$0xf] %v2343
      %2443 = vst [vmem:[#allocation3 + $0x29c] sm:$0xf] %v2347
      %2444 = vst [vmem:[#allocation3 + $0x2c0] sm:$0xf] %v2350
      %2445 = vst [vmem:[#allocation3 + $0x2e4] sm:$0xf] %v2354
      %2446 = vst [vmem:[#allocation3 + $0x308] sm:$0xf] %v2357
      %2447 = vst [vmem:[#allocation3 + $0x32c] sm:$0xf] %v2361
      %2448 = vst [vmem:[#allocation3 + $0x350] sm:$0xf] %v2364
      %2449 = vst [vmem:[#allocation3 + $0x374] sm:$0xf] %v2368
      %2450 = vst [vmem:[#allocation3 + $0x398] sm:$0xf] %v2371
      %2451 = vst [vmem:[#allocation3 + $0x3bc] sm:$0xf] %v2375
      %2452 = vst [vmem:[#allocation3 + $0x3e0] sm:$0xf] %v2378
      %2453 = vst [vmem:[#allocation3 + $0x404] sm:$0xf] %v2382
      %2454 = vst [vmem:[#allocation3 + $0x428] sm:$0xf] %v2385
      %2455 = vst [vmem:[#allocation3 + $0x44c] sm:$0xf] %v2389
      %2456 = vst [vmem:[#allocation3 + $0x470] sm:$0xf] %v2392
      %s2457 = scalar_lea.vmem [#allocation2], 24
      %v2458 = vld [vmem:[%s2457] sm:$0xf]
      %v2459 = vld [vmem:[%s2457 + $0x4] sm:$0xf]
      %v2460 = vld [vmem:[%s2457 + $0xc] sm:$0xf]
      %v2461 = vld [vmem:[%s2457 + $0x10] sm:$0xf]
      %v2462 = vld [vmem:[%s2457 + $0x18] sm:$0xf]
      %v2463 = vld [vmem:[%s2457 + $0x1c] sm:$0xf]
      %v2464 = vld [vmem:[%s2457 + $0x24] sm:$0xf]
      %v2465 = vld [vmem:[%s2457 + $0x28] sm:$0xf]
      %v2466 = vld [vmem:[%s2457 + $0x30] sm:$0xf]
      %v2467 = vld [vmem:[%s2457 + $0x34] sm:$0xf]
      %v2468 = vld [vmem:[%s2457 + $0x3c] sm:$0xf]
      %v2469 = vld [vmem:[%s2457 + $0x40] sm:$0xf]
      %v2470 = vld [vmem:[%s2457 + $0x48] sm:$0xf]
      %v2471 = vld [vmem:[%s2457 + $0x4c] sm:$0xf]
      %v2472 = vld [vmem:[%s2457 + $0x54] sm:$0xf]
      %v2473 = vld [vmem:[%s2457 + $0x58] sm:$0xf]
      %v2474 = vld [vmem:[%s2457 + $0x60] sm:$0xf]
      %v2475 = vld [vmem:[%s2457 + $0x64] sm:$0xf]
      %v2476 = vld [vmem:[%s2457 + $0x6c] sm:$0xf]
      %v2477 = vld [vmem:[%s2457 + $0x70] sm:$0xf]
      %v2478 = vld [vmem:[%s2457 + $0x78] sm:$0xf]
      %v2479 = vld [vmem:[%s2457 + $0x7c] sm:$0xf]
      %v2480 = vld [vmem:[%s2457 + $0x84] sm:$0xf]
      %v2481 = vld [vmem:[%s2457 + $0x88] sm:$0xf]
      %v2482 = vld [vmem:[%s2457 + $0x90] sm:$0xf]
      %v2483 = vld [vmem:[%s2457 + $0x94] sm:$0xf]
      %v2484 = vld [vmem:[%s2457 + $0x9c] sm:$0xf]
      %v2485 = vld [vmem:[%s2457 + $0xa0] sm:$0xf]
      %v2486 = vld [vmem:[%s2457 + $0xa8] sm:$0xf]
      %v2487 = vld [vmem:[%s2457 + $0xac] sm:$0xf]
      %v2488 = vld [vmem:[%s2457 + $0xb4] sm:$0xf]
      %v2489 = vld [vmem:[%s2457 + $0xb8] sm:$0xf]
      %2490 = vst [vmem:[#allocation3 + $0x18] sm:$0xf] %v2458
      %2491 = vst [vmem:[#allocation3 + $0x3c] sm:$0xf] %v2459
      %2492 = vst [vmem:[#allocation3 + $0x60] sm:$0xf] %v2460
      %2493 = vst [vmem:[#allocation3 + $0x84] sm:$0xf] %v2461
      %2494 = vst [vmem:[#allocation3 + $0xa8] sm:$0xf] %v2462
      %2495 = vst [vmem:[#allocation3 + $0xcc] sm:$0xf] %v2463
      %2496 = vst [vmem:[#allocation3 + $0xf0] sm:$0xf] %v2464
      %2497 = vst [vmem:[#allocation3 + $0x114] sm:$0xf] %v2465
      %2498 = vst [vmem:[#allocation3 + $0x138] sm:$0xf] %v2466
      %2499 = vst [vmem:[#allocation3 + $0x15c] sm:$0xf] %v2467
      %2500 = vst [vmem:[#allocation3 + $0x180] sm:$0xf] %v2468
      %2501 = vst [vmem:[#allocation3 + $0x1a4] sm:$0xf] %v2469
      %2502 = vst [vmem:[#allocation3 + $0x1c8] sm:$0xf] %v2470
      %2503 = vst [vmem:[#allocation3 + $0x1ec] sm:$0xf] %v2471
      %2504 = vst [vmem:[#allocation3 + $0x210] sm:$0xf] %v2472
      %2505 = vst [vmem:[#allocation3 + $0x234] sm:$0xf] %v2473
      %2506 = vst [vmem:[#allocation3 + $0x258] sm:$0xf] %v2474
      %2507 = vst [vmem:[#allocation3 + $0x27c] sm:$0xf] %v2475
      %2508 = vst [vmem:[#allocation3 + $0x2a0] sm:$0xf] %v2476
      %2509 = vst [vmem:[#allocation3 + $0x2c4] sm:$0xf] %v2477
      %2510 = vst [vmem:[#allocation3 + $0x2e8] sm:$0xf] %v2478
      %2511 = vst [vmem:[#allocation3 + $0x30c] sm:$0xf] %v2479
      %2512 = vst [vmem:[#allocation3 + $0x330] sm:$0xf] %v2480
      %2513 = vst [vmem:[#allocation3 + $0x354] sm:$0xf] %v2481
      %2514 = vst [vmem:[#allocation3 + $0x378] sm:$0xf] %v2482
      %2515 = vst [vmem:[#allocation3 + $0x39c] sm:$0xf] %v2483
      %2516 = vst [vmem:[#allocation3 + $0x3c0] sm:$0xf] %v2484
      %2517 = vst [vmem:[#allocation3 + $0x3e4] sm:$0xf] %v2485
      %2518 = vst [vmem:[#allocation3 + $0x408] sm:$0xf] %v2486
      %2519 = vst [vmem:[#allocation3 + $0x42c] sm:$0xf] %v2487
      %2520 = vst [vmem:[#allocation3 + $0x450] sm:$0xf] %v2488
      %2521 = vst [vmem:[#allocation3 + $0x474] sm:$0xf] %v2489
      %v2522 = vld [vmem:[%s2457] sm:$0xf]
      %v2523 = vld [vmem:[%s2457 + $0x4] sm:$0xf]
      %v2524 = vld [vmem:[%s2457 + $0x8] sm:$0x1]
      %v2525 = vld [vmem:[%s2457 + $0xc] sm:$0xf]
      %v2526 = vld [vmem:[%s2457 + $0x10] sm:$0xf]
      %v2527 = vld [vmem:[%s2457 + $0x14] sm:$0x1]
      %v2528 = vld [vmem:[%s2457 + $0x18] sm:$0xf]
      %v2529 = vld [vmem:[%s2457 + $0x1c] sm:$0xf]
      %v2530 = vld [vmem:[%s2457 + $0x20] sm:$0x1]
      %v2531 = vld [vmem:[%s2457 + $0x24] sm:$0xf]
      %v2532 = vld [vmem:[%s2457 + $0x28] sm:$0xf]
      %v2533 = vld [vmem:[%s2457 + $0x2c] sm:$0x1]
      %v2534 = vld [vmem:[%s2457 + $0x30] sm:$0xf]
      %v2535 = vld [vmem:[%s2457 + $0x34] sm:$0xf]
      %v2536 = vld [vmem:[%s2457 + $0x38] sm:$0x1]
      %v2537 = vld [vmem:[%s2457 + $0x3c] sm:$0xf]
      %v2538 = vld [vmem:[%s2457 + $0x40] sm:$0xf]
      %v2539 = vld [vmem:[%s2457 + $0x44] sm:$0x1]
      %v2540 = vld [vmem:[%s2457 + $0x48] sm:$0xf]
      %v2541 = vld [vmem:[%s2457 + $0x4c] sm:$0xf]
      %v2542 = vld [vmem:[%s2457 + $0x50] sm:$0x1]
      %v2543 = vld [vmem:[%s2457 + $0x54] sm:$0xf]
      %v2544 = vld [vmem:[%s2457 + $0x58] sm:$0xf]
      %v2545 = vld [vmem:[%s2457 + $0x5c] sm:$0x1]
      %v2546 = vld [vmem:[%s2457 + $0x60] sm:$0xf]
      %v2547 = vld [vmem:[%s2457 + $0x64] sm:$0xf]
      %v2548 = vld [vmem:[%s2457 + $0x68] sm:$0x1]
      %v2549 = vld [vmem:[%s2457 + $0x6c] sm:$0xf]
      %v2550 = vld [vmem:[%s2457 + $0x70] sm:$0xf]
      %v2551 = vld [vmem:[%s2457 + $0x74] sm:$0x1]
      %v2552 = vld [vmem:[%s2457 + $0x78] sm:$0xf]
      %v2553 = vld [vmem:[%s2457 + $0x7c] sm:$0xf]
      %v2554 = vld [vmem:[%s2457 + $0x80] sm:$0x1]
      %v2555 = vld [vmem:[%s2457 + $0x84] sm:$0xf]
      %v2556 = vld [vmem:[%s2457 + $0x88] sm:$0xf]
      %v2557 = vld [vmem:[%s2457 + $0x8c] sm:$0x1]
      %v2558 = vld [vmem:[%s2457 + $0x90] sm:$0xf]
      %v2559 = vld [vmem:[%s2457 + $0x94] sm:$0xf]
      %v2560 = vld [vmem:[%s2457 + $0x98] sm:$0x1]
      %v2561 = vld [vmem:[%s2457 + $0x9c] sm:$0xf]
      %v2562 = vld [vmem:[%s2457 + $0xa0] sm:$0xf]
      %v2563 = vld [vmem:[%s2457 + $0xa4] sm:$0x1]
      %v2564 = vld [vmem:[%s2457 + $0xa8] sm:$0xf]
      %v2565 = vld [vmem:[%s2457 + $0xac] sm:$0xf]
      %v2566 = vld [vmem:[%s2457 + $0xb0] sm:$0x1]
      %v2567 = vld [vmem:[%s2457 + $0xb4] sm:$0xf]
      %v2568 = vld [vmem:[%s2457 + $0xb8] sm:$0xf]
      %v2569 = vld [vmem:[%s2457 + $0xbc] sm:$0x1]
      %v2571 = vshrl.u32 %v2522, 16
      %v2573 = vrot.slane %v2571, 4
      %v2574 = vshll.u32 %v2522, 16
      %v2576 = vrot.slane %v2574, 5
      %v2577 = vor.u32 %v2573, %v2576
      %v2578 = vrot.slane %v2577, 4
      %v2580 = vshll.u32 %v2523, 16
      %v2582 = vrot.slane %v2580, 5
      %v2583 = vsel %vm901, %v2578, %v2582
      %v2584 = vshrl.u32 %v2523, 16
      %v2586 = vrot.slane %v2584, 4
      %v2587 = vor.u32 %v2586, %v2582
      %v2588 = vrot.slane %v2587, 4
      %v2590 = vshll.u32 %v2524, 16
      %v2592 = vrot.slane %v2590, 5
      %v2593 = vsel %vm901, %v2588, %v2592
      %v2595 = vshrl.u32 %v2525, 16
      %v2597 = vrot.slane %v2595, 4
      %v2598 = vshll.u32 %v2525, 16
      %v2600 = vrot.slane %v2598, 5
      %v2601 = vor.u32 %v2597, %v2600
      %v2602 = vrot.slane %v2601, 4
      %v2604 = vshll.u32 %v2526, 16
      %v2606 = vrot.slane %v2604, 5
      %v2607 = vsel %vm901, %v2602, %v2606
      %v2608 = vshrl.u32 %v2526, 16
      %v2610 = vrot.slane %v2608, 4
      %v2611 = vor.u32 %v2610, %v2606
      %v2612 = vrot.slane %v2611, 4
      %v2614 = vshll.u32 %v2527, 16
      %v2616 = vrot.slane %v2614, 5
      %v2617 = vsel %vm901, %v2612, %v2616
      %v2619 = vshrl.u32 %v2528, 16
      %v2621 = vrot.slane %v2619, 4
      %v2622 = vshll.u32 %v2528, 16
      %v2624 = vrot.slane %v2622, 5
      %v2625 = vor.u32 %v2621, %v2624
      %v2626 = vrot.slane %v2625, 4
      %v2628 = vshll.u32 %v2529, 16
      %v2630 = vrot.slane %v2628, 5
      %v2631 = vsel %vm901, %v2626, %v2630
      %v2632 = vshrl.u32 %v2529, 16
      %v2634 = vrot.slane %v2632, 4
      %v2635 = vor.u32 %v2634, %v2630
      %v2636 = vrot.slane %v2635, 4
      %v2638 = vshll.u32 %v2530, 16
      %v2640 = vrot.slane %v2638, 5
      %v2641 = vsel %vm901, %v2636, %v2640
      %v2643 = vshrl.u32 %v2531, 16
      %v2645 = vrot.slane %v2643, 4
      %v2646 = vshll.u32 %v2531, 16
      %v2648 = vrot.slane %v2646, 5
      %v2649 = vor.u32 %v2645, %v2648
      %v2650 = vrot.slane %v2649, 4
      %v2652 = vshll.u32 %v2532, 16
      %v2654 = vrot.slane %v2652, 5
      %v2655 = vsel %vm901, %v2650, %v2654
      %v2656 = vshrl.u32 %v2532, 16
      %v2658 = vrot.slane %v2656, 4
      %v2659 = vor.u32 %v2658, %v2654
      %v2660 = vrot.slane %v2659, 4
      %v2662 = vshll.u32 %v2533, 16
      %v2664 = vrot.slane %v2662, 5
      %v2665 = vsel %vm901, %v2660, %v2664
      %v2667 = vshrl.u32 %v2534, 16
      %v2669 = vrot.slane %v2667, 4
      %v2670 = vshll.u32 %v2534, 16
      %v2672 = vrot.slane %v2670, 5
      %v2673 = vor.u32 %v2669, %v2672
      %v2674 = vrot.slane %v2673, 4
      %v2676 = vshll.u32 %v2535, 16
      %v2678 = vrot.slane %v2676, 5
      %v2679 = vsel %vm901, %v2674, %v2678
      %v2680 = vshrl.u32 %v2535, 16
      %v2682 = vrot.slane %v2680, 4
      %v2683 = vor.u32 %v2682, %v2678
      %v2684 = vrot.slane %v2683, 4
      %v2686 = vshll.u32 %v2536, 16
      %v2688 = vrot.slane %v2686, 5
      %v2689 = vsel %vm901, %v2684, %v2688
      %v2691 = vshrl.u32 %v2537, 16
      %v2693 = vrot.slane %v2691, 4
      %v2694 = vshll.u32 %v2537, 16
      %v2696 = vrot.slane %v2694, 5
      %v2697 = vor.u32 %v2693, %v2696
      %v2698 = vrot.slane %v2697, 4
      %v2700 = vshll.u32 %v2538, 16
      %v2702 = vrot.slane %v2700, 5
      %v2703 = vsel %vm901, %v2698, %v2702
      %v2704 = vshrl.u32 %v2538, 16
      %v2706 = vrot.slane %v2704, 4
      %v2707 = vor.u32 %v2706, %v2702
      %v2708 = vrot.slane %v2707, 4
      %v2710 = vshll.u32 %v2539, 16
      %v2712 = vrot.slane %v2710, 5
      %v2713 = vsel %vm901, %v2708, %v2712
      %v2715 = vshrl.u32 %v2540, 16
      %v2717 = vrot.slane %v2715, 4
      %v2718 = vshll.u32 %v2540, 16
      %v2720 = vrot.slane %v2718, 5
      %v2721 = vor.u32 %v2717, %v2720
      %v2722 = vrot.slane %v2721, 4
      %v2724 = vshll.u32 %v2541, 16
      %v2726 = vrot.slane %v2724, 5
      %v2727 = vsel %vm901, %v2722, %v2726
      %v2728 = vshrl.u32 %v2541, 16
      %v2730 = vrot.slane %v2728, 4
      %v2731 = vor.u32 %v2730, %v2726
      %v2732 = vrot.slane %v2731, 4
      %v2734 = vshll.u32 %v2542, 16
      %v2736 = vrot.slane %v2734, 5
      %v2737 = vsel %vm901, %v2732, %v2736
      %v2739 = vshrl.u32 %v2543, 16
      %v2741 = vrot.slane %v2739, 4
      %v2742 = vshll.u32 %v2543, 16
      %v2744 = vrot.slane %v2742, 5
      %v2745 = vor.u32 %v2741, %v2744
      %v2746 = vrot.slane %v2745, 4
      %v2748 = vshll.u32 %v2544, 16
      %v2750 = vrot.slane %v2748, 5
      %v2751 = vsel %vm901, %v2746, %v2750
      %v2752 = vshrl.u32 %v2544, 16
      %v2754 = vrot.slane %v2752, 4
      %v2755 = vor.u32 %v2754, %v2750
      %v2756 = vrot.slane %v2755, 4
      %v2758 = vshll.u32 %v2545, 16
      %v2760 = vrot.slane %v2758, 5
      %v2761 = vsel %vm901, %v2756, %v2760
      %v2763 = vshrl.u32 %v2546, 16
      %v2765 = vrot.slane %v2763, 4
      %v2766 = vshll.u32 %v2546, 16
      %v2768 = vrot.slane %v2766, 5
      %v2769 = vor.u32 %v2765, %v2768
      %v2770 = vrot.slane %v2769, 4
      %v2772 = vshll.u32 %v2547, 16
      %v2774 = vrot.slane %v2772, 5
      %v2775 = vsel %vm901, %v2770, %v2774
      %v2776 = vshrl.u32 %v2547, 16
      %v2778 = vrot.slane %v2776, 4
      %v2779 = vor.u32 %v2778, %v2774
      %v2780 = vrot.slane %v2779, 4
      %v2782 = vshll.u32 %v2548, 16
      %v2784 = vrot.slane %v2782, 5
      %v2785 = vsel %vm901, %v2780, %v2784
      %v2787 = vshrl.u32 %v2549, 16
      %v2789 = vrot.slane %v2787, 4
      %v2790 = vshll.u32 %v2549, 16
      %v2792 = vrot.slane %v2790, 5
      %v2793 = vor.u32 %v2789, %v2792
      %v2794 = vrot.slane %v2793, 4
      %v2796 = vshll.u32 %v2550, 16
      %v2798 = vrot.slane %v2796, 5
      %v2799 = vsel %vm901, %v2794, %v2798
      %v2800 = vshrl.u32 %v2550, 16
      %v2802 = vrot.slane %v2800, 4
      %v2803 = vor.u32 %v2802, %v2798
      %v2804 = vrot.slane %v2803, 4
      %v2806 = vshll.u32 %v2551, 16
      %v2808 = vrot.slane %v2806, 5
      %v2809 = vsel %vm901, %v2804, %v2808
      %v2811 = vshrl.u32 %v2552, 16
      %v2813 = vrot.slane %v2811, 4
      %v2814 = vshll.u32 %v2552, 16
      %v2816 = vrot.slane %v2814, 5
      %v2817 = vor.u32 %v2813, %v2816
      %v2818 = vrot.slane %v2817, 4
      %v2820 = vshll.u32 %v2553, 16
      %v2822 = vrot.slane %v2820, 5
      %v2823 = vsel %vm901, %v2818, %v2822
      %v2824 = vshrl.u32 %v2553, 16
      %v2826 = vrot.slane %v2824, 4
      %v2827 = vor.u32 %v2826, %v2822
      %v2828 = vrot.slane %v2827, 4
      %v2830 = vshll.u32 %v2554, 16
      %v2832 = vrot.slane %v2830, 5
      %v2833 = vsel %vm901, %v2828, %v2832
      %v2835 = vshrl.u32 %v2555, 16
      %v2837 = vrot.slane %v2835, 4
      %v2838 = vshll.u32 %v2555, 16
      %v2840 = vrot.slane %v2838, 5
      %v2841 = vor.u32 %v2837, %v2840
      %v2842 = vrot.slane %v2841, 4
      %v2844 = vshll.u32 %v2556, 16
      %v2846 = vrot.slane %v2844, 5
      %v2847 = vsel %vm901, %v2842, %v2846
      %v2848 = vshrl.u32 %v2556, 16
      %v2850 = vrot.slane %v2848, 4
      %v2851 = vor.u32 %v2850, %v2846
      %v2852 = vrot.slane %v2851, 4
      %v2854 = vshll.u32 %v2557, 16
      %v2856 = vrot.slane %v2854, 5
      %v2857 = vsel %vm901, %v2852, %v2856
      %v2859 = vshrl.u32 %v2558, 16
      %v2861 = vrot.slane %v2859, 4
      %v2862 = vshll.u32 %v2558, 16
      %v2864 = vrot.slane %v2862, 5
      %v2865 = vor.u32 %v2861, %v2864
      %v2866 = vrot.slane %v2865, 4
      %v2868 = vshll.u32 %v2559, 16
      %v2870 = vrot.slane %v2868, 5
      %v2871 = vsel %vm901, %v2866, %v2870
      %v2872 = vshrl.u32 %v2559, 16
      %v2874 = vrot.slane %v2872, 4
      %v2875 = vor.u32 %v2874, %v2870
      %v2876 = vrot.slane %v2875, 4
      %v2878 = vshll.u32 %v2560, 16
      %v2880 = vrot.slane %v2878, 5
      %v2881 = vsel %vm901, %v2876, %v2880
      %v2883 = vshrl.u32 %v2561, 16
      %v2885 = vrot.slane %v2883, 4
      %v2886 = vshll.u32 %v2561, 16
      %v2888 = vrot.slane %v2886, 5
      %v2889 = vor.u32 %v2885, %v2888
      %v2890 = vrot.slane %v2889, 4
      %v2892 = vshll.u32 %v2562, 16
      %v2894 = vrot.slane %v2892, 5
      %v2895 = vsel %vm901, %v2890, %v2894
      %v2896 = vshrl.u32 %v2562, 16
      %v2898 = vrot.slane %v2896, 4
      %v2899 = vor.u32 %v2898, %v2894
      %v2900 = vrot.slane %v2899, 4
      %v2902 = vshll.u32 %v2563, 16
      %v2904 = vrot.slane %v2902, 5
      %v2905 = vsel %vm901, %v2900, %v2904
      %v2907 = vshrl.u32 %v2564, 16
      %v2909 = vrot.slane %v2907, 4
      %v2910 = vshll.u32 %v2564, 16
      %v2912 = vrot.slane %v2910, 5
      %v2913 = vor.u32 %v2909, %v2912
      %v2914 = vrot.slane %v2913, 4
      %v2916 = vshll.u32 %v2565, 16
      %v2918 = vrot.slane %v2916, 5
      %v2919 = vsel %vm901, %v2914, %v2918
      %v2920 = vshrl.u32 %v2565, 16
      %v2922 = vrot.slane %v2920, 4
      %v2923 = vor.u32 %v2922, %v2918
      %v2924 = vrot.slane %v2923, 4
      %v2926 = vshll.u32 %v2566, 16
      %v2928 = vrot.slane %v2926, 5
      %v2929 = vsel %vm901, %v2924, %v2928
      %v2931 = vshrl.u32 %v2567, 16
      %v2933 = vrot.slane %v2931, 4
      %v2934 = vshll.u32 %v2567, 16
      %v2936 = vrot.slane %v2934, 5
      %v2937 = vor.u32 %v2933, %v2936
      %v2938 = vrot.slane %v2937, 4
      %v2940 = vshll.u32 %v2568, 16
      %v2942 = vrot.slane %v2940, 5
      %v2943 = vsel %vm901, %v2938, %v2942
      %v2944 = vshrl.u32 %v2568, 16
      %v2946 = vrot.slane %v2944, 4
      %v2947 = vor.u32 %v2946, %v2942
      %v2948 = vrot.slane %v2947, 4
      %v2950 = vshll.u32 %v2569, 16
      %v2952 = vrot.slane %v2950, 5
      %v2953 = vsel %vm901, %v2948, %v2952
      %2986 = vst [vmem:[#allocation3 + $0x1c] sm:$0xf] %v2583
      %2987 = vst [vmem:[#allocation3 + $0x40] sm:$0xf] %v2593
      %2988 = vst [vmem:[#allocation3 + $0x64] sm:$0xf] %v2607
      %2989 = vst [vmem:[#allocation3 + $0x88] sm:$0xf] %v2617
      %2990 = vst [vmem:[#allocation3 + $0xac] sm:$0xf] %v2631
      %2991 = vst [vmem:[#allocation3 + $0xd0] sm:$0xf] %v2641
      %2992 = vst [vmem:[#allocation3 + $0xf4] sm:$0xf] %v2655
      %2993 = vst [vmem:[#allocation3 + $0x118] sm:$0xf] %v2665
      %2994 = vst [vmem:[#allocation3 + $0x13c] sm:$0xf] %v2679
      %2995 = vst [vmem:[#allocation3 + $0x160] sm:$0xf] %v2689
      %2996 = vst [vmem:[#allocation3 + $0x184] sm:$0xf] %v2703
      %2997 = vst [vmem:[#allocation3 + $0x1a8] sm:$0xf] %v2713
      %2998 = vst [vmem:[#allocation3 + $0x1cc] sm:$0xf] %v2727
      %2999 = vst [vmem:[#allocation3 + $0x1f0] sm:$0xf] %v2737
      %3000 = vst [vmem:[#allocation3 + $0x214] sm:$0xf] %v2751
      %3001 = vst [vmem:[#allocation3 + $0x238] sm:$0xf] %v2761
      %3002 = vst [vmem:[#allocation3 + $0x25c] sm:$0xf] %v2775
      %3003 = vst [vmem:[#allocation3 + $0x280] sm:$0xf] %v2785
      %3004 = vst [vmem:[#allocation3 + $0x2a4] sm:$0xf] %v2799
      %3005 = vst [vmem:[#allocation3 + $0x2c8] sm:$0xf] %v2809
      %3006 = vst [vmem:[#allocation3 + $0x2ec] sm:$0xf] %v2823
      %3007 = vst [vmem:[#allocation3 + $0x310] sm:$0xf] %v2833
      %3008 = vst [vmem:[#allocation3 + $0x334] sm:$0xf] %v2847
      %3009 = vst [vmem:[#allocation3 + $0x358] sm:$0xf] %v2857
      %3010 = vst [vmem:[#allocation3 + $0x37c] sm:$0xf] %v2871
      %3011 = vst [vmem:[#allocation3 + $0x3a0] sm:$0xf] %v2881
      %3012 = vst [vmem:[#allocation3 + $0x3c4] sm:$0xf] %v2895
      %3013 = vst [vmem:[#allocation3 + $0x3e8] sm:$0xf] %v2905
      %3014 = vst [vmem:[#allocation3 + $0x40c] sm:$0xf] %v2919
      %3015 = vst [vmem:[#allocation3 + $0x430] sm:$0xf] %v2929
      %3016 = vst [vmem:[#allocation3 + $0x454] sm:$0xf] %v2943
      %3017 = vst [vmem:[#allocation3 + $0x478] sm:$0xf] %v2953
      %v3018 = vld [vmem:[%s2457] sm:$0xe]
      %v3019 = vld [vmem:[%s2457 + $0x4] sm:$0xf]
      %v3020 = vld [vmem:[%s2457 + $0x8] sm:$0x1]
      %v3021 = vld [vmem:[%s2457 + $0xc] sm:$0xe]
      %v3022 = vld [vmem:[%s2457 + $0x10] sm:$0xf]
      %v3023 = vld [vmem:[%s2457 + $0x14] sm:$0x1]
      %v3024 = vld [vmem:[%s2457 + $0x18] sm:$0xe]
      %v3025 = vld [vmem:[%s2457 + $0x1c] sm:$0xf]
      %v3026 = vld [vmem:[%s2457 + $0x20] sm:$0x1]
      %v3027 = vld [vmem:[%s2457 + $0x24] sm:$0xe]
      %v3028 = vld [vmem:[%s2457 + $0x28] sm:$0xf]
      %v3029 = vld [vmem:[%s2457 + $0x2c] sm:$0x1]
      %v3030 = vld [vmem:[%s2457 + $0x30] sm:$0xe]
      %v3031 = vld [vmem:[%s2457 + $0x34] sm:$0xf]
      %v3032 = vld [vmem:[%s2457 + $0x38] sm:$0x1]
      %v3033 = vld [vmem:[%s2457 + $0x3c] sm:$0xe]
      %v3034 = vld [vmem:[%s2457 + $0x40] sm:$0xf]
      %v3035 = vld [vmem:[%s2457 + $0x44] sm:$0x1]
      %v3036 = vld [vmem:[%s2457 + $0x48] sm:$0xe]
      %v3037 = vld [vmem:[%s2457 + $0x4c] sm:$0xf]
      %v3038 = vld [vmem:[%s2457 + $0x50] sm:$0x1]
      %v3039 = vld [vmem:[%s2457 + $0x54] sm:$0xe]
      %v3040 = vld [vmem:[%s2457 + $0x58] sm:$0xf]
      %v3041 = vld [vmem:[%s2457 + $0x5c] sm:$0x1]
      %v3042 = vld [vmem:[%s2457 + $0x60] sm:$0xe]
      %v3043 = vld [vmem:[%s2457 + $0x64] sm:$0xf]
      %v3044 = vld [vmem:[%s2457 + $0x68] sm:$0x1]
      %v3045 = vld [vmem:[%s2457 + $0x6c] sm:$0xe]
      %v3046 = vld [vmem:[%s2457 + $0x70] sm:$0xf]
      %v3047 = vld [vmem:[%s2457 + $0x74] sm:$0x1]
      %v3048 = vld [vmem:[%s2457 + $0x78] sm:$0xe]
      %v3049 = vld [vmem:[%s2457 + $0x7c] sm:$0xf]
      %v3050 = vld [vmem:[%s2457 + $0x80] sm:$0x1]
      %v3051 = vld [vmem:[%s2457 + $0x84] sm:$0xe]
      %v3052 = vld [vmem:[%s2457 + $0x88] sm:$0xf]
      %v3053 = vld [vmem:[%s2457 + $0x8c] sm:$0x1]
      %v3054 = vld [vmem:[%s2457 + $0x90] sm:$0xe]
      %v3055 = vld [vmem:[%s2457 + $0x94] sm:$0xf]
      %v3056 = vld [vmem:[%s2457 + $0x98] sm:$0x1]
      %v3057 = vld [vmem:[%s2457 + $0x9c] sm:$0xe]
      %v3058 = vld [vmem:[%s2457 + $0xa0] sm:$0xf]
      %v3059 = vld [vmem:[%s2457 + $0xa4] sm:$0x1]
      %v3060 = vld [vmem:[%s2457 + $0xa8] sm:$0xe]
      %v3061 = vld [vmem:[%s2457 + $0xac] sm:$0xf]
      %v3062 = vld [vmem:[%s2457 + $0xb0] sm:$0x1]
      %v3063 = vld [vmem:[%s2457 + $0xb4] sm:$0xe]
      %v3064 = vld [vmem:[%s2457 + $0xb8] sm:$0xf]
      %v3065 = vld [vmem:[%s2457 + $0xbc] sm:$0x1]
      %v3114 = vrot.slane %v3018, 5
      %v3115 = vrot.slane %v3114, 4
      %v3116 = vrot.slane %v3019, 5
      %v3117 = vsel %vm1448, %v3115, %v3116
      %v3118 = vrot.slane %v3116, 4
      %v3119 = vrot.slane %v3020, 5
      %v3120 = vsel %vm1448, %v3118, %v3119
      %v3121 = vrot.slane %v3021, 5
      %v3122 = vrot.slane %v3121, 4
      %v3123 = vrot.slane %v3022, 5
      %v3124 = vsel %vm1448, %v3122, %v3123
      %v3125 = vrot.slane %v3123, 4
      %v3126 = vrot.slane %v3023, 5
      %v3127 = vsel %vm1448, %v3125, %v3126
      %v3128 = vrot.slane %v3024, 5
      %v3129 = vrot.slane %v3128, 4
      %v3130 = vrot.slane %v3025, 5
      %v3131 = vsel %vm1448, %v3129, %v3130
      %v3132 = vrot.slane %v3130, 4
      %v3133 = vrot.slane %v3026, 5
      %v3134 = vsel %vm1448, %v3132, %v3133
      %v3135 = vrot.slane %v3027, 5
      %v3136 = vrot.slane %v3135, 4
      %v3137 = vrot.slane %v3028, 5
      %v3138 = vsel %vm1448, %v3136, %v3137
      %v3139 = vrot.slane %v3137, 4
      %v3140 = vrot.slane %v3029, 5
      %v3141 = vsel %vm1448, %v3139, %v3140
      %v3142 = vrot.slane %v3030, 5
      %v3143 = vrot.slane %v3142, 4
      %v3144 = vrot.slane %v3031, 5
      %v3145 = vsel %vm1448, %v3143, %v3144
      %v3146 = vrot.slane %v3144, 4
      %v3147 = vrot.slane %v3032, 5
      %v3148 = vsel %vm1448, %v3146, %v3147
      %v3149 = vrot.slane %v3033, 5
      %v3150 = vrot.slane %v3149, 4
      %v3151 = vrot.slane %v3034, 5
      %v3152 = vsel %vm1448, %v3150, %v3151
      %v3153 = vrot.slane %v3151, 4
      %v3154 = vrot.slane %v3035, 5
      %v3155 = vsel %vm1448, %v3153, %v3154
      %v3156 = vrot.slane %v3036, 5
      %v3157 = vrot.slane %v3156, 4
      %v3158 = vrot.slane %v3037, 5
      %v3159 = vsel %vm1448, %v3157, %v3158
      %v3160 = vrot.slane %v3158, 4
      %v3161 = vrot.slane %v3038, 5
      %v3162 = vsel %vm1448, %v3160, %v3161
      %v3163 = vrot.slane %v3039, 5
      %v3164 = vrot.slane %v3163, 4
      %v3165 = vrot.slane %v3040, 5
      %v3166 = vsel %vm1448, %v3164, %v3165
      %v3167 = vrot.slane %v3165, 4
      %v3168 = vrot.slane %v3041, 5
      %v3169 = vsel %vm1448, %v3167, %v3168
      %v3170 = vrot.slane %v3042, 5
      %v3171 = vrot.slane %v3170, 4
      %v3172 = vrot.slane %v3043, 5
      %v3173 = vsel %vm1448, %v3171, %v3172
      %v3174 = vrot.slane %v3172, 4
      %v3175 = vrot.slane %v3044, 5
      %v3176 = vsel %vm1448, %v3174, %v3175
      %v3177 = vrot.slane %v3045, 5
      %v3178 = vrot.slane %v3177, 4
      %v3179 = vrot.slane %v3046, 5
      %v3180 = vsel %vm1448, %v3178, %v3179
      %v3181 = vrot.slane %v3179, 4
      %v3182 = vrot.slane %v3047, 5
      %v3183 = vsel %vm1448, %v3181, %v3182
      %v3184 = vrot.slane %v3048, 5
      %v3185 = vrot.slane %v3184, 4
      %v3186 = vrot.slane %v3049, 5
      %v3187 = vsel %vm1448, %v3185, %v3186
      %v3188 = vrot.slane %v3186, 4
      %v3189 = vrot.slane %v3050, 5
      %v3190 = vsel %vm1448, %v3188, %v3189
      %v3191 = vrot.slane %v3051, 5
      %v3192 = vrot.slane %v3191, 4
      %v3193 = vrot.slane %v3052, 5
      %v3194 = vsel %vm1448, %v3192, %v3193
      %v3195 = vrot.slane %v3193, 4
      %v3196 = vrot.slane %v3053, 5
      %v3197 = vsel %vm1448, %v3195, %v3196
      %v3198 = vrot.slane %v3054, 5
      %v3199 = vrot.slane %v3198, 4
      %v3200 = vrot.slane %v3055, 5
      %v3201 = vsel %vm1448, %v3199, %v3200
      %v3202 = vrot.slane %v3200, 4
      %v3203 = vrot.slane %v3056, 5
      %v3204 = vsel %vm1448, %v3202, %v3203
      %v3205 = vrot.slane %v3057, 5
      %v3206 = vrot.slane %v3205, 4
      %v3207 = vrot.slane %v3058, 5
      %v3208 = vsel %vm1448, %v3206, %v3207
      %v3209 = vrot.slane %v3207, 4
      %v3210 = vrot.slane %v3059, 5
      %v3211 = vsel %vm1448, %v3209, %v3210
      %v3212 = vrot.slane %v3060, 5
      %v3213 = vrot.slane %v3212, 4
      %v3214 = vrot.slane %v3061, 5
      %v3215 = vsel %vm1448, %v3213, %v3214
      %v3216 = vrot.slane %v3214, 4
      %v3217 = vrot.slane %v3062, 5
      %v3218 = vsel %vm1448, %v3216, %v3217
      %v3219 = vrot.slane %v3063, 5
      %v3220 = vrot.slane %v3219, 4
      %v3221 = vrot.slane %v3064, 5
      %v3222 = vsel %vm1448, %v3220, %v3221
      %v3223 = vrot.slane %v3221, 4
      %v3224 = vrot.slane %v3065, 5
      %v3225 = vsel %vm1448, %v3223, %v3224
      %3258 = vst [vmem:[#allocation3 + $0x20] sm:$0xf] %v3117
      %3259 = vst [vmem:[#allocation3 + $0x44] sm:$0xf] %v3120
      %3260 = vst [vmem:[#allocation3 + $0x68] sm:$0xf] %v3124
      %3261 = vst [vmem:[#allocation3 + $0x8c] sm:$0xf] %v3127
      %3262 = vst [vmem:[#allocation3 + $0xb0] sm:$0xf] %v3131
      %3263 = vst [vmem:[#allocation3 + $0xd4] sm:$0xf] %v3134
      %3264 = vst [vmem:[#allocation3 + $0xf8] sm:$0xf] %v3138
      %3265 = vst [vmem:[#allocation3 + $0x11c] sm:$0xf] %v3141
      %3266 = vst [vmem:[#allocation3 + $0x140] sm:$0xf] %v3145
      %3267 = vst [vmem:[#allocation3 + $0x164] sm:$0xf] %v3148
      %3268 = vst [vmem:[#allocation3 + $0x188] sm:$0xf] %v3152
      %3269 = vst [vmem:[#allocation3 + $0x1ac] sm:$0xf] %v3155
      %3270 = vst [vmem:[#allocation3 + $0x1d0] sm:$0xf] %v3159
      %3271 = vst [vmem:[#allocation3 + $0x1f4] sm:$0xf] %v3162
      %3272 = vst [vmem:[#allocation3 + $0x218] sm:$0xf] %v3166
      %3273 = vst [vmem:[#allocation3 + $0x23c] sm:$0xf] %v3169
      %3274 = vst [vmem:[#allocation3 + $0x260] sm:$0xf] %v3173
      %3275 = vst [vmem:[#allocation3 + $0x284] sm:$0xf] %v3176
      %3276 = vst [vmem:[#allocation3 + $0x2a8] sm:$0xf] %v3180
      %3277 = vst [vmem:[#allocation3 + $0x2cc] sm:$0xf] %v3183
      %3278 = vst [vmem:[#allocation3 + $0x2f0] sm:$0xf] %v3187
      %3279 = vst [vmem:[#allocation3 + $0x314] sm:$0xf] %v3190
      %3280 = vst [vmem:[#allocation3 + $0x338] sm:$0xf] %v3194
      %3281 = vst [vmem:[#allocation3 + $0x35c] sm:$0xf] %v3197
      %3282 = vst [vmem:[#allocation3 + $0x380] sm:$0xf] %v3201
      %3283 = vst [vmem:[#allocation3 + $0x3a4] sm:$0xf] %v3204
      %3284 = vst [vmem:[#allocation3 + $0x3c8] sm:$0xf] %v3208
      %3285 = vst [vmem:[#allocation3 + $0x3ec] sm:$0xf] %v3211
      %3286 = vst [vmem:[#allocation3 + $0x410] sm:$0xf] %v3215
      %3287 = vst [vmem:[#allocation3 + $0x434] sm:$0xf] %v3218
      %3288 = vst [vmem:[#allocation3 + $0x458] sm:$0xf] %v3222
      %3289 = vst [vmem:[#allocation3 + $0x47c] sm:$0xf] %v3225
      %v3290 = vld [vmem:[#allocation3] sm:$0xff]
      %v3291 = vld [vmem:[#allocation3 + $0x8] sm:$0xff]
      %v3292 = vld [vmem:[#allocation3 + $0x10] sm:$0xff]
      %v3293 = vld [vmem:[#allocation3 + $0x18] sm:$0xff]
      %v3294 = vld [vmem:[#allocation3 + $0x20] sm:$0xf]
      %v3295 = vld [vmem:[#allocation3 + $0x24] sm:$0xff]
      %v3296 = vld [vmem:[#allocation3 + $0x2c] sm:$0xff]
      %v3297 = vld [vmem:[#allocation3 + $0x34] sm:$0xff]
      %v3298 = vld [vmem:[#allocation3 + $0x3c] sm:$0xff]
      %v3299 = vld [vmem:[#allocation3 + $0x44] sm:$0xf]
      %v3300 = vld [vmem:[#allocation3 + $0x48] sm:$0xff]
      %v3301 = vld [vmem:[#allocation3 + $0x50] sm:$0xff]
      %v3302 = vld [vmem:[#allocation3 + $0x58] sm:$0xff]
      %v3303 = vld [vmem:[#allocation3 + $0x60] sm:$0xff]
      %v3304 = vld [vmem:[#allocation3 + $0x68] sm:$0xf]
      %v3305 = vld [vmem:[#allocation3 + $0x6c] sm:$0xff]
      %v3306 = vld [vmem:[#allocation3 + $0x74] sm:$0xff]
      %v3307 = vld [vmem:[#allocation3 + $0x7c] sm:$0xff]
      %v3308 = vld [vmem:[#allocation3 + $0x84] sm:$0xff]
      %v3309 = vld [vmem:[#allocation3 + $0x8c] sm:$0xf]
      %v3310 = vld [vmem:[#allocation3 + $0x90] sm:$0xff]
      %v3311 = vld [vmem:[#allocation3 + $0x98] sm:$0xff]
      %v3312 = vld [vmem:[#allocation3 + $0xa0] sm:$0xff]
      %v3313 = vld [vmem:[#allocation3 + $0xa8] sm:$0xff]
      %v3314 = vld [vmem:[#allocation3 + $0xb0] sm:$0xf]
      %v3315 = vld [vmem:[#allocation3 + $0xb4] sm:$0xff]
      %v3316 = vld [vmem:[#allocation3 + $0xbc] sm:$0xff]
      %v3317 = vld [vmem:[#allocation3 + $0xc4] sm:$0xff]
      %v3318 = vld [vmem:[#allocation3 + $0xcc] sm:$0xff]
      %v3319 = vld [vmem:[#allocation3 + $0xd4] sm:$0xf]
      %v3320 = vld [vmem:[#allocation3 + $0xd8] sm:$0xff]
      %v3321 = vld [vmem:[#allocation3 + $0xe0] sm:$0xff]
      %v3322 = vld [vmem:[#allocation3 + $0xe8] sm:$0xff]
      %v3323 = vld [vmem:[#allocation3 + $0xf0] sm:$0xff]
      %v3324 = vld [vmem:[#allocation3 + $0xf8] sm:$0xf]
      %v3325 = vld [vmem:[#allocation3 + $0xfc] sm:$0xff]
      %v3326 = vld [vmem:[#allocation3 + $0x104] sm:$0xff]
      %v3327 = vld [vmem:[#allocation3 + $0x10c] sm:$0xff]
      %v3328 = vld [vmem:[#allocation3 + $0x114] sm:$0xff]
      %v3329 = vld [vmem:[#allocation3 + $0x11c] sm:$0xf]
      %v3330 = vld [vmem:[#allocation3 + $0x120] sm:$0xff]
      %v3331 = vld [vmem:[#allocation3 + $0x128] sm:$0xff]
      %v3332 = vld [vmem:[#allocation3 + $0x130] sm:$0xff]
      %v3333 = vld [vmem:[#allocation3 + $0x138] sm:$0xff]
      %v3334 = vld [vmem:[#allocation3 + $0x140] sm:$0xf]
      %v3335 = vld [vmem:[#allocation3 + $0x144] sm:$0xff]
      %v3336 = vld [vmem:[#allocation3 + $0x14c] sm:$0xff]
      %v3337 = vld [vmem:[#allocation3 + $0x154] sm:$0xff]
      %v3338 = vld [vmem:[#allocation3 + $0x15c] sm:$0xff]
      %v3339 = vld [vmem:[#allocation3 + $0x164] sm:$0xf]
      %v3340 = vld [vmem:[#allocation3 + $0x168] sm:$0xff]
      %v3341 = vld [vmem:[#allocation3 + $0x170] sm:$0xff]
      %v3342 = vld [vmem:[#allocation3 + $0x178] sm:$0xff]
      %v3343 = vld [vmem:[#allocation3 + $0x180] sm:$0xff]
      %v3344 = vld [vmem:[#allocation3 + $0x188] sm:$0xf]
      %v3345 = vld [vmem:[#allocation3 + $0x18c] sm:$0xff]
      %v3346 = vld [vmem:[#allocation3 + $0x194] sm:$0xff]
      %v3347 = vld [vmem:[#allocation3 + $0x19c] sm:$0xff]
      %v3348 = vld [vmem:[#allocation3 + $0x1a4] sm:$0xff]
      %v3349 = vld [vmem:[#allocation3 + $0x1ac] sm:$0xf]
      %v3350 = vld [vmem:[#allocation3 + $0x1b0] sm:$0xff]
      %v3351 = vld [vmem:[#allocation3 + $0x1b8] sm:$0xff]
      %v3352 = vld [vmem:[#allocation3 + $0x1c0] sm:$0xff]
      %v3353 = vld [vmem:[#allocation3 + $0x1c8] sm:$0xff]
      %v3354 = vld [vmem:[#allocation3 + $0x1d0] sm:$0xf]
      %v3355 = vld [vmem:[#allocation3 + $0x1d4] sm:$0xff]
      %v3356 = vld [vmem:[#allocation3 + $0x1dc] sm:$0xff]
      %v3357 = vld [vmem:[#allocation3 + $0x1e4] sm:$0xff]
      %v3358 = vld [vmem:[#allocation3 + $0x1ec] sm:$0xff]
      %v3359 = vld [vmem:[#allocation3 + $0x1f4] sm:$0xf]
      %v3360 = vld [vmem:[#allocation3 + $0x1f8] sm:$0xff]
      %v3361 = vld [vmem:[#allocation3 + $0x200] sm:$0xff]
      %v3362 = vld [vmem:[#allocation3 + $0x208] sm:$0xff]
      %v3363 = vld [vmem:[#allocation3 + $0x210] sm:$0xff]
      %v3364 = vld [vmem:[#allocation3 + $0x218] sm:$0xf]
      %v3365 = vld [vmem:[#allocation3 + $0x21c] sm:$0xff]
      %v3366 = vld [vmem:[#allocation3 + $0x224] sm:$0xff]
      %v3367 = vld [vmem:[#allocation3 + $0x22c] sm:$0xff]
      %v3368 = vld [vmem:[#allocation3 + $0x234] sm:$0xff]
      %v3369 = vld [vmem:[#allocation3 + $0x23c] sm:$0xf]
      %v3370 = vld [vmem:[#allocation3 + $0x240] sm:$0xff]
      %v3371 = vld [vmem:[#allocation3 + $0x248] sm:$0xff]
      %v3372 = vld [vmem:[#allocation3 + $0x250] sm:$0xff]
      %v3373 = vld [vmem:[#allocation3 + $0x258] sm:$0xff]
      %v3374 = vld [vmem:[#allocation3 + $0x260] sm:$0xf]
      %v3375 = vld [vmem:[#allocation3 + $0x264] sm:$0xff]
      %v3376 = vld [vmem:[#allocation3 + $0x26c] sm:$0xff]
      %v3377 = vld [vmem:[#allocation3 + $0x274] sm:$0xff]
      %v3378 = vld [vmem:[#allocation3 + $0x27c] sm:$0xff]
      %v3379 = vld [vmem:[#allocation3 + $0x284] sm:$0xf]
      %v3380 = vld [vmem:[#allocation3 + $0x288] sm:$0xff]
      %v3381 = vld [vmem:[#allocation3 + $0x290] sm:$0xff]
      %v3382 = vld [vmem:[#allocation3 + $0x298] sm:$0xff]
      %v3383 = vld [vmem:[#allocation3 + $0x2a0] sm:$0xff]
      %v3384 = vld [vmem:[#allocation3 + $0x2a8] sm:$0xf]
      %v3385 = vld [vmem:[#allocation3 + $0x2ac] sm:$0xff]
      %v3386 = vld [vmem:[#allocation3 + $0x2b4] sm:$0xff]
      %v3387 = vld [vmem:[#allocation3 + $0x2bc] sm:$0xff]
      %v3388 = vld [vmem:[#allocation3 + $0x2c4] sm:$0xff]
      %v3389 = vld [vmem:[#allocation3 + $0x2cc] sm:$0xf]
      %v3390 = vld [vmem:[#allocation3 + $0x2d0] sm:$0xff]
      %v3391 = vld [vmem:[#allocation3 + $0x2d8] sm:$0xff]
      %v3392 = vld [vmem:[#allocation3 + $0x2e0] sm:$0xff]
      %v3393 = vld [vmem:[#allocation3 + $0x2e8] sm:$0xff]
      %v3394 = vld [vmem:[#allocation3 + $0x2f0] sm:$0xf]
      %v3395 = vld [vmem:[#allocation3 + $0x2f4] sm:$0xff]
      %v3396 = vld [vmem:[#allocation3 + $0x2fc] sm:$0xff]
      %v3397 = vld [vmem:[#allocation3 + $0x304] sm:$0xff]
      %v3398 = vld [vmem:[#allocation3 + $0x30c] sm:$0xff]
      %v3399 = vld [vmem:[#allocation3 + $0x314] sm:$0xf]
      %v3400 = vld [vmem:[#allocation3 + $0x318] sm:$0xff]
      %v3401 = vld [vmem:[#allocation3 + $0x320] sm:$0xff]
      %v3402 = vld [vmem:[#allocation3 + $0x328] sm:$0xff]
      %v3403 = vld [vmem:[#allocation3 + $0x330] sm:$0xff]
      %v3404 = vld [vmem:[#allocation3 + $0x338] sm:$0xf]
      %v3405 = vld [vmem:[#allocation3 + $0x33c] sm:$0xff]
      %v3406 = vld [vmem:[#allocation3 + $0x344] sm:$0xff]
      %v3407 = vld [vmem:[#allocation3 + $0x34c] sm:$0xff]
      %v3408 = vld [vmem:[#allocation3 + $0x354] sm:$0xff]
      %v3409 = vld [vmem:[#allocation3 + $0x35c] sm:$0xf]
      %v3410 = vld [vmem:[#allocation3 + $0x360] sm:$0xff]
      %v3411 = vld [vmem:[#allocation3 + $0x368] sm:$0xff]
      %v3412 = vld [vmem:[#allocation3 + $0x370] sm:$0xff]
      %v3413 = vld [vmem:[#allocation3 + $0x378] sm:$0xff]
      %v3414 = vld [vmem:[#allocation3 + $0x380] sm:$0xf]
      %v3415 = vld [vmem:[#allocation3 + $0x384] sm:$0xff]
      %v3416 = vld [vmem:[#allocation3 + $0x38c] sm:$0xff]
      %v3417 = vld [vmem:[#allocation3 + $0x394] sm:$0xff]
      %v3418 = vld [vmem:[#allocation3 + $0x39c] sm:$0xff]
      %v3419 = vld [vmem:[#allocation3 + $0x3a4] sm:$0xf]
      %v3420 = vld [vmem:[#allocation3 + $0x3a8] sm:$0xff]
      %v3421 = vld [vmem:[#allocation3 + $0x3b0] sm:$0xff]
      %v3422 = vld [vmem:[#allocation3 + $0x3b8] sm:$0xff]
      %v3423 = vld [vmem:[#allocation3 + $0x3c0] sm:$0xff]
      %v3424 = vld [vmem:[#allocation3 + $0x3c8] sm:$0xf]
      %v3425 = vld [vmem:[#allocation3 + $0x3cc] sm:$0xff]
      %v3426 = vld [vmem:[#allocation3 + $0x3d4] sm:$0xff]
      %v3427 = vld [vmem:[#allocation3 + $0x3dc] sm:$0xff]
      %v3428 = vld [vmem:[#allocation3 + $0x3e4] sm:$0xff]
      %v3429 = vld [vmem:[#allocation3 + $0x3ec] sm:$0xf]
      %v3430 = vld [vmem:[#allocation3 + $0x3f0] sm:$0xff]
      %v3431 = vld [vmem:[#allocation3 + $0x3f8] sm:$0xff]
      %v3432 = vld [vmem:[#allocation3 + $0x400] sm:$0xff]
      %v3433 = vld [vmem:[#allocation3 + $0x408] sm:$0xff]
      %v3434 = vld [vmem:[#allocation3 + $0x410] sm:$0xf]
      %v3435 = vld [vmem:[#allocation3 + $0x414] sm:$0xff]
      %v3436 = vld [vmem:[#allocation3 + $0x41c] sm:$0xff]
      %v3437 = vld [vmem:[#allocation3 + $0x424] sm:$0xff]
      %v3438 = vld [vmem:[#allocation3 + $0x42c] sm:$0xff]
      %v3439 = vld [vmem:[#allocation3 + $0x434] sm:$0xf]
      %v3440 = vld [vmem:[#allocation3 + $0x438] sm:$0xff]
      %v3441 = vld [vmem:[#allocation3 + $0x440] sm:$0xff]
      %v3442 = vld [vmem:[#allocation3 + $0x448] sm:$0xff]
      %v3443 = vld [vmem:[#allocation3 + $0x450] sm:$0xff]
      %v3444 = vld [vmem:[#allocation3 + $0x458] sm:$0xf]
      %v3445 = vld [vmem:[#allocation3 + $0x45c] sm:$0xff]
      %v3446 = vld [vmem:[#allocation3 + $0x464] sm:$0xff]
      %v3447 = vld [vmem:[#allocation3 + $0x46c] sm:$0xff]
      %v3448 = vld [vmem:[#allocation3 + $0x474] sm:$0xff]
      %v3449 = vld [vmem:[#allocation3 + $0x47c] sm:$0xf]
      %v3450 = vld [vmem:[%s1] sm:$0xf]
      %v3451 = vld [vmem:[%s1 + $0x4] sm:$0xf]
      %v3452 = vld [vmem:[%s1 + $0x8] sm:$0xf]
      %v3453 = vld [vmem:[%s1 + $0xc] sm:$0xf]
      %v3454 = vld [vmem:[%s1 + $0x10] sm:$0xf]
      %v3455 = vld [vmem:[%s1 + $0x14] sm:$0xf]
      %v3456 = vld [vmem:[%s1 + $0x18] sm:$0xf]
      %v3457 = vld [vmem:[%s1 + $0x1c] sm:$0xf]
      %v3458 = vld [vmem:[%s1 + $0x20] sm:$0xf]
      %v3459 = vld [vmem:[%s1 + $0x24] sm:$0xf]
      %v3460 = vld [vmem:[%s1 + $0x28] sm:$0xf]
      %v3461 = vld [vmem:[%s1 + $0x2c] sm:$0xf]
      %v3462 = vld [vmem:[%s1 + $0x30] sm:$0xf]
      %v3463 = vld [vmem:[%s1 + $0x34] sm:$0xf]
      %v3464 = vld [vmem:[%s1 + $0x38] sm:$0xf]
      %v3465 = vld [vmem:[%s1 + $0x3c] sm:$0xf]
      %v3466 = vld [vmem:[%s1 + $0x40] sm:$0xf]
      %v3467 = vld [vmem:[%s1 + $0x44] sm:$0xf]
      %v3468 = vld [vmem:[%s1 + $0x48] sm:$0xf]
      %v3469 = vld [vmem:[%s1 + $0x4c] sm:$0xf]
      %v3470 = vld [vmem:[%s1 + $0x50] sm:$0xf]
      %v3471 = vld [vmem:[%s1 + $0x54] sm:$0xf]
      %v3472 = vld [vmem:[%s1 + $0x58] sm:$0xf]
      %v3473 = vld [vmem:[%s1 + $0x5c] sm:$0xf]
      %v3474 = vld [vmem:[%s1 + $0x60] sm:$0xf]
      %v3475 = vld [vmem:[%s1 + $0x64] sm:$0xf]
      %v3476 = vld [vmem:[%s1 + $0x68] sm:$0xf]
      %v3477 = vld [vmem:[%s1 + $0x6c] sm:$0xf]
      %v3478 = vld [vmem:[%s1 + $0x70] sm:$0xf]
      %v3479 = vld [vmem:[%s1 + $0x74] sm:$0xf]
      %v3480 = vld [vmem:[%s1 + $0x78] sm:$0xf]
      %v3481 = vld [vmem:[%s1 + $0x7c] sm:$0xf]
      %v3482 = vld [vmem:[%s1 + $0x80] sm:$0xf]
      %v3483 = vld [vmem:[%s1 + $0x84] sm:$0xf]
      %v3484 = vld [vmem:[%s1 + $0x88] sm:$0xf]
      %v3485 = vld [vmem:[%s1 + $0x8c] sm:$0xf]
      %v3486 = vld [vmem:[%s1 + $0x90] sm:$0xf]
      %v3487 = vld [vmem:[%s1 + $0x94] sm:$0xf]
      %v3488 = vld [vmem:[%s1 + $0x98] sm:$0xf]
      %v3489 = vld [vmem:[%s1 + $0x9c] sm:$0xf]
      %v3490 = vld [vmem:[%s1 + $0xa0] sm:$0xf]
      %v3491 = vld [vmem:[%s1 + $0xa4] sm:$0xf]
      %v3492 = vld [vmem:[%s1 + $0xa8] sm:$0xf]
      %v3493 = vld [vmem:[%s1 + $0xac] sm:$0xf]
      %v3494 = vld [vmem:[%s1 + $0xb0] sm:$0xf]
      %v3495 = vld [vmem:[%s1 + $0xb4] sm:$0xf]
      %v3496 = vld [vmem:[%s1 + $0xb8] sm:$0xf]
      %v3497 = vld [vmem:[%s1 + $0xbc] sm:$0xf]
      %v3498 = vld [vmem:[%s1 + $0xc0] sm:$0xf]
      %v3499 = vld [vmem:[%s1 + $0xc4] sm:$0xf]
      %v3500 = vld [vmem:[%s1 + $0xc8] sm:$0xf]
      %v3501 = vld [vmem:[%s1 + $0xcc] sm:$0xf]
      %v3502 = vld [vmem:[%s1 + $0xd0] sm:$0xf]
      %v3503 = vld [vmem:[%s1 + $0xd4] sm:$0xf]
      %v3504 = vld [vmem:[%s1 + $0xd8] sm:$0xf]
      %v3505 = vld [vmem:[%s1 + $0xdc] sm:$0xf]
      %v3506 = vld [vmem:[%s1 + $0xe0] sm:$0xf]
      %v3507 = vld [vmem:[%s1 + $0xe4] sm:$0xf]
      %v3508 = vld [vmem:[%s1 + $0xe8] sm:$0xf]
      %v3509 = vld [vmem:[%s1 + $0xec] sm:$0xf]
      %v3510 = vld [vmem:[%s1 + $0xf0] sm:$0xf]
      %v3511 = vld [vmem:[%s1 + $0xf4] sm:$0xf]
      %v3512 = vld [vmem:[%s1 + $0xf8] sm:$0xf]
      %v3513 = vld [vmem:[%s1 + $0xfc] sm:$0xf]
      %v3514 = vld [vmem:[%s1 + $0x100] sm:$0xf]
      %v3515 = vld [vmem:[%s1 + $0x104] sm:$0xf]
      %v3516 = vld [vmem:[%s1 + $0x108] sm:$0xf]
      %v3517 = vld [vmem:[%s1 + $0x10c] sm:$0xf]
      %v3518 = vld [vmem:[%s1 + $0x110] sm:$0xf]
      %v3519 = vld [vmem:[%s1 + $0x114] sm:$0xf]
      %v3520 = vld [vmem:[%s1 + $0x118] sm:$0xf]
      %v3521 = vld [vmem:[%s1 + $0x11c] sm:$0xf]
      %v3522 = vld [vmem:[%s1 + $0x120] sm:$0xf]
      %v3523 = vld [vmem:[%s1 + $0x124] sm:$0xf]
      %v3524 = vld [vmem:[%s1 + $0x128] sm:$0xf]
      %v3525 = vld [vmem:[%s1 + $0x12c] sm:$0xf]
      %v3526 = vld [vmem:[%s1 + $0x130] sm:$0xf]
      %v3527 = vld [vmem:[%s1 + $0x134] sm:$0xf]
      %v3528 = vld [vmem:[%s1 + $0x138] sm:$0xf]
      %v3529 = vld [vmem:[%s1 + $0x13c] sm:$0xf]
      %v3530 = vld [vmem:[%s1 + $0x140] sm:$0xf]
      %v3531 = vld [vmem:[%s1 + $0x144] sm:$0xf]
      %v3532 = vld [vmem:[%s1 + $0x148] sm:$0xf]
      %v3533 = vld [vmem:[%s1 + $0x14c] sm:$0xf]
      %v3534 = vld [vmem:[%s1 + $0x150] sm:$0xf]
      %v3535 = vld [vmem:[%s1 + $0x154] sm:$0xf]
      %v3536 = vld [vmem:[%s1 + $0x158] sm:$0xf]
      %v3537 = vld [vmem:[%s1 + $0x15c] sm:$0xf]
      %v3538 = vld [vmem:[%s1 + $0x160] sm:$0xf]
      %v3539 = vld [vmem:[%s1 + $0x164] sm:$0xf]
      %v3540 = vld [vmem:[%s1 + $0x168] sm:$0xf]
      %v3541 = vld [vmem:[%s1 + $0x16c] sm:$0xf]
      %v3542 = vld [vmem:[%s1 + $0x170] sm:$0xf]
      %v3543 = vld [vmem:[%s1 + $0x174] sm:$0xf]
      %v3544 = vld [vmem:[%s1 + $0x178] sm:$0xf]
      %v3545 = vld [vmem:[%s1 + $0x17c] sm:$0xf]
      %v3546 = vld [vmem:[%s1 + $0x180] sm:$0xf]
      %v3547 = vld [vmem:[%s1 + $0x184] sm:$0xf]
      %v3548 = vld [vmem:[%s1 + $0x188] sm:$0xf]
      %v3549 = vld [vmem:[%s1 + $0x18c] sm:$0xf]
      %v3550 = vld [vmem:[%s1 + $0x190] sm:$0xf]
      %v3551 = vld [vmem:[%s1 + $0x194] sm:$0xf]
      %v3552 = vld [vmem:[%s1 + $0x198] sm:$0xf]
      %v3553 = vld [vmem:[%s1 + $0x19c] sm:$0xf]
      %v3554 = vld [vmem:[%s1 + $0x1a0] sm:$0xf]
      %v3555 = vld [vmem:[%s1 + $0x1a4] sm:$0xf]
      %v3556 = vld [vmem:[%s1 + $0x1a8] sm:$0xf]
      %v3557 = vld [vmem:[%s1 + $0x1ac] sm:$0xf]
      %v3558 = vld [vmem:[%s1 + $0x1b0] sm:$0xf]
      %v3559 = vld [vmem:[%s1 + $0x1b4] sm:$0xf]
      %v3560 = vld [vmem:[%s1 + $0x1b8] sm:$0xf]
      %v3561 = vld [vmem:[%s1 + $0x1bc] sm:$0xf]
      %v3562 = vld [vmem:[%s1 + $0x1c0] sm:$0xf]
      %v3563 = vld [vmem:[%s1 + $0x1c4] sm:$0xf]
      %v3564 = vld [vmem:[%s1 + $0x1c8] sm:$0xf]
      %v3565 = vld [vmem:[%s1 + $0x1cc] sm:$0xf]
      %v3566 = vld [vmem:[%s1 + $0x1d0] sm:$0xf]
      %v3567 = vld [vmem:[%s1 + $0x1d4] sm:$0xf]
      %v3568 = vld [vmem:[%s1 + $0x1d8] sm:$0xf]
      %v3569 = vld [vmem:[%s1 + $0x1dc] sm:$0xf]
      %v3570 = vld [vmem:[%s1 + $0x1e0] sm:$0xf]
      %v3571 = vld [vmem:[%s1 + $0x1e4] sm:$0xf]
      %v3572 = vld [vmem:[%s1 + $0x1e8] sm:$0xf]
      %v3573 = vld [vmem:[%s1 + $0x1ec] sm:$0xf]
      %v3574 = vld [vmem:[%s1 + $0x1f0] sm:$0xf]
      %v3575 = vld [vmem:[%s1 + $0x1f4] sm:$0xf]
      %v3576 = vld [vmem:[%s1 + $0x1f8] sm:$0xf]
      %v3577 = vld [vmem:[%s1 + $0x1fc] sm:$0xf]
      %v3578 = vld [vmem:[%s1 + $0x200] sm:$0xf]
      %v3579 = vld [vmem:[%s1 + $0x204] sm:$0xf]
      %v3580 = vld [vmem:[%s1 + $0x208] sm:$0xf]
      %v3581 = vld [vmem:[%s1 + $0x20c] sm:$0xf]
      %v3582 = vld [vmem:[%s1 + $0x210] sm:$0xf]
      %v3583 = vld [vmem:[%s1 + $0x214] sm:$0xf]
      %v3584 = vld [vmem:[%s1 + $0x218] sm:$0xf]
      %v3585 = vld [vmem:[%s1 + $0x21c] sm:$0xf]
      %v3586 = vld [vmem:[%s1 + $0x220] sm:$0xf]
      %v3587 = vld [vmem:[%s1 + $0x224] sm:$0xf]
      %v3588 = vld [vmem:[%s1 + $0x228] sm:$0xf]
      %v3589 = vld [vmem:[%s1 + $0x22c] sm:$0xf]
      %v3590 = vld [vmem:[%s1 + $0x230] sm:$0xf]
      %v3591 = vld [vmem:[%s1 + $0x234] sm:$0xf]
      %v3592 = vld [vmem:[%s1 + $0x238] sm:$0xf]
      %v3593 = vld [vmem:[%s1 + $0x23c] sm:$0xf]
      %v3594 = vld [vmem:[%s2] sm:$0x1]
      %v3596 = vlaneseq
      %v3597 = vshrl.u32 %v3596, 7
      %v3598 = vsub.s32 0, %v3597
      %v3599 = vrot.slane %v3594, %v3598
      %v3761 = vunpack.c.l.b16 %v3290
      %v3762 = vunpack.c.h.b16 %v3290
      %v3763 = vunpack.c.l.b16 %v3291
      %v3764 = vunpack.c.h.b16 %v3291
      %v3765 = vunpack.c.l.b16 %v3292
      %v3766 = vunpack.c.h.b16 %v3292
      %v3767 = vunpack.c.l.b16 %v3293
      %v3768 = vunpack.c.h.b16 %v3293
      %v3769 = vunpack.c.l.b16 %v3294
      %v3770 = vunpack.c.l.b16 %v3295
      %v3771 = vunpack.c.h.b16 %v3295
      %v3772 = vunpack.c.l.b16 %v3296
      %v3773 = vunpack.c.h.b16 %v3296
      %v3774 = vunpack.c.l.b16 %v3297
      %v3775 = vunpack.c.h.b16 %v3297
      %v3776 = vunpack.c.l.b16 %v3298
      %v3777 = vunpack.c.h.b16 %v3298
      %v3778 = vunpack.c.l.b16 %v3299
      %v3779 = vunpack.c.l.b16 %v3300
      %v3780 = vunpack.c.h.b16 %v3300
      %v3781 = vunpack.c.l.b16 %v3301
      %v3782 = vunpack.c.h.b16 %v3301
      %v3783 = vunpack.c.l.b16 %v3302
      %v3784 = vunpack.c.h.b16 %v3302
      %v3785 = vunpack.c.l.b16 %v3303
      %v3786 = vunpack.c.h.b16 %v3303
      %v3787 = vunpack.c.l.b16 %v3304
      %v3788 = vunpack.c.l.b16 %v3305
      %v3789 = vunpack.c.h.b16 %v3305
      %v3790 = vunpack.c.l.b16 %v3306
      %v3791 = vunpack.c.h.b16 %v3306
      %v3792 = vunpack.c.l.b16 %v3307
      %v3793 = vunpack.c.h.b16 %v3307
      %v3794 = vunpack.c.l.b16 %v3308
      %v3795 = vunpack.c.h.b16 %v3308
      %v3796 = vunpack.c.l.b16 %v3309
      %v3797 = vunpack.c.l.b16 %v3310
      %v3798 = vunpack.c.h.b16 %v3310
      %v3799 = vunpack.c.l.b16 %v3311
      %v3800 = vunpack.c.h.b16 %v3311
      %v3801 = vunpack.c.l.b16 %v3312
      %v3802 = vunpack.c.h.b16 %v3312
      %v3803 = vunpack.c.l.b16 %v3313
      %v3804 = vunpack.c.h.b16 %v3313
      %v3805 = vunpack.c.l.b16 %v3314
      %v3806 = vunpack.c.l.b16 %v3315
      %v3807 = vunpack.c.h.b16 %v3315
      %v3808 = vunpack.c.l.b16 %v3316
      %v3809 = vunpack.c.h.b16 %v3316
      %v3810 = vunpack.c.l.b16 %v3317
      %v3811 = vunpack.c.h.b16 %v3317
      %v3812 = vunpack.c.l.b16 %v3318
      %v3813 = vunpack.c.h.b16 %v3318
      %v3814 = vunpack.c.l.b16 %v3319
      %v3815 = vunpack.c.l.b16 %v3320
      %v3816 = vunpack.c.h.b16 %v3320
      %v3817 = vunpack.c.l.b16 %v3321
      %v3818 = vunpack.c.h.b16 %v3321
      %v3819 = vunpack.c.l.b16 %v3322
      %v3820 = vunpack.c.h.b16 %v3322
      %v3821 = vunpack.c.l.b16 %v3323
      %v3822 = vunpack.c.h.b16 %v3323
      %v3823 = vunpack.c.l.b16 %v3324
      %v3824 = vunpack.c.l.b16 %v3325
      %v3825 = vunpack.c.h.b16 %v3325
      %v3826 = vunpack.c.l.b16 %v3326
      %v3827 = vunpack.c.h.b16 %v3326
      %v3828 = vunpack.c.l.b16 %v3327
      %v3829 = vunpack.c.h.b16 %v3327
      %v3830 = vunpack.c.l.b16 %v3328
      %v3831 = vunpack.c.h.b16 %v3328
      %v3832 = vunpack.c.l.b16 %v3329
      %v3833 = vunpack.c.l.b16 %v3330
      %v3834 = vunpack.c.h.b16 %v3330
      %v3835 = vunpack.c.l.b16 %v3331
      %v3836 = vunpack.c.h.b16 %v3331
      %v3837 = vunpack.c.l.b16 %v3332
      %v3838 = vunpack.c.h.b16 %v3332
      %v3839 = vunpack.c.l.b16 %v3333
      %v3840 = vunpack.c.h.b16 %v3333
      %v3841 = vunpack.c.l.b16 %v3334
      %v3842 = vunpack.c.l.b16 %v3335
      %v3843 = vunpack.c.h.b16 %v3335
      %v3844 = vunpack.c.l.b16 %v3336
      %v3845 = vunpack.c.h.b16 %v3336
      %v3846 = vunpack.c.l.b16 %v3337
      %v3847 = vunpack.c.h.b16 %v3337
      %v3848 = vunpack.c.l.b16 %v3338
      %v3849 = vunpack.c.h.b16 %v3338
      %v3850 = vunpack.c.l.b16 %v3339
      %v3851 = vunpack.c.l.b16 %v3340
      %v3852 = vunpack.c.h.b16 %v3340
      %v3853 = vunpack.c.l.b16 %v3341
      %v3854 = vunpack.c.h.b16 %v3341
      %v3855 = vunpack.c.l.b16 %v3342
      %v3856 = vunpack.c.h.b16 %v3342
      %v3857 = vunpack.c.l.b16 %v3343
      %v3858 = vunpack.c.h.b16 %v3343
      %v3859 = vunpack.c.l.b16 %v3344
      %v3860 = vunpack.c.l.b16 %v3345
      %v3861 = vunpack.c.h.b16 %v3345
      %v3862 = vunpack.c.l.b16 %v3346
      %v3863 = vunpack.c.h.b16 %v3346
      %v3864 = vunpack.c.l.b16 %v3347
      %v3865 = vunpack.c.h.b16 %v3347
      %v3866 = vunpack.c.l.b16 %v3348
      %v3867 = vunpack.c.h.b16 %v3348
      %v3868 = vunpack.c.l.b16 %v3349
      %v3869 = vunpack.c.l.b16 %v3350
      %v3870 = vunpack.c.h.b16 %v3350
      %v3871 = vunpack.c.l.b16 %v3351
      %v3872 = vunpack.c.h.b16 %v3351
      %v3873 = vunpack.c.l.b16 %v3352
      %v3874 = vunpack.c.h.b16 %v3352
      %v3875 = vunpack.c.l.b16 %v3353
      %v3876 = vunpack.c.h.b16 %v3353
      %v3877 = vunpack.c.l.b16 %v3354
      %v3878 = vunpack.c.l.b16 %v3355
      %v3879 = vunpack.c.h.b16 %v3355
      %v3880 = vunpack.c.l.b16 %v3356
      %v3881 = vunpack.c.h.b16 %v3356
      %v3882 = vunpack.c.l.b16 %v3357
      %v3883 = vunpack.c.h.b16 %v3357
      %v3884 = vunpack.c.l.b16 %v3358
      %v3885 = vunpack.c.h.b16 %v3358
      %v3886 = vunpack.c.l.b16 %v3359
      %v3887 = vunpack.c.l.b16 %v3360
      %v3888 = vunpack.c.h.b16 %v3360
      %v3889 = vunpack.c.l.b16 %v3361
      %v3890 = vunpack.c.h.b16 %v3361
      %v3891 = vunpack.c.l.b16 %v3362
      %v3892 = vunpack.c.h.b16 %v3362
      %v3893 = vunpack.c.l.b16 %v3363
      %v3894 = vunpack.c.h.b16 %v3363
      %v3895 = vunpack.c.l.b16 %v3364
      %v3896 = vunpack.c.l.b16 %v3365
      %v3897 = vunpack.c.h.b16 %v3365
      %v3898 = vunpack.c.l.b16 %v3366
      %v3899 = vunpack.c.h.b16 %v3366
      %v3900 = vunpack.c.l.b16 %v3367
      %v3901 = vunpack.c.h.b16 %v3367
      %v3902 = vunpack.c.l.b16 %v3368
      %v3903 = vunpack.c.h.b16 %v3368
      %v3904 = vunpack.c.l.b16 %v3369
      %v3905 = vunpack.c.l.b16 %v3370
      %v3906 = vunpack.c.h.b16 %v3370
      %v3907 = vunpack.c.l.b16 %v3371
      %v3908 = vunpack.c.h.b16 %v3371
      %v3909 = vunpack.c.l.b16 %v3372
      %v3910 = vunpack.c.h.b16 %v3372
      %v3911 = vunpack.c.l.b16 %v3373
      %v3912 = vunpack.c.h.b16 %v3373
      %v3913 = vunpack.c.l.b16 %v3374
      %v3914 = vunpack.c.l.b16 %v3375
      %v3915 = vunpack.c.h.b16 %v3375
      %v3916 = vunpack.c.l.b16 %v3376
      %v3917 = vunpack.c.h.b16 %v3376
      %v3918 = vunpack.c.l.b16 %v3377
      %v3919 = vunpack.c.h.b16 %v3377
      %v3920 = vunpack.c.l.b16 %v3378
      %v3921 = vunpack.c.h.b16 %v3378
      %v3922 = vunpack.c.l.b16 %v3379
      %v3923 = vunpack.c.l.b16 %v3380
      %v3924 = vunpack.c.h.b16 %v3380
      %v3925 = vunpack.c.l.b16 %v3381
      %v3926 = vunpack.c.h.b16 %v3381
      %v3927 = vunpack.c.l.b16 %v3382
      %v3928 = vunpack.c.h.b16 %v3382
      %v3929 = vunpack.c.l.b16 %v3383
      %v3930 = vunpack.c.h.b16 %v3383
      %v3931 = vunpack.c.l.b16 %v3384
      %v3932 = vunpack.c.l.b16 %v3385
      %v3933 = vunpack.c.h.b16 %v3385
      %v3934 = vunpack.c.l.b16 %v3386
      %v3935 = vunpack.c.h.b16 %v3386
      %v3936 = vunpack.c.l.b16 %v3387
      %v3937 = vunpack.c.h.b16 %v3387
      %v3938 = vunpack.c.l.b16 %v3388
      %v3939 = vunpack.c.h.b16 %v3388
      %v3940 = vunpack.c.l.b16 %v3389
      %v3941 = vunpack.c.l.b16 %v3390
      %v3942 = vunpack.c.h.b16 %v3390
      %v3943 = vunpack.c.l.b16 %v3391
      %v3944 = vunpack.c.h.b16 %v3391
      %v3945 = vunpack.c.l.b16 %v3392
      %v3946 = vunpack.c.h.b16 %v3392
      %v3947 = vunpack.c.l.b16 %v3393
      %v3948 = vunpack.c.h.b16 %v3393
      %v3949 = vunpack.c.l.b16 %v3394
      %v3950 = vunpack.c.l.b16 %v3395
      %v3951 = vunpack.c.h.b16 %v3395
      %v3952 = vunpack.c.l.b16 %v3396
      %v3953 = vunpack.c.h.b16 %v3396
      %v3954 = vunpack.c.l.b16 %v3397
      %v3955 = vunpack.c.h.b16 %v3397
      %v3956 = vunpack.c.l.b16 %v3398
      %v3957 = vunpack.c.h.b16 %v3398
      %v3958 = vunpack.c.l.b16 %v3399
      %v3959 = vunpack.c.l.b16 %v3400
      %v3960 = vunpack.c.h.b16 %v3400
      %v3961 = vunpack.c.l.b16 %v3401
      %v3962 = vunpack.c.h.b16 %v3401
      %v3963 = vunpack.c.l.b16 %v3402
      %v3964 = vunpack.c.h.b16 %v3402
      %v3965 = vunpack.c.l.b16 %v3403
      %v3966 = vunpack.c.h.b16 %v3403
      %v3967 = vunpack.c.l.b16 %v3404
      %v3968 = vunpack.c.l.b16 %v3405
      %v3969 = vunpack.c.h.b16 %v3405
      %v3970 = vunpack.c.l.b16 %v3406
      %v3971 = vunpack.c.h.b16 %v3406
      %v3972 = vunpack.c.l.b16 %v3407
      %v3973 = vunpack.c.h.b16 %v3407
      %v3974 = vunpack.c.l.b16 %v3408
      %v3975 = vunpack.c.h.b16 %v3408
      %v3976 = vunpack.c.l.b16 %v3409
      %v3977 = vunpack.c.l.b16 %v3410
      %v3978 = vunpack.c.h.b16 %v3410
      %v3979 = vunpack.c.l.b16 %v3411
      %v3980 = vunpack.c.h.b16 %v3411
      %v3981 = vunpack.c.l.b16 %v3412
      %v3982 = vunpack.c.h.b16 %v3412
      %v3983 = vunpack.c.l.b16 %v3413
      %v3984 = vunpack.c.h.b16 %v3413
      %v3985 = vunpack.c.l.b16 %v3414
      %v3986 = vunpack.c.l.b16 %v3415
      %v3987 = vunpack.c.h.b16 %v3415
      %v3988 = vunpack.c.l.b16 %v3416
      %v3989 = vunpack.c.h.b16 %v3416
      %v3990 = vunpack.c.l.b16 %v3417
      %v3991 = vunpack.c.h.b16 %v3417
      %v3992 = vunpack.c.l.b16 %v3418
      %v3993 = vunpack.c.h.b16 %v3418
      %v3994 = vunpack.c.l.b16 %v3419
      %v3995 = vunpack.c.l.b16 %v3420
      %v3996 = vunpack.c.h.b16 %v3420
      %v3997 = vunpack.c.l.b16 %v3421
      %v3998 = vunpack.c.h.b16 %v3421
      %v3999 = vunpack.c.l.b16 %v3422
      %v4000 = vunpack.c.h.b16 %v3422
      %v4001 = vunpack.c.l.b16 %v3423
      %v4002 = vunpack.c.h.b16 %v3423
      %v4003 = vunpack.c.l.b16 %v3424
      %v4004 = vunpack.c.l.b16 %v3425
      %v4005 = vunpack.c.h.b16 %v3425
      %v4006 = vunpack.c.l.b16 %v3426
      %v4007 = vunpack.c.h.b16 %v3426
      %v4008 = vunpack.c.l.b16 %v3427
      %v4009 = vunpack.c.h.b16 %v3427
      %v4010 = vunpack.c.l.b16 %v3428
      %v4011 = vunpack.c.h.b16 %v3428
      %v4012 = vunpack.c.l.b16 %v3429
      %v4013 = vunpack.c.l.b16 %v3430
      %v4014 = vunpack.c.h.b16 %v3430
      %v4015 = vunpack.c.l.b16 %v3431
      %v4016 = vunpack.c.h.b16 %v3431
      %v4017 = vunpack.c.l.b16 %v3432
      %v4018 = vunpack.c.h.b16 %v3432
      %v4019 = vunpack.c.l.b16 %v3433
      %v4020 = vunpack.c.h.b16 %v3433
      %v4021 = vunpack.c.l.b16 %v3434
      %v4022 = vunpack.c.l.b16 %v3435
      %v4023 = vunpack.c.h.b16 %v3435
      %v4024 = vunpack.c.l.b16 %v3436
      %v4025 = vunpack.c.h.b16 %v3436
      %v4026 = vunpack.c.l.b16 %v3437
      %v4027 = vunpack.c.h.b16 %v3437
      %v4028 = vunpack.c.l.b16 %v3438
      %v4029 = vunpack.c.h.b16 %v3438
      %v4030 = vunpack.c.l.b16 %v3439
      %v4031 = vunpack.c.l.b16 %v3440
      %v4032 = vunpack.c.h.b16 %v3440
      %v4033 = vunpack.c.l.b16 %v3441
      %v4034 = vunpack.c.h.b16 %v3441
      %v4035 = vunpack.c.l.b16 %v3442
      %v4036 = vunpack.c.h.b16 %v3442
      %v4037 = vunpack.c.l.b16 %v3443
      %v4038 = vunpack.c.h.b16 %v3443
      %v4039 = vunpack.c.l.b16 %v3444
      %v4040 = vunpack.c.l.b16 %v3445
      %v4041 = vunpack.c.h.b16 %v3445
      %v4042 = vunpack.c.l.b16 %v3446
      %v4043 = vunpack.c.h.b16 %v3446
      %v4044 = vunpack.c.l.b16 %v3447
      %v4045 = vunpack.c.h.b16 %v3447
      %v4046 = vunpack.c.l.b16 %v3448
      %v4047 = vunpack.c.h.b16 %v3448
      %v4048 = vunpack.c.l.b16 %v3449
      %v4049 = vpack.c.b16 %v3770, %v3761
      %v4050 = vpack.c.b16 %v3771, %v3762
      %v4051 = vpack.c.b16 %v3772, %v3763
      %v4052 = vpack.c.b16 %v3773, %v3764
      %v4053 = vpack.c.b16 %v3774, %v3765
      %v4054 = vpack.c.b16 %v3775, %v3766
      %v4055 = vpack.c.b16 %v3776, %v3767
      %v4056 = vpack.c.b16 %v3777, %v3768
      %v4057 = vpack.c.b16 %v3778, %v3769
      %v4058 = vpack.c.b16 %v3788, %v3779
      %v4059 = vpack.c.b16 %v3789, %v3780
      %v4060 = vpack.c.b16 %v3790, %v3781
      %v4061 = vpack.c.b16 %v3791, %v3782
      %v4062 = vpack.c.b16 %v3792, %v3783
      %v4063 = vpack.c.b16 %v3793, %v3784
      %v4064 = vpack.c.b16 %v3794, %v3785
      %v4065 = vpack.c.b16 %v3795, %v3786
      %v4066 = vpack.c.b16 %v3796, %v3787
      %v4067 = vpack.c.b16 %v3806, %v3797
      %v4068 = vpack.c.b16 %v3807, %v3798
      %v4069 = vpack.c.b16 %v3808, %v3799
      %v4070 = vpack.c.b16 %v3809, %v3800
      %v4071 = vpack.c.b16 %v3810, %v3801
      %v4072 = vpack.c.b16 %v3811, %v3802
      %v4073 = vpack.c.b16 %v3812, %v3803
      %v4074 = vpack.c.b16 %v3813, %v3804
      %v4075 = vpack.c.b16 %v3814, %v3805
      %v4076 = vpack.c.b16 %v3824, %v3815
      %v4077 = vpack.c.b16 %v3825, %v3816
      %v4078 = vpack.c.b16 %v3826, %v3817
      %v4079 = vpack.c.b16 %v3827, %v3818
      %v4080 = vpack.c.b16 %v3828, %v3819
      %v4081 = vpack.c.b16 %v3829, %v3820
      %v4082 = vpack.c.b16 %v3830, %v3821
      %v4083 = vpack.c.b16 %v3831, %v3822
      %v4084 = vpack.c.b16 %v3832, %v3823
      %v4085 = vpack.c.b16 %v3842, %v3833
      %v4086 = vpack.c.b16 %v3843, %v3834
      %v4087 = vpack.c.b16 %v3844, %v3835
      %v4088 = vpack.c.b16 %v3845, %v3836
      %v4089 = vpack.c.b16 %v3846, %v3837
      %v4090 = vpack.c.b16 %v3847, %v3838
      %v4091 = vpack.c.b16 %v3848, %v3839
      %v4092 = vpack.c.b16 %v3849, %v3840
      %v4093 = vpack.c.b16 %v3850, %v3841
      %v4094 = vpack.c.b16 %v3860, %v3851
      %v4095 = vpack.c.b16 %v3861, %v3852
      %v4096 = vpack.c.b16 %v3862, %v3853
      %v4097 = vpack.c.b16 %v3863, %v3854
      %v4098 = vpack.c.b16 %v3864, %v3855
      %v4099 = vpack.c.b16 %v3865, %v3856
      %v4100 = vpack.c.b16 %v3866, %v3857
      %v4101 = vpack.c.b16 %v3867, %v3858
      %v4102 = vpack.c.b16 %v3868, %v3859
      %v4103 = vpack.c.b16 %v3878, %v3869
      %v4104 = vpack.c.b16 %v3879, %v3870
      %v4105 = vpack.c.b16 %v3880, %v3871
      %v4106 = vpack.c.b16 %v3881, %v3872
      %v4107 = vpack.c.b16 %v3882, %v3873
      %v4108 = vpack.c.b16 %v3883, %v3874
      %v4109 = vpack.c.b16 %v3884, %v3875
      %v4110 = vpack.c.b16 %v3885, %v3876
      %v4111 = vpack.c.b16 %v3886, %v3877
      %v4112 = vpack.c.b16 %v3896, %v3887
      %v4113 = vpack.c.b16 %v3897, %v3888
      %v4114 = vpack.c.b16 %v3898, %v3889
      %v4115 = vpack.c.b16 %v3899, %v3890
      %v4116 = vpack.c.b16 %v3900, %v3891
      %v4117 = vpack.c.b16 %v3901, %v3892
      %v4118 = vpack.c.b16 %v3902, %v3893
      %v4119 = vpack.c.b16 %v3903, %v3894
      %v4120 = vpack.c.b16 %v3904, %v3895
      %v4121 = vpack.c.b16 %v3914, %v3905
      %v4122 = vpack.c.b16 %v3915, %v3906
      %v4123 = vpack.c.b16 %v3916, %v3907
      %v4124 = vpack.c.b16 %v3917, %v3908
      %v4125 = vpack.c.b16 %v3918, %v3909
      %v4126 = vpack.c.b16 %v3919, %v3910
      %v4127 = vpack.c.b16 %v3920, %v3911
      %v4128 = vpack.c.b16 %v3921, %v3912
      %v4129 = vpack.c.b16 %v3922, %v3913
      %v4130 = vpack.c.b16 %v3932, %v3923
      %v4131 = vpack.c.b16 %v3933, %v3924
      %v4132 = vpack.c.b16 %v3934, %v3925
      %v4133 = vpack.c.b16 %v3935, %v3926
      %v4134 = vpack.c.b16 %v3936, %v3927
      %v4135 = vpack.c.b16 %v3937, %v3928
      %v4136 = vpack.c.b16 %v3938, %v3929
      %v4137 = vpack.c.b16 %v3939, %v3930
      %v4138 = vpack.c.b16 %v3940, %v3931
      %v4139 = vpack.c.b16 %v3950, %v3941
      %v4140 = vpack.c.b16 %v3951, %v3942
      %v4141 = vpack.c.b16 %v3952, %v3943
      %v4142 = vpack.c.b16 %v3953, %v3944
      %v4143 = vpack.c.b16 %v3954, %v3945
      %v4144 = vpack.c.b16 %v3955, %v3946
      %v4145 = vpack.c.b16 %v3956, %v3947
      %v4146 = vpack.c.b16 %v3957, %v3948
      %v4147 = vpack.c.b16 %v3958, %v3949
      %v4148 = vpack.c.b16 %v3968, %v3959
      %v4149 = vpack.c.b16 %v3969, %v3960
      %v4150 = vpack.c.b16 %v3970, %v3961
      %v4151 = vpack.c.b16 %v3971, %v3962
      %v4152 = vpack.c.b16 %v3972, %v3963
      %v4153 = vpack.c.b16 %v3973, %v3964
      %v4154 = vpack.c.b16 %v3974, %v3965
      %v4155 = vpack.c.b16 %v3975, %v3966
      %v4156 = vpack.c.b16 %v3976, %v3967
      %v4157 = vpack.c.b16 %v3986, %v3977
      %v4158 = vpack.c.b16 %v3987, %v3978
      %v4159 = vpack.c.b16 %v3988, %v3979
      %v4160 = vpack.c.b16 %v3989, %v3980
      %v4161 = vpack.c.b16 %v3990, %v3981
      %v4162 = vpack.c.b16 %v3991, %v3982
      %v4163 = vpack.c.b16 %v3992, %v3983
      %v4164 = vpack.c.b16 %v3993, %v3984
      %v4165 = vpack.c.b16 %v3994, %v3985
      %v4166 = vpack.c.b16 %v4004, %v3995
      %v4167 = vpack.c.b16 %v4005, %v3996
      %v4168 = vpack.c.b16 %v4006, %v3997
      %v4169 = vpack.c.b16 %v4007, %v3998
      %v4170 = vpack.c.b16 %v4008, %v3999
      %v4171 = vpack.c.b16 %v4009, %v4000
      %v4172 = vpack.c.b16 %v4010, %v4001
      %v4173 = vpack.c.b16 %v4011, %v4002
      %v4174 = vpack.c.b16 %v4012, %v4003
      %v4175 = vpack.c.b16 %v4022, %v4013
      %v4176 = vpack.c.b16 %v4023, %v4014
      %v4177 = vpack.c.b16 %v4024, %v4015
      %v4178 = vpack.c.b16 %v4025, %v4016
      %v4179 = vpack.c.b16 %v4026, %v4017
      %v4180 = vpack.c.b16 %v4027, %v4018
      %v4181 = vpack.c.b16 %v4028, %v4019
      %v4182 = vpack.c.b16 %v4029, %v4020
      %v4183 = vpack.c.b16 %v4030, %v4021
      %v4184 = vpack.c.b16 %v4040, %v4031
      %v4185 = vpack.c.b16 %v4041, %v4032
      %v4186 = vpack.c.b16 %v4042, %v4033
      %v4187 = vpack.c.b16 %v4043, %v4034
      %v4188 = vpack.c.b16 %v4044, %v4035
      %v4189 = vpack.c.b16 %v4045, %v4036
      %v4190 = vpack.c.b16 %v4046, %v4037
      %v4191 = vpack.c.b16 %v4047, %v4038
      %v4192 = vpack.c.b16 %v4048, %v4039
      %v4481 = vunpack.c.l.b16 %v3450
      %v4482 = vunpack.c.l.b16 %v3451
      %v4483 = vunpack.c.l.b16 %v3452
      %v4484 = vunpack.c.l.b16 %v3453
      %v4485 = vunpack.c.l.b16 %v3454
      %v4486 = vunpack.c.l.b16 %v3455
      %v4487 = vunpack.c.l.b16 %v3456
      %v4488 = vunpack.c.l.b16 %v3457
      %v4489 = vunpack.c.l.b16 %v3458
      %v4490 = vunpack.c.l.b16 %v3459
      %v4491 = vunpack.c.l.b16 %v3460
      %v4492 = vunpack.c.l.b16 %v3461
      %v4493 = vunpack.c.l.b16 %v3462
      %v4494 = vunpack.c.l.b16 %v3463
      %v4495 = vunpack.c.l.b16 %v3464
      %v4496 = vunpack.c.l.b16 %v3465
      %v4497 = vunpack.c.l.b16 %v3466
      %v4498 = vunpack.c.l.b16 %v3467
      %v4499 = vunpack.c.l.b16 %v3468
      %v4500 = vunpack.c.l.b16 %v3469
      %v4501 = vunpack.c.l.b16 %v3470
      %v4502 = vunpack.c.l.b16 %v3471
      %v4503 = vunpack.c.l.b16 %v3472
      %v4504 = vunpack.c.l.b16 %v3473
      %v4505 = vunpack.c.l.b16 %v3474
      %v4506 = vunpack.c.l.b16 %v3475
      %v4507 = vunpack.c.l.b16 %v3476
      %v4508 = vunpack.c.l.b16 %v3477
      %v4509 = vunpack.c.l.b16 %v3478
      %v4510 = vunpack.c.l.b16 %v3479
      %v4511 = vunpack.c.l.b16 %v3480
      %v4512 = vunpack.c.l.b16 %v3481
      %v4513 = vunpack.c.l.b16 %v3482
      %v4514 = vunpack.c.l.b16 %v3483
      %v4515 = vunpack.c.l.b16 %v3484
      %v4516 = vunpack.c.l.b16 %v3485
      %v4517 = vunpack.c.l.b16 %v3486
      %v4518 = vunpack.c.l.b16 %v3487
      %v4519 = vunpack.c.l.b16 %v3488
      %v4520 = vunpack.c.l.b16 %v3489
      %v4521 = vunpack.c.l.b16 %v3490
      %v4522 = vunpack.c.l.b16 %v3491
      %v4523 = vunpack.c.l.b16 %v3492
      %v4524 = vunpack.c.l.b16 %v3493
      %v4525 = vunpack.c.l.b16 %v3494
      %v4526 = vunpack.c.l.b16 %v3495
      %v4527 = vunpack.c.l.b16 %v3496
      %v4528 = vunpack.c.l.b16 %v3497
      %v4529 = vunpack.c.l.b16 %v3498
      %v4530 = vunpack.c.l.b16 %v3499
      %v4531 = vunpack.c.l.b16 %v3500
      %v4532 = vunpack.c.l.b16 %v3501
      %v4533 = vunpack.c.l.b16 %v3502
      %v4534 = vunpack.c.l.b16 %v3503
      %v4535 = vunpack.c.l.b16 %v3504
      %v4536 = vunpack.c.l.b16 %v3505
      %v4537 = vunpack.c.l.b16 %v3506
      %v4538 = vunpack.c.l.b16 %v3507
      %v4539 = vunpack.c.l.b16 %v3508
      %v4540 = vunpack.c.l.b16 %v3509
      %v4541 = vunpack.c.l.b16 %v3510
      %v4542 = vunpack.c.l.b16 %v3511
      %v4543 = vunpack.c.l.b16 %v3512
      %v4544 = vunpack.c.l.b16 %v3513
      %v4545 = vunpack.c.l.b16 %v3514
      %v4546 = vunpack.c.l.b16 %v3515
      %v4547 = vunpack.c.l.b16 %v3516
      %v4548 = vunpack.c.l.b16 %v3517
      %v4549 = vunpack.c.l.b16 %v3518
      %v4550 = vunpack.c.l.b16 %v3519
      %v4551 = vunpack.c.l.b16 %v3520
      %v4552 = vunpack.c.l.b16 %v3521
      %v4553 = vunpack.c.l.b16 %v3522
      %v4554 = vunpack.c.l.b16 %v3523
      %v4555 = vunpack.c.l.b16 %v3524
      %v4556 = vunpack.c.l.b16 %v3525
      %v4557 = vunpack.c.l.b16 %v3526
      %v4558 = vunpack.c.l.b16 %v3527
      %v4559 = vunpack.c.l.b16 %v3528
      %v4560 = vunpack.c.l.b16 %v3529
      %v4561 = vunpack.c.l.b16 %v3530
      %v4562 = vunpack.c.l.b16 %v3531
      %v4563 = vunpack.c.l.b16 %v3532
      %v4564 = vunpack.c.l.b16 %v3533
      %v4565 = vunpack.c.l.b16 %v3534
      %v4566 = vunpack.c.l.b16 %v3535
      %v4567 = vunpack.c.l.b16 %v3536
      %v4568 = vunpack.c.l.b16 %v3537
      %v4569 = vunpack.c.l.b16 %v3538
      %v4570 = vunpack.c.l.b16 %v3539
      %v4571 = vunpack.c.l.b16 %v3540
      %v4572 = vunpack.c.l.b16 %v3541
      %v4573 = vunpack.c.l.b16 %v3542
      %v4574 = vunpack.c.l.b16 %v3543
      %v4575 = vunpack.c.l.b16 %v3544
      %v4576 = vunpack.c.l.b16 %v3545
      %v4577 = vunpack.c.l.b16 %v3546
      %v4578 = vunpack.c.l.b16 %v3547
      %v4579 = vunpack.c.l.b16 %v3548
      %v4580 = vunpack.c.l.b16 %v3549
      %v4581 = vunpack.c.l.b16 %v3550
      %v4582 = vunpack.c.l.b16 %v3551
      %v4583 = vunpack.c.l.b16 %v3552
      %v4584 = vunpack.c.l.b16 %v3553
      %v4585 = vunpack.c.l.b16 %v3554
      %v4586 = vunpack.c.l.b16 %v3555
      %v4587 = vunpack.c.l.b16 %v3556
      %v4588 = vunpack.c.l.b16 %v3557
      %v4589 = vunpack.c.l.b16 %v3558
      %v4590 = vunpack.c.l.b16 %v3559
      %v4591 = vunpack.c.l.b16 %v3560
      %v4592 = vunpack.c.l.b16 %v3561
      %v4593 = vunpack.c.l.b16 %v3562
      %v4594 = vunpack.c.l.b16 %v3563
      %v4595 = vunpack.c.l.b16 %v3564
      %v4596 = vunpack.c.l.b16 %v3565
      %v4597 = vunpack.c.l.b16 %v3566
      %v4598 = vunpack.c.l.b16 %v3567
      %v4599 = vunpack.c.l.b16 %v3568
      %v4600 = vunpack.c.l.b16 %v3569
      %v4601 = vunpack.c.l.b16 %v3570
      %v4602 = vunpack.c.l.b16 %v3571
      %v4603 = vunpack.c.l.b16 %v3572
      %v4604 = vunpack.c.l.b16 %v3573
      %v4605 = vunpack.c.l.b16 %v3574
      %v4606 = vunpack.c.l.b16 %v3575
      %v4607 = vunpack.c.l.b16 %v3576
      %v4608 = vunpack.c.l.b16 %v3577
      %v4609 = vunpack.c.l.b16 %v3578
      %v4610 = vunpack.c.l.b16 %v3579
      %v4611 = vunpack.c.l.b16 %v3580
      %v4612 = vunpack.c.l.b16 %v3581
      %v4613 = vunpack.c.l.b16 %v3582
      %v4614 = vunpack.c.l.b16 %v3583
      %v4615 = vunpack.c.l.b16 %v3584
      %v4616 = vunpack.c.l.b16 %v3585
      %v4617 = vunpack.c.l.b16 %v3586
      %v4618 = vunpack.c.l.b16 %v3587
      %v4619 = vunpack.c.l.b16 %v3588
      %v4620 = vunpack.c.l.b16 %v3589
      %v4621 = vunpack.c.l.b16 %v3590
      %v4622 = vunpack.c.l.b16 %v3591
      %v4623 = vunpack.c.l.b16 %v3592
      %v4624 = vunpack.c.l.b16 %v3593
      %v4625 = vpack.c.b16 %v4482, %v4481
      %v4626 = vpack.c.b16 %v4484, %v4483
      %v4627 = vpack.c.b16 %v4486, %v4485
      %v4628 = vpack.c.b16 %v4488, %v4487
      %v4629 = vpack.c.b16 %v4490, %v4489
      %v4630 = vpack.c.b16 %v4492, %v4491
      %v4631 = vpack.c.b16 %v4494, %v4493
      %v4632 = vpack.c.b16 %v4496, %v4495
      %v4633 = vpack.c.b16 %v4498, %v4497
      %v4634 = vpack.c.b16 %v4500, %v4499
      %v4635 = vpack.c.b16 %v4502, %v4501
      %v4636 = vpack.c.b16 %v4504, %v4503
      %v4637 = vpack.c.b16 %v4506, %v4505
      %v4638 = vpack.c.b16 %v4508, %v4507
      %v4639 = vpack.c.b16 %v4510, %v4509
      %v4640 = vpack.c.b16 %v4512, %v4511
      %v4641 = vpack.c.b16 %v4514, %v4513
      %v4642 = vpack.c.b16 %v4516, %v4515
      %v4643 = vpack.c.b16 %v4518, %v4517
      %v4644 = vpack.c.b16 %v4520, %v4519
      %v4645 = vpack.c.b16 %v4522, %v4521
      %v4646 = vpack.c.b16 %v4524, %v4523
      %v4647 = vpack.c.b16 %v4526, %v4525
      %v4648 = vpack.c.b16 %v4528, %v4527
      %v4649 = vpack.c.b16 %v4530, %v4529
      %v4650 = vpack.c.b16 %v4532, %v4531
      %v4651 = vpack.c.b16 %v4534, %v4533
      %v4652 = vpack.c.b16 %v4536, %v4535
      %v4653 = vpack.c.b16 %v4538, %v4537
      %v4654 = vpack.c.b16 %v4540, %v4539
      %v4655 = vpack.c.b16 %v4542, %v4541
      %v4656 = vpack.c.b16 %v4544, %v4543
      %v4657 = vpack.c.b16 %v4546, %v4545
      %v4658 = vpack.c.b16 %v4548, %v4547
      %v4659 = vpack.c.b16 %v4550, %v4549
      %v4660 = vpack.c.b16 %v4552, %v4551
      %v4661 = vpack.c.b16 %v4554, %v4553
      %v4662 = vpack.c.b16 %v4556, %v4555
      %v4663 = vpack.c.b16 %v4558, %v4557
      %v4664 = vpack.c.b16 %v4560, %v4559
      %v4665 = vpack.c.b16 %v4562, %v4561
      %v4666 = vpack.c.b16 %v4564, %v4563
      %v4667 = vpack.c.b16 %v4566, %v4565
      %v4668 = vpack.c.b16 %v4568, %v4567
      %v4669 = vpack.c.b16 %v4570, %v4569
      %v4670 = vpack.c.b16 %v4572, %v4571
      %v4671 = vpack.c.b16 %v4574, %v4573
      %v4672 = vpack.c.b16 %v4576, %v4575
      %v4673 = vpack.c.b16 %v4578, %v4577
      %v4674 = vpack.c.b16 %v4580, %v4579
      %v4675 = vpack.c.b16 %v4582, %v4581
      %v4676 = vpack.c.b16 %v4584, %v4583
      %v4677 = vpack.c.b16 %v4586, %v4585
      %v4678 = vpack.c.b16 %v4588, %v4587
      %v4679 = vpack.c.b16 %v4590, %v4589
      %v4680 = vpack.c.b16 %v4592, %v4591
      %v4681 = vpack.c.b16 %v4594, %v4593
      %v4682 = vpack.c.b16 %v4596, %v4595
      %v4683 = vpack.c.b16 %v4598, %v4597
      %v4684 = vpack.c.b16 %v4600, %v4599
      %v4685 = vpack.c.b16 %v4602, %v4601
      %v4686 = vpack.c.b16 %v4604, %v4603
      %v4687 = vpack.c.b16 %v4606, %v4605
      %v4688 = vpack.c.b16 %v4608, %v4607
      %v4689 = vpack.c.b16 %v4610, %v4609
      %v4690 = vpack.c.b16 %v4612, %v4611
      %v4691 = vpack.c.b16 %v4614, %v4613
      %v4692 = vpack.c.b16 %v4616, %v4615
      %v4693 = vpack.c.b16 %v4618, %v4617
      %v4694 = vpack.c.b16 %v4620, %v4619
      %v4695 = vpack.c.b16 %v4622, %v4621
      %v4696 = vpack.c.b16 %v4624, %v4623
      %4769 = vmatprep.subr.bf16.mxu0 0
      %4770 = vmatpush1.bf16.msra.mxu0 %v4632
      %4771 = vmatprep.subr.bf16.mxu0 0
      %4772 = vmatpush1.bf16.msra.mxu0 %v4631
      %4773 = vmatprep.subr.bf16.mxu0 0
      %4774 = vmatpush1.bf16.msra.mxu0 %v4630
      %4775 = vmatprep.subr.bf16.mxu0 0
      %4776 = vmatpush1.bf16.msra.mxu0 %v4629
      %4777 = vmatprep.subr.bf16.mxu0 0
      %4778 = vmatpush1.bf16.msra.mxu0 %v4628
      %4779 = vmatprep.subr.bf16.mxu0 0
      %4780 = vmatpush1.bf16.msra.mxu0 %v4627
      %4781 = vmatprep.subr.bf16.mxu0 0
      %4782 = vmatpush1.bf16.msra.mxu0 %v4626
      %4783 = vmatprep.subr.bf16.mxu0 0
      %4784 = vmatpush1.bf16.msra.mxu0 %v4625
      %4785 = vmatprep.subr.bf16.mxu0 0
      %4786 = vmatpush2.bf16.msra.mxu0 %v4640
      %4787 = vmatprep.subr.bf16.mxu0 0
      %4788 = vmatpush2.bf16.msra.mxu0 %v4639
      %4789 = vmatprep.subr.bf16.mxu0 0
      %4790 = vmatpush2.bf16.msra.mxu0 %v4638
      %4791 = vmatprep.subr.bf16.mxu0 0
      %4792 = vmatpush2.bf16.msra.mxu0 %v4637
      %4793 = vmatprep.subr.bf16.mxu0 0
      %4794 = vmatpush2.bf16.msra.mxu0 %v4636
      %4795 = vmatprep.subr.bf16.mxu0 0
      %4796 = vmatpush2.bf16.msra.mxu0 %v4635
      %4797 = vmatprep.subr.bf16.mxu0 0
      %4798 = vmatpush2.bf16.msra.mxu0 %v4634
      %4799 = vmatprep.subr.bf16.mxu0 0
      %4800 = vmatpush2.bf16.msra.mxu0 %v4633
      %4801 = vmatprep.mubr.bf16.mxu0 %v4050
      %4802 = vmatmul.mubr.bf16.gmra.mxu0 %v4049
      %v4803 = vpop.f32.mrf.mxu0
      %v4804 = vadd.f32 %v3599, %v4803
      %v4805 = vpop.f32.mrf.mxu0
      %v4806 = vpop.f32.mrf.mxu0
      %v4807 = vadd.f32 %v3599, %v4806
      %v4808 = vpop.f32.mrf.mxu0
      %4809 = vmatprep.mubr.bf16.mxu0 %v4059
      %4810 = vmatmul.mubr.bf16.gmra.mxu0 %v4058
      %v4811 = vpop.f32.mrf.mxu0
      %v4812 = vadd.f32 %v3599, %v4811
      %v4813 = vpop.f32.mrf.mxu0
      %v4814 = vpop.f32.mrf.mxu0
      %v4815 = vadd.f32 %v3599, %v4814
      %v4816 = vpop.f32.mrf.mxu0
      %4817 = vmatprep.mubr.bf16.mxu0 %v4068
      %4818 = vmatmul.mubr.bf16.gmra.mxu0 %v4067
      %v4819 = vpop.f32.mrf.mxu0
      %v4820 = vadd.f32 %v3599, %v4819
      %v4821 = vpop.f32.mrf.mxu0
      %v4822 = vpop.f32.mrf.mxu0
      %v4823 = vadd.f32 %v3599, %v4822
      %v4824 = vpop.f32.mrf.mxu0
      %4825 = vmatprep.mubr.bf16.mxu0 %v4077
      %4826 = vmatmul.mubr.bf16.gmra.mxu0 %v4076
      %v4827 = vpop.f32.mrf.mxu0
      %v4828 = vadd.f32 %v3599, %v4827
      %v4829 = vpop.f32.mrf.mxu0
      %v4830 = vpop.f32.mrf.mxu0
      %v4831 = vadd.f32 %v3599, %v4830
      %v4832 = vpop.f32.mrf.mxu0
      %4833 = vmatprep.mubr.bf16.mxu0 %v4086
      %4834 = vmatmul.mubr.bf16.gmra.mxu0 %v4085
      %v4835 = vpop.f32.mrf.mxu0
      %v4836 = vadd.f32 %v3599, %v4835
      %v4837 = vpop.f32.mrf.mxu0
      %v4838 = vpop.f32.mrf.mxu0
      %v4839 = vadd.f32 %v3599, %v4838
      %v4840 = vpop.f32.mrf.mxu0
      %4841 = vmatprep.mubr.bf16.mxu0 %v4095
      %4842 = vmatmul.mubr.bf16.gmra.mxu0 %v4094
      %v4843 = vpop.f32.mrf.mxu0
      %v4844 = vadd.f32 %v3599, %v4843
      %v4845 = vpop.f32.mrf.mxu0
      %v4846 = vpop.f32.mrf.mxu0
      %v4847 = vadd.f32 %v3599, %v4846
      %v4848 = vpop.f32.mrf.mxu0
      %4849 = vmatprep.mubr.bf16.mxu0 %v4104
      %4850 = vmatmul.mubr.bf16.gmra.mxu0 %v4103
      %v4851 = vpop.f32.mrf.mxu0
      %v4852 = vadd.f32 %v3599, %v4851
      %v4853 = vpop.f32.mrf.mxu0
      %v4854 = vpop.f32.mrf.mxu0
      %v4855 = vadd.f32 %v3599, %v4854
      %v4856 = vpop.f32.mrf.mxu0
      %4857 = vmatprep.mubr.bf16.mxu0 %v4113
      %4858 = vmatmul.mubr.bf16.gmra.mxu0 %v4112
      %v4859 = vpop.f32.mrf.mxu0
      %v4860 = vadd.f32 %v3599, %v4859
      %v4861 = vpop.f32.mrf.mxu0
      %v4862 = vpop.f32.mrf.mxu0
      %v4863 = vadd.f32 %v3599, %v4862
      %v4864 = vpop.f32.mrf.mxu0
      %4865 = vmatprep.mubr.bf16.mxu0 %v4122
      %4866 = vmatmul.mubr.bf16.gmra.mxu0 %v4121
      %v4867 = vpop.f32.mrf.mxu0
      %v4868 = vadd.f32 %v3599, %v4867
      %v4869 = vpop.f32.mrf.mxu0
      %v4870 = vpop.f32.mrf.mxu0
      %v4871 = vadd.f32 %v3599, %v4870
      %v4872 = vpop.f32.mrf.mxu0
      %4873 = vmatprep.mubr.bf16.mxu0 %v4131
      %4874 = vmatmul.mubr.bf16.gmra.mxu0 %v4130
      %v4875 = vpop.f32.mrf.mxu0
      %v4876 = vadd.f32 %v3599, %v4875
      %v4877 = vpop.f32.mrf.mxu0
      %v4878 = vpop.f32.mrf.mxu0
      %v4879 = vadd.f32 %v3599, %v4878
      %v4880 = vpop.f32.mrf.mxu0
      %4881 = vmatprep.mubr.bf16.mxu0 %v4140
      %4882 = vmatmul.mubr.bf16.gmra.mxu0 %v4139
      %v4883 = vpop.f32.mrf.mxu0
      %v4884 = vadd.f32 %v3599, %v4883
      %v4885 = vpop.f32.mrf.mxu0
      %v4886 = vpop.f32.mrf.mxu0
      %v4887 = vadd.f32 %v3599, %v4886
      %v4888 = vpop.f32.mrf.mxu0
      %4889 = vmatprep.mubr.bf16.mxu0 %v4149
      %4890 = vmatmul.mubr.bf16.gmra.mxu0 %v4148
      %v4891 = vpop.f32.mrf.mxu0
      %v4892 = vadd.f32 %v3599, %v4891
      %v4893 = vpop.f32.mrf.mxu0
      %v4894 = vpop.f32.mrf.mxu0
      %v4895 = vadd.f32 %v3599, %v4894
      %v4896 = vpop.f32.mrf.mxu0
      %4897 = vmatprep.mubr.bf16.mxu0 %v4158
      %4898 = vmatmul.mubr.bf16.gmra.mxu0 %v4157
      %v4899 = vpop.f32.mrf.mxu0
      %v4900 = vadd.f32 %v3599, %v4899
      %v4901 = vpop.f32.mrf.mxu0
      %v4902 = vpop.f32.mrf.mxu0
      %v4903 = vadd.f32 %v3599, %v4902
      %v4904 = vpop.f32.mrf.mxu0
      %4905 = vmatprep.mubr.bf16.mxu0 %v4167
      %4906 = vmatmul.mubr.bf16.gmra.mxu0 %v4166
      %v4907 = vpop.f32.mrf.mxu0
      %v4908 = vadd.f32 %v3599, %v4907
      %v4909 = vpop.f32.mrf.mxu0
      %v4910 = vpop.f32.mrf.mxu0
      %v4911 = vadd.f32 %v3599, %v4910
      %v4912 = vpop.f32.mrf.mxu0
      %4913 = vmatprep.mubr.bf16.mxu0 %v4176
      %4914 = vmatmul.mubr.bf16.gmra.mxu0 %v4175
      %v4915 = vpop.f32.mrf.mxu0
      %v4916 = vadd.f32 %v3599, %v4915
      %v4917 = vpop.f32.mrf.mxu0
      %v4918 = vpop.f32.mrf.mxu0
      %v4919 = vadd.f32 %v3599, %v4918
      %v4920 = vpop.f32.mrf.mxu0
      %4921 = vmatprep.mubr.bf16.mxu0 %v4185
      %4922 = vmatmul.mubr.bf16.gmra.mxu0 %v4184
      %v4923 = vpop.f32.mrf.mxu0
      %v4924 = vadd.f32 %v3599, %v4923
      %v4925 = vpop.f32.mrf.mxu0
      %v4926 = vpop.f32.mrf.mxu0
      %v4927 = vadd.f32 %v3599, %v4926
      %v4928 = vpop.f32.mrf.mxu0
      %4929 = vdwg.mxu0
      %4930 = vmatprep.subr.bf16.mxu0 0
      %4931 = vmatpush1.bf16.msra.mxu0 %v4648
      %4932 = vmatprep.subr.bf16.mxu0 0
      %4933 = vmatpush1.bf16.msra.mxu0 %v4647
      %4934 = vmatprep.subr.bf16.mxu0 0
      %4935 = vmatpush1.bf16.msra.mxu0 %v4646
      %4936 = vmatprep.subr.bf16.mxu0 0
      %4937 = vmatpush1.bf16.msra.mxu0 %v4645
      %4938 = vmatprep.subr.bf16.mxu0 0
      %4939 = vmatpush1.bf16.msra.mxu0 %v4644
      %4940 = vmatprep.subr.bf16.mxu0 0
      %4941 = vmatpush1.bf16.msra.mxu0 %v4643
      %4942 = vmatprep.subr.bf16.mxu0 0
      %4943 = vmatpush1.bf16.msra.mxu0 %v4642
      %4944 = vmatprep.subr.bf16.mxu0 0
      %4945 = vmatpush1.bf16.msra.mxu0 %v4641
      %4946 = vmatprep.subr.bf16.mxu0 0
      %4947 = vmatpush2.bf16.msra.mxu0 %v4656
      %4948 = vmatprep.subr.bf16.mxu0 0
      %4949 = vmatpush2.bf16.msra.mxu0 %v4655
      %4950 = vmatprep.subr.bf16.mxu0 0
      %4951 = vmatpush2.bf16.msra.mxu0 %v4654
      %4952 = vmatprep.subr.bf16.mxu0 0
      %4953 = vmatpush2.bf16.msra.mxu0 %v4653
      %4954 = vmatprep.subr.bf16.mxu0 0
      %4955 = vmatpush2.bf16.msra.mxu0 %v4652
      %4956 = vmatprep.subr.bf16.mxu0 0
      %4957 = vmatpush2.bf16.msra.mxu0 %v4651
      %4958 = vmatprep.subr.bf16.mxu0 0
      %4959 = vmatpush2.bf16.msra.mxu0 %v4650
      %4960 = vmatprep.subr.bf16.mxu0 0
      %4961 = vmatpush2.bf16.msra.mxu0 %v4649
      %4962 = vmatprep.mubr.bf16.mxu0 %v4052
      %4963 = vmatmul.mubr.bf16.gmra.mxu0 %v4051
      %v4964 = vpop.f32.mrf.mxu0
      %v4965 = vadd.f32 %v4804, %v4964
      %v4966 = vpop.f32.mrf.mxu0
      %v4967 = vpop.f32.mrf.mxu0
      %v4968 = vadd.f32 %v4807, %v4967
      %v4969 = vpop.f32.mrf.mxu0
      %4970 = vmatprep.mubr.bf16.mxu0 %v4061
      %4971 = vmatmul.mubr.bf16.gmra.mxu0 %v4060
      %v4972 = vpop.f32.mrf.mxu0
      %v4973 = vadd.f32 %v4812, %v4972
      %v4974 = vpop.f32.mrf.mxu0
      %v4975 = vpop.f32.mrf.mxu0
      %v4976 = vadd.f32 %v4815, %v4975
      %v4977 = vpop.f32.mrf.mxu0
      %4978 = vmatprep.mubr.bf16.mxu0 %v4070
      %4979 = vmatmul.mubr.bf16.gmra.mxu0 %v4069
      %v4980 = vpop.f32.mrf.mxu0
      %v4981 = vadd.f32 %v4820, %v4980
      %v4982 = vpop.f32.mrf.mxu0
      %v4983 = vpop.f32.mrf.mxu0
      %v4984 = vadd.f32 %v4823, %v4983
      %v4985 = vpop.f32.mrf.mxu0
      %4986 = vmatprep.mubr.bf16.mxu0 %v4079
      %4987 = vmatmul.mubr.bf16.gmra.mxu0 %v4078
      %v4988 = vpop.f32.mrf.mxu0
      %v4989 = vadd.f32 %v4828, %v4988
      %v4990 = vpop.f32.mrf.mxu0
      %v4991 = vpop.f32.mrf.mxu0
      %v4992 = vadd.f32 %v4831, %v4991
      %v4993 = vpop.f32.mrf.mxu0
      %4994 = vmatprep.mubr.bf16.mxu0 %v4088
      %4995 = vmatmul.mubr.bf16.gmra.mxu0 %v4087
      %v4996 = vpop.f32.mrf.mxu0
      %v4997 = vadd.f32 %v4836, %v4996
      %v4998 = vpop.f32.mrf.mxu0
      %v4999 = vpop.f32.mrf.mxu0
      %v5000 = vadd.f32 %v4839, %v4999
      %v5001 = vpop.f32.mrf.mxu0
      %5002 = vmatprep.mubr.bf16.mxu0 %v4097
      %5003 = vmatmul.mubr.bf16.gmra.mxu0 %v4096
      %v5004 = vpop.f32.mrf.mxu0
      %v5005 = vadd.f32 %v4844, %v5004
      %v5006 = vpop.f32.mrf.mxu0
      %v5007 = vpop.f32.mrf.mxu0
      %v5008 = vadd.f32 %v4847, %v5007
      %v5009 = vpop.f32.mrf.mxu0
      %5010 = vmatprep.mubr.bf16.mxu0 %v4106
      %5011 = vmatmul.mubr.bf16.gmra.mxu0 %v4105
      %v5012 = vpop.f32.mrf.mxu0
      %v5013 = vadd.f32 %v4852, %v5012
      %v5014 = vpop.f32.mrf.mxu0
      %v5015 = vpop.f32.mrf.mxu0
      %v5016 = vadd.f32 %v4855, %v5015
      %v5017 = vpop.f32.mrf.mxu0
      %5018 = vmatprep.mubr.bf16.mxu0 %v4115
      %5019 = vmatmul.mubr.bf16.gmra.mxu0 %v4114
      %v5020 = vpop.f32.mrf.mxu0
      %v5021 = vadd.f32 %v4860, %v5020
      %v5022 = vpop.f32.mrf.mxu0
      %v5023 = vpop.f32.mrf.mxu0
      %v5024 = vadd.f32 %v4863, %v5023
      %v5025 = vpop.f32.mrf.mxu0
      %5026 = vmatprep.mubr.bf16.mxu0 %v4124
      %5027 = vmatmul.mubr.bf16.gmra.mxu0 %v4123
      %v5028 = vpop.f32.mrf.mxu0
      %v5029 = vadd.f32 %v4868, %v5028
      %v5030 = vpop.f32.mrf.mxu0
      %v5031 = vpop.f32.mrf.mxu0
      %v5032 = vadd.f32 %v4871, %v5031
      %v5033 = vpop.f32.mrf.mxu0
      %5034 = vmatprep.mubr.bf16.mxu0 %v4133
      %5035 = vmatmul.mubr.bf16.gmra.mxu0 %v4132
      %v5036 = vpop.f32.mrf.mxu0
      %v5037 = vadd.f32 %v4876, %v5036
      %v5038 = vpop.f32.mrf.mxu0
      %v5039 = vpop.f32.mrf.mxu0
      %v5040 = vadd.f32 %v4879, %v5039
      %v5041 = vpop.f32.mrf.mxu0
      %5042 = vmatprep.mubr.bf16.mxu0 %v4142
      %5043 = vmatmul.mubr.bf16.gmra.mxu0 %v4141
      %v5044 = vpop.f32.mrf.mxu0
      %v5045 = vadd.f32 %v4884, %v5044
      %v5046 = vpop.f32.mrf.mxu0
      %v5047 = vpop.f32.mrf.mxu0
      %v5048 = vadd.f32 %v4887, %v5047
      %v5049 = vpop.f32.mrf.mxu0
      %5050 = vmatprep.mubr.bf16.mxu0 %v4151
      %5051 = vmatmul.mubr.bf16.gmra.mxu0 %v4150
      %v5052 = vpop.f32.mrf.mxu0
      %v5053 = vadd.f32 %v4892, %v5052
      %v5054 = vpop.f32.mrf.mxu0
      %v5055 = vpop.f32.mrf.mxu0
      %v5056 = vadd.f32 %v4895, %v5055
      %v5057 = vpop.f32.mrf.mxu0
      %5058 = vmatprep.mubr.bf16.mxu0 %v4160
      %5059 = vmatmul.mubr.bf16.gmra.mxu0 %v4159
      %v5060 = vpop.f32.mrf.mxu0
      %v5061 = vadd.f32 %v4900, %v5060
      %v5062 = vpop.f32.mrf.mxu0
      %v5063 = vpop.f32.mrf.mxu0
      %v5064 = vadd.f32 %v4903, %v5063
      %v5065 = vpop.f32.mrf.mxu0
      %5066 = vmatprep.mubr.bf16.mxu0 %v4169
      %5067 = vmatmul.mubr.bf16.gmra.mxu0 %v4168
      %v5068 = vpop.f32.mrf.mxu0
      %v5069 = vadd.f32 %v4908, %v5068
      %v5070 = vpop.f32.mrf.mxu0
      %v5071 = vpop.f32.mrf.mxu0
      %v5072 = vadd.f32 %v4911, %v5071
      %v5073 = vpop.f32.mrf.mxu0
      %5074 = vmatprep.mubr.bf16.mxu0 %v4178
      %5075 = vmatmul.mubr.bf16.gmra.mxu0 %v4177
      %v5076 = vpop.f32.mrf.mxu0
      %v5077 = vadd.f32 %v4916, %v5076
      %v5078 = vpop.f32.mrf.mxu0
      %v5079 = vpop.f32.mrf.mxu0
      %v5080 = vadd.f32 %v4919, %v5079
      %v5081 = vpop.f32.mrf.mxu0
      %5082 = vmatprep.mubr.bf16.mxu0 %v4187
      %5083 = vmatmul.mubr.bf16.gmra.mxu0 %v4186
      %v5084 = vpop.f32.mrf.mxu0
      %v5085 = vadd.f32 %v4924, %v5084
      %v5086 = vpop.f32.mrf.mxu0
      %v5087 = vpop.f32.mrf.mxu0
      %v5088 = vadd.f32 %v4927, %v5087
      %v5089 = vpop.f32.mrf.mxu0
      %5090 = vdwg.mxu0
      %5091 = vmatprep.subr.bf16.mxu0 0
      %5092 = vmatpush1.bf16.msra.mxu0 %v4664
      %5093 = vmatprep.subr.bf16.mxu0 0
      %5094 = vmatpush1.bf16.msra.mxu0 %v4663
      %5095 = vmatprep.subr.bf16.mxu0 0
      %5096 = vmatpush1.bf16.msra.mxu0 %v4662
      %5097 = vmatprep.subr.bf16.mxu0 0
      %5098 = vmatpush1.bf16.msra.mxu0 %v4661
      %5099 = vmatprep.subr.bf16.mxu0 0
      %5100 = vmatpush1.bf16.msra.mxu0 %v4660
      %5101 = vmatprep.subr.bf16.mxu0 0
      %5102 = vmatpush1.bf16.msra.mxu0 %v4659
      %5103 = vmatprep.subr.bf16.mxu0 0
      %5104 = vmatpush1.bf16.msra.mxu0 %v4658
      %5105 = vmatprep.subr.bf16.mxu0 0
      %5106 = vmatpush1.bf16.msra.mxu0 %v4657
      %5107 = vmatprep.subr.bf16.mxu0 0
      %5108 = vmatpush2.bf16.msra.mxu0 %v4672
      %5109 = vmatprep.subr.bf16.mxu0 0
      %5110 = vmatpush2.bf16.msra.mxu0 %v4671
      %5111 = vmatprep.subr.bf16.mxu0 0
      %5112 = vmatpush2.bf16.msra.mxu0 %v4670
      %5113 = vmatprep.subr.bf16.mxu0 0
      %5114 = vmatpush2.bf16.msra.mxu0 %v4669
      %5115 = vmatprep.subr.bf16.mxu0 0
      %5116 = vmatpush2.bf16.msra.mxu0 %v4668
      %5117 = vmatprep.subr.bf16.mxu0 0
      %5118 = vmatpush2.bf16.msra.mxu0 %v4667
      %5119 = vmatprep.subr.bf16.mxu0 0
      %5120 = vmatpush2.bf16.msra.mxu0 %v4666
      %5121 = vmatprep.subr.bf16.mxu0 0
      %5122 = vmatpush2.bf16.msra.mxu0 %v4665
      %5123 = vmatprep.mubr.bf16.mxu0 %v4054
      %5124 = vmatmul.mubr.bf16.gmra.mxu0 %v4053
      %v5125 = vpop.f32.mrf.mxu0
      %v5126 = vadd.f32 %v4965, %v5125
      %v5127 = vpop.f32.mrf.mxu0
      %v5128 = vpop.f32.mrf.mxu0
      %v5129 = vadd.f32 %v4968, %v5128
      %v5130 = vpop.f32.mrf.mxu0
      %5131 = vmatprep.mubr.bf16.mxu0 %v4063
      %5132 = vmatmul.mubr.bf16.gmra.mxu0 %v4062
      %v5133 = vpop.f32.mrf.mxu0
      %v5134 = vadd.f32 %v4973, %v5133
      %v5135 = vpop.f32.mrf.mxu0
      %v5136 = vpop.f32.mrf.mxu0
      %v5137 = vadd.f32 %v4976, %v5136
      %v5138 = vpop.f32.mrf.mxu0
      %5139 = vmatprep.mubr.bf16.mxu0 %v4072
      %5140 = vmatmul.mubr.bf16.gmra.mxu0 %v4071
      %v5141 = vpop.f32.mrf.mxu0
      %v5142 = vadd.f32 %v4981, %v5141
      %v5143 = vpop.f32.mrf.mxu0
      %v5144 = vpop.f32.mrf.mxu0
      %v5145 = vadd.f32 %v4984, %v5144
      %v5146 = vpop.f32.mrf.mxu0
      %5147 = vmatprep.mubr.bf16.mxu0 %v4081
      %5148 = vmatmul.mubr.bf16.gmra.mxu0 %v4080
      %v5149 = vpop.f32.mrf.mxu0
      %v5150 = vadd.f32 %v4989, %v5149
      %v5151 = vpop.f32.mrf.mxu0
      %v5152 = vpop.f32.mrf.mxu0
      %v5153 = vadd.f32 %v4992, %v5152
      %v5154 = vpop.f32.mrf.mxu0
      %5155 = vmatprep.mubr.bf16.mxu0 %v4090
      %5156 = vmatmul.mubr.bf16.gmra.mxu0 %v4089
      %v5157 = vpop.f32.mrf.mxu0
      %v5158 = vadd.f32 %v4997, %v5157
      %v5159 = vpop.f32.mrf.mxu0
      %v5160 = vpop.f32.mrf.mxu0
      %v5161 = vadd.f32 %v5000, %v5160
      %v5162 = vpop.f32.mrf.mxu0
      %5163 = vmatprep.mubr.bf16.mxu0 %v4099
      %5164 = vmatmul.mubr.bf16.gmra.mxu0 %v4098
      %v5165 = vpop.f32.mrf.mxu0
      %v5166 = vadd.f32 %v5005, %v5165
      %v5167 = vpop.f32.mrf.mxu0
      %v5168 = vpop.f32.mrf.mxu0
      %v5169 = vadd.f32 %v5008, %v5168
      %v5170 = vpop.f32.mrf.mxu0
      %5171 = vmatprep.mubr.bf16.mxu0 %v4108
      %5172 = vmatmul.mubr.bf16.gmra.mxu0 %v4107
      %v5173 = vpop.f32.mrf.mxu0
      %v5174 = vadd.f32 %v5013, %v5173
      %v5175 = vpop.f32.mrf.mxu0
      %v5176 = vpop.f32.mrf.mxu0
      %v5177 = vadd.f32 %v5016, %v5176
      %v5178 = vpop.f32.mrf.mxu0
      %5179 = vmatprep.mubr.bf16.mxu0 %v4117
      %5180 = vmatmul.mubr.bf16.gmra.mxu0 %v4116
      %v5181 = vpop.f32.mrf.mxu0
      %v5182 = vadd.f32 %v5021, %v5181
      %v5183 = vpop.f32.mrf.mxu0
      %v5184 = vpop.f32.mrf.mxu0
      %v5185 = vadd.f32 %v5024, %v5184
      %v5186 = vpop.f32.mrf.mxu0
      %5187 = vmatprep.mubr.bf16.mxu0 %v4126
      %5188 = vmatmul.mubr.bf16.gmra.mxu0 %v4125
      %v5189 = vpop.f32.mrf.mxu0
      %v5190 = vadd.f32 %v5029, %v5189
      %v5191 = vpop.f32.mrf.mxu0
      %v5192 = vpop.f32.mrf.mxu0
      %v5193 = vadd.f32 %v5032, %v5192
      %v5194 = vpop.f32.mrf.mxu0
      %5195 = vmatprep.mubr.bf16.mxu0 %v4135
      %5196 = vmatmul.mubr.bf16.gmra.mxu0 %v4134
      %v5197 = vpop.f32.mrf.mxu0
      %v5198 = vadd.f32 %v5037, %v5197
      %v5199 = vpop.f32.mrf.mxu0
      %v5200 = vpop.f32.mrf.mxu0
      %v5201 = vadd.f32 %v5040, %v5200
      %v5202 = vpop.f32.mrf.mxu0
      %5203 = vmatprep.mubr.bf16.mxu0 %v4144
      %5204 = vmatmul.mubr.bf16.gmra.mxu0 %v4143
      %v5205 = vpop.f32.mrf.mxu0
      %v5206 = vadd.f32 %v5045, %v5205
      %v5207 = vpop.f32.mrf.mxu0
      %v5208 = vpop.f32.mrf.mxu0
      %v5209 = vadd.f32 %v5048, %v5208
      %v5210 = vpop.f32.mrf.mxu0
      %5211 = vmatprep.mubr.bf16.mxu0 %v4153
      %5212 = vmatmul.mubr.bf16.gmra.mxu0 %v4152
      %v5213 = vpop.f32.mrf.mxu0
      %v5214 = vadd.f32 %v5053, %v5213
      %v5215 = vpop.f32.mrf.mxu0
      %v5216 = vpop.f32.mrf.mxu0
      %v5217 = vadd.f32 %v5056, %v5216
      %v5218 = vpop.f32.mrf.mxu0
      %5219 = vmatprep.mubr.bf16.mxu0 %v4162
      %5220 = vmatmul.mubr.bf16.gmra.mxu0 %v4161
      %v5221 = vpop.f32.mrf.mxu0
      %v5222 = vadd.f32 %v5061, %v5221
      %v5223 = vpop.f32.mrf.mxu0
      %v5224 = vpop.f32.mrf.mxu0
      %v5225 = vadd.f32 %v5064, %v5224
      %v5226 = vpop.f32.mrf.mxu0
      %5227 = vmatprep.mubr.bf16.mxu0 %v4171
      %5228 = vmatmul.mubr.bf16.gmra.mxu0 %v4170
      %v5229 = vpop.f32.mrf.mxu0
      %v5230 = vadd.f32 %v5069, %v5229
      %v5231 = vpop.f32.mrf.mxu0
      %v5232 = vpop.f32.mrf.mxu0
      %v5233 = vadd.f32 %v5072, %v5232
      %v5234 = vpop.f32.mrf.mxu0
      %5235 = vmatprep.mubr.bf16.mxu0 %v4180
      %5236 = vmatmul.mubr.bf16.gmra.mxu0 %v4179
      %v5237 = vpop.f32.mrf.mxu0
      %v5238 = vadd.f32 %v5077, %v5237
      %v5239 = vpop.f32.mrf.mxu0
      %v5240 = vpop.f32.mrf.mxu0
      %v5241 = vadd.f32 %v5080, %v5240
      %v5242 = vpop.f32.mrf.mxu0
      %5243 = vmatprep.mubr.bf16.mxu0 %v4189
      %5244 = vmatmul.mubr.bf16.gmra.mxu0 %v4188
      %v5245 = vpop.f32.mrf.mxu0
      %v5246 = vadd.f32 %v5085, %v5245
      %v5247 = vpop.f32.mrf.mxu0
      %v5248 = vpop.f32.mrf.mxu0
      %v5249 = vadd.f32 %v5088, %v5248
      %v5250 = vpop.f32.mrf.mxu0
      %5251 = vdwg.mxu0
      %5252 = vmatprep.subr.bf16.mxu0 0
      %5253 = vmatpush1.bf16.msra.mxu0 %v4680
      %5254 = vmatprep.subr.bf16.mxu0 0
      %5255 = vmatpush1.bf16.msra.mxu0 %v4679
      %5256 = vmatprep.subr.bf16.mxu0 0
      %5257 = vmatpush1.bf16.msra.mxu0 %v4678
      %5258 = vmatprep.subr.bf16.mxu0 0
      %5259 = vmatpush1.bf16.msra.mxu0 %v4677
      %5260 = vmatprep.subr.bf16.mxu0 0
      %5261 = vmatpush1.bf16.msra.mxu0 %v4676
      %5262 = vmatprep.subr.bf16.mxu0 0
      %5263 = vmatpush1.bf16.msra.mxu0 %v4675
      %5264 = vmatprep.subr.bf16.mxu0 0
      %5265 = vmatpush1.bf16.msra.mxu0 %v4674
      %5266 = vmatprep.subr.bf16.mxu0 0
      %5267 = vmatpush1.bf16.msra.mxu0 %v4673
      %5268 = vmatprep.subr.bf16.mxu0 0
      %5269 = vmatpush2.bf16.msra.mxu0 %v4688
      %5270 = vmatprep.subr.bf16.mxu0 0
      %5271 = vmatpush2.bf16.msra.mxu0 %v4687
      %5272 = vmatprep.subr.bf16.mxu0 0
      %5273 = vmatpush2.bf16.msra.mxu0 %v4686
      %5274 = vmatprep.subr.bf16.mxu0 0
      %5275 = vmatpush2.bf16.msra.mxu0 %v4685
      %5276 = vmatprep.subr.bf16.mxu0 0
      %5277 = vmatpush2.bf16.msra.mxu0 %v4684
      %5278 = vmatprep.subr.bf16.mxu0 0
      %5279 = vmatpush2.bf16.msra.mxu0 %v4683
      %5280 = vmatprep.subr.bf16.mxu0 0
      %5281 = vmatpush2.bf16.msra.mxu0 %v4682
      %5282 = vmatprep.subr.bf16.mxu0 0
      %5283 = vmatpush2.bf16.msra.mxu0 %v4681
      %5284 = vmatprep.mubr.bf16.mxu0 %v4056
      %5285 = vmatmul.mubr.bf16.gmra.mxu0 %v4055
      %v5286 = vpop.f32.mrf.mxu0
      %v5287 = vadd.f32 %v5126, %v5286
      %v5288 = vpop.f32.mrf.mxu0
      %v5289 = vpop.f32.mrf.mxu0
      %v5290 = vadd.f32 %v5129, %v5289
      %v5291 = vpop.f32.mrf.mxu0
      %5292 = vmatprep.mubr.bf16.mxu0 %v4065
      %5293 = vmatmul.mubr.bf16.gmra.mxu0 %v4064
      %v5294 = vpop.f32.mrf.mxu0
      %v5295 = vadd.f32 %v5134, %v5294
      %v5296 = vpop.f32.mrf.mxu0
      %v5297 = vpop.f32.mrf.mxu0
      %v5298 = vadd.f32 %v5137, %v5297
      %v5299 = vpop.f32.mrf.mxu0
      %5300 = vmatprep.mubr.bf16.mxu0 %v4074
      %5301 = vmatmul.mubr.bf16.gmra.mxu0 %v4073
      %v5302 = vpop.f32.mrf.mxu0
      %v5303 = vadd.f32 %v5142, %v5302
      %v5304 = vpop.f32.mrf.mxu0
      %v5305 = vpop.f32.mrf.mxu0
      %v5306 = vadd.f32 %v5145, %v5305
      %v5307 = vpop.f32.mrf.mxu0
      %5308 = vmatprep.mubr.bf16.mxu0 %v4083
      %5309 = vmatmul.mubr.bf16.gmra.mxu0 %v4082
      %v5310 = vpop.f32.mrf.mxu0
      %v5311 = vadd.f32 %v5150, %v5310
      %v5312 = vpop.f32.mrf.mxu0
      %v5313 = vpop.f32.mrf.mxu0
      %v5314 = vadd.f32 %v5153, %v5313
      %v5315 = vpop.f32.mrf.mxu0
      %5316 = vmatprep.mubr.bf16.mxu0 %v4092
      %5317 = vmatmul.mubr.bf16.gmra.mxu0 %v4091
      %v5318 = vpop.f32.mrf.mxu0
      %v5319 = vadd.f32 %v5158, %v5318
      %v5320 = vpop.f32.mrf.mxu0
      %v5321 = vpop.f32.mrf.mxu0
      %v5322 = vadd.f32 %v5161, %v5321
      %v5323 = vpop.f32.mrf.mxu0
      %5324 = vmatprep.mubr.bf16.mxu0 %v4101
      %5325 = vmatmul.mubr.bf16.gmra.mxu0 %v4100
      %v5326 = vpop.f32.mrf.mxu0
      %v5327 = vadd.f32 %v5166, %v5326
      %v5328 = vpop.f32.mrf.mxu0
      %v5329 = vpop.f32.mrf.mxu0
      %v5330 = vadd.f32 %v5169, %v5329
      %v5331 = vpop.f32.mrf.mxu0
      %5332 = vmatprep.mubr.bf16.mxu0 %v4110
      %5333 = vmatmul.mubr.bf16.gmra.mxu0 %v4109
      %v5334 = vpop.f32.mrf.mxu0
      %v5335 = vadd.f32 %v5174, %v5334
      %v5336 = vpop.f32.mrf.mxu0
      %v5337 = vpop.f32.mrf.mxu0
      %v5338 = vadd.f32 %v5177, %v5337
      %v5339 = vpop.f32.mrf.mxu0
      %5340 = vmatprep.mubr.bf16.mxu0 %v4119
      %5341 = vmatmul.mubr.bf16.gmra.mxu0 %v4118
      %v5342 = vpop.f32.mrf.mxu0
      %v5343 = vadd.f32 %v5182, %v5342
      %v5344 = vpop.f32.mrf.mxu0
      %v5345 = vpop.f32.mrf.mxu0
      %v5346 = vadd.f32 %v5185, %v5345
      %v5347 = vpop.f32.mrf.mxu0
      %5348 = vmatprep.mubr.bf16.mxu0 %v4128
      %5349 = vmatmul.mubr.bf16.gmra.mxu0 %v4127
      %v5350 = vpop.f32.mrf.mxu0
      %v5351 = vadd.f32 %v5190, %v5350
      %v5352 = vpop.f32.mrf.mxu0
      %v5353 = vpop.f32.mrf.mxu0
      %v5354 = vadd.f32 %v5193, %v5353
      %v5355 = vpop.f32.mrf.mxu0
      %5356 = vmatprep.mubr.bf16.mxu0 %v4137
      %5357 = vmatmul.mubr.bf16.gmra.mxu0 %v4136
      %v5358 = vpop.f32.mrf.mxu0
      %v5359 = vadd.f32 %v5198, %v5358
      %v5360 = vpop.f32.mrf.mxu0
      %v5361 = vpop.f32.mrf.mxu0
      %v5362 = vadd.f32 %v5201, %v5361
      %v5363 = vpop.f32.mrf.mxu0
      %5364 = vmatprep.mubr.bf16.mxu0 %v4146
      %5365 = vmatmul.mubr.bf16.gmra.mxu0 %v4145
      %v5366 = vpop.f32.mrf.mxu0
      %v5367 = vadd.f32 %v5206, %v5366
      %v5368 = vpop.f32.mrf.mxu0
      %v5369 = vpop.f32.mrf.mxu0
      %v5370 = vadd.f32 %v5209, %v5369
      %v5371 = vpop.f32.mrf.mxu0
      %5372 = vmatprep.mubr.bf16.mxu0 %v4155
      %5373 = vmatmul.mubr.bf16.gmra.mxu0 %v4154
      %v5374 = vpop.f32.mrf.mxu0
      %v5375 = vadd.f32 %v5214, %v5374
      %v5376 = vpop.f32.mrf.mxu0
      %v5377 = vpop.f32.mrf.mxu0
      %v5378 = vadd.f32 %v5217, %v5377
      %v5379 = vpop.f32.mrf.mxu0
      %5380 = vmatprep.mubr.bf16.mxu0 %v4164
      %5381 = vmatmul.mubr.bf16.gmra.mxu0 %v4163
      %v5382 = vpop.f32.mrf.mxu0
      %v5383 = vadd.f32 %v5222, %v5382
      %v5384 = vpop.f32.mrf.mxu0
      %v5385 = vpop.f32.mrf.mxu0
      %v5386 = vadd.f32 %v5225, %v5385
      %v5387 = vpop.f32.mrf.mxu0
      %5388 = vmatprep.mubr.bf16.mxu0 %v4173
      %5389 = vmatmul.mubr.bf16.gmra.mxu0 %v4172
      %v5390 = vpop.f32.mrf.mxu0
      %v5391 = vadd.f32 %v5230, %v5390
      %v5392 = vpop.f32.mrf.mxu0
      %v5393 = vpop.f32.mrf.mxu0
      %v5394 = vadd.f32 %v5233, %v5393
      %v5395 = vpop.f32.mrf.mxu0
      %5396 = vmatprep.mubr.bf16.mxu0 %v4182
      %5397 = vmatmul.mubr.bf16.gmra.mxu0 %v4181
      %v5398 = vpop.f32.mrf.mxu0
      %v5399 = vadd.f32 %v5238, %v5398
      %v5400 = vpop.f32.mrf.mxu0
      %v5401 = vpop.f32.mrf.mxu0
      %v5402 = vadd.f32 %v5241, %v5401
      %v5403 = vpop.f32.mrf.mxu0
      %5404 = vmatprep.mubr.bf16.mxu0 %v4191
      %5405 = vmatmul.mubr.bf16.gmra.mxu0 %v4190
      %v5406 = vpop.f32.mrf.mxu0
      %v5407 = vadd.f32 %v5246, %v5406
      %v5408 = vpop.f32.mrf.mxu0
      %v5409 = vpop.f32.mrf.mxu0
      %v5410 = vadd.f32 %v5249, %v5409
      %v5411 = vpop.f32.mrf.mxu0
      %5412 = vdwg.mxu0
      %5413 = vmatprep.subr.bf16.mxu0 0
      %5414 = vmatpush1.bf16.msra.mxu0 %v4696
      %5415 = vmatprep.subr.bf16.mxu0 0
      %5416 = vmatpush1.bf16.msra.mxu0 %v4695
      %5417 = vmatprep.subr.bf16.mxu0 0
      %5418 = vmatpush1.bf16.msra.mxu0 %v4694
      %5419 = vmatprep.subr.bf16.mxu0 0
      %5420 = vmatpush1.bf16.msra.mxu0 %v4693
      %5421 = vmatprep.subr.bf16.mxu0 0
      %5422 = vmatpush1.bf16.msra.mxu0 %v4692
      %5423 = vmatprep.subr.bf16.mxu0 0
      %5424 = vmatpush1.bf16.msra.mxu0 %v4691
      %5425 = vmatprep.subr.bf16.mxu0 0
      %5426 = vmatpush1.bf16.msra.mxu0 %v4690
      %5427 = vmatprep.subr.bf16.mxu0 0
      %5428 = vmatpush1.bf16.msra.mxu0 %v4689
      %5429 = vmatprep.subr.bf16.mxu0 0
      %5430 = vmatpush2.bf16.msra.mxu0 0
      %5431 = vmatprep.subr.bf16.mxu0 0
      %5432 = vmatpush2.bf16.msra.mxu0 0
      %5433 = vmatprep.subr.bf16.mxu0 0
      %5434 = vmatpush2.bf16.msra.mxu0 0
      %5435 = vmatprep.subr.bf16.mxu0 0
      %5436 = vmatpush2.bf16.msra.mxu0 0
      %5437 = vmatprep.subr.bf16.mxu0 0
      %5438 = vmatpush2.bf16.msra.mxu0 0
      %5439 = vmatprep.subr.bf16.mxu0 0
      %5440 = vmatpush2.bf16.msra.mxu0 0
      %5441 = vmatprep.subr.bf16.mxu0 0
      %5442 = vmatpush2.bf16.msra.mxu0 0
      %5443 = vmatprep.subr.bf16.mxu0 0
      %5444 = vmatpush2.bf16.msra.mxu0 0
      %5445 = vmatprep.mubr.bf16.mxu0 0
      %5446 = vmatmul.mubr.bf16.gmra.mxu0 %v4057
      %v5447 = vpop.f32.mrf.mxu0
      %v5448 = vadd.f32 %v5287, %v5447
      %v5449 = vpop.f32.mrf.mxu0
      %v5450 = vpop.f32.mrf.mxu0
      %v5451 = vadd.f32 %v5290, %v5450
      %v5452 = vpop.f32.mrf.mxu0
      %5453 = vmatprep.mubr.bf16.mxu0 0
      %5454 = vmatmul.mubr.bf16.gmra.mxu0 %v4066
      %v5455 = vpop.f32.mrf.mxu0
      %v5456 = vadd.f32 %v5295, %v5455
      %v5457 = vpop.f32.mrf.mxu0
      %v5458 = vpop.f32.mrf.mxu0
      %v5459 = vadd.f32 %v5298, %v5458
      %v5460 = vpop.f32.mrf.mxu0
      %5461 = vmatprep.mubr.bf16.mxu0 0
      %5462 = vmatmul.mubr.bf16.gmra.mxu0 %v4075
      %v5463 = vpop.f32.mrf.mxu0
      %v5464 = vadd.f32 %v5303, %v5463
      %v5465 = vpop.f32.mrf.mxu0
      %v5466 = vpop.f32.mrf.mxu0
      %v5467 = vadd.f32 %v5306, %v5466
      %v5468 = vpop.f32.mrf.mxu0
      %5469 = vmatprep.mubr.bf16.mxu0 0
      %5470 = vmatmul.mubr.bf16.gmra.mxu0 %v4084
      %v5471 = vpop.f32.mrf.mxu0
      %v5472 = vadd.f32 %v5311, %v5471
      %v5473 = vpop.f32.mrf.mxu0
      %v5474 = vpop.f32.mrf.mxu0
      %v5475 = vadd.f32 %v5314, %v5474
      %v5476 = vpop.f32.mrf.mxu0
      %5477 = vmatprep.mubr.bf16.mxu0 0
      %5478 = vmatmul.mubr.bf16.gmra.mxu0 %v4093
      %v5479 = vpop.f32.mrf.mxu0
      %v5480 = vadd.f32 %v5319, %v5479
      %v5481 = vpop.f32.mrf.mxu0
      %v5482 = vpop.f32.mrf.mxu0
      %v5483 = vadd.f32 %v5322, %v5482
      %v5484 = vpop.f32.mrf.mxu0
      %5485 = vmatprep.mubr.bf16.mxu0 0
      %5486 = vmatmul.mubr.bf16.gmra.mxu0 %v4102
      %v5487 = vpop.f32.mrf.mxu0
      %v5488 = vadd.f32 %v5327, %v5487
      %v5489 = vpop.f32.mrf.mxu0
      %v5490 = vpop.f32.mrf.mxu0
      %v5491 = vadd.f32 %v5330, %v5490
      %v5492 = vpop.f32.mrf.mxu0
      %5493 = vmatprep.mubr.bf16.mxu0 0
      %5494 = vmatmul.mubr.bf16.gmra.mxu0 %v4111
      %v5495 = vpop.f32.mrf.mxu0
      %v5496 = vadd.f32 %v5335, %v5495
      %v5497 = vpop.f32.mrf.mxu0
      %v5498 = vpop.f32.mrf.mxu0
      %v5499 = vadd.f32 %v5338, %v5498
      %v5500 = vpop.f32.mrf.mxu0
      %5501 = vmatprep.mubr.bf16.mxu0 0
      %5502 = vmatmul.mubr.bf16.gmra.mxu0 %v4120
      %v5503 = vpop.f32.mrf.mxu0
      %v5504 = vadd.f32 %v5343, %v5503
      %v5505 = vpop.f32.mrf.mxu0
      %v5506 = vpop.f32.mrf.mxu0
      %v5507 = vadd.f32 %v5346, %v5506
      %v5508 = vpop.f32.mrf.mxu0
      %5509 = vmatprep.mubr.bf16.mxu0 0
      %5510 = vmatmul.mubr.bf16.gmra.mxu0 %v4129
      %v5511 = vpop.f32.mrf.mxu0
      %v5512 = vadd.f32 %v5351, %v5511
      %v5513 = vpop.f32.mrf.mxu0
      %v5514 = vpop.f32.mrf.mxu0
      %v5515 = vadd.f32 %v5354, %v5514
      %v5516 = vpop.f32.mrf.mxu0
      %5517 = vmatprep.mubr.bf16.mxu0 0
      %5518 = vmatmul.mubr.bf16.gmra.mxu0 %v4138
      %v5519 = vpop.f32.mrf.mxu0
      %v5520 = vadd.f32 %v5359, %v5519
      %v5521 = vpop.f32.mrf.mxu0
      %v5522 = vpop.f32.mrf.mxu0
      %v5523 = vadd.f32 %v5362, %v5522
      %v5524 = vpop.f32.mrf.mxu0
      %5525 = vmatprep.mubr.bf16.mxu0 0
      %5526 = vmatmul.mubr.bf16.gmra.mxu0 %v4147
      %v5527 = vpop.f32.mrf.mxu0
      %v5528 = vadd.f32 %v5367, %v5527
      %v5529 = vpop.f32.mrf.mxu0
      %v5530 = vpop.f32.mrf.mxu0
      %v5531 = vadd.f32 %v5370, %v5530
      %v5532 = vpop.f32.mrf.mxu0
      %5533 = vmatprep.mubr.bf16.mxu0 0
      %5534 = vmatmul.mubr.bf16.gmra.mxu0 %v4156
      %v5535 = vpop.f32.mrf.mxu0
      %v5536 = vadd.f32 %v5375, %v5535
      %v5537 = vpop.f32.mrf.mxu0
      %v5538 = vpop.f32.mrf.mxu0
      %v5539 = vadd.f32 %v5378, %v5538
      %v5540 = vpop.f32.mrf.mxu0
      %5541 = vmatprep.mubr.bf16.mxu0 0
      %5542 = vmatmul.mubr.bf16.gmra.mxu0 %v4165
      %v5543 = vpop.f32.mrf.mxu0
      %v5544 = vadd.f32 %v5383, %v5543
      %v5545 = vpop.f32.mrf.mxu0
      %v5546 = vpop.f32.mrf.mxu0
      %v5547 = vadd.f32 %v5386, %v5546
      %v5548 = vpop.f32.mrf.mxu0
      %5549 = vmatprep.mubr.bf16.mxu0 0
      %5550 = vmatmul.mubr.bf16.gmra.mxu0 %v4174
      %v5551 = vpop.f32.mrf.mxu0
      %v5552 = vadd.f32 %v5391, %v5551
      %v5553 = vpop.f32.mrf.mxu0
      %v5554 = vpop.f32.mrf.mxu0
      %v5555 = vadd.f32 %v5394, %v5554
      %v5556 = vpop.f32.mrf.mxu0
      %5557 = vmatprep.mubr.bf16.mxu0 0
      %5558 = vmatmul.mubr.bf16.gmra.mxu0 %v4183
      %v5559 = vpop.f32.mrf.mxu0
      %v5560 = vadd.f32 %v5399, %v5559
      %v5561 = vpop.f32.mrf.mxu0
      %v5562 = vpop.f32.mrf.mxu0
      %v5563 = vadd.f32 %v5402, %v5562
      %v5564 = vpop.f32.mrf.mxu0
      %5565 = vmatprep.mubr.bf16.mxu0 0
      %5566 = vmatmul.mubr.bf16.gmra.mxu0 %v4192
      %v5567 = vpop.f32.mrf.mxu0
      %v5568 = vadd.f32 %v5407, %v5567
      %v5569 = vpop.f32.mrf.mxu0
      %v5570 = vpop.f32.mrf.mxu0
      %v5571 = vadd.f32 %v5410, %v5570
      %v5572 = vpop.f32.mrf.mxu0
      %5573 = vdwg.mxu0
      %v5574 = vadd.f32 %v5448, %v5451
      %v5575 = vadd.f32 %v5574, %v5456
      %v5576 = vadd.f32 %v5575, %v5459
      %v5577 = vadd.f32 %v5576, %v5464
      %v5578 = vadd.f32 %v5577, %v5467
      %v5579 = vadd.f32 %v5578, %v5472
      %v5580 = vadd.f32 %v5579, %v5475
      %v5581 = vadd.f32 %v5580, %v5480
      %v5582 = vadd.f32 %v5581, %v5483
      %v5583 = vadd.f32 %v5582, %v5488
      %v5584 = vadd.f32 %v5583, %v5491
      %v5585 = vadd.f32 %v5584, %v5496
      %v5586 = vadd.f32 %v5585, %v5499
      %v5587 = vadd.f32 %v5586, %v5504
      %v5588 = vadd.f32 %v5587, %v5507
      %v5589 = vadd.f32 %v5588, %v5512
      %v5590 = vadd.f32 %v5589, %v5515
      %v5591 = vadd.f32 %v5590, %v5520
      %v5592 = vadd.f32 %v5591, %v5523
      %v5593 = vadd.f32 %v5592, %v5528
      %v5594 = vadd.f32 %v5593, %v5531
      %v5595 = vadd.f32 %v5594, %v5536
      %v5596 = vadd.f32 %v5595, %v5539
      %v5597 = vadd.f32 %v5596, %v5544
      %v5598 = vadd.f32 %v5597, %v5547
      %v5599 = vadd.f32 %v5598, %v5552
      %v5600 = vadd.f32 %v5599, %v5555
      %v5601 = vadd.f32 %v5600, %v5560
      %v5602 = vadd.f32 %v5601, %v5563
      %v5603 = vadd.f32 %v5602, %v5568
      %v5604 = vadd.f32 %v5603, %v5571
      %v5605 = vrot.slane %v5604, 4
      %v5606 = vadd.f32 %v5604, %v5605
      %v5607 = vrot.slane %v5606, 2
      %v5608 = vadd.f32 %v5606, %v5607
      %v5609 = vrot.slane %v5608, 1
      %v5610 = vadd.f32 %v5608, %v5609
      %5611 = vst [vmem:[%s208] sm:$0x1] %v5610
      %v5612 = vmul.f32 %v5448, %v5448
      %v5613 = vmul.f32 %v5451, %v5451
      %v5614 = vmul.f32 %v5456, %v5456
      %v5615 = vmul.f32 %v5459, %v5459
      %v5616 = vmul.f32 %v5464, %v5464
      %v5617 = vmul.f32 %v5467, %v5467
      %v5618 = vmul.f32 %v5472, %v5472
      %v5619 = vmul.f32 %v5475, %v5475
      %v5620 = vmul.f32 %v5480, %v5480
      %v5621 = vmul.f32 %v5483, %v5483
      %v5622 = vmul.f32 %v5488, %v5488
      %v5623 = vmul.f32 %v5491, %v5491
      %v5624 = vmul.f32 %v5496, %v5496
      %v5625 = vmul.f32 %v5499, %v5499
      %v5626 = vmul.f32 %v5504, %v5504
      %v5627 = vmul.f32 %v5507, %v5507
      %v5628 = vmul.f32 %v5512, %v5512
      %v5629 = vmul.f32 %v5515, %v5515
      %v5630 = vmul.f32 %v5520, %v5520
      %v5631 = vmul.f32 %v5523, %v5523
      %v5632 = vmul.f32 %v5528, %v5528
      %v5633 = vmul.f32 %v5531, %v5531
      %v5634 = vmul.f32 %v5536, %v5536
      %v5635 = vmul.f32 %v5539, %v5539
      %v5636 = vmul.f32 %v5544, %v5544
      %v5637 = vmul.f32 %v5547, %v5547
      %v5638 = vmul.f32 %v5552, %v5552
      %v5639 = vmul.f32 %v5555, %v5555
      %v5640 = vmul.f32 %v5560, %v5560
      %v5641 = vmul.f32 %v5563, %v5563
      %v5642 = vmul.f32 %v5568, %v5568
      %v5643 = vmul.f32 %v5571, %v5571
      %v5644 = vadd.f32 %v5612, %v5613
      %v5645 = vadd.f32 %v5644, %v5614
      %v5646 = vadd.f32 %v5645, %v5615
      %v5647 = vadd.f32 %v5646, %v5616
      %v5648 = vadd.f32 %v5647, %v5617
      %v5649 = vadd.f32 %v5648, %v5618
      %v5650 = vadd.f32 %v5649, %v5619
      %v5651 = vadd.f32 %v5650, %v5620
      %v5652 = vadd.f32 %v5651, %v5621
      %v5653 = vadd.f32 %v5652, %v5622
      %v5654 = vadd.f32 %v5653, %v5623
      %v5655 = vadd.f32 %v5654, %v5624
      %v5656 = vadd.f32 %v5655, %v5625
      %v5657 = vadd.f32 %v5656, %v5626
      %v5658 = vadd.f32 %v5657, %v5627
      %v5659 = vadd.f32 %v5658, %v5628
      %v5660 = vadd.f32 %v5659, %v5629
      %v5661 = vadd.f32 %v5660, %v5630
      %v5662 = vadd.f32 %v5661, %v5631
      %v5663 = vadd.f32 %v5662, %v5632
      %v5664 = vadd.f32 %v5663, %v5633
      %v5665 = vadd.f32 %v5664, %v5634
      %v5666 = vadd.f32 %v5665, %v5635
      %v5667 = vadd.f32 %v5666, %v5636
      %v5668 = vadd.f32 %v5667, %v5637
      %v5669 = vadd.f32 %v5668, %v5638
      %v5670 = vadd.f32 %v5669, %v5639
      %v5671 = vadd.f32 %v5670, %v5640
      %v5672 = vadd.f32 %v5671, %v5641
      %v5673 = vadd.f32 %v5672, %v5642
      %v5674 = vadd.f32 %v5673, %v5643
      %v5675 = vrot.slane %v5674, 4
      %v5676 = vadd.f32 %v5674, %v5675
      %v5677 = vrot.slane %v5676, 2
      %v5678 = vadd.f32 %v5676, %v5677
      %v5679 = vrot.slane %v5678, 1
      %v5680 = vadd.f32 %v5678, %v5679
      %5681 = vst [vmem:[%s208 + $0x1] sm:$0x1] %v5680
      %5682 = vst [vmem:[%s204] sm:$0xff] %v5448
      %5683 = vst [vmem:[%s204 + $0x8] sm:$0xff] %v5451
      %5684 = vst [vmem:[%s204 + $0x10] sm:$0xff] %v5456
      %5685 = vst [vmem:[%s204 + $0x18] sm:$0xff] %v5459
      %5686 = vst [vmem:[%s204 + $0x20] sm:$0xff] %v5464
      %5687 = vst [vmem:[%s204 + $0x28] sm:$0xff] %v5467
      %5688 = vst [vmem:[%s204 + $0x30] sm:$0xff] %v5472
      %5689 = vst [vmem:[%s204 + $0x38] sm:$0xff] %v5475
      %5690 = vst [vmem:[%s204 + $0x40] sm:$0xff] %v5480
      %5691 = vst [vmem:[%s204 + $0x48] sm:$0xff] %v5483
      %5692 = vst [vmem:[%s204 + $0x50] sm:$0xff] %v5488
      %5693 = vst [vmem:[%s204 + $0x58] sm:$0xff] %v5491
      %5694 = vst [vmem:[%s204 + $0x60] sm:$0xff] %v5496
      %5695 = vst [vmem:[%s204 + $0x68] sm:$0xff] %v5499
      %5696 = vst [vmem:[%s204 + $0x70] sm:$0xff] %v5504
      %5697 = vst [vmem:[%s204 + $0x78] sm:$0xff] %v5507
      %5698 = vst [vmem:[%s204 + $0x80] sm:$0xff] %v5512
      %5699 = vst [vmem:[%s204 + $0x88] sm:$0xff] %v5515
      %5700 = vst [vmem:[%s204 + $0x90] sm:$0xff] %v5520
      %5701 = vst [vmem:[%s204 + $0x98] sm:$0xff] %v5523
      %5702 = vst [vmem:[%s204 + $0xa0] sm:$0xff] %v5528
      %5703 = vst [vmem:[%s204 + $0xa8] sm:$0xff] %v5531
      %5704 = vst [vmem:[%s204 + $0xb0] sm:$0xff] %v5536
      %5705 = vst [vmem:[%s204 + $0xb8] sm:$0xff] %v5539
      %5706 = vst [vmem:[%s204 + $0xc0] sm:$0xff] %v5544
      %5707 = vst [vmem:[%s204 + $0xc8] sm:$0xff] %v5547
      %5708 = vst [vmem:[%s204 + $0xd0] sm:$0xff] %v5552
      %5709 = vst [vmem:[%s204 + $0xd8] sm:$0xff] %v5555
      %5710 = vst [vmem:[%s204 + $0xe0] sm:$0xff] %v5560
      %5711 = vst [vmem:[%s204 + $0xe8] sm:$0xff] %v5563
      %5712 = vst [vmem:[%s204 + $0xf0] sm:$0xff] %v5568
      %5713 = vst [vmem:[%s204 + $0xf8] sm:$0xff] %v5571
      %p5714 = scmp.lt.s32.totalorder %s16, 1
      %s5715 = scalar_select %p5714, %s16, 1
      %s5716 = smul.addr %s5715, 32
      %s5717 = smul.addr %s5716, 8
      %s5718 = scalar_lea.vmem %s3, %s5717
      %p5719 = scmp.lt.s32.totalorder %s16, 1
      %s5720 = scalar_select %p5719, %s16, 1
      %s5721 = smul.addr %s5720, 2
      %s5722 = scalar_lea.vmem %s4, %s5721
      // Predicated region
      $region33: #{double_conv_block.3} parent=31 // pred_check
        %p5723 = pneg %p102
      $region34: #{double_conv_block.3} parent=31 // pred_check_branch
        %5725 = sbr.rel (%p5723) target = $region36
      $region35: #{double_conv_block.3} parent=31 // pred_region
        _
      $region36: #{double_conv_block.3} parent=31 // pred_fallthru
        _
      // Predicated region
      $region37: #{double_conv_block.3} parent=31 // pred_check
        %p5726 = pneg %p128
      $region38: #{double_conv_block.3} parent=31 // pred_check_branch
        %5728 = sbr.rel (%p5726) target = $region40
      $region39: #{double_conv_block.3} parent=31 // pred_region
        _
      $region40: #{double_conv_block.3} parent=31 // pred_fallthru
        _
    $region32: #{double_conv_block.3} parent=5 // pred_fallthru
      _
    %p5729 = scmp.le.s32.totalorder 2, %s11
    // Predicated region
    $region41: #{double_conv_block.3} parent=5 // pred_check
      %p5730 = pneg %p5729
    $region42: #{double_conv_block.3} parent=5 // pred_check_branch
      %5732 = sbr.rel (%p5730) target = $region44
    $region43: #{double_conv_block.3} parent=5 // pred_region
      %s5733 = ssub.s32 %s11, 2
      // Predicated region
      $region45: #{double_conv_block.3} parent=43 // pred_check
        %p5734 = pneg %p108
      $region46: #{double_conv_block.3} parent=43 // pred_check_branch
        %5736 = sbr.rel (%p5734) target = $region48
      $region47: #{double_conv_block.3} parent=43 // pred_region
        %p5737 = scmp.lt.s32.totalorder %s17, 1
        %s5738 = scalar_select %p5737, %s17, 1
        %s5739 = smul.addr %s5738, 32
        %s5740 = smul.addr %s5739, 8
        %s5741 = scalar_lea.vmem %s3, %s5740
      $region48: #{double_conv_block.3} parent=43 // pred_fallthru
        _
      // Predicated region
      $region49: #{double_conv_block.3} parent=43 // pred_check
        %p5742 = pneg %p134
      $region50: #{double_conv_block.3} parent=43 // pred_check_branch
        %5744 = sbr.rel (%p5742) target = $region52
      $region51: #{double_conv_block.3} parent=43 // pred_region
        %p5745 = scmp.lt.s32.totalorder %s17, 1
        %s5746 = scalar_select %p5745, %s17, 1
        %s5747 = smul.addr %s5746, 2
        %s5748 = scalar_lea.vmem %s4, %s5747
      $region52: #{double_conv_block.3} parent=43 // pred_fallthru
        _
    $region44: #{double_conv_block.3} parent=5 // pred_fallthru
      _
  $region6: #{double_conv_block.3} parent=0 // loop_footer
    %s15 = sadd.s32 1, %s11
  $region7: #{double_conv_block.3} parent=0 // loop_footer_branch
    %10 = sbr.rel target = $region3
  $region8: #{double_conv_block.3} parent=0 // loop_exit
    _

// kernel: double_conv_block.4
$region0: #{double_conv_block.4}
  #allocation0 [shape = 'u32[]', space=smem, size = 0x4, offset = 0x4, fixed_abs, tag = 'smem constant byte address 0x4 - core index']
  #allocation1 [shape = 'u32[144,128]{1,0:T(1,128)}', space=vmem, size = 0x12000, scoped, tag = 'internal scratch']
  #allocation2 [shape = 'bf16[18,18,128]{2,1,0:T(8,128)(2,1)}', space=vmem, size = 0x1b000, scoped, tag = 'scratch operand']
  #allocation3 [shape = 'bf16[256,1152]{1,0:T(8,128)(2,1)}', space=vmem, size = 0x90000, scoped, tag = 'scratch operand']
  %s0 = inlined_call_operand.vmem [shape: f32[2,16,16,128], index: 0, kind: input, shape index: {}]
  %s1 = inlined_call_operand.vmem [shape: f32[1,128], index: 1, kind: input, shape index: {}]
  %s2 = inlined_call_operand.vmem [shape: f32[1,128], index: 2, kind: input, shape index: {}]
  %s3 = inlined_call_operand.vmem [shape: bf16[1152,128], index: 3, kind: input, shape index: {}]
  %s4 = inlined_call_operand.vmem [shape: f32[1,128], index: 4, kind: input, shape index: {}]
  %s5 = inlined_call_operand.vmem [shape: f32[2,16,16,128], index: 5, kind: output, shape index: {0}]
  %s6 = inlined_call_operand.vmem [shape: f32[2,2,128], index: 6, kind: output, shape index: {1}]
  %7 = xla_tuple %s5, %s6
  %s8 = sld [smem:[#allocation0]]
  $region61: #{double_conv_block.4} parent=0
    _
  %s10 = ssub.s32 1, %s8
  %s11 = scalar_select 0, %s10, %s8
  loop: start=0, step=1, limit=4
  $region2: #{double_conv_block.4} parent=0 // loop_pre_header
    _
  $region3: #{double_conv_block.4} parent=0 // loop_header
    %s13 = sphi 0, %s17
    %p14 = scmp.ge.s32.totalorder %s13, 4
    %s23 = sphi 0, %s25
    %s26 = sphi 0, %s23
    %s27 = sphi 0, %s26
    %s43 = sphi 0, %s27
    %s47 = sphi 0, %s47
    %s49 = sphi 0, %s47
    %s50 = sphi 0, %s49
    %s64 = sphi 0, %s50
    %s68 = sphi 0, %s68
    %s70 = sphi 0, %s68
    %s71 = sphi 0, %s70
    %s85 = sphi 0, %s71
    %s89 = sphi 0, %s89
    %s91 = sphi 0, %s89
    %s92 = sphi 0, %s91
    %s106 = sphi 0, %s92
    %s110 = sphi 0, %s110
    %s112 = sphi 0, %s110
    %s113 = sphi 0, %s112
    %s127 = sphi 0, %s113
    %s133 = sphi 0, %s135
    %s136 = sphi 0, %s133
    %s137 = sphi 0, %s136
    %s153 = sphi 0, %s137
    %s159 = sphi 0, %s161
    %s162 = sphi 0, %s159
    %s163 = sphi 0, %s162
    %s179 = sphi 0, %s163
  $region4: #{double_conv_block.4} parent=0 // loop_header_branch
    %16 = sbr.rel (%p14) target = $region8
  $region5: #{double_conv_block.4} parent=0 // loop_body
    %s18 = ssub.s32 %s13, 1
    %s19 = ssub.s32 %s13, 2
    %s20 = sadd.s32 %s13, 1
    %s21 = ssub.s32 %s13, %s20
    %p22 = scmp.eq.s32.totalorder %s21, 0
    %s24 = sadd.s32 %s23, 1
    %s25 = scalar_select %p22, %s23, %s24
    %p28 = pneg %p22
    %p29 = scmp.eq.s32.totalorder %s13, 1
    %p30 = por %p28, %p29
    %p31 = scmp.ne.s32.totalorder %s23, %s26
    %p32 = scmp.eq.s32.totalorder %s13, 0
    %p33 = por %p31, %p32
    %p34 = scmp.ne.s32.totalorder %s23, %s26
    %p35 = scmp.eq.s32.totalorder %s18, 1
    %p36 = por %p34, %p35
    %p37 = scmp.ne.s32.totalorder %s26, %s27
    %p38 = scmp.eq.s32.totalorder %s18, 0
    %p39 = por %p37, %p38
    %p40 = scmp.ne.s32.totalorder %s26, %s27
    %p41 = scmp.eq.s32.totalorder %s19, 1
    %p42 = por %p40, %p41
    %p44 = scmp.ne.s32.totalorder %s27, %s43
    %p45 = scmp.eq.s32.totalorder %s19, 0
    %p46 = por %p44, %p45
    %s48 = sadd.s32 %s47, 1
    %p51 = scmp.eq.s32.totalorder %s13, 1
    %p52 = scmp.ne.s32.totalorder %s47, %s49
    %p53 = scmp.eq.s32.totalorder %s13, 0
    %p54 = por %p52, %p53
    %p55 = scmp.ne.s32.totalorder %s47, %s49
    %p56 = scmp.eq.s32.totalorder %s18, 1
    %p57 = por %p55, %p56
    %p58 = scmp.ne.s32.totalorder %s49, %s50
    %p59 = scmp.eq.s32.totalorder %s18, 0
    %p60 = por %p58, %p59
    %p61 = scmp.ne.s32.totalorder %s49, %s50
    %p62 = scmp.eq.s32.totalorder %s19, 1
    %p63 = por %p61, %p62
    %p65 = scmp.ne.s32.totalorder %s50, %s64
    %p66 = scmp.eq.s32.totalorder %s19, 0
    %p67 = por %p65, %p66
    %s69 = sadd.s32 %s68, 1
    %p72 = scmp.eq.s32.totalorder %s13, 1
    %p73 = scmp.ne.s32.totalorder %s68, %s70
    %p74 = scmp.eq.s32.totalorder %s13, 0
    %p75 = por %p73, %p74
    %p76 = scmp.ne.s32.totalorder %s68, %s70
    %p77 = scmp.eq.s32.totalorder %s18, 1
    %p78 = por %p76, %p77
    %p79 = scmp.ne.s32.totalorder %s70, %s71
    %p80 = scmp.eq.s32.totalorder %s18, 0
    %p81 = por %p79, %p80
    %p82 = scmp.ne.s32.totalorder %s70, %s71
    %p83 = scmp.eq.s32.totalorder %s19, 1
    %p84 = por %p82, %p83
    %p86 = scmp.ne.s32.totalorder %s71, %s85
    %p87 = scmp.eq.s32.totalorder %s19, 0
    %p88 = por %p86, %p87
    %s90 = sadd.s32 %s89, 1
    %p93 = scmp.eq.s32.totalorder %s13, 1
    %p94 = scmp.ne.s32.totalorder %s89, %s91
    %p95 = scmp.eq.s32.totalorder %s13, 0
    %p96 = por %p94, %p95
    %p97 = scmp.ne.s32.totalorder %s89, %s91
    %p98 = scmp.eq.s32.totalorder %s18, 1
    %p99 = por %p97, %p98
    %p100 = scmp.ne.s32.totalorder %s91, %s92
    %p101 = scmp.eq.s32.totalorder %s18, 0
    %p102 = por %p100, %p101
    %p103 = scmp.ne.s32.totalorder %s91, %s92
    %p104 = scmp.eq.s32.totalorder %s19, 1
    %p105 = por %p103, %p104
    %p107 = scmp.ne.s32.totalorder %s92, %s106
    %p108 = scmp.eq.s32.totalorder %s19, 0
    %p109 = por %p107, %p108
    %s111 = sadd.s32 %s110, 1
    %p114 = scmp.eq.s32.totalorder %s13, 1
    %p115 = scmp.ne.s32.totalorder %s110, %s112
    %p116 = scmp.eq.s32.totalorder %s13, 0
    %p117 = por %p115, %p116
    %p118 = scmp.ne.s32.totalorder %s110, %s112
    %p119 = scmp.eq.s32.totalorder %s18, 1
    %p120 = por %p118, %p119
    %p121 = scmp.ne.s32.totalorder %s112, %s113
    %p122 = scmp.eq.s32.totalorder %s18, 0
    %p123 = por %p121, %p122
    %p124 = scmp.ne.s32.totalorder %s112, %s113
    %p125 = scmp.eq.s32.totalorder %s19, 1
    %p126 = por %p124, %p125
    %p128 = scmp.ne.s32.totalorder %s113, %s127
    %p129 = scmp.eq.s32.totalorder %s19, 0
    %p130 = por %p128, %p129
    %s131 = ssub.s32 %s13, %s20
    %p132 = scmp.eq.s32.totalorder %s131, 0
    %s134 = sadd.s32 %s133, 1
    %s135 = scalar_select %p132, %s133, %s134
    %p138 = pneg %p132
    %p139 = scmp.eq.s32.totalorder %s13, 1
    %p140 = por %p138, %p139
    %p141 = scmp.ne.s32.totalorder %s133, %s136
    %p142 = scmp.eq.s32.totalorder %s13, 0
    %p143 = por %p141, %p142
    %p144 = scmp.ne.s32.totalorder %s133, %s136
    %p145 = scmp.eq.s32.totalorder %s18, 1
    %p146 = por %p144, %p145
    %p147 = scmp.ne.s32.totalorder %s136, %s137
    %p148 = scmp.eq.s32.totalorder %s18, 0
    %p149 = por %p147, %p148
    %p150 = scmp.ne.s32.totalorder %s136, %s137
    %p151 = scmp.eq.s32.totalorder %s19, 1
    %p152 = por %p150, %p151
    %p154 = scmp.ne.s32.totalorder %s137, %s153
    %p155 = scmp.eq.s32.totalorder %s19, 0
    %p156 = por %p154, %p155
    %s157 = ssub.s32 %s13, %s20
    %p158 = scmp.eq.s32.totalorder %s157, 0
    %s160 = sadd.s32 %s159, 1
    %s161 = scalar_select %p158, %s159, %s160
    %p164 = pneg %p158
    %p165 = scmp.eq.s32.totalorder %s13, 1
    %p166 = por %p164, %p165
    %p167 = scmp.ne.s32.totalorder %s159, %s162
    %p168 = scmp.eq.s32.totalorder %s13, 0
    %p169 = por %p167, %p168
    %p170 = scmp.ne.s32.totalorder %s159, %s162
    %p171 = scmp.eq.s32.totalorder %s18, 1
    %p172 = por %p170, %p171
    %p173 = scmp.ne.s32.totalorder %s162, %s163
    %p174 = scmp.eq.s32.totalorder %s18, 0
    %p175 = por %p173, %p174
    %p176 = scmp.ne.s32.totalorder %s162, %s163
    %p177 = scmp.eq.s32.totalorder %s19, 1
    %p178 = por %p176, %p177
    %p180 = scmp.ne.s32.totalorder %s163, %s179
    %p181 = scmp.eq.s32.totalorder %s19, 0
    %p182 = por %p180, %p181
    %p183 = scmp.le.s32.totalorder 1, %s13
    %p184 = scmp.lt.s32.totalorder %s13, 3
    %p185 = pnand %p183, %p184
    %p186 = pneg %p185
    // Predicated region
    $region9: #{double_conv_block.4} parent=5 // pred_check
      _
    $region10: #{double_conv_block.4} parent=5 // pred_check_branch
      %188 = sbr.rel (%p185) target = $region12
    $region11: #{double_conv_block.4} parent=5 // pred_region
      %s189 = ssub.s32 %s13, 1
      // Predicated region
      $region13: #{double_conv_block.4} parent=11 // pred_check
        %p190 = pneg %p60
      $region14: #{double_conv_block.4} parent=11 // pred_check_branch
        %192 = sbr.rel (%p190) target = $region16
      $region15: #{double_conv_block.4} parent=11 // pred_region
        _
      $region16: #{double_conv_block.4} parent=11 // pred_fallthru
        _
      // Predicated region
      $region17: #{double_conv_block.4} parent=11 // pred_check
        %p193 = pneg %p81
      $region18: #{double_conv_block.4} parent=11 // pred_check_branch
        %195 = sbr.rel (%p193) target = $region20
      $region19: #{double_conv_block.4} parent=11 // pred_region
        _
      $region20: #{double_conv_block.4} parent=11 // pred_fallthru
        _
      // Predicated region
      $region21: #{double_conv_block.4} parent=11 // pred_check
        %p196 = pneg %p102
      $region22: #{double_conv_block.4} parent=11 // pred_check_branch
        %198 = sbr.rel (%p196) target = $region24
      $region23: #{double_conv_block.4} parent=11 // pred_region
        _
      $region24: #{double_conv_block.4} parent=11 // pred_fallthru
        _
      // Predicated region
      $region25: #{double_conv_block.4} parent=11 // pred_check
        %p199 = pneg %p123
      $region26: #{double_conv_block.4} parent=11 // pred_check_branch
        %201 = sbr.rel (%p199) target = $region28
      $region27: #{double_conv_block.4} parent=11 // pred_region
        _
      $region28: #{double_conv_block.4} parent=11 // pred_fallthru
        _
    $region12: #{double_conv_block.4} parent=5 // pred_fallthru
      _
    %p202 = scmp.lt.s32.totalorder %s13, 2
    // Predicated region
    $region29: #{double_conv_block.4} parent=5 // pred_check
      %p203 = pneg %p202
    $region30: #{double_conv_block.4} parent=5 // pred_check_branch
      %205 = sbr.rel (%p203) target = $region32
    $region31: #{double_conv_block.4} parent=5 // pred_region
      // Predicated region
      $region33: #{double_conv_block.4} parent=31 // pred_check
        %p206 = pneg %p33
      $region34: #{double_conv_block.4} parent=31 // pred_check_branch
        %208 = sbr.rel (%p206) target = $region36
      $region35: #{double_conv_block.4} parent=31 // pred_region
        %p209 = scmp.lt.s32.totalorder %s13, 1
        %s210 = scalar_select %p209, %s13, 1
        %s211 = smul.addr %s210, 32
        %s212 = smul.addr %s211, 8
        %s213 = scalar_lea.vmem %s0, %s212
      $region36: #{double_conv_block.4} parent=31 // pred_fallthru
        _
    $region32: #{double_conv_block.4} parent=5 // pred_fallthru
      _
    %p214 = scmp.le.s32.totalorder 1, %s13
    %p215 = scmp.lt.s32.totalorder %s13, 3
    %p216 = pnand %p214, %p215
    %p217 = pneg %p216
    // Predicated region
    $region37: #{double_conv_block.4} parent=5 // pred_check
      _
    $region38: #{double_conv_block.4} parent=5 // pred_check_branch
      %219 = sbr.rel (%p216) target = $region40
    $region39: #{double_conv_block.4} parent=5 // pred_region
      %s220 = ssub.s32 %s13, 1
      %p221 = scmp.lt.s32.totalorder %s18, 1
      %s222 = scalar_select %p221, %s18, 1
      %s223 = smul.addr %s222, 32
      %s224 = smul.addr %s223, 8
      %s225 = scalar_lea.vmem %s0, %s224
      %p226 = pneg %p39
      %p227 = pneg %p36
      %p228 = pneg %p60
      %p229 = pneg %p57
      %p230 = pneg %p81
      %p231 = pneg %p78
      %p232 = pneg %p102
      %p233 = pneg %p99
      %p234 = pneg %p123
      %p235 = pneg %p120
      %p236 = pneg %p149
      %p237 = pneg %p146
      %p238 = scmp.lt.s32.totalorder %s18, 1
      %s239 = scalar_select %p238, %s18, 1
      %s240 = smul.addr %s239, 32
      %s241 = smul.addr %s240, 8
      %s242 = scalar_lea.vmem %s5, %s241
      %p243 = pneg %p175
      %p244 = pneg %p172
      %p245 = scmp.lt.s32.totalorder %s18, 1
      %s246 = scalar_select %p245, %s18, 1
      %s247 = smul.addr %s246, 2
      %s248 = scalar_lea.vmem %s6, %s247
      %p249 = scmp.lt.s32.totalorder %s18, 1
      %s250 = scalar_select %p249, %s18, 1
      %s251 = smul.addr %s250, 32
      %s252 = smul.addr %s251, 8
      %s253 = scalar_lea.vmem %s0, %s252
      %p254 = scmp.lt.s32.totalorder %s18, 1
      %s255 = scalar_select %p254, %s18, 1
      %s256 = smul.addr %s255, 32
      %s257 = smul.addr %s256, 8
      %s258 = scalar_lea.vmem %s5, %s257
      %p259 = scmp.lt.s32.totalorder %s18, 1
      %s260 = scalar_select %p259, %s18, 1
      %s261 = smul.addr %s260, 2
      %s262 = scalar_lea.vmem %s6, %s261
      %v264 = vld [vmem:[%s1] sm:$0x1]
      %v265 = vld [vmem:[%s2] sm:$0x1]
      %v266 = vld [vmem:[%s253] sm:$0xff]
      %v267 = vld [vmem:[%s253 + $0x8] sm:$0xff]
      %v268 = vld [vmem:[%s253 + $0x10] sm:$0xff]
      %v269 = vld [vmem:[%s253 + $0x18] sm:$0xff]
      %v270 = vld [vmem:[%s253 + $0x20] sm:$0xff]
      %v271 = vld [vmem:[%s253 + $0x28] sm:$0xff]
      %v272 = vld [vmem:[%s253 + $0x30] sm:$0xff]
      %v273 = vld [vmem:[%s253 + $0x38] sm:$0xff]
      %v274 = vld [vmem:[%s253 + $0x40] sm:$0xff]
      %v275 = vld [vmem:[%s253 + $0x48] sm:$0xff]
      %v276 = vld [vmem:[%s253 + $0x50] sm:$0xff]
      %v277 = vld [vmem:[%s253 + $0x58] sm:$0xff]
      %v278 = vld [vmem:[%s253 + $0x60] sm:$0xff]
      %v279 = vld [vmem:[%s253 + $0x68] sm:$0xff]
      %v280 = vld [vmem:[%s253 + $0x70] sm:$0xff]
      %v281 = vld [vmem:[%s253 + $0x78] sm:$0xff]
      %v282 = vld [vmem:[%s253 + $0x80] sm:$0xff]
      %v283 = vld [vmem:[%s253 + $0x88] sm:$0xff]
      %v284 = vld [vmem:[%s253 + $0x90] sm:$0xff]
      %v285 = vld [vmem:[%s253 + $0x98] sm:$0xff]
      %v286 = vld [vmem:[%s253 + $0xa0] sm:$0xff]
      %v287 = vld [vmem:[%s253 + $0xa8] sm:$0xff]
      %v288 = vld [vmem:[%s253 + $0xb0] sm:$0xff]
      %v289 = vld [vmem:[%s253 + $0xb8] sm:$0xff]
      %v290 = vld [vmem:[%s253 + $0xc0] sm:$0xff]
      %v291 = vld [vmem:[%s253 + $0xc8] sm:$0xff]
      %v292 = vld [vmem:[%s253 + $0xd0] sm:$0xff]
      %v293 = vld [vmem:[%s253 + $0xd8] sm:$0xff]
      %v294 = vld [vmem:[%s253 + $0xe0] sm:$0xff]
      %v295 = vld [vmem:[%s253 + $0xe8] sm:$0xff]
      %v296 = vld [vmem:[%s253 + $0xf0] sm:$0xff]
      %v297 = vld [vmem:[%s253 + $0xf8] sm:$0xff]
      %v299 = vlaneseq
      %v300 = vshrl.u32 %v299, 7
      %v301 = vsub.s32 0, %v300
      %v302 = vrot.slane %v264, %v301
      %v304 = vmul.f32 %v266, %v302
      %v305 = vmul.f32 %v267, %v302
      %v306 = vmul.f32 %v268, %v302
      %v307 = vmul.f32 %v269, %v302
      %v308 = vmul.f32 %v270, %v302
      %v309 = vmul.f32 %v271, %v302
      %v310 = vmul.f32 %v272, %v302
      %v311 = vmul.f32 %v273, %v302
      %v312 = vmul.f32 %v274, %v302
      %v313 = vmul.f32 %v275, %v302
      %v314 = vmul.f32 %v276, %v302
      %v315 = vmul.f32 %v277, %v302
      %v316 = vmul.f32 %v278, %v302
      %v317 = vmul.f32 %v279, %v302
      %v318 = vmul.f32 %v280, %v302
      %v319 = vmul.f32 %v281, %v302
      %v320 = vmul.f32 %v282, %v302
      %v321 = vmul.f32 %v283, %v302
      %v322 = vmul.f32 %v284, %v302
      %v323 = vmul.f32 %v285, %v302
      %v324 = vmul.f32 %v286, %v302
      %v325 = vmul.f32 %v287, %v302
      %v326 = vmul.f32 %v288, %v302
      %v327 = vmul.f32 %v289, %v302
      %v328 = vmul.f32 %v290, %v302
      %v329 = vmul.f32 %v291, %v302
      %v330 = vmul.f32 %v292, %v302
      %v331 = vmul.f32 %v293, %v302
      %v332 = vmul.f32 %v294, %v302
      %v333 = vmul.f32 %v295, %v302
      %v334 = vmul.f32 %v296, %v302
      %v335 = vmul.f32 %v297, %v302
      %v337 = vlaneseq
      %v338 = vshrl.u32 %v337, 7
      %v339 = vsub.s32 0, %v338
      %v340 = vrot.slane %v265, %v339
      %v342 = vadd.f32 %v304, %v340
      %v343 = vadd.f32 %v305, %v340
      %v344 = vadd.f32 %v306, %v340
      %v345 = vadd.f32 %v307, %v340
      %v346 = vadd.f32 %v308, %v340
      %v347 = vadd.f32 %v309, %v340
      %v348 = vadd.f32 %v310, %v340
      %v349 = vadd.f32 %v311, %v340
      %v350 = vadd.f32 %v312, %v340
      %v351 = vadd.f32 %v313, %v340
      %v352 = vadd.f32 %v314, %v340
      %v353 = vadd.f32 %v315, %v340
      %v354 = vadd.f32 %v316, %v340
      %v355 = vadd.f32 %v317, %v340
      %v356 = vadd.f32 %v318, %v340
      %v357 = vadd.f32 %v319, %v340
      %v358 = vadd.f32 %v320, %v340
      %v359 = vadd.f32 %v321, %v340
      %v360 = vadd.f32 %v322, %v340
      %v361 = vadd.f32 %v323, %v340
      %v362 = vadd.f32 %v324, %v340
      %v363 = vadd.f32 %v325, %v340
      %v364 = vadd.f32 %v326, %v340
      %v365 = vadd.f32 %v327, %v340
      %v366 = vadd.f32 %v328, %v340
      %v367 = vadd.f32 %v329, %v340
      %v368 = vadd.f32 %v330, %v340
      %v369 = vadd.f32 %v331, %v340
      %v370 = vadd.f32 %v332, %v340
      %v371 = vadd.f32 %v333, %v340
      %v372 = vadd.f32 %v334, %v340
      %v373 = vadd.f32 %v335, %v340
      %v374 = vmax.f32 %v342, 0.0
      %v375 = vmax.f32 %v343, 0.0
      %v376 = vmax.f32 %v344, 0.0
      %v377 = vmax.f32 %v345, 0.0
      %v378 = vmax.f32 %v346, 0.0
      %v379 = vmax.f32 %v347, 0.0
      %v380 = vmax.f32 %v348, 0.0
      %v381 = vmax.f32 %v349, 0.0
      %v382 = vmax.f32 %v350, 0.0
      %v383 = vmax.f32 %v351, 0.0
      %v384 = vmax.f32 %v352, 0.0
      %v385 = vmax.f32 %v353, 0.0
      %v386 = vmax.f32 %v354, 0.0
      %v387 = vmax.f32 %v355, 0.0
      %v388 = vmax.f32 %v356, 0.0
      %v389 = vmax.f32 %v357, 0.0
      %v390 = vmax.f32 %v358, 0.0
      %v391 = vmax.f32 %v359, 0.0
      %v392 = vmax.f32 %v360, 0.0
      %v393 = vmax.f32 %v361, 0.0
      %v394 = vmax.f32 %v362, 0.0
      %v395 = vmax.f32 %v363, 0.0
      %v396 = vmax.f32 %v364, 0.0
      %v397 = vmax.f32 %v365, 0.0
      %v398 = vmax.f32 %v366, 0.0
      %v399 = vmax.f32 %v367, 0.0
      %v400 = vmax.f32 %v368, 0.0
      %v401 = vmax.f32 %v369, 0.0
      %v402 = vmax.f32 %v370, 0.0
      %v403 = vmax.f32 %v371, 0.0
      %v404 = vmax.f32 %v372, 0.0
      %v405 = vmax.f32 %v373, 0.0
      %v406 = vpack.c.bf16 %v375, %v374
      %v407 = vpack.c.bf16 %v377, %v376
      %v408 = vpack.c.bf16 %v379, %v378
      %v409 = vpack.c.bf16 %v381, %v380
      %v410 = vpack.c.bf16 %v383, %v382
      %v411 = vpack.c.bf16 %v385, %v384
      %v412 = vpack.c.bf16 %v387, %v386
      %v413 = vpack.c.bf16 %v389, %v388
      %v414 = vpack.c.bf16 %v391, %v390
      %v415 = vpack.c.bf16 %v393, %v392
      %v416 = vpack.c.bf16 %v395, %v394
      %v417 = vpack.c.bf16 %v397, %v396
      %v418 = vpack.c.bf16 %v399, %v398
      %v419 = vpack.c.bf16 %v401, %v400
      %v420 = vpack.c.bf16 %v403, %v402
      %v421 = vpack.c.bf16 %v405, %v404
      %422 = vst [vmem:[#allocation2] sm:$0xf] 0
      %423 = vst [vmem:[#allocation2 + $0x4] sm:$0xf] 0
      %424 = vst [vmem:[#allocation2 + $0x8] sm:$0x1] 0
      %s425 = scalar_lea.vmem [#allocation2], 204
      %426 = vst [vmem:[%s425] sm:$0xf] 0
      %427 = vst [vmem:[%s425 + $0x4] sm:$0xf] 0
      %428 = vst [vmem:[%s425 + $0x8] sm:$0x1] 0
      %s429 = scalar_lea.vmem [#allocation2], 12
      %vm430 = vcmask 1040384
      %vm431 = vsmask.f32 256
      %vm432 = vmand %vm430, %vm431
      %v433 = vld [vmem:[%s429] sm:$0x1]
      %v434 = vsel %vm432, 0, %v433
      %435 = vst [vmem:[%s429] sm:$0x1] %v434
      %v436 = vld [vmem:[%s429 + $0xc] sm:$0x1]
      %v437 = vsel %vm432, 0, %v436
      %438 = vst [vmem:[%s429 + $0xc] sm:$0x1] %v437
      %v439 = vld [vmem:[%s429 + $0x18] sm:$0x1]
      %v440 = vsel %vm432, 0, %v439
      %441 = vst [vmem:[%s429 + $0x18] sm:$0x1] %v440
      %v442 = vld [vmem:[%s429 + $0x24] sm:$0x1]
      %v443 = vsel %vm432, 0, %v442
      %444 = vst [vmem:[%s429 + $0x24] sm:$0x1] %v443
      %v445 = vld [vmem:[%s429 + $0x30] sm:$0x1]
      %v446 = vsel %vm432, 0, %v445
      %447 = vst [vmem:[%s429 + $0x30] sm:$0x1] %v446
      %v448 = vld [vmem:[%s429 + $0x3c] sm:$0x1]
      %v449 = vsel %vm432, 0, %v448
      %450 = vst [vmem:[%s429 + $0x3c] sm:$0x1] %v449
      %v451 = vld [vmem:[%s429 + $0x48] sm:$0x1]
      %v452 = vsel %vm432, 0, %v451
      %453 = vst [vmem:[%s429 + $0x48] sm:$0x1] %v452
      %v454 = vld [vmem:[%s429 + $0x54] sm:$0x1]
      %v455 = vsel %vm432, 0, %v454
      %456 = vst [vmem:[%s429 + $0x54] sm:$0x1] %v455
      %v457 = vld [vmem:[%s429 + $0x60] sm:$0x1]
      %v458 = vsel %vm432, 0, %v457
      %459 = vst [vmem:[%s429 + $0x60] sm:$0x1] %v458
      %v460 = vld [vmem:[%s429 + $0x6c] sm:$0x1]
      %v461 = vsel %vm432, 0, %v460
      %462 = vst [vmem:[%s429 + $0x6c] sm:$0x1] %v461
      %v463 = vld [vmem:[%s429 + $0x78] sm:$0x1]
      %v464 = vsel %vm432, 0, %v463
      %465 = vst [vmem:[%s429 + $0x78] sm:$0x1] %v464
      %v466 = vld [vmem:[%s429 + $0x84] sm:$0x1]
      %v467 = vsel %vm432, 0, %v466
      %468 = vst [vmem:[%s429 + $0x84] sm:$0x1] %v467
      %v469 = vld [vmem:[%s429 + $0x90] sm:$0x1]
      %v470 = vsel %vm432, 0, %v469
      %471 = vst [vmem:[%s429 + $0x90] sm:$0x1] %v470
      %v472 = vld [vmem:[%s429 + $0x9c] sm:$0x1]
      %v473 = vsel %vm432, 0, %v472
      %474 = vst [vmem:[%s429 + $0x9c] sm:$0x1] %v473
      %v475 = vld [vmem:[%s429 + $0xa8] sm:$0x1]
      %v476 = vsel %vm432, 0, %v475
      %477 = vst [vmem:[%s429 + $0xa8] sm:$0x1] %v476
      %v478 = vld [vmem:[%s429 + $0xb4] sm:$0x1]
      %v479 = vsel %vm432, 0, %v478
      %480 = vst [vmem:[%s429 + $0xb4] sm:$0x1] %v479
      %vm481 = vsmask.f32 7938
      %vm482 = vmand %vm430, %vm481
      %v483 = vld [vmem:[%s429 + $0x8] sm:$0x1]
      %v484 = vsel %vm482, 0, %v483
      %485 = vst [vmem:[%s429 + $0x8] sm:$0x1] %v484
      %v486 = vld [vmem:[%s429 + $0x14] sm:$0x1]
      %v487 = vsel %vm482, 0, %v486
      %488 = vst [vmem:[%s429 + $0x14] sm:$0x1] %v487
      %v489 = vld [vmem:[%s429 + $0x20] sm:$0x1]
      %v490 = vsel %vm482, 0, %v489
      %491 = vst [vmem:[%s429 + $0x20] sm:$0x1] %v490
      %v492 = vld [vmem:[%s429 + $0x2c] sm:$0x1]
      %v493 = vsel %vm482, 0, %v492
      %494 = vst [vmem:[%s429 + $0x2c] sm:$0x1] %v493
      %v495 = vld [vmem:[%s429 + $0x38] sm:$0x1]
      %v496 = vsel %vm482, 0, %v495
      %497 = vst [vmem:[%s429 + $0x38] sm:$0x1] %v496
      %v498 = vld [vmem:[%s429 + $0x44] sm:$0x1]
      %v499 = vsel %vm482, 0, %v498
      %500 = vst [vmem:[%s429 + $0x44] sm:$0x1] %v499
      %v501 = vld [vmem:[%s429 + $0x50] sm:$0x1]
      %v502 = vsel %vm482, 0, %v501
      %503 = vst [vmem:[%s429 + $0x50] sm:$0x1] %v502
      %v504 = vld [vmem:[%s429 + $0x5c] sm:$0x1]
      %v505 = vsel %vm482, 0, %v504
      %506 = vst [vmem:[%s429 + $0x5c] sm:$0x1] %v505
      %v507 = vld [vmem:[%s429 + $0x68] sm:$0x1]
      %v508 = vsel %vm482, 0, %v507
      %509 = vst [vmem:[%s429 + $0x68] sm:$0x1] %v508
      %v510 = vld [vmem:[%s429 + $0x74] sm:$0x1]
      %v511 = vsel %vm482, 0, %v510
      %512 = vst [vmem:[%s429 + $0x74] sm:$0x1] %v511
      %v513 = vld [vmem:[%s429 + $0x80] sm:$0x1]
      %v514 = vsel %vm482, 0, %v513
      %515 = vst [vmem:[%s429 + $0x80] sm:$0x1] %v514
      %v516 = vld [vmem:[%s429 + $0x8c] sm:$0x1]
      %v517 = vsel %vm482, 0, %v516
      %518 = vst [vmem:[%s429 + $0x8c] sm:$0x1] %v517
      %v519 = vld [vmem:[%s429 + $0x98] sm:$0x1]
      %v520 = vsel %vm482, 0, %v519
      %521 = vst [vmem:[%s429 + $0x98] sm:$0x1] %v520
      %v522 = vld [vmem:[%s429 + $0xa4] sm:$0x1]
      %v523 = vsel %vm482, 0, %v522
      %524 = vst [vmem:[%s429 + $0xa4] sm:$0x1] %v523
      %v525 = vld [vmem:[%s429 + $0xb0] sm:$0x1]
      %v526 = vsel %vm482, 0, %v525
      %527 = vst [vmem:[%s429 + $0xb0] sm:$0x1] %v526
      %v528 = vld [vmem:[%s429 + $0xbc] sm:$0x1]
      %v529 = vsel %vm482, 0, %v528
      %530 = vst [vmem:[%s429 + $0xbc] sm:$0x1] %v529
      %v547 = vunpack.c.l.b16 %v406
      %v548 = vunpack.c.h.b16 %v406
      %v549 = vunpack.c.l.b16 %v407
      %v550 = vunpack.c.h.b16 %v407
      %v551 = vunpack.c.l.b16 %v408
      %v552 = vunpack.c.h.b16 %v408
      %v553 = vunpack.c.l.b16 %v409
      %v554 = vunpack.c.h.b16 %v409
      %v555 = vunpack.c.l.b16 %v410
      %v556 = vunpack.c.h.b16 %v410
      %v557 = vunpack.c.l.b16 %v411
      %v558 = vunpack.c.h.b16 %v411
      %v559 = vunpack.c.l.b16 %v412
      %v560 = vunpack.c.h.b16 %v412
      %v561 = vunpack.c.l.b16 %v413
      %v562 = vunpack.c.h.b16 %v413
      %v563 = vunpack.c.l.b16 %v414
      %v564 = vunpack.c.h.b16 %v414
      %v565 = vunpack.c.l.b16 %v415
      %v566 = vunpack.c.h.b16 %v415
      %v567 = vunpack.c.l.b16 %v416
      %v568 = vunpack.c.h.b16 %v416
      %v569 = vunpack.c.l.b16 %v417
      %v570 = vunpack.c.h.b16 %v417
      %v571 = vunpack.c.l.b16 %v418
      %v572 = vunpack.c.h.b16 %v418
      %v573 = vunpack.c.l.b16 %v419
      %v574 = vunpack.c.h.b16 %v419
      %v575 = vunpack.c.l.b16 %v420
      %v576 = vunpack.c.h.b16 %v420
      %v577 = vunpack.c.l.b16 %v421
      %v578 = vunpack.c.h.b16 %v421
      %v579 = vpack.c.b16 %v547, %v547
      %v580 = vpack.c.b16 %v548, %v548
      %v581 = vpack.c.b16 %v549, %v549
      %v582 = vpack.c.b16 %v550, %v550
      %v583 = vpack.c.b16 %v551, %v551
      %v584 = vpack.c.b16 %v552, %v552
      %v585 = vpack.c.b16 %v553, %v553
      %v586 = vpack.c.b16 %v554, %v554
      %v587 = vpack.c.b16 %v555, %v555
      %v588 = vpack.c.b16 %v556, %v556
      %v589 = vpack.c.b16 %v557, %v557
      %v590 = vpack.c.b16 %v558, %v558
      %v591 = vpack.c.b16 %v559, %v559
      %v592 = vpack.c.b16 %v560, %v560
      %v593 = vpack.c.b16 %v561, %v561
      %v594 = vpack.c.b16 %v562, %v562
      %v595 = vpack.c.b16 %v563, %v563
      %v596 = vpack.c.b16 %v564, %v564
      %v597 = vpack.c.b16 %v565, %v565
      %v598 = vpack.c.b16 %v566, %v566
      %v599 = vpack.c.b16 %v567, %v567
      %v600 = vpack.c.b16 %v568, %v568
      %v601 = vpack.c.b16 %v569, %v569
      %v602 = vpack.c.b16 %v570, %v570
      %v603 = vpack.c.b16 %v571, %v571
      %v604 = vpack.c.b16 %v572, %v572
      %v605 = vpack.c.b16 %v573, %v573
      %v606 = vpack.c.b16 %v574, %v574
      %v607 = vpack.c.b16 %v575, %v575
      %v608 = vpack.c.b16 %v576, %v576
      %v609 = vpack.c.b16 %v577, %v577
      %v610 = vpack.c.b16 %v578, %v578
      %vm611 = vsmask.f32 4368
      %vm612 = vmor %vm431, %vm611
      %v614 = vshrl.u32 %v579, 16
      %v616 = vrot.slane %v614, 7
      %v617 = vshll.u32 %v579, 16
      %v619 = vor.u32 %v616, %v617
      %v620 = vrot.slane %v616, 4
      %v622 = vshrl.u32 %v580, 16
      %v624 = vrot.slane %v622, 7
      %v625 = vshll.u32 %v580, 16
      %v627 = vor.u32 %v624, %v625
      %v628 = vsel %vm612, %v620, %v627
      %v629 = vrot.slane %v624, 4
      %v631 = vshrl.u32 %v581, 16
      %v633 = vrot.slane %v631, 7
      %v634 = vshll.u32 %v581, 16
      %v636 = vor.u32 %v633, %v634
      %v637 = vrot.slane %v633, 4
      %v639 = vshrl.u32 %v582, 16
      %v641 = vrot.slane %v639, 7
      %v642 = vshll.u32 %v582, 16
      %v644 = vor.u32 %v641, %v642
      %v645 = vsel %vm612, %v637, %v644
      %v646 = vrot.slane %v641, 4
      %v648 = vshrl.u32 %v583, 16
      %v650 = vrot.slane %v648, 7
      %v651 = vshll.u32 %v583, 16
      %v653 = vor.u32 %v650, %v651
      %v654 = vrot.slane %v650, 4
      %v656 = vshrl.u32 %v584, 16
      %v658 = vrot.slane %v656, 7
      %v659 = vshll.u32 %v584, 16
      %v661 = vor.u32 %v658, %v659
      %v662 = vsel %vm612, %v654, %v661
      %v663 = vrot.slane %v658, 4
      %v665 = vshrl.u32 %v585, 16
      %v667 = vrot.slane %v665, 7
      %v668 = vshll.u32 %v585, 16
      %v670 = vor.u32 %v667, %v668
      %v671 = vrot.slane %v667, 4
      %v673 = vshrl.u32 %v586, 16
      %v675 = vrot.slane %v673, 7
      %v676 = vshll.u32 %v586, 16
      %v678 = vor.u32 %v675, %v676
      %v679 = vsel %vm612, %v671, %v678
      %v680 = vrot.slane %v675, 4
      %v682 = vshrl.u32 %v587, 16
      %v684 = vrot.slane %v682, 7
      %v685 = vshll.u32 %v587, 16
      %v687 = vor.u32 %v684, %v685
      %v688 = vrot.slane %v684, 4
      %v690 = vshrl.u32 %v588, 16
      %v692 = vrot.slane %v690, 7
      %v693 = vshll.u32 %v588, 16
      %v695 = vor.u32 %v692, %v693
      %v696 = vsel %vm612, %v688, %v695
      %v697 = vrot.slane %v692, 4
      %v699 = vshrl.u32 %v589, 16
      %v701 = vrot.slane %v699, 7
      %v702 = vshll.u32 %v589, 16
      %v704 = vor.u32 %v701, %v702
      %v705 = vrot.slane %v701, 4
      %v707 = vshrl.u32 %v590, 16
      %v709 = vrot.slane %v707, 7
      %v710 = vshll.u32 %v590, 16
      %v712 = vor.u32 %v709, %v710
      %v713 = vsel %vm612, %v705, %v712
      %v714 = vrot.slane %v709, 4
      %v716 = vshrl.u32 %v591, 16
      %v718 = vrot.slane %v716, 7
      %v719 = vshll.u32 %v591, 16
      %v721 = vor.u32 %v718, %v719
      %v722 = vrot.slane %v718, 4
      %v724 = vshrl.u32 %v592, 16
      %v726 = vrot.slane %v724, 7
      %v727 = vshll.u32 %v592, 16
      %v729 = vor.u32 %v726, %v727
      %v730 = vsel %vm612, %v722, %v729
      %v731 = vrot.slane %v726, 4
      %v733 = vshrl.u32 %v593, 16
      %v735 = vrot.slane %v733, 7
      %v736 = vshll.u32 %v593, 16
      %v738 = vor.u32 %v735, %v736
      %v739 = vrot.slane %v735, 4
      %v741 = vshrl.u32 %v594, 16
      %v743 = vrot.slane %v741, 7
      %v744 = vshll.u32 %v594, 16
      %v746 = vor.u32 %v743, %v744
      %v747 = vsel %vm612, %v739, %v746
      %v748 = vrot.slane %v743, 4
      %v750 = vshrl.u32 %v595, 16
      %v752 = vrot.slane %v750, 7
      %v753 = vshll.u32 %v595, 16
      %v755 = vor.u32 %v752, %v753
      %v756 = vrot.slane %v752, 4
      %v758 = vshrl.u32 %v596, 16
      %v760 = vrot.slane %v758, 7
      %v761 = vshll.u32 %v596, 16
      %v763 = vor.u32 %v760, %v761
      %v764 = vsel %vm612, %v756, %v763
      %v765 = vrot.slane %v760, 4
      %v767 = vshrl.u32 %v597, 16
      %v769 = vrot.slane %v767, 7
      %v770 = vshll.u32 %v597, 16
      %v772 = vor.u32 %v769, %v770
      %v773 = vrot.slane %v769, 4
      %v775 = vshrl.u32 %v598, 16
      %v777 = vrot.slane %v775, 7
      %v778 = vshll.u32 %v598, 16
      %v780 = vor.u32 %v777, %v778
      %v781 = vsel %vm612, %v773, %v780
      %v782 = vrot.slane %v777, 4
      %v784 = vshrl.u32 %v599, 16
      %v786 = vrot.slane %v784, 7
      %v787 = vshll.u32 %v599, 16
      %v789 = vor.u32 %v786, %v787
      %v790 = vrot.slane %v786, 4
      %v792 = vshrl.u32 %v600, 16
      %v794 = vrot.slane %v792, 7
      %v795 = vshll.u32 %v600, 16
      %v797 = vor.u32 %v794, %v795
      %v798 = vsel %vm612, %v790, %v797
      %v799 = vrot.slane %v794, 4
      %v801 = vshrl.u32 %v601, 16
      %v803 = vrot.slane %v801, 7
      %v804 = vshll.u32 %v601, 16
      %v806 = vor.u32 %v803, %v804
      %v807 = vrot.slane %v803, 4
      %v809 = vshrl.u32 %v602, 16
      %v811 = vrot.slane %v809, 7
      %v812 = vshll.u32 %v602, 16
      %v814 = vor.u32 %v811, %v812
      %v815 = vsel %vm612, %v807, %v814
      %v816 = vrot.slane %v811, 4
      %v818 = vshrl.u32 %v603, 16
      %v820 = vrot.slane %v818, 7
      %v821 = vshll.u32 %v603, 16
      %v823 = vor.u32 %v820, %v821
      %v824 = vrot.slane %v820, 4
      %v826 = vshrl.u32 %v604, 16
      %v828 = vrot.slane %v826, 7
      %v829 = vshll.u32 %v604, 16
      %v831 = vor.u32 %v828, %v829
      %v832 = vsel %vm612, %v824, %v831
      %v833 = vrot.slane %v828, 4
      %v835 = vshrl.u32 %v605, 16
      %v837 = vrot.slane %v835, 7
      %v838 = vshll.u32 %v605, 16
      %v840 = vor.u32 %v837, %v838
      %v841 = vrot.slane %v837, 4
      %v843 = vshrl.u32 %v606, 16
      %v845 = vrot.slane %v843, 7
      %v846 = vshll.u32 %v606, 16
      %v848 = vor.u32 %v845, %v846
      %v849 = vsel %vm612, %v841, %v848
      %v850 = vrot.slane %v845, 4
      %v852 = vshrl.u32 %v607, 16
      %v854 = vrot.slane %v852, 7
      %v855 = vshll.u32 %v607, 16
      %v857 = vor.u32 %v854, %v855
      %v858 = vrot.slane %v854, 4
      %v860 = vshrl.u32 %v608, 16
      %v862 = vrot.slane %v860, 7
      %v863 = vshll.u32 %v608, 16
      %v865 = vor.u32 %v862, %v863
      %v866 = vsel %vm612, %v858, %v865
      %v867 = vrot.slane %v862, 4
      %v869 = vshrl.u32 %v609, 16
      %v871 = vrot.slane %v869, 7
      %v872 = vshll.u32 %v609, 16
      %v874 = vor.u32 %v871, %v872
      %v875 = vrot.slane %v871, 4
      %v877 = vshrl.u32 %v610, 16
      %v879 = vrot.slane %v877, 7
      %v880 = vshll.u32 %v610, 16
      %v882 = vor.u32 %v879, %v880
      %v883 = vsel %vm612, %v875, %v882
      %v884 = vrot.slane %v879, 4
      %vm933 = vcmask 1043456
      %vm934 = vmand %vm933, %vm481
      %v935 = vld [vmem:[%s429] sm:$0xf]
      %v936 = vsel %vm934, %v619, %v935
      %937 = vst [vmem:[%s429] sm:$0xf] %v936
      %938 = vst [vmem:[%s429 + $0x4] sm:$0xf] %v628
      %v939 = vld [vmem:[%s429 + $0x8] sm:$0x1]
      %v940 = vsel %vm432, %v629, %v939
      %941 = vst [vmem:[%s429 + $0x8] sm:$0x1] %v940
      %v942 = vld [vmem:[%s429 + $0xc] sm:$0xf]
      %v943 = vsel %vm934, %v636, %v942
      %944 = vst [vmem:[%s429 + $0xc] sm:$0xf] %v943
      %945 = vst [vmem:[%s429 + $0x10] sm:$0xf] %v645
      %v946 = vld [vmem:[%s429 + $0x14] sm:$0x1]
      %v947 = vsel %vm432, %v646, %v946
      %948 = vst [vmem:[%s429 + $0x14] sm:$0x1] %v947
      %v949 = vld [vmem:[%s429 + $0x18] sm:$0xf]
      %v950 = vsel %vm934, %v653, %v949
      %951 = vst [vmem:[%s429 + $0x18] sm:$0xf] %v950
      %952 = vst [vmem:[%s429 + $0x1c] sm:$0xf] %v662
      %v953 = vld [vmem:[%s429 + $0x20] sm:$0x1]
      %v954 = vsel %vm432, %v663, %v953
      %955 = vst [vmem:[%s429 + $0x20] sm:$0x1] %v954
      %v956 = vld [vmem:[%s429 + $0x24] sm:$0xf]
      %v957 = vsel %vm934, %v670, %v956
      %958 = vst [vmem:[%s429 + $0x24] sm:$0xf] %v957
      %959 = vst [vmem:[%s429 + $0x28] sm:$0xf] %v679
      %v960 = vld [vmem:[%s429 + $0x2c] sm:$0x1]
      %v961 = vsel %vm432, %v680, %v960
      %962 = vst [vmem:[%s429 + $0x2c] sm:$0x1] %v961
      %v963 = vld [vmem:[%s429 + $0x30] sm:$0xf]
      %v964 = vsel %vm934, %v687, %v963
      %965 = vst [vmem:[%s429 + $0x30] sm:$0xf] %v964
      %966 = vst [vmem:[%s429 + $0x34] sm:$0xf] %v696
      %v967 = vld [vmem:[%s429 + $0x38] sm:$0x1]
      %v968 = vsel %vm432, %v697, %v967
      %969 = vst [vmem:[%s429 + $0x38] sm:$0x1] %v968
      %v970 = vld [vmem:[%s429 + $0x3c] sm:$0xf]
      %v971 = vsel %vm934, %v704, %v970
      %972 = vst [vmem:[%s429 + $0x3c] sm:$0xf] %v971
      %973 = vst [vmem:[%s429 + $0x40] sm:$0xf] %v713
      %v974 = vld [vmem:[%s429 + $0x44] sm:$0x1]
      %v975 = vsel %vm432, %v714, %v974
      %976 = vst [vmem:[%s429 + $0x44] sm:$0x1] %v975
      %v977 = vld [vmem:[%s429 + $0x48] sm:$0xf]
      %v978 = vsel %vm934, %v721, %v977
      %979 = vst [vmem:[%s429 + $0x48] sm:$0xf] %v978
      %980 = vst [vmem:[%s429 + $0x4c] sm:$0xf] %v730
      %v981 = vld [vmem:[%s429 + $0x50] sm:$0x1]
      %v982 = vsel %vm432, %v731, %v981
      %983 = vst [vmem:[%s429 + $0x50] sm:$0x1] %v982
      %v984 = vld [vmem:[%s429 + $0x54] sm:$0xf]
      %v985 = vsel %vm934, %v738, %v984
      %986 = vst [vmem:[%s429 + $0x54] sm:$0xf] %v985
      %987 = vst [vmem:[%s429 + $0x58] sm:$0xf] %v747
      %v988 = vld [vmem:[%s429 + $0x5c] sm:$0x1]
      %v989 = vsel %vm432, %v748, %v988
      %990 = vst [vmem:[%s429 + $0x5c] sm:$0x1] %v989
      %v991 = vld [vmem:[%s429 + $0x60] sm:$0xf]
      %v992 = vsel %vm934, %v755, %v991
      %993 = vst [vmem:[%s429 + $0x60] sm:$0xf] %v992
      %994 = vst [vmem:[%s429 + $0x64] sm:$0xf] %v764
      %v995 = vld [vmem:[%s429 + $0x68] sm:$0x1]
      %v996 = vsel %vm432, %v765, %v995
      %997 = vst [vmem:[%s429 + $0x68] sm:$0x1] %v996
      %v998 = vld [vmem:[%s429 + $0x6c] sm:$0xf]
      %v999 = vsel %vm934, %v772, %v998
      %1000 = vst [vmem:[%s429 + $0x6c] sm:$0xf] %v999
      %1001 = vst [vmem:[%s429 + $0x70] sm:$0xf] %v781
      %v1002 = vld [vmem:[%s429 + $0x74] sm:$0x1]
      %v1003 = vsel %vm432, %v782, %v1002
      %1004 = vst [vmem:[%s429 + $0x74] sm:$0x1] %v1003
      %v1005 = vld [vmem:[%s429 + $0x78] sm:$0xf]
      %v1006 = vsel %vm934, %v789, %v1005
      %1007 = vst [vmem:[%s429 + $0x78] sm:$0xf] %v1006
      %1008 = vst [vmem:[%s429 + $0x7c] sm:$0xf] %v798
      %v1009 = vld [vmem:[%s429 + $0x80] sm:$0x1]
      %v1010 = vsel %vm432, %v799, %v1009
      %1011 = vst [vmem:[%s429 + $0x80] sm:$0x1] %v1010
      %v1012 = vld [vmem:[%s429 + $0x84] sm:$0xf]
      %v1013 = vsel %vm934, %v806, %v1012
      %1014 = vst [vmem:[%s429 + $0x84] sm:$0xf] %v1013
      %1015 = vst [vmem:[%s429 + $0x88] sm:$0xf] %v815
      %v1016 = vld [vmem:[%s429 + $0x8c] sm:$0x1]
      %v1017 = vsel %vm432, %v816, %v1016
      %1018 = vst [vmem:[%s429 + $0x8c] sm:$0x1] %v1017
      %v1019 = vld [vmem:[%s429 + $0x90] sm:$0xf]
      %v1020 = vsel %vm934, %v823, %v1019
      %1021 = vst [vmem:[%s429 + $0x90] sm:$0xf] %v1020
      %1022 = vst [vmem:[%s429 + $0x94] sm:$0xf] %v832
      %v1023 = vld [vmem:[%s429 + $0x98] sm:$0x1]
      %v1024 = vsel %vm432, %v833, %v1023
      %1025 = vst [vmem:[%s429 + $0x98] sm:$0x1] %v1024
      %v1026 = vld [vmem:[%s429 + $0x9c] sm:$0xf]
      %v1027 = vsel %vm934, %v840, %v1026
      %1028 = vst [vmem:[%s429 + $0x9c] sm:$0xf] %v1027
      %1029 = vst [vmem:[%s429 + $0xa0] sm:$0xf] %v849
      %v1030 = vld [vmem:[%s429 + $0xa4] sm:$0x1]
      %v1031 = vsel %vm432, %v850, %v1030
      %1032 = vst [vmem:[%s429 + $0xa4] sm:$0x1] %v1031
      %v1033 = vld [vmem:[%s429 + $0xa8] sm:$0xf]
      %v1034 = vsel %vm934, %v857, %v1033
      %1035 = vst [vmem:[%s429 + $0xa8] sm:$0xf] %v1034
      %1036 = vst [vmem:[%s429 + $0xac] sm:$0xf] %v866
      %v1037 = vld [vmem:[%s429 + $0xb0] sm:$0x1]
      %v1038 = vsel %vm432, %v867, %v1037
      %1039 = vst [vmem:[%s429 + $0xb0] sm:$0x1] %v1038
      %v1040 = vld [vmem:[%s429 + $0xb4] sm:$0xf]
      %v1041 = vsel %vm934, %v874, %v1040
      %1042 = vst [vmem:[%s429 + $0xb4] sm:$0xf] %v1041
      %1043 = vst [vmem:[%s429 + $0xb8] sm:$0xf] %v883
      %v1044 = vld [vmem:[%s429 + $0xbc] sm:$0x1]
      %v1045 = vsel %vm432, %v884, %v1044
      %1046 = vst [vmem:[%s429 + $0xbc] sm:$0x1] %v1045
      %v1047 = vld [vmem:[#allocation2] sm:$0xf]
      %v1048 = vld [vmem:[#allocation2 + $0x4] sm:$0xf]
      %v1049 = vld [vmem:[#allocation2 + $0xc] sm:$0xf]
      %v1050 = vld [vmem:[#allocation2 + $0x10] sm:$0xf]
      %v1051 = vld [vmem:[#allocation2 + $0x18] sm:$0xf]
      %v1052 = vld [vmem:[#allocation2 + $0x1c] sm:$0xf]
      %v1053 = vld [vmem:[#allocation2 + $0x24] sm:$0xf]
      %v1054 = vld [vmem:[#allocation2 + $0x28] sm:$0xf]
      %v1055 = vld [vmem:[#allocation2 + $0x30] sm:$0xf]
      %v1056 = vld [vmem:[#allocation2 + $0x34] sm:$0xf]
      %v1057 = vld [vmem:[#allocation2 + $0x3c] sm:$0xf]
      %v1058 = vld [vmem:[#allocation2 + $0x40] sm:$0xf]
      %v1059 = vld [vmem:[#allocation2 + $0x48] sm:$0xf]
      %v1060 = vld [vmem:[#allocation2 + $0x4c] sm:$0xf]
      %v1061 = vld [vmem:[#allocation2 + $0x54] sm:$0xf]
      %v1062 = vld [vmem:[#allocation2 + $0x58] sm:$0xf]
      %v1063 = vld [vmem:[#allocation2 + $0x60] sm:$0xf]
      %v1064 = vld [vmem:[#allocation2 + $0x64] sm:$0xf]
      %v1065 = vld [vmem:[#allocation2 + $0x6c] sm:$0xf]
      %v1066 = vld [vmem:[#allocation2 + $0x70] sm:$0xf]
      %v1067 = vld [vmem:[#allocation2 + $0x78] sm:$0xf]
      %v1068 = vld [vmem:[#allocation2 + $0x7c] sm:$0xf]
      %v1069 = vld [vmem:[#allocation2 + $0x84] sm:$0xf]
      %v1070 = vld [vmem:[#allocation2 + $0x88] sm:$0xf]
      %v1071 = vld [vmem:[#allocation2 + $0x90] sm:$0xf]
      %v1072 = vld [vmem:[#allocation2 + $0x94] sm:$0xf]
      %v1073 = vld [vmem:[#allocation2 + $0x9c] sm:$0xf]
      %v1074 = vld [vmem:[#allocation2 + $0xa0] sm:$0xf]
      %v1075 = vld [vmem:[#allocation2 + $0xa8] sm:$0xf]
      %v1076 = vld [vmem:[#allocation2 + $0xac] sm:$0xf]
      %v1077 = vld [vmem:[#allocation2 + $0xb4] sm:$0xf]
      %v1078 = vld [vmem:[#allocation2 + $0xb8] sm:$0xf]
      %1079 = vst [vmem:[#allocation3] sm:$0xf] %v1047
      %1080 = vst [vmem:[#allocation3 + $0x24] sm:$0xf] %v1048
      %1081 = vst [vmem:[#allocation3 + $0x48] sm:$0xf] %v1049
      %1082 = vst [vmem:[#allocation3 + $0x6c] sm:$0xf] %v1050
      %1083 = vst [vmem:[#allocation3 + $0x90] sm:$0xf] %v1051
      %1084 = vst [vmem:[#allocation3 + $0xb4] sm:$0xf] %v1052
      %1085 = vst [vmem:[#allocation3 + $0xd8] sm:$0xf] %v1053
      %1086 = vst [vmem:[#allocation3 + $0xfc] sm:$0xf] %v1054
      %1087 = vst [vmem:[#allocation3 + $0x120] sm:$0xf] %v1055
      %1088 = vst [vmem:[#allocation3 + $0x144] sm:$0xf] %v1056
      %1089 = vst [vmem:[#allocation3 + $0x168] sm:$0xf] %v1057
      %1090 = vst [vmem:[#allocation3 + $0x18c] sm:$0xf] %v1058
      %1091 = vst [vmem:[#allocation3 + $0x1b0] sm:$0xf] %v1059
      %1092 = vst [vmem:[#allocation3 + $0x1d4] sm:$0xf] %v1060
      %1093 = vst [vmem:[#allocation3 + $0x1f8] sm:$0xf] %v1061
      %1094 = vst [vmem:[#allocation3 + $0x21c] sm:$0xf] %v1062
      %1095 = vst [vmem:[#allocation3 + $0x240] sm:$0xf] %v1063
      %1096 = vst [vmem:[#allocation3 + $0x264] sm:$0xf] %v1064
      %1097 = vst [vmem:[#allocation3 + $0x288] sm:$0xf] %v1065
      %1098 = vst [vmem:[#allocation3 + $0x2ac] sm:$0xf] %v1066
      %1099 = vst [vmem:[#allocation3 + $0x2d0] sm:$0xf] %v1067
      %1100 = vst [vmem:[#allocation3 + $0x2f4] sm:$0xf] %v1068
      %1101 = vst [vmem:[#allocation3 + $0x318] sm:$0xf] %v1069
      %1102 = vst [vmem:[#allocation3 + $0x33c] sm:$0xf] %v1070
      %1103 = vst [vmem:[#allocation3 + $0x360] sm:$0xf] %v1071
      %1104 = vst [vmem:[#allocation3 + $0x384] sm:$0xf] %v1072
      %1105 = vst [vmem:[#allocation3 + $0x3a8] sm:$0xf] %v1073
      %1106 = vst [vmem:[#allocation3 + $0x3cc] sm:$0xf] %v1074
      %1107 = vst [vmem:[#allocation3 + $0x3f0] sm:$0xf] %v1075
      %1108 = vst [vmem:[#allocation3 + $0x414] sm:$0xf] %v1076
      %1109 = vst [vmem:[#allocation3 + $0x438] sm:$0xf] %v1077
      %1110 = vst [vmem:[#allocation3 + $0x45c] sm:$0xf] %v1078
      %v1111 = vld [vmem:[#allocation2] sm:$0xf]
      %v1112 = vld [vmem:[#allocation2 + $0x4] sm:$0xf]
      %v1113 = vld [vmem:[#allocation2 + $0x8] sm:$0x1]
      %v1114 = vld [vmem:[#allocation2 + $0xc] sm:$0xf]
      %v1115 = vld [vmem:[#allocation2 + $0x10] sm:$0xf]
      %v1116 = vld [vmem:[#allocation2 + $0x14] sm:$0x1]
      %v1117 = vld [vmem:[#allocation2 + $0x18] sm:$0xf]
      %v1118 = vld [vmem:[#allocation2 + $0x1c] sm:$0xf]
      %v1119 = vld [vmem:[#allocation2 + $0x20] sm:$0x1]
      %v1120 = vld [vmem:[#allocation2 + $0x24] sm:$0xf]
      %v1121 = vld [vmem:[#allocation2 + $0x28] sm:$0xf]
      %v1122 = vld [vmem:[#allocation2 + $0x2c] sm:$0x1]
      %v1123 = vld [vmem:[#allocation2 + $0x30] sm:$0xf]
      %v1124 = vld [vmem:[#allocation2 + $0x34] sm:$0xf]
      %v1125 = vld [vmem:[#allocation2 + $0x38] sm:$0x1]
      %v1126 = vld [vmem:[#allocation2 + $0x3c] sm:$0xf]
      %v1127 = vld [vmem:[#allocation2 + $0x40] sm:$0xf]
      %v1128 = vld [vmem:[#allocation2 + $0x44] sm:$0x1]
      %v1129 = vld [vmem:[#allocation2 + $0x48] sm:$0xf]
      %v1130 = vld [vmem:[#allocation2 + $0x4c] sm:$0xf]
      %v1131 = vld [vmem:[#allocation2 + $0x50] sm:$0x1]
      %v1132 = vld [vmem:[#allocation2 + $0x54] sm:$0xf]
      %v1133 = vld [vmem:[#allocation2 + $0x58] sm:$0xf]
      %v1134 = vld [vmem:[#allocation2 + $0x5c] sm:$0x1]
      %v1135 = vld [vmem:[#allocation2 + $0x60] sm:$0xf]
      %v1136 = vld [vmem:[#allocation2 + $0x64] sm:$0xf]
      %v1137 = vld [vmem:[#allocation2 + $0x68] sm:$0x1]
      %v1138 = vld [vmem:[#allocation2 + $0x6c] sm:$0xf]
      %v1139 = vld [vmem:[#allocation2 + $0x70] sm:$0xf]
      %v1140 = vld [vmem:[#allocation2 + $0x74] sm:$0x1]
      %v1141 = vld [vmem:[#allocation2 + $0x78] sm:$0xf]
      %v1142 = vld [vmem:[#allocation2 + $0x7c] sm:$0xf]
      %v1143 = vld [vmem:[#allocation2 + $0x80] sm:$0x1]
      %v1144 = vld [vmem:[#allocation2 + $0x84] sm:$0xf]
      %v1145 = vld [vmem:[#allocation2 + $0x88] sm:$0xf]
      %v1146 = vld [vmem:[#allocation2 + $0x8c] sm:$0x1]
      %v1147 = vld [vmem:[#allocation2 + $0x90] sm:$0xf]
      %v1148 = vld [vmem:[#allocation2 + $0x94] sm:$0xf]
      %v1149 = vld [vmem:[#allocation2 + $0x98] sm:$0x1]
      %v1150 = vld [vmem:[#allocation2 + $0x9c] sm:$0xf]
      %v1151 = vld [vmem:[#allocation2 + $0xa0] sm:$0xf]
      %v1152 = vld [vmem:[#allocation2 + $0xa4] sm:$0x1]
      %v1153 = vld [vmem:[#allocation2 + $0xa8] sm:$0xf]
      %v1154 = vld [vmem:[#allocation2 + $0xac] sm:$0xf]
      %v1155 = vld [vmem:[#allocation2 + $0xb0] sm:$0x1]
      %v1156 = vld [vmem:[#allocation2 + $0xb4] sm:$0xf]
      %v1157 = vld [vmem:[#allocation2 + $0xb8] sm:$0xf]
      %v1158 = vld [vmem:[#allocation2 + $0xbc] sm:$0x1]
      %vm1159 = vsmask.f32 3328
      %vm1160 = vsmask.f32 7440
      %vm1161 = vmor %vm1159, %vm1160
      %v1163 = vshrl.u32 %v1111, 16
      %v1165 = vrot.slane %v1163, 4
      %v1166 = vshll.u32 %v1111, 16
      %v1168 = vrot.slane %v1166, 5
      %v1169 = vor.u32 %v1165, %v1168
      %v1170 = vrot.slane %v1169, 4
      %v1172 = vshll.u32 %v1112, 16
      %v1174 = vrot.slane %v1172, 5
      %v1175 = vsel %vm1161, %v1170, %v1174
      %v1176 = vshrl.u32 %v1112, 16
      %v1178 = vrot.slane %v1176, 4
      %v1179 = vor.u32 %v1178, %v1174
      %v1180 = vrot.slane %v1179, 4
      %v1182 = vshll.u32 %v1113, 16
      %v1184 = vrot.slane %v1182, 5
      %v1185 = vsel %vm1161, %v1180, %v1184
      %v1187 = vshrl.u32 %v1114, 16
      %v1189 = vrot.slane %v1187, 4
      %v1190 = vshll.u32 %v1114, 16
      %v1192 = vrot.slane %v1190, 5
      %v1193 = vor.u32 %v1189, %v1192
      %v1194 = vrot.slane %v1193, 4
      %v1196 = vshll.u32 %v1115, 16
      %v1198 = vrot.slane %v1196, 5
      %v1199 = vsel %vm1161, %v1194, %v1198
      %v1200 = vshrl.u32 %v1115, 16
      %v1202 = vrot.slane %v1200, 4
      %v1203 = vor.u32 %v1202, %v1198
      %v1204 = vrot.slane %v1203, 4
      %v1206 = vshll.u32 %v1116, 16
      %v1208 = vrot.slane %v1206, 5
      %v1209 = vsel %vm1161, %v1204, %v1208
      %v1211 = vshrl.u32 %v1117, 16
      %v1213 = vrot.slane %v1211, 4
      %v1214 = vshll.u32 %v1117, 16
      %v1216 = vrot.slane %v1214, 5
      %v1217 = vor.u32 %v1213, %v1216
      %v1218 = vrot.slane %v1217, 4
      %v1220 = vshll.u32 %v1118, 16
      %v1222 = vrot.slane %v1220, 5
      %v1223 = vsel %vm1161, %v1218, %v1222
      %v1224 = vshrl.u32 %v1118, 16
      %v1226 = vrot.slane %v1224, 4
      %v1227 = vor.u32 %v1226, %v1222
      %v1228 = vrot.slane %v1227, 4
      %v1230 = vshll.u32 %v1119, 16
      %v1232 = vrot.slane %v1230, 5
      %v1233 = vsel %vm1161, %v1228, %v1232
      %v1235 = vshrl.u32 %v1120, 16
      %v1237 = vrot.slane %v1235, 4
      %v1238 = vshll.u32 %v1120, 16
      %v1240 = vrot.slane %v1238, 5
      %v1241 = vor.u32 %v1237, %v1240
      %v1242 = vrot.slane %v1241, 4
      %v1244 = vshll.u32 %v1121, 16
      %v1246 = vrot.slane %v1244, 5
      %v1247 = vsel %vm1161, %v1242, %v1246
      %v1248 = vshrl.u32 %v1121, 16
      %v1250 = vrot.slane %v1248, 4
      %v1251 = vor.u32 %v1250, %v1246
      %v1252 = vrot.slane %v1251, 4
      %v1254 = vshll.u32 %v1122, 16
      %v1256 = vrot.slane %v1254, 5
      %v1257 = vsel %vm1161, %v1252, %v1256
      %v1259 = vshrl.u32 %v1123, 16
      %v1261 = vrot.slane %v1259, 4
      %v1262 = vshll.u32 %v1123, 16
      %v1264 = vrot.slane %v1262, 5
      %v1265 = vor.u32 %v1261, %v1264
      %v1266 = vrot.slane %v1265, 4
      %v1268 = vshll.u32 %v1124, 16
      %v1270 = vrot.slane %v1268, 5
      %v1271 = vsel %vm1161, %v1266, %v1270
      %v1272 = vshrl.u32 %v1124, 16
      %v1274 = vrot.slane %v1272, 4
      %v1275 = vor.u32 %v1274, %v1270
      %v1276 = vrot.slane %v1275, 4
      %v1278 = vshll.u32 %v1125, 16
      %v1280 = vrot.slane %v1278, 5
      %v1281 = vsel %vm1161, %v1276, %v1280
      %v1283 = vshrl.u32 %v1126, 16
      %v1285 = vrot.slane %v1283, 4
      %v1286 = vshll.u32 %v1126, 16
      %v1288 = vrot.slane %v1286, 5
      %v1289 = vor.u32 %v1285, %v1288
      %v1290 = vrot.slane %v1289, 4
      %v1292 = vshll.u32 %v1127, 16
      %v1294 = vrot.slane %v1292, 5
      %v1295 = vsel %vm1161, %v1290, %v1294
      %v1296 = vshrl.u32 %v1127, 16
      %v1298 = vrot.slane %v1296, 4
      %v1299 = vor.u32 %v1298, %v1294
      %v1300 = vrot.slane %v1299, 4
      %v1302 = vshll.u32 %v1128, 16
      %v1304 = vrot.slane %v1302, 5
      %v1305 = vsel %vm1161, %v1300, %v1304
      %v1307 = vshrl.u32 %v1129, 16
      %v1309 = vrot.slane %v1307, 4
      %v1310 = vshll.u32 %v1129, 16
      %v1312 = vrot.slane %v1310, 5
      %v1313 = vor.u32 %v1309, %v1312
      %v1314 = vrot.slane %v1313, 4
      %v1316 = vshll.u32 %v1130, 16
      %v1318 = vrot.slane %v1316, 5
      %v1319 = vsel %vm1161, %v1314, %v1318
      %v1320 = vshrl.u32 %v1130, 16
      %v1322 = vrot.slane %v1320, 4
      %v1323 = vor.u32 %v1322, %v1318
      %v1324 = vrot.slane %v1323, 4
      %v1326 = vshll.u32 %v1131, 16
      %v1328 = vrot.slane %v1326, 5
      %v1329 = vsel %vm1161, %v1324, %v1328
      %v1331 = vshrl.u32 %v1132, 16
      %v1333 = vrot.slane %v1331, 4
      %v1334 = vshll.u32 %v1132, 16
      %v1336 = vrot.slane %v1334, 5
      %v1337 = vor.u32 %v1333, %v1336
      %v1338 = vrot.slane %v1337, 4
      %v1340 = vshll.u32 %v1133, 16
      %v1342 = vrot.slane %v1340, 5
      %v1343 = vsel %vm1161, %v1338, %v1342
      %v1344 = vshrl.u32 %v1133, 16
      %v1346 = vrot.slane %v1344, 4
      %v1347 = vor.u32 %v1346, %v1342
      %v1348 = vrot.slane %v1347, 4
      %v1350 = vshll.u32 %v1134, 16
      %v1352 = vrot.slane %v1350, 5
      %v1353 = vsel %vm1161, %v1348, %v1352
      %v1355 = vshrl.u32 %v1135, 16
      %v1357 = vrot.slane %v1355, 4
      %v1358 = vshll.u32 %v1135, 16
      %v1360 = vrot.slane %v1358, 5
      %v1361 = vor.u32 %v1357, %v1360
      %v1362 = vrot.slane %v1361, 4
      %v1364 = vshll.u32 %v1136, 16
      %v1366 = vrot.slane %v1364, 5
      %v1367 = vsel %vm1161, %v1362, %v1366
      %v1368 = vshrl.u32 %v1136, 16
      %v1370 = vrot.slane %v1368, 4
      %v1371 = vor.u32 %v1370, %v1366
      %v1372 = vrot.slane %v1371, 4
      %v1374 = vshll.u32 %v1137, 16
      %v1376 = vrot.slane %v1374, 5
      %v1377 = vsel %vm1161, %v1372, %v1376
      %v1379 = vshrl.u32 %v1138, 16
      %v1381 = vrot.slane %v1379, 4
      %v1382 = vshll.u32 %v1138, 16
      %v1384 = vrot.slane %v1382, 5
      %v1385 = vor.u32 %v1381, %v1384
      %v1386 = vrot.slane %v1385, 4
      %v1388 = vshll.u32 %v1139, 16
      %v1390 = vrot.slane %v1388, 5
      %v1391 = vsel %vm1161, %v1386, %v1390
      %v1392 = vshrl.u32 %v1139, 16
      %v1394 = vrot.slane %v1392, 4
      %v1395 = vor.u32 %v1394, %v1390
      %v1396 = vrot.slane %v1395, 4
      %v1398 = vshll.u32 %v1140, 16
      %v1400 = vrot.slane %v1398, 5
      %v1401 = vsel %vm1161, %v1396, %v1400
      %v1403 = vshrl.u32 %v1141, 16
      %v1405 = vrot.slane %v1403, 4
      %v1406 = vshll.u32 %v1141, 16
      %v1408 = vrot.slane %v1406, 5
      %v1409 = vor.u32 %v1405, %v1408
      %v1410 = vrot.slane %v1409, 4
      %v1412 = vshll.u32 %v1142, 16
      %v1414 = vrot.slane %v1412, 5
      %v1415 = vsel %vm1161, %v1410, %v1414
      %v1416 = vshrl.u32 %v1142, 16
      %v1418 = vrot.slane %v1416, 4
      %v1419 = vor.u32 %v1418, %v1414
      %v1420 = vrot.slane %v1419, 4
      %v1422 = vshll.u32 %v1143, 16
      %v1424 = vrot.slane %v1422, 5
      %v1425 = vsel %vm1161, %v1420, %v1424
      %v1427 = vshrl.u32 %v1144, 16
      %v1429 = vrot.slane %v1427, 4
      %v1430 = vshll.u32 %v1144, 16
      %v1432 = vrot.slane %v1430, 5
      %v1433 = vor.u32 %v1429, %v1432
      %v1434 = vrot.slane %v1433, 4
      %v1436 = vshll.u32 %v1145, 16
      %v1438 = vrot.slane %v1436, 5
      %v1439 = vsel %vm1161, %v1434, %v1438
      %v1440 = vshrl.u32 %v1145, 16
      %v1442 = vrot.slane %v1440, 4
      %v1443 = vor.u32 %v1442, %v1438
      %v1444 = vrot.slane %v1443, 4
      %v1446 = vshll.u32 %v1146, 16
      %v1448 = vrot.slane %v1446, 5
      %v1449 = vsel %vm1161, %v1444, %v1448
      %v1451 = vshrl.u32 %v1147, 16
      %v1453 = vrot.slane %v1451, 4
      %v1454 = vshll.u32 %v1147, 16
      %v1456 = vrot.slane %v1454, 5
      %v1457 = vor.u32 %v1453, %v1456
      %v1458 = vrot.slane %v1457, 4
      %v1460 = vshll.u32 %v1148, 16
      %v1462 = vrot.slane %v1460, 5
      %v1463 = vsel %vm1161, %v1458, %v1462
      %v1464 = vshrl.u32 %v1148, 16
      %v1466 = vrot.slane %v1464, 4
      %v1467 = vor.u32 %v1466, %v1462
      %v1468 = vrot.slane %v1467, 4
      %v1470 = vshll.u32 %v1149, 16
      %v1472 = vrot.slane %v1470, 5
      %v1473 = vsel %vm1161, %v1468, %v1472
      %v1475 = vshrl.u32 %v1150, 16
      %v1477 = vrot.slane %v1475, 4
      %v1478 = vshll.u32 %v1150, 16
      %v1480 = vrot.slane %v1478, 5
      %v1481 = vor.u32 %v1477, %v1480
      %v1482 = vrot.slane %v1481, 4
      %v1484 = vshll.u32 %v1151, 16
      %v1486 = vrot.slane %v1484, 5
      %v1487 = vsel %vm1161, %v1482, %v1486
      %v1488 = vshrl.u32 %v1151, 16
      %v1490 = vrot.slane %v1488, 4
      %v1491 = vor.u32 %v1490, %v1486
      %v1492 = vrot.slane %v1491, 4
      %v1494 = vshll.u32 %v1152, 16
      %v1496 = vrot.slane %v1494, 5
      %v1497 = vsel %vm1161, %v1492, %v1496
      %v1499 = vshrl.u32 %v1153, 16
      %v1501 = vrot.slane %v1499, 4
      %v1502 = vshll.u32 %v1153, 16
      %v1504 = vrot.slane %v1502, 5
      %v1505 = vor.u32 %v1501, %v1504
      %v1506 = vrot.slane %v1505, 4
      %v1508 = vshll.u32 %v1154, 16
      %v1510 = vrot.slane %v1508, 5
      %v1511 = vsel %vm1161, %v1506, %v1510
      %v1512 = vshrl.u32 %v1154, 16
      %v1514 = vrot.slane %v1512, 4
      %v1515 = vor.u32 %v1514, %v1510
      %v1516 = vrot.slane %v1515, 4
      %v1518 = vshll.u32 %v1155, 16
      %v1520 = vrot.slane %v1518, 5
      %v1521 = vsel %vm1161, %v1516, %v1520
      %v1523 = vshrl.u32 %v1156, 16
      %v1525 = vrot.slane %v1523, 4
      %v1526 = vshll.u32 %v1156, 16
      %v1528 = vrot.slane %v1526, 5
      %v1529 = vor.u32 %v1525, %v1528
      %v1530 = vrot.slane %v1529, 4
      %v1532 = vshll.u32 %v1157, 16
      %v1534 = vrot.slane %v1532, 5
      %v1535 = vsel %vm1161, %v1530, %v1534
      %v1536 = vshrl.u32 %v1157, 16
      %v1538 = vrot.slane %v1536, 4
      %v1539 = vor.u32 %v1538, %v1534
      %v1540 = vrot.slane %v1539, 4
      %v1542 = vshll.u32 %v1158, 16
      %v1544 = vrot.slane %v1542, 5
      %v1545 = vsel %vm1161, %v1540, %v1544
      %1578 = vst [vmem:[#allocation3 + $0x4] sm:$0xf] %v1175
      %1579 = vst [vmem:[#allocation3 + $0x28] sm:$0xf] %v1185
      %1580 = vst [vmem:[#allocation3 + $0x4c] sm:$0xf] %v1199
      %1581 = vst [vmem:[#allocation3 + $0x70] sm:$0xf] %v1209
      %1582 = vst [vmem:[#allocation3 + $0x94] sm:$0xf] %v1223
      %1583 = vst [vmem:[#allocation3 + $0xb8] sm:$0xf] %v1233
      %1584 = vst [vmem:[#allocation3 + $0xdc] sm:$0xf] %v1247
      %1585 = vst [vmem:[#allocation3 + $0x100] sm:$0xf] %v1257
      %1586 = vst [vmem:[#allocation3 + $0x124] sm:$0xf] %v1271
      %1587 = vst [vmem:[#allocation3 + $0x148] sm:$0xf] %v1281
      %1588 = vst [vmem:[#allocation3 + $0x16c] sm:$0xf] %v1295
      %1589 = vst [vmem:[#allocation3 + $0x190] sm:$0xf] %v1305
      %1590 = vst [vmem:[#allocation3 + $0x1b4] sm:$0xf] %v1319
      %1591 = vst [vmem:[#allocation3 + $0x1d8] sm:$0xf] %v1329
      %1592 = vst [vmem:[#allocation3 + $0x1fc] sm:$0xf] %v1343
      %1593 = vst [vmem:[#allocation3 + $0x220] sm:$0xf] %v1353
      %1594 = vst [vmem:[#allocation3 + $0x244] sm:$0xf] %v1367
      %1595 = vst [vmem:[#allocation3 + $0x268] sm:$0xf] %v1377
      %1596 = vst [vmem:[#allocation3 + $0x28c] sm:$0xf] %v1391
      %1597 = vst [vmem:[#allocation3 + $0x2b0] sm:$0xf] %v1401
      %1598 = vst [vmem:[#allocation3 + $0x2d4] sm:$0xf] %v1415
      %1599 = vst [vmem:[#allocation3 + $0x2f8] sm:$0xf] %v1425
      %1600 = vst [vmem:[#allocation3 + $0x31c] sm:$0xf] %v1439
      %1601 = vst [vmem:[#allocation3 + $0x340] sm:$0xf] %v1449
      %1602 = vst [vmem:[#allocation3 + $0x364] sm:$0xf] %v1463
      %1603 = vst [vmem:[#allocation3 + $0x388] sm:$0xf] %v1473
      %1604 = vst [vmem:[#allocation3 + $0x3ac] sm:$0xf] %v1487
      %1605 = vst [vmem:[#allocation3 + $0x3d0] sm:$0xf] %v1497
      %1606 = vst [vmem:[#allocation3 + $0x3f4] sm:$0xf] %v1511
      %1607 = vst [vmem:[#allocation3 + $0x418] sm:$0xf] %v1521
      %1608 = vst [vmem:[#allocation3 + $0x43c] sm:$0xf] %v1535
      %1609 = vst [vmem:[#allocation3 + $0x460] sm:$0xf] %v1545
      %v1610 = vld [vmem:[#allocation2] sm:$0xe]
      %v1611 = vld [vmem:[#allocation2 + $0x4] sm:$0xf]
      %v1612 = vld [vmem:[#allocation2 + $0x8] sm:$0x1]
      %v1613 = vld [vmem:[#allocation2 + $0xc] sm:$0xe]
      %v1614 = vld [vmem:[#allocation2 + $0x10] sm:$0xf]
      %v1615 = vld [vmem:[#allocation2 + $0x14] sm:$0x1]
      %v1616 = vld [vmem:[#allocation2 + $0x18] sm:$0xe]
      %v1617 = vld [vmem:[#allocation2 + $0x1c] sm:$0xf]
      %v1618 = vld [vmem:[#allocation2 + $0x20] sm:$0x1]
      %v1619 = vld [vmem:[#allocation2 + $0x24] sm:$0xe]
      %v1620 = vld [vmem:[#allocation2 + $0x28] sm:$0xf]
      %v1621 = vld [vmem:[#allocation2 + $0x2c] sm:$0x1]
      %v1622 = vld [vmem:[#allocation2 + $0x30] sm:$0xe]
      %v1623 = vld [vmem:[#allocation2 + $0x34] sm:$0xf]
      %v1624 = vld [vmem:[#allocation2 + $0x38] sm:$0x1]
      %v1625 = vld [vmem:[#allocation2 + $0x3c] sm:$0xe]
      %v1626 = vld [vmem:[#allocation2 + $0x40] sm:$0xf]
      %v1627 = vld [vmem:[#allocation2 + $0x44] sm:$0x1]
      %v1628 = vld [vmem:[#allocation2 + $0x48] sm:$0xe]
      %v1629 = vld [vmem:[#allocation2 + $0x4c] sm:$0xf]
      %v1630 = vld [vmem:[#allocation2 + $0x50] sm:$0x1]
      %v1631 = vld [vmem:[#allocation2 + $0x54] sm:$0xe]
      %v1632 = vld [vmem:[#allocation2 + $0x58] sm:$0xf]
      %v1633 = vld [vmem:[#allocation2 + $0x5c] sm:$0x1]
      %v1634 = vld [vmem:[#allocation2 + $0x60] sm:$0xe]
      %v1635 = vld [vmem:[#allocation2 + $0x64] sm:$0xf]
      %v1636 = vld [vmem:[#allocation2 + $0x68] sm:$0x1]
      %v1637 = vld [vmem:[#allocation2 + $0x6c] sm:$0xe]
      %v1638 = vld [vmem:[#allocation2 + $0x70] sm:$0xf]
      %v1639 = vld [vmem:[#allocation2 + $0x74] sm:$0x1]
      %v1640 = vld [vmem:[#allocation2 + $0x78] sm:$0xe]
      %v1641 = vld [vmem:[#allocation2 + $0x7c] sm:$0xf]
      %v1642 = vld [vmem:[#allocation2 + $0x80] sm:$0x1]
      %v1643 = vld [vmem:[#allocation2 + $0x84] sm:$0xe]
      %v1644 = vld [vmem:[#allocation2 + $0x88] sm:$0xf]
      %v1645 = vld [vmem:[#allocation2 + $0x8c] sm:$0x1]
      %v1646 = vld [vmem:[#allocation2 + $0x90] sm:$0xe]
      %v1647 = vld [vmem:[#allocation2 + $0x94] sm:$0xf]
      %v1648 = vld [vmem:[#allocation2 + $0x98] sm:$0x1]
      %v1649 = vld [vmem:[#allocation2 + $0x9c] sm:$0xe]
      %v1650 = vld [vmem:[#allocation2 + $0xa0] sm:$0xf]
      %v1651 = vld [vmem:[#allocation2 + $0xa4] sm:$0x1]
      %v1652 = vld [vmem:[#allocation2 + $0xa8] sm:$0xe]
      %v1653 = vld [vmem:[#allocation2 + $0xac] sm:$0xf]
      %v1654 = vld [vmem:[#allocation2 + $0xb0] sm:$0x1]
      %v1655 = vld [vmem:[#allocation2 + $0xb4] sm:$0xe]
      %v1656 = vld [vmem:[#allocation2 + $0xb8] sm:$0xf]
      %v1657 = vld [vmem:[#allocation2 + $0xbc] sm:$0x1]
      %vm1706 = vcmask 1042432
      %vm1707 = vcmask 1046532
      %vm1708 = vmor %vm1706, %vm1707
      %v1709 = vrot.slane %v1610, 5
      %v1710 = vrot.slane %v1709, 4
      %v1711 = vrot.slane %v1611, 5
      %v1712 = vsel %vm1708, %v1710, %v1711
      %v1713 = vrot.slane %v1711, 4
      %v1714 = vrot.slane %v1612, 5
      %v1715 = vsel %vm1708, %v1713, %v1714
      %v1716 = vrot.slane %v1613, 5
      %v1717 = vrot.slane %v1716, 4
      %v1718 = vrot.slane %v1614, 5
      %v1719 = vsel %vm1708, %v1717, %v1718
      %v1720 = vrot.slane %v1718, 4
      %v1721 = vrot.slane %v1615, 5
      %v1722 = vsel %vm1708, %v1720, %v1721
      %v1723 = vrot.slane %v1616, 5
      %v1724 = vrot.slane %v1723, 4
      %v1725 = vrot.slane %v1617, 5
      %v1726 = vsel %vm1708, %v1724, %v1725
      %v1727 = vrot.slane %v1725, 4
      %v1728 = vrot.slane %v1618, 5
      %v1729 = vsel %vm1708, %v1727, %v1728
      %v1730 = vrot.slane %v1619, 5
      %v1731 = vrot.slane %v1730, 4
      %v1732 = vrot.slane %v1620, 5
      %v1733 = vsel %vm1708, %v1731, %v1732
      %v1734 = vrot.slane %v1732, 4
      %v1735 = vrot.slane %v1621, 5
      %v1736 = vsel %vm1708, %v1734, %v1735
      %v1737 = vrot.slane %v1622, 5
      %v1738 = vrot.slane %v1737, 4
      %v1739 = vrot.slane %v1623, 5
      %v1740 = vsel %vm1708, %v1738, %v1739
      %v1741 = vrot.slane %v1739, 4
      %v1742 = vrot.slane %v1624, 5
      %v1743 = vsel %vm1708, %v1741, %v1742
      %v1744 = vrot.slane %v1625, 5
      %v1745 = vrot.slane %v1744, 4
      %v1746 = vrot.slane %v1626, 5
      %v1747 = vsel %vm1708, %v1745, %v1746
      %v1748 = vrot.slane %v1746, 4
      %v1749 = vrot.slane %v1627, 5
      %v1750 = vsel %vm1708, %v1748, %v1749
      %v1751 = vrot.slane %v1628, 5
      %v1752 = vrot.slane %v1751, 4
      %v1753 = vrot.slane %v1629, 5
      %v1754 = vsel %vm1708, %v1752, %v1753
      %v1755 = vrot.slane %v1753, 4
      %v1756 = vrot.slane %v1630, 5
      %v1757 = vsel %vm1708, %v1755, %v1756
      %v1758 = vrot.slane %v1631, 5
      %v1759 = vrot.slane %v1758, 4
      %v1760 = vrot.slane %v1632, 5
      %v1761 = vsel %vm1708, %v1759, %v1760
      %v1762 = vrot.slane %v1760, 4
      %v1763 = vrot.slane %v1633, 5
      %v1764 = vsel %vm1708, %v1762, %v1763
      %v1765 = vrot.slane %v1634, 5
      %v1766 = vrot.slane %v1765, 4
      %v1767 = vrot.slane %v1635, 5
      %v1768 = vsel %vm1708, %v1766, %v1767
      %v1769 = vrot.slane %v1767, 4
      %v1770 = vrot.slane %v1636, 5
      %v1771 = vsel %vm1708, %v1769, %v1770
      %v1772 = vrot.slane %v1637, 5
      %v1773 = vrot.slane %v1772, 4
      %v1774 = vrot.slane %v1638, 5
      %v1775 = vsel %vm1708, %v1773, %v1774
      %v1776 = vrot.slane %v1774, 4
      %v1777 = vrot.slane %v1639, 5
      %v1778 = vsel %vm1708, %v1776, %v1777
      %v1779 = vrot.slane %v1640, 5
      %v1780 = vrot.slane %v1779, 4
      %v1781 = vrot.slane %v1641, 5
      %v1782 = vsel %vm1708, %v1780, %v1781
      %v1783 = vrot.slane %v1781, 4
      %v1784 = vrot.slane %v1642, 5
      %v1785 = vsel %vm1708, %v1783, %v1784
      %v1786 = vrot.slane %v1643, 5
      %v1787 = vrot.slane %v1786, 4
      %v1788 = vrot.slane %v1644, 5
      %v1789 = vsel %vm1708, %v1787, %v1788
      %v1790 = vrot.slane %v1788, 4
      %v1791 = vrot.slane %v1645, 5
      %v1792 = vsel %vm1708, %v1790, %v1791
      %v1793 = vrot.slane %v1646, 5
      %v1794 = vrot.slane %v1793, 4
      %v1795 = vrot.slane %v1647, 5
      %v1796 = vsel %vm1708, %v1794, %v1795
      %v1797 = vrot.slane %v1795, 4
      %v1798 = vrot.slane %v1648, 5
      %v1799 = vsel %vm1708, %v1797, %v1798
      %v1800 = vrot.slane %v1649, 5
      %v1801 = vrot.slane %v1800, 4
      %v1802 = vrot.slane %v1650, 5
      %v1803 = vsel %vm1708, %v1801, %v1802
      %v1804 = vrot.slane %v1802, 4
      %v1805 = vrot.slane %v1651, 5
      %v1806 = vsel %vm1708, %v1804, %v1805
      %v1807 = vrot.slane %v1652, 5
      %v1808 = vrot.slane %v1807, 4
      %v1809 = vrot.slane %v1653, 5
      %v1810 = vsel %vm1708, %v1808, %v1809
      %v1811 = vrot.slane %v1809, 4
      %v1812 = vrot.slane %v1654, 5
      %v1813 = vsel %vm1708, %v1811, %v1812
      %v1814 = vrot.slane %v1655, 5
      %v1815 = vrot.slane %v1814, 4
      %v1816 = vrot.slane %v1656, 5
      %v1817 = vsel %vm1708, %v1815, %v1816
      %v1818 = vrot.slane %v1816, 4
      %v1819 = vrot.slane %v1657, 5
      %v1820 = vsel %vm1708, %v1818, %v1819
      %1853 = vst [vmem:[#allocation3 + $0x8] sm:$0xf] %v1712
      %1854 = vst [vmem:[#allocation3 + $0x2c] sm:$0xf] %v1715
      %1855 = vst [vmem:[#allocation3 + $0x50] sm:$0xf] %v1719
      %1856 = vst [vmem:[#allocation3 + $0x74] sm:$0xf] %v1722
      %1857 = vst [vmem:[#allocation3 + $0x98] sm:$0xf] %v1726
      %1858 = vst [vmem:[#allocation3 + $0xbc] sm:$0xf] %v1729
      %1859 = vst [vmem:[#allocation3 + $0xe0] sm:$0xf] %v1733
      %1860 = vst [vmem:[#allocation3 + $0x104] sm:$0xf] %v1736
      %1861 = vst [vmem:[#allocation3 + $0x128] sm:$0xf] %v1740
      %1862 = vst [vmem:[#allocation3 + $0x14c] sm:$0xf] %v1743
      %1863 = vst [vmem:[#allocation3 + $0x170] sm:$0xf] %v1747
      %1864 = vst [vmem:[#allocation3 + $0x194] sm:$0xf] %v1750
      %1865 = vst [vmem:[#allocation3 + $0x1b8] sm:$0xf] %v1754
      %1866 = vst [vmem:[#allocation3 + $0x1dc] sm:$0xf] %v1757
      %1867 = vst [vmem:[#allocation3 + $0x200] sm:$0xf] %v1761
      %1868 = vst [vmem:[#allocation3 + $0x224] sm:$0xf] %v1764
      %1869 = vst [vmem:[#allocation3 + $0x248] sm:$0xf] %v1768
      %1870 = vst [vmem:[#allocation3 + $0x26c] sm:$0xf] %v1771
      %1871 = vst [vmem:[#allocation3 + $0x290] sm:$0xf] %v1775
      %1872 = vst [vmem:[#allocation3 + $0x2b4] sm:$0xf] %v1778
      %1873 = vst [vmem:[#allocation3 + $0x2d8] sm:$0xf] %v1782
      %1874 = vst [vmem:[#allocation3 + $0x2fc] sm:$0xf] %v1785
      %1875 = vst [vmem:[#allocation3 + $0x320] sm:$0xf] %v1789
      %1876 = vst [vmem:[#allocation3 + $0x344] sm:$0xf] %v1792
      %1877 = vst [vmem:[#allocation3 + $0x368] sm:$0xf] %v1796
      %1878 = vst [vmem:[#allocation3 + $0x38c] sm:$0xf] %v1799
      %1879 = vst [vmem:[#allocation3 + $0x3b0] sm:$0xf] %v1803
      %1880 = vst [vmem:[#allocation3 + $0x3d4] sm:$0xf] %v1806
      %1881 = vst [vmem:[#allocation3 + $0x3f8] sm:$0xf] %v1810
      %1882 = vst [vmem:[#allocation3 + $0x41c] sm:$0xf] %v1813
      %1883 = vst [vmem:[#allocation3 + $0x440] sm:$0xf] %v1817
      %1884 = vst [vmem:[#allocation3 + $0x464] sm:$0xf] %v1820
      %v1885 = vld [vmem:[%s429] sm:$0xf]
      %v1886 = vld [vmem:[%s429 + $0x4] sm:$0xf]
      %v1887 = vld [vmem:[%s429 + $0xc] sm:$0xf]
      %v1888 = vld [vmem:[%s429 + $0x10] sm:$0xf]
      %v1889 = vld [vmem:[%s429 + $0x18] sm:$0xf]
      %v1890 = vld [vmem:[%s429 + $0x1c] sm:$0xf]
      %v1891 = vld [vmem:[%s429 + $0x24] sm:$0xf]
      %v1892 = vld [vmem:[%s429 + $0x28] sm:$0xf]
      %v1893 = vld [vmem:[%s429 + $0x30] sm:$0xf]
      %v1894 = vld [vmem:[%s429 + $0x34] sm:$0xf]
      %v1895 = vld [vmem:[%s429 + $0x3c] sm:$0xf]
      %v1896 = vld [vmem:[%s429 + $0x40] sm:$0xf]
      %v1897 = vld [vmem:[%s429 + $0x48] sm:$0xf]
      %v1898 = vld [vmem:[%s429 + $0x4c] sm:$0xf]
      %v1899 = vld [vmem:[%s429 + $0x54] sm:$0xf]
      %v1900 = vld [vmem:[%s429 + $0x58] sm:$0xf]
      %v1901 = vld [vmem:[%s429 + $0x60] sm:$0xf]
      %v1902 = vld [vmem:[%s429 + $0x64] sm:$0xf]
      %v1903 = vld [vmem:[%s429 + $0x6c] sm:$0xf]
      %v1904 = vld [vmem:[%s429 + $0x70] sm:$0xf]
      %v1905 = vld [vmem:[%s429 + $0x78] sm:$0xf]
      %v1906 = vld [vmem:[%s429 + $0x7c] sm:$0xf]
      %v1907 = vld [vmem:[%s429 + $0x84] sm:$0xf]
      %v1908 = vld [vmem:[%s429 + $0x88] sm:$0xf]
      %v1909 = vld [vmem:[%s429 + $0x90] sm:$0xf]
      %v1910 = vld [vmem:[%s429 + $0x94] sm:$0xf]
      %v1911 = vld [vmem:[%s429 + $0x9c] sm:$0xf]
      %v1912 = vld [vmem:[%s429 + $0xa0] sm:$0xf]
      %v1913 = vld [vmem:[%s429 + $0xa8] sm:$0xf]
      %v1914 = vld [vmem:[%s429 + $0xac] sm:$0xf]
      %v1915 = vld [vmem:[%s429 + $0xb4] sm:$0xf]
      %v1916 = vld [vmem:[%s429 + $0xb8] sm:$0xf]
      %1917 = vst [vmem:[#allocation3 + $0xc] sm:$0xf] %v1885
      %1918 = vst [vmem:[#allocation3 + $0x30] sm:$0xf] %v1886
      %1919 = vst [vmem:[#allocation3 + $0x54] sm:$0xf] %v1887
      %1920 = vst [vmem:[#allocation3 + $0x78] sm:$0xf] %v1888
      %1921 = vst [vmem:[#allocation3 + $0x9c] sm:$0xf] %v1889
      %1922 = vst [vmem:[#allocation3 + $0xc0] sm:$0xf] %v1890
      %1923 = vst [vmem:[#allocation3 + $0xe4] sm:$0xf] %v1891
      %1924 = vst [vmem:[#allocation3 + $0x108] sm:$0xf] %v1892
      %1925 = vst [vmem:[#allocation3 + $0x12c] sm:$0xf] %v1893
      %1926 = vst [vmem:[#allocation3 + $0x150] sm:$0xf] %v1894
      %1927 = vst [vmem:[#allocation3 + $0x174] sm:$0xf] %v1895
      %1928 = vst [vmem:[#allocation3 + $0x198] sm:$0xf] %v1896
      %1929 = vst [vmem:[#allocation3 + $0x1bc] sm:$0xf] %v1897
      %1930 = vst [vmem:[#allocation3 + $0x1e0] sm:$0xf] %v1898
      %1931 = vst [vmem:[#allocation3 + $0x204] sm:$0xf] %v1899
      %1932 = vst [vmem:[#allocation3 + $0x228] sm:$0xf] %v1900
      %1933 = vst [vmem:[#allocation3 + $0x24c] sm:$0xf] %v1901
      %1934 = vst [vmem:[#allocation3 + $0x270] sm:$0xf] %v1902
      %1935 = vst [vmem:[#allocation3 + $0x294] sm:$0xf] %v1903
      %1936 = vst [vmem:[#allocation3 + $0x2b8] sm:$0xf] %v1904
      %1937 = vst [vmem:[#allocation3 + $0x2dc] sm:$0xf] %v1905
      %1938 = vst [vmem:[#allocation3 + $0x300] sm:$0xf] %v1906
      %1939 = vst [vmem:[#allocation3 + $0x324] sm:$0xf] %v1907
      %1940 = vst [vmem:[#allocation3 + $0x348] sm:$0xf] %v1908
      %1941 = vst [vmem:[#allocation3 + $0x36c] sm:$0xf] %v1909
      %1942 = vst [vmem:[#allocation3 + $0x390] sm:$0xf] %v1910
      %1943 = vst [vmem:[#allocation3 + $0x3b4] sm:$0xf] %v1911
      %1944 = vst [vmem:[#allocation3 + $0x3d8] sm:$0xf] %v1912
      %1945 = vst [vmem:[#allocation3 + $0x3fc] sm:$0xf] %v1913
      %1946 = vst [vmem:[#allocation3 + $0x420] sm:$0xf] %v1914
      %1947 = vst [vmem:[#allocation3 + $0x444] sm:$0xf] %v1915
      %1948 = vst [vmem:[#allocation3 + $0x468] sm:$0xf] %v1916
      %v1949 = vld [vmem:[%s429] sm:$0xf]
      %v1950 = vld [vmem:[%s429 + $0x4] sm:$0xf]
      %v1951 = vld [vmem:[%s429 + $0x8] sm:$0x1]
      %v1952 = vld [vmem:[%s429 + $0xc] sm:$0xf]
      %v1953 = vld [vmem:[%s429 + $0x10] sm:$0xf]
      %v1954 = vld [vmem:[%s429 + $0x14] sm:$0x1]
      %v1955 = vld [vmem:[%s429 + $0x18] sm:$0xf]
      %v1956 = vld [vmem:[%s429 + $0x1c] sm:$0xf]
      %v1957 = vld [vmem:[%s429 + $0x20] sm:$0x1]
      %v1958 = vld [vmem:[%s429 + $0x24] sm:$0xf]
      %v1959 = vld [vmem:[%s429 + $0x28] sm:$0xf]
      %v1960 = vld [vmem:[%s429 + $0x2c] sm:$0x1]
      %v1961 = vld [vmem:[%s429 + $0x30] sm:$0xf]
      %v1962 = vld [vmem:[%s429 + $0x34] sm:$0xf]
      %v1963 = vld [vmem:[%s429 + $0x38] sm:$0x1]
      %v1964 = vld [vmem:[%s429 + $0x3c] sm:$0xf]
      %v1965 = vld [vmem:[%s429 + $0x40] sm:$0xf]
      %v1966 = vld [vmem:[%s429 + $0x44] sm:$0x1]
      %v1967 = vld [vmem:[%s429 + $0x48] sm:$0xf]
      %v1968 = vld [vmem:[%s429 + $0x4c] sm:$0xf]
      %v1969 = vld [vmem:[%s429 + $0x50] sm:$0x1]
      %v1970 = vld [vmem:[%s429 + $0x54] sm:$0xf]
      %v1971 = vld [vmem:[%s429 + $0x58] sm:$0xf]
      %v1972 = vld [vmem:[%s429 + $0x5c] sm:$0x1]
      %v1973 = vld [vmem:[%s429 + $0x60] sm:$0xf]
      %v1974 = vld [vmem:[%s429 + $0x64] sm:$0xf]
      %v1975 = vld [vmem:[%s429 + $0x68] sm:$0x1]
      %v1976 = vld [vmem:[%s429 + $0x6c] sm:$0xf]
      %v1977 = vld [vmem:[%s429 + $0x70] sm:$0xf]
      %v1978 = vld [vmem:[%s429 + $0x74] sm:$0x1]
      %v1979 = vld [vmem:[%s429 + $0x78] sm:$0xf]
      %v1980 = vld [vmem:[%s429 + $0x7c] sm:$0xf]
      %v1981 = vld [vmem:[%s429 + $0x80] sm:$0x1]
      %v1982 = vld [vmem:[%s429 + $0x84] sm:$0xf]
      %v1983 = vld [vmem:[%s429 + $0x88] sm:$0xf]
      %v1984 = vld [vmem:[%s429 + $0x8c] sm:$0x1]
      %v1985 = vld [vmem:[%s429 + $0x90] sm:$0xf]
      %v1986 = vld [vmem:[%s429 + $0x94] sm:$0xf]
      %v1987 = vld [vmem:[%s429 + $0x98] sm:$0x1]
      %v1988 = vld [vmem:[%s429 + $0x9c] sm:$0xf]
      %v1989 = vld [vmem:[%s429 + $0xa0] sm:$0xf]
      %v1990 = vld [vmem:[%s429 + $0xa4] sm:$0x1]
      %v1991 = vld [vmem:[%s429 + $0xa8] sm:$0xf]
      %v1992 = vld [vmem:[%s429 + $0xac] sm:$0xf]
      %v1993 = vld [vmem:[%s429 + $0xb0] sm:$0x1]
      %v1994 = vld [vmem:[%s429 + $0xb4] sm:$0xf]
      %v1995 = vld [vmem:[%s429 + $0xb8] sm:$0xf]
      %v1996 = vld [vmem:[%s429 + $0xbc] sm:$0x1]
      %v1998 = vshrl.u32 %v1949, 16
      %v2000 = vrot.slane %v1998, 4
      %v2001 = vshll.u32 %v1949, 16
      %v2003 = vrot.slane %v2001, 5
      %v2004 = vor.u32 %v2000, %v2003
      %v2005 = vrot.slane %v2004, 4
      %v2007 = vshll.u32 %v1950, 16
      %v2009 = vrot.slane %v2007, 5
      %v2010 = vsel %vm1161, %v2005, %v2009
      %v2011 = vshrl.u32 %v1950, 16
      %v2013 = vrot.slane %v2011, 4
      %v2014 = vor.u32 %v2013, %v2009
      %v2015 = vrot.slane %v2014, 4
      %v2017 = vshll.u32 %v1951, 16
      %v2019 = vrot.slane %v2017, 5
      %v2020 = vsel %vm1161, %v2015, %v2019
      %v2022 = vshrl.u32 %v1952, 16
      %v2024 = vrot.slane %v2022, 4
      %v2025 = vshll.u32 %v1952, 16
      %v2027 = vrot.slane %v2025, 5
      %v2028 = vor.u32 %v2024, %v2027
      %v2029 = vrot.slane %v2028, 4
      %v2031 = vshll.u32 %v1953, 16
      %v2033 = vrot.slane %v2031, 5
      %v2034 = vsel %vm1161, %v2029, %v2033
      %v2035 = vshrl.u32 %v1953, 16
      %v2037 = vrot.slane %v2035, 4
      %v2038 = vor.u32 %v2037, %v2033
      %v2039 = vrot.slane %v2038, 4
      %v2041 = vshll.u32 %v1954, 16
      %v2043 = vrot.slane %v2041, 5
      %v2044 = vsel %vm1161, %v2039, %v2043
      %v2046 = vshrl.u32 %v1955, 16
      %v2048 = vrot.slane %v2046, 4
      %v2049 = vshll.u32 %v1955, 16
      %v2051 = vrot.slane %v2049, 5
      %v2052 = vor.u32 %v2048, %v2051
      %v2053 = vrot.slane %v2052, 4
      %v2055 = vshll.u32 %v1956, 16
      %v2057 = vrot.slane %v2055, 5
      %v2058 = vsel %vm1161, %v2053, %v2057
      %v2059 = vshrl.u32 %v1956, 16
      %v2061 = vrot.slane %v2059, 4
      %v2062 = vor.u32 %v2061, %v2057
      %v2063 = vrot.slane %v2062, 4
      %v2065 = vshll.u32 %v1957, 16
      %v2067 = vrot.slane %v2065, 5
      %v2068 = vsel %vm1161, %v2063, %v2067
      %v2070 = vshrl.u32 %v1958, 16
      %v2072 = vrot.slane %v2070, 4
      %v2073 = vshll.u32 %v1958, 16
      %v2075 = vrot.slane %v2073, 5
      %v2076 = vor.u32 %v2072, %v2075
      %v2077 = vrot.slane %v2076, 4
      %v2079 = vshll.u32 %v1959, 16
      %v2081 = vrot.slane %v2079, 5
      %v2082 = vsel %vm1161, %v2077, %v2081
      %v2083 = vshrl.u32 %v1959, 16
      %v2085 = vrot.slane %v2083, 4
      %v2086 = vor.u32 %v2085, %v2081
      %v2087 = vrot.slane %v2086, 4
      %v2089 = vshll.u32 %v1960, 16
      %v2091 = vrot.slane %v2089, 5
      %v2092 = vsel %vm1161, %v2087, %v2091
      %v2094 = vshrl.u32 %v1961, 16
      %v2096 = vrot.slane %v2094, 4
      %v2097 = vshll.u32 %v1961, 16
      %v2099 = vrot.slane %v2097, 5
      %v2100 = vor.u32 %v2096, %v2099
      %v2101 = vrot.slane %v2100, 4
      %v2103 = vshll.u32 %v1962, 16
      %v2105 = vrot.slane %v2103, 5
      %v2106 = vsel %vm1161, %v2101, %v2105
      %v2107 = vshrl.u32 %v1962, 16
      %v2109 = vrot.slane %v2107, 4
      %v2110 = vor.u32 %v2109, %v2105
      %v2111 = vrot.slane %v2110, 4
      %v2113 = vshll.u32 %v1963, 16
      %v2115 = vrot.slane %v2113, 5
      %v2116 = vsel %vm1161, %v2111, %v2115
      %v2118 = vshrl.u32 %v1964, 16
      %v2120 = vrot.slane %v2118, 4
      %v2121 = vshll.u32 %v1964, 16
      %v2123 = vrot.slane %v2121, 5
      %v2124 = vor.u32 %v2120, %v2123
      %v2125 = vrot.slane %v2124, 4
      %v2127 = vshll.u32 %v1965, 16
      %v2129 = vrot.slane %v2127, 5
      %v2130 = vsel %vm1161, %v2125, %v2129
      %v2131 = vshrl.u32 %v1965, 16
      %v2133 = vrot.slane %v2131, 4
      %v2134 = vor.u32 %v2133, %v2129
      %v2135 = vrot.slane %v2134, 4
      %v2137 = vshll.u32 %v1966, 16
      %v2139 = vrot.slane %v2137, 5
      %v2140 = vsel %vm1161, %v2135, %v2139
      %v2142 = vshrl.u32 %v1967, 16
      %v2144 = vrot.slane %v2142, 4
      %v2145 = vshll.u32 %v1967, 16
      %v2147 = vrot.slane %v2145, 5
      %v2148 = vor.u32 %v2144, %v2147
      %v2149 = vrot.slane %v2148, 4
      %v2151 = vshll.u32 %v1968, 16
      %v2153 = vrot.slane %v2151, 5
      %v2154 = vsel %vm1161, %v2149, %v2153
      %v2155 = vshrl.u32 %v1968, 16
      %v2157 = vrot.slane %v2155, 4
      %v2158 = vor.u32 %v2157, %v2153
      %v2159 = vrot.slane %v2158, 4
      %v2161 = vshll.u32 %v1969, 16
      %v2163 = vrot.slane %v2161, 5
      %v2164 = vsel %vm1161, %v2159, %v2163
      %v2166 = vshrl.u32 %v1970, 16
      %v2168 = vrot.slane %v2166, 4
      %v2169 = vshll.u32 %v1970, 16
      %v2171 = vrot.slane %v2169, 5
      %v2172 = vor.u32 %v2168, %v2171
      %v2173 = vrot.slane %v2172, 4
      %v2175 = vshll.u32 %v1971, 16
      %v2177 = vrot.slane %v2175, 5
      %v2178 = vsel %vm1161, %v2173, %v2177
      %v2179 = vshrl.u32 %v1971, 16
      %v2181 = vrot.slane %v2179, 4
      %v2182 = vor.u32 %v2181, %v2177
      %v2183 = vrot.slane %v2182, 4
      %v2185 = vshll.u32 %v1972, 16
      %v2187 = vrot.slane %v2185, 5
      %v2188 = vsel %vm1161, %v2183, %v2187
      %v2190 = vshrl.u32 %v1973, 16
      %v2192 = vrot.slane %v2190, 4
      %v2193 = vshll.u32 %v1973, 16
      %v2195 = vrot.slane %v2193, 5
      %v2196 = vor.u32 %v2192, %v2195
      %v2197 = vrot.slane %v2196, 4
      %v2199 = vshll.u32 %v1974, 16
      %v2201 = vrot.slane %v2199, 5
      %v2202 = vsel %vm1161, %v2197, %v2201
      %v2203 = vshrl.u32 %v1974, 16
      %v2205 = vrot.slane %v2203, 4
      %v2206 = vor.u32 %v2205, %v2201
      %v2207 = vrot.slane %v2206, 4
      %v2209 = vshll.u32 %v1975, 16
      %v2211 = vrot.slane %v2209, 5
      %v2212 = vsel %vm1161, %v2207, %v2211
      %v2214 = vshrl.u32 %v1976, 16
      %v2216 = vrot.slane %v2214, 4
      %v2217 = vshll.u32 %v1976, 16
      %v2219 = vrot.slane %v2217, 5
      %v2220 = vor.u32 %v2216, %v2219
      %v2221 = vrot.slane %v2220, 4
      %v2223 = vshll.u32 %v1977, 16
      %v2225 = vrot.slane %v2223, 5
      %v2226 = vsel %vm1161, %v2221, %v2225
      %v2227 = vshrl.u32 %v1977, 16
      %v2229 = vrot.slane %v2227, 4
      %v2230 = vor.u32 %v2229, %v2225
      %v2231 = vrot.slane %v2230, 4
      %v2233 = vshll.u32 %v1978, 16
      %v2235 = vrot.slane %v2233, 5
      %v2236 = vsel %vm1161, %v2231, %v2235
      %v2238 = vshrl.u32 %v1979, 16
      %v2240 = vrot.slane %v2238, 4
      %v2241 = vshll.u32 %v1979, 16
      %v2243 = vrot.slane %v2241, 5
      %v2244 = vor.u32 %v2240, %v2243
      %v2245 = vrot.slane %v2244, 4
      %v2247 = vshll.u32 %v1980, 16
      %v2249 = vrot.slane %v2247, 5
      %v2250 = vsel %vm1161, %v2245, %v2249
      %v2251 = vshrl.u32 %v1980, 16
      %v2253 = vrot.slane %v2251, 4
      %v2254 = vor.u32 %v2253, %v2249
      %v2255 = vrot.slane %v2254, 4
      %v2257 = vshll.u32 %v1981, 16
      %v2259 = vrot.slane %v2257, 5
      %v2260 = vsel %vm1161, %v2255, %v2259
      %v2262 = vshrl.u32 %v1982, 16
      %v2264 = vrot.slane %v2262, 4
      %v2265 = vshll.u32 %v1982, 16
      %v2267 = vrot.slane %v2265, 5
      %v2268 = vor.u32 %v2264, %v2267
      %v2269 = vrot.slane %v2268, 4
      %v2271 = vshll.u32 %v1983, 16
      %v2273 = vrot.slane %v2271, 5
      %v2274 = vsel %vm1161, %v2269, %v2273
      %v2275 = vshrl.u32 %v1983, 16
      %v2277 = vrot.slane %v2275, 4
      %v2278 = vor.u32 %v2277, %v2273
      %v2279 = vrot.slane %v2278, 4
      %v2281 = vshll.u32 %v1984, 16
      %v2283 = vrot.slane %v2281, 5
      %v2284 = vsel %vm1161, %v2279, %v2283
      %v2286 = vshrl.u32 %v1985, 16
      %v2288 = vrot.slane %v2286, 4
      %v2289 = vshll.u32 %v1985, 16
      %v2291 = vrot.slane %v2289, 5
      %v2292 = vor.u32 %v2288, %v2291
      %v2293 = vrot.slane %v2292, 4
      %v2295 = vshll.u32 %v1986, 16
      %v2297 = vrot.slane %v2295, 5
      %v2298 = vsel %vm1161, %v2293, %v2297
      %v2299 = vshrl.u32 %v1986, 16
      %v2301 = vrot.slane %v2299, 4
      %v2302 = vor.u32 %v2301, %v2297
      %v2303 = vrot.slane %v2302, 4
      %v2305 = vshll.u32 %v1987, 16
      %v2307 = vrot.slane %v2305, 5
      %v2308 = vsel %vm1161, %v2303, %v2307
      %v2310 = vshrl.u32 %v1988, 16
      %v2312 = vrot.slane %v2310, 4
      %v2313 = vshll.u32 %v1988, 16
      %v2315 = vrot.slane %v2313, 5
      %v2316 = vor.u32 %v2312, %v2315
      %v2317 = vrot.slane %v2316, 4
      %v2319 = vshll.u32 %v1989, 16
      %v2321 = vrot.slane %v2319, 5
      %v2322 = vsel %vm1161, %v2317, %v2321
      %v2323 = vshrl.u32 %v1989, 16
      %v2325 = vrot.slane %v2323, 4
      %v2326 = vor.u32 %v2325, %v2321
      %v2327 = vrot.slane %v2326, 4
      %v2329 = vshll.u32 %v1990, 16
      %v2331 = vrot.slane %v2329, 5
      %v2332 = vsel %vm1161, %v2327, %v2331
      %v2334 = vshrl.u32 %v1991, 16
      %v2336 = vrot.slane %v2334, 4
      %v2337 = vshll.u32 %v1991, 16
      %v2339 = vrot.slane %v2337, 5
      %v2340 = vor.u32 %v2336, %v2339
      %v2341 = vrot.slane %v2340, 4
      %v2343 = vshll.u32 %v1992, 16
      %v2345 = vrot.slane %v2343, 5
      %v2346 = vsel %vm1161, %v2341, %v2345
      %v2347 = vshrl.u32 %v1992, 16
      %v2349 = vrot.slane %v2347, 4
      %v2350 = vor.u32 %v2349, %v2345
      %v2351 = vrot.slane %v2350, 4
      %v2353 = vshll.u32 %v1993, 16
      %v2355 = vrot.slane %v2353, 5
      %v2356 = vsel %vm1161, %v2351, %v2355
      %v2358 = vshrl.u32 %v1994, 16
      %v2360 = vrot.slane %v2358, 4
      %v2361 = vshll.u32 %v1994, 16
      %v2363 = vrot.slane %v2361, 5
      %v2364 = vor.u32 %v2360, %v2363
      %v2365 = vrot.slane %v2364, 4
      %v2367 = vshll.u32 %v1995, 16
      %v2369 = vrot.slane %v2367, 5
      %v2370 = vsel %vm1161, %v2365, %v2369
      %v2371 = vshrl.u32 %v1995, 16
      %v2373 = vrot.slane %v2371, 4
      %v2374 = vor.u32 %v2373, %v2369
      %v2375 = vrot.slane %v2374, 4
      %v2377 = vshll.u32 %v1996, 16
      %v2379 = vrot.slane %v2377, 5
      %v2380 = vsel %vm1161, %v2375, %v2379
      %2413 = vst [vmem:[#allocation3 + $0x10] sm:$0xf] %v2010
      %2414 = vst [vmem:[#allocation3 + $0x34] sm:$0xf] %v2020
      %2415 = vst [vmem:[#allocation3 + $0x58] sm:$0xf] %v2034
      %2416 = vst [vmem:[#allocation3 + $0x7c] sm:$0xf] %v2044
      %2417 = vst [vmem:[#allocation3 + $0xa0] sm:$0xf] %v2058
      %2418 = vst [vmem:[#allocation3 + $0xc4] sm:$0xf] %v2068
      %2419 = vst [vmem:[#allocation3 + $0xe8] sm:$0xf] %v2082
      %2420 = vst [vmem:[#allocation3 + $0x10c] sm:$0xf] %v2092
      %2421 = vst [vmem:[#allocation3 + $0x130] sm:$0xf] %v2106
      %2422 = vst [vmem:[#allocation3 + $0x154] sm:$0xf] %v2116
      %2423 = vst [vmem:[#allocation3 + $0x178] sm:$0xf] %v2130
      %2424 = vst [vmem:[#allocation3 + $0x19c] sm:$0xf] %v2140
      %2425 = vst [vmem:[#allocation3 + $0x1c0] sm:$0xf] %v2154
      %2426 = vst [vmem:[#allocation3 + $0x1e4] sm:$0xf] %v2164
      %2427 = vst [vmem:[#allocation3 + $0x208] sm:$0xf] %v2178
      %2428 = vst [vmem:[#allocation3 + $0x22c] sm:$0xf] %v2188
      %2429 = vst [vmem:[#allocation3 + $0x250] sm:$0xf] %v2202
      %2430 = vst [vmem:[#allocation3 + $0x274] sm:$0xf] %v2212
      %2431 = vst [vmem:[#allocation3 + $0x298] sm:$0xf] %v2226
      %2432 = vst [vmem:[#allocation3 + $0x2bc] sm:$0xf] %v2236
      %2433 = vst [vmem:[#allocation3 + $0x2e0] sm:$0xf] %v2250
      %2434 = vst [vmem:[#allocation3 + $0x304] sm:$0xf] %v2260
      %2435 = vst [vmem:[#allocation3 + $0x328] sm:$0xf] %v2274
      %2436 = vst [vmem:[#allocation3 + $0x34c] sm:$0xf] %v2284
      %2437 = vst [vmem:[#allocation3 + $0x370] sm:$0xf] %v2298
      %2438 = vst [vmem:[#allocation3 + $0x394] sm:$0xf] %v2308
      %2439 = vst [vmem:[#allocation3 + $0x3b8] sm:$0xf] %v2322
      %2440 = vst [vmem:[#allocation3 + $0x3dc] sm:$0xf] %v2332
      %2441 = vst [vmem:[#allocation3 + $0x400] sm:$0xf] %v2346
      %2442 = vst [vmem:[#allocation3 + $0x424] sm:$0xf] %v2356
      %2443 = vst [vmem:[#allocation3 + $0x448] sm:$0xf] %v2370
      %2444 = vst [vmem:[#allocation3 + $0x46c] sm:$0xf] %v2380
      %v2445 = vld [vmem:[%s429] sm:$0xe]
      %v2446 = vld [vmem:[%s429 + $0x4] sm:$0xf]
      %v2447 = vld [vmem:[%s429 + $0x8] sm:$0x1]
      %v2448 = vld [vmem:[%s429 + $0xc] sm:$0xe]
      %v2449 = vld [vmem:[%s429 + $0x10] sm:$0xf]
      %v2450 = vld [vmem:[%s429 + $0x14] sm:$0x1]
      %v2451 = vld [vmem:[%s429 + $0x18] sm:$0xe]
      %v2452 = vld [vmem:[%s429 + $0x1c] sm:$0xf]
      %v2453 = vld [vmem:[%s429 + $0x20] sm:$0x1]
      %v2454 = vld [vmem:[%s429 + $0x24] sm:$0xe]
      %v2455 = vld [vmem:[%s429 + $0x28] sm:$0xf]
      %v2456 = vld [vmem:[%s429 + $0x2c] sm:$0x1]
      %v2457 = vld [vmem:[%s429 + $0x30] sm:$0xe]
      %v2458 = vld [vmem:[%s429 + $0x34] sm:$0xf]
      %v2459 = vld [vmem:[%s429 + $0x38] sm:$0x1]
      %v2460 = vld [vmem:[%s429 + $0x3c] sm:$0xe]
      %v2461 = vld [vmem:[%s429 + $0x40] sm:$0xf]
      %v2462 = vld [vmem:[%s429 + $0x44] sm:$0x1]
      %v2463 = vld [vmem:[%s429 + $0x48] sm:$0xe]
      %v2464 = vld [vmem:[%s429 + $0x4c] sm:$0xf]
      %v2465 = vld [vmem:[%s429 + $0x50] sm:$0x1]
      %v2466 = vld [vmem:[%s429 + $0x54] sm:$0xe]
      %v2467 = vld [vmem:[%s429 + $0x58] sm:$0xf]
      %v2468 = vld [vmem:[%s429 + $0x5c] sm:$0x1]
      %v2469 = vld [vmem:[%s429 + $0x60] sm:$0xe]
      %v2470 = vld [vmem:[%s429 + $0x64] sm:$0xf]
      %v2471 = vld [vmem:[%s429 + $0x68] sm:$0x1]
      %v2472 = vld [vmem:[%s429 + $0x6c] sm:$0xe]
      %v2473 = vld [vmem:[%s429 + $0x70] sm:$0xf]
      %v2474 = vld [vmem:[%s429 + $0x74] sm:$0x1]
      %v2475 = vld [vmem:[%s429 + $0x78] sm:$0xe]
      %v2476 = vld [vmem:[%s429 + $0x7c] sm:$0xf]
      %v2477 = vld [vmem:[%s429 + $0x80] sm:$0x1]
      %v2478 = vld [vmem:[%s429 + $0x84] sm:$0xe]
      %v2479 = vld [vmem:[%s429 + $0x88] sm:$0xf]
      %v2480 = vld [vmem:[%s429 + $0x8c] sm:$0x1]
      %v2481 = vld [vmem:[%s429 + $0x90] sm:$0xe]
      %v2482 = vld [vmem:[%s429 + $0x94] sm:$0xf]
      %v2483 = vld [vmem:[%s429 + $0x98] sm:$0x1]
      %v2484 = vld [vmem:[%s429 + $0x9c] sm:$0xe]
      %v2485 = vld [vmem:[%s429 + $0xa0] sm:$0xf]
      %v2486 = vld [vmem:[%s429 + $0xa4] sm:$0x1]
      %v2487 = vld [vmem:[%s429 + $0xa8] sm:$0xe]
      %v2488 = vld [vmem:[%s429 + $0xac] sm:$0xf]
      %v2489 = vld [vmem:[%s429 + $0xb0] sm:$0x1]
      %v2490 = vld [vmem:[%s429 + $0xb4] sm:$0xe]
      %v2491 = vld [vmem:[%s429 + $0xb8] sm:$0xf]
      %v2492 = vld [vmem:[%s429 + $0xbc] sm:$0x1]
      %v2541 = vrot.slane %v2445, 5
      %v2542 = vrot.slane %v2541, 4
      %v2543 = vrot.slane %v2446, 5
      %v2544 = vsel %vm1708, %v2542, %v2543
      %v2545 = vrot.slane %v2543, 4
      %v2546 = vrot.slane %v2447, 5
      %v2547 = vsel %vm1708, %v2545, %v2546
      %v2548 = vrot.slane %v2448, 5
      %v2549 = vrot.slane %v2548, 4
      %v2550 = vrot.slane %v2449, 5
      %v2551 = vsel %vm1708, %v2549, %v2550
      %v2552 = vrot.slane %v2550, 4
      %v2553 = vrot.slane %v2450, 5
      %v2554 = vsel %vm1708, %v2552, %v2553
      %v2555 = vrot.slane %v2451, 5
      %v2556 = vrot.slane %v2555, 4
      %v2557 = vrot.slane %v2452, 5
      %v2558 = vsel %vm1708, %v2556, %v2557
      %v2559 = vrot.slane %v2557, 4
      %v2560 = vrot.slane %v2453, 5
      %v2561 = vsel %vm1708, %v2559, %v2560
      %v2562 = vrot.slane %v2454, 5
      %v2563 = vrot.slane %v2562, 4
      %v2564 = vrot.slane %v2455, 5
      %v2565 = vsel %vm1708, %v2563, %v2564
      %v2566 = vrot.slane %v2564, 4
      %v2567 = vrot.slane %v2456, 5
      %v2568 = vsel %vm1708, %v2566, %v2567
      %v2569 = vrot.slane %v2457, 5
      %v2570 = vrot.slane %v2569, 4
      %v2571 = vrot.slane %v2458, 5
      %v2572 = vsel %vm1708, %v2570, %v2571
      %v2573 = vrot.slane %v2571, 4
      %v2574 = vrot.slane %v2459, 5
      %v2575 = vsel %vm1708, %v2573, %v2574
      %v2576 = vrot.slane %v2460, 5
      %v2577 = vrot.slane %v2576, 4
      %v2578 = vrot.slane %v2461, 5
      %v2579 = vsel %vm1708, %v2577, %v2578
      %v2580 = vrot.slane %v2578, 4
      %v2581 = vrot.slane %v2462, 5
      %v2582 = vsel %vm1708, %v2580, %v2581
      %v2583 = vrot.slane %v2463, 5
      %v2584 = vrot.slane %v2583, 4
      %v2585 = vrot.slane %v2464, 5
      %v2586 = vsel %vm1708, %v2584, %v2585
      %v2587 = vrot.slane %v2585, 4
      %v2588 = vrot.slane %v2465, 5
      %v2589 = vsel %vm1708, %v2587, %v2588
      %v2590 = vrot.slane %v2466, 5
      %v2591 = vrot.slane %v2590, 4
      %v2592 = vrot.slane %v2467, 5
      %v2593 = vsel %vm1708, %v2591, %v2592
      %v2594 = vrot.slane %v2592, 4
      %v2595 = vrot.slane %v2468, 5
      %v2596 = vsel %vm1708, %v2594, %v2595
      %v2597 = vrot.slane %v2469, 5
      %v2598 = vrot.slane %v2597, 4
      %v2599 = vrot.slane %v2470, 5
      %v2600 = vsel %vm1708, %v2598, %v2599
      %v2601 = vrot.slane %v2599, 4
      %v2602 = vrot.slane %v2471, 5
      %v2603 = vsel %vm1708, %v2601, %v2602
      %v2604 = vrot.slane %v2472, 5
      %v2605 = vrot.slane %v2604, 4
      %v2606 = vrot.slane %v2473, 5
      %v2607 = vsel %vm1708, %v2605, %v2606
      %v2608 = vrot.slane %v2606, 4
      %v2609 = vrot.slane %v2474, 5
      %v2610 = vsel %vm1708, %v2608, %v2609
      %v2611 = vrot.slane %v2475, 5
      %v2612 = vrot.slane %v2611, 4
      %v2613 = vrot.slane %v2476, 5
      %v2614 = vsel %vm1708, %v2612, %v2613
      %v2615 = vrot.slane %v2613, 4
      %v2616 = vrot.slane %v2477, 5
      %v2617 = vsel %vm1708, %v2615, %v2616
      %v2618 = vrot.slane %v2478, 5
      %v2619 = vrot.slane %v2618, 4
      %v2620 = vrot.slane %v2479, 5
      %v2621 = vsel %vm1708, %v2619, %v2620
      %v2622 = vrot.slane %v2620, 4
      %v2623 = vrot.slane %v2480, 5
      %v2624 = vsel %vm1708, %v2622, %v2623
      %v2625 = vrot.slane %v2481, 5
      %v2626 = vrot.slane %v2625, 4
      %v2627 = vrot.slane %v2482, 5
      %v2628 = vsel %vm1708, %v2626, %v2627
      %v2629 = vrot.slane %v2627, 4
      %v2630 = vrot.slane %v2483, 5
      %v2631 = vsel %vm1708, %v2629, %v2630
      %v2632 = vrot.slane %v2484, 5
      %v2633 = vrot.slane %v2632, 4
      %v2634 = vrot.slane %v2485, 5
      %v2635 = vsel %vm1708, %v2633, %v2634
      %v2636 = vrot.slane %v2634, 4
      %v2637 = vrot.slane %v2486, 5
      %v2638 = vsel %vm1708, %v2636, %v2637
      %v2639 = vrot.slane %v2487, 5
      %v2640 = vrot.slane %v2639, 4
      %v2641 = vrot.slane %v2488, 5
      %v2642 = vsel %vm1708, %v2640, %v2641
      %v2643 = vrot.slane %v2641, 4
      %v2644 = vrot.slane %v2489, 5
      %v2645 = vsel %vm1708, %v2643, %v2644
      %v2646 = vrot.slane %v2490, 5
      %v2647 = vrot.slane %v2646, 4
      %v2648 = vrot.slane %v2491, 5
      %v2649 = vsel %vm1708, %v2647, %v2648
      %v2650 = vrot.slane %v2648, 4
      %v2651 = vrot.slane %v2492, 5
      %v2652 = vsel %vm1708, %v2650, %v2651
      %2685 = vst [vmem:[#allocation3 + $0x14] sm:$0xf] %v2544
      %2686 = vst [vmem:[#allocation3 + $0x38] sm:$0xf] %v2547
      %2687 = vst [vmem:[#allocation3 + $0x5c] sm:$0xf] %v2551
      %2688 = vst [vmem:[#allocation3 + $0x80] sm:$0xf] %v2554
      %2689 = vst [vmem:[#allocation3 + $0xa4] sm:$0xf] %v2558
      %2690 = vst [vmem:[#allocation3 + $0xc8] sm:$0xf] %v2561
      %2691 = vst [vmem:[#allocation3 + $0xec] sm:$0xf] %v2565
      %2692 = vst [vmem:[#allocation3 + $0x110] sm:$0xf] %v2568
      %2693 = vst [vmem:[#allocation3 + $0x134] sm:$0xf] %v2572
      %2694 = vst [vmem:[#allocation3 + $0x158] sm:$0xf] %v2575
      %2695 = vst [vmem:[#allocation3 + $0x17c] sm:$0xf] %v2579
      %2696 = vst [vmem:[#allocation3 + $0x1a0] sm:$0xf] %v2582
      %2697 = vst [vmem:[#allocation3 + $0x1c4] sm:$0xf] %v2586
      %2698 = vst [vmem:[#allocation3 + $0x1e8] sm:$0xf] %v2589
      %2699 = vst [vmem:[#allocation3 + $0x20c] sm:$0xf] %v2593
      %2700 = vst [vmem:[#allocation3 + $0x230] sm:$0xf] %v2596
      %2701 = vst [vmem:[#allocation3 + $0x254] sm:$0xf] %v2600
      %2702 = vst [vmem:[#allocation3 + $0x278] sm:$0xf] %v2603
      %2703 = vst [vmem:[#allocation3 + $0x29c] sm:$0xf] %v2607
      %2704 = vst [vmem:[#allocation3 + $0x2c0] sm:$0xf] %v2610
      %2705 = vst [vmem:[#allocation3 + $0x2e4] sm:$0xf] %v2614
      %2706 = vst [vmem:[#allocation3 + $0x308] sm:$0xf] %v2617
      %2707 = vst [vmem:[#allocation3 + $0x32c] sm:$0xf] %v2621
      %2708 = vst [vmem:[#allocation3 + $0x350] sm:$0xf] %v2624
      %2709 = vst [vmem:[#allocation3 + $0x374] sm:$0xf] %v2628
      %2710 = vst [vmem:[#allocation3 + $0x398] sm:$0xf] %v2631
      %2711 = vst [vmem:[#allocation3 + $0x3bc] sm:$0xf] %v2635
      %2712 = vst [vmem:[#allocation3 + $0x3e0] sm:$0xf] %v2638
      %2713 = vst [vmem:[#allocation3 + $0x404] sm:$0xf] %v2642
      %2714 = vst [vmem:[#allocation3 + $0x428] sm:$0xf] %v2645
      %2715 = vst [vmem:[#allocation3 + $0x44c] sm:$0xf] %v2649
      %2716 = vst [vmem:[#allocation3 + $0x470] sm:$0xf] %v2652
      %s2717 = scalar_lea.vmem [#allocation2], 24
      %v2718 = vld [vmem:[%s2717] sm:$0xf]
      %v2719 = vld [vmem:[%s2717 + $0x4] sm:$0xf]
      %v2720 = vld [vmem:[%s2717 + $0xc] sm:$0xf]
      %v2721 = vld [vmem:[%s2717 + $0x10] sm:$0xf]
      %v2722 = vld [vmem:[%s2717 + $0x18] sm:$0xf]
      %v2723 = vld [vmem:[%s2717 + $0x1c] sm:$0xf]
      %v2724 = vld [vmem:[%s2717 + $0x24] sm:$0xf]
      %v2725 = vld [vmem:[%s2717 + $0x28] sm:$0xf]
      %v2726 = vld [vmem:[%s2717 + $0x30] sm:$0xf]
      %v2727 = vld [vmem:[%s2717 + $0x34] sm:$0xf]
      %v2728 = vld [vmem:[%s2717 + $0x3c] sm:$0xf]
      %v2729 = vld [vmem:[%s2717 + $0x40] sm:$0xf]
      %v2730 = vld [vmem:[%s2717 + $0x48] sm:$0xf]
      %v2731 = vld [vmem:[%s2717 + $0x4c] sm:$0xf]
      %v2732 = vld [vmem:[%s2717 + $0x54] sm:$0xf]
      %v2733 = vld [vmem:[%s2717 + $0x58] sm:$0xf]
      %v2734 = vld [vmem:[%s2717 + $0x60] sm:$0xf]
      %v2735 = vld [vmem:[%s2717 + $0x64] sm:$0xf]
      %v2736 = vld [vmem:[%s2717 + $0x6c] sm:$0xf]
      %v2737 = vld [vmem:[%s2717 + $0x70] sm:$0xf]
      %v2738 = vld [vmem:[%s2717 + $0x78] sm:$0xf]
      %v2739 = vld [vmem:[%s2717 + $0x7c] sm:$0xf]
      %v2740 = vld [vmem:[%s2717 + $0x84] sm:$0xf]
      %v2741 = vld [vmem:[%s2717 + $0x88] sm:$0xf]
      %v2742 = vld [vmem:[%s2717 + $0x90] sm:$0xf]
      %v2743 = vld [vmem:[%s2717 + $0x94] sm:$0xf]
      %v2744 = vld [vmem:[%s2717 + $0x9c] sm:$0xf]
      %v2745 = vld [vmem:[%s2717 + $0xa0] sm:$0xf]
      %v2746 = vld [vmem:[%s2717 + $0xa8] sm:$0xf]
      %v2747 = vld [vmem:[%s2717 + $0xac] sm:$0xf]
      %v2748 = vld [vmem:[%s2717 + $0xb4] sm:$0xf]
      %v2749 = vld [vmem:[%s2717 + $0xb8] sm:$0xf]
      %2750 = vst [vmem:[#allocation3 + $0x18] sm:$0xf] %v2718
      %2751 = vst [vmem:[#allocation3 + $0x3c] sm:$0xf] %v2719
      %2752 = vst [vmem:[#allocation3 + $0x60] sm:$0xf] %v2720
      %2753 = vst [vmem:[#allocation3 + $0x84] sm:$0xf] %v2721
      %2754 = vst [vmem:[#allocation3 + $0xa8] sm:$0xf] %v2722
      %2755 = vst [vmem:[#allocation3 + $0xcc] sm:$0xf] %v2723
      %2756 = vst [vmem:[#allocation3 + $0xf0] sm:$0xf] %v2724
      %2757 = vst [vmem:[#allocation3 + $0x114] sm:$0xf] %v2725
      %2758 = vst [vmem:[#allocation3 + $0x138] sm:$0xf] %v2726
      %2759 = vst [vmem:[#allocation3 + $0x15c] sm:$0xf] %v2727
      %2760 = vst [vmem:[#allocation3 + $0x180] sm:$0xf] %v2728
      %2761 = vst [vmem:[#allocation3 + $0x1a4] sm:$0xf] %v2729
      %2762 = vst [vmem:[#allocation3 + $0x1c8] sm:$0xf] %v2730
      %2763 = vst [vmem:[#allocation3 + $0x1ec] sm:$0xf] %v2731
      %2764 = vst [vmem:[#allocation3 + $0x210] sm:$0xf] %v2732
      %2765 = vst [vmem:[#allocation3 + $0x234] sm:$0xf] %v2733
      %2766 = vst [vmem:[#allocation3 + $0x258] sm:$0xf] %v2734
      %2767 = vst [vmem:[#allocation3 + $0x27c] sm:$0xf] %v2735
      %2768 = vst [vmem:[#allocation3 + $0x2a0] sm:$0xf] %v2736
      %2769 = vst [vmem:[#allocation3 + $0x2c4] sm:$0xf] %v2737
      %2770 = vst [vmem:[#allocation3 + $0x2e8] sm:$0xf] %v2738
      %2771 = vst [vmem:[#allocation3 + $0x30c] sm:$0xf] %v2739
      %2772 = vst [vmem:[#allocation3 + $0x330] sm:$0xf] %v2740
      %2773 = vst [vmem:[#allocation3 + $0x354] sm:$0xf] %v2741
      %2774 = vst [vmem:[#allocation3 + $0x378] sm:$0xf] %v2742
      %2775 = vst [vmem:[#allocation3 + $0x39c] sm:$0xf] %v2743
      %2776 = vst [vmem:[#allocation3 + $0x3c0] sm:$0xf] %v2744
      %2777 = vst [vmem:[#allocation3 + $0x3e4] sm:$0xf] %v2745
      %2778 = vst [vmem:[#allocation3 + $0x408] sm:$0xf] %v2746
      %2779 = vst [vmem:[#allocation3 + $0x42c] sm:$0xf] %v2747
      %2780 = vst [vmem:[#allocation3 + $0x450] sm:$0xf] %v2748
      %2781 = vst [vmem:[#allocation3 + $0x474] sm:$0xf] %v2749
      %v2782 = vld [vmem:[%s2717] sm:$0xf]
      %v2783 = vld [vmem:[%s2717 + $0x4] sm:$0xf]
      %v2784 = vld [vmem:[%s2717 + $0x8] sm:$0x1]
      %v2785 = vld [vmem:[%s2717 + $0xc] sm:$0xf]
      %v2786 = vld [vmem:[%s2717 + $0x10] sm:$0xf]
      %v2787 = vld [vmem:[%s2717 + $0x14] sm:$0x1]
      %v2788 = vld [vmem:[%s2717 + $0x18] sm:$0xf]
      %v2789 = vld [vmem:[%s2717 + $0x1c] sm:$0xf]
      %v2790 = vld [vmem:[%s2717 + $0x20] sm:$0x1]
      %v2791 = vld [vmem:[%s2717 + $0x24] sm:$0xf]
      %v2792 = vld [vmem:[%s2717 + $0x28] sm:$0xf]
      %v2793 = vld [vmem:[%s2717 + $0x2c] sm:$0x1]
      %v2794 = vld [vmem:[%s2717 + $0x30] sm:$0xf]
      %v2795 = vld [vmem:[%s2717 + $0x34] sm:$0xf]
      %v2796 = vld [vmem:[%s2717 + $0x38] sm:$0x1]
      %v2797 = vld [vmem:[%s2717 + $0x3c] sm:$0xf]
      %v2798 = vld [vmem:[%s2717 + $0x40] sm:$0xf]
      %v2799 = vld [vmem:[%s2717 + $0x44] sm:$0x1]
      %v2800 = vld [vmem:[%s2717 + $0x48] sm:$0xf]
      %v2801 = vld [vmem:[%s2717 + $0x4c] sm:$0xf]
      %v2802 = vld [vmem:[%s2717 + $0x50] sm:$0x1]
      %v2803 = vld [vmem:[%s2717 + $0x54] sm:$0xf]
      %v2804 = vld [vmem:[%s2717 + $0x58] sm:$0xf]
      %v2805 = vld [vmem:[%s2717 + $0x5c] sm:$0x1]
      %v2806 = vld [vmem:[%s2717 + $0x60] sm:$0xf]
      %v2807 = vld [vmem:[%s2717 + $0x64] sm:$0xf]
      %v2808 = vld [vmem:[%s2717 + $0x68] sm:$0x1]
      %v2809 = vld [vmem:[%s2717 + $0x6c] sm:$0xf]
      %v2810 = vld [vmem:[%s2717 + $0x70] sm:$0xf]
      %v2811 = vld [vmem:[%s2717 + $0x74] sm:$0x1]
      %v2812 = vld [vmem:[%s2717 + $0x78] sm:$0xf]
      %v2813 = vld [vmem:[%s2717 + $0x7c] sm:$0xf]
      %v2814 = vld [vmem:[%s2717 + $0x80] sm:$0x1]
      %v2815 = vld [vmem:[%s2717 + $0x84] sm:$0xf]
      %v2816 = vld [vmem:[%s2717 + $0x88] sm:$0xf]
      %v2817 = vld [vmem:[%s2717 + $0x8c] sm:$0x1]
      %v2818 = vld [vmem:[%s2717 + $0x90] sm:$0xf]
      %v2819 = vld [vmem:[%s2717 + $0x94] sm:$0xf]
      %v2820 = vld [vmem:[%s2717 + $0x98] sm:$0x1]
      %v2821 = vld [vmem:[%s2717 + $0x9c] sm:$0xf]
      %v2822 = vld [vmem:[%s2717 + $0xa0] sm:$0xf]
      %v2823 = vld [vmem:[%s2717 + $0xa4] sm:$0x1]
      %v2824 = vld [vmem:[%s2717 + $0xa8] sm:$0xf]
      %v2825 = vld [vmem:[%s2717 + $0xac] sm:$0xf]
      %v2826 = vld [vmem:[%s2717 + $0xb0] sm:$0x1]
      %v2827 = vld [vmem:[%s2717 + $0xb4] sm:$0xf]
      %v2828 = vld [vmem:[%s2717 + $0xb8] sm:$0xf]
      %v2829 = vld [vmem:[%s2717 + $0xbc] sm:$0x1]
      %v2831 = vshrl.u32 %v2782, 16
      %v2833 = vrot.slane %v2831, 4
      %v2834 = vshll.u32 %v2782, 16
      %v2836 = vrot.slane %v2834, 5
      %v2837 = vor.u32 %v2833, %v2836
      %v2838 = vrot.slane %v2837, 4
      %v2840 = vshll.u32 %v2783, 16
      %v2842 = vrot.slane %v2840, 5
      %v2843 = vsel %vm1161, %v2838, %v2842
      %v2844 = vshrl.u32 %v2783, 16
      %v2846 = vrot.slane %v2844, 4
      %v2847 = vor.u32 %v2846, %v2842
      %v2848 = vrot.slane %v2847, 4
      %v2850 = vshll.u32 %v2784, 16
      %v2852 = vrot.slane %v2850, 5
      %v2853 = vsel %vm1161, %v2848, %v2852
      %v2855 = vshrl.u32 %v2785, 16
      %v2857 = vrot.slane %v2855, 4
      %v2858 = vshll.u32 %v2785, 16
      %v2860 = vrot.slane %v2858, 5
      %v2861 = vor.u32 %v2857, %v2860
      %v2862 = vrot.slane %v2861, 4
      %v2864 = vshll.u32 %v2786, 16
      %v2866 = vrot.slane %v2864, 5
      %v2867 = vsel %vm1161, %v2862, %v2866
      %v2868 = vshrl.u32 %v2786, 16
      %v2870 = vrot.slane %v2868, 4
      %v2871 = vor.u32 %v2870, %v2866
      %v2872 = vrot.slane %v2871, 4
      %v2874 = vshll.u32 %v2787, 16
      %v2876 = vrot.slane %v2874, 5
      %v2877 = vsel %vm1161, %v2872, %v2876
      %v2879 = vshrl.u32 %v2788, 16
      %v2881 = vrot.slane %v2879, 4
      %v2882 = vshll.u32 %v2788, 16
      %v2884 = vrot.slane %v2882, 5
      %v2885 = vor.u32 %v2881, %v2884
      %v2886 = vrot.slane %v2885, 4
      %v2888 = vshll.u32 %v2789, 16
      %v2890 = vrot.slane %v2888, 5
      %v2891 = vsel %vm1161, %v2886, %v2890
      %v2892 = vshrl.u32 %v2789, 16
      %v2894 = vrot.slane %v2892, 4
      %v2895 = vor.u32 %v2894, %v2890
      %v2896 = vrot.slane %v2895, 4
      %v2898 = vshll.u32 %v2790, 16
      %v2900 = vrot.slane %v2898, 5
      %v2901 = vsel %vm1161, %v2896, %v2900
      %v2903 = vshrl.u32 %v2791, 16
      %v2905 = vrot.slane %v2903, 4
      %v2906 = vshll.u32 %v2791, 16
      %v2908 = vrot.slane %v2906, 5
      %v2909 = vor.u32 %v2905, %v2908
      %v2910 = vrot.slane %v2909, 4
      %v2912 = vshll.u32 %v2792, 16
      %v2914 = vrot.slane %v2912, 5
      %v2915 = vsel %vm1161, %v2910, %v2914
      %v2916 = vshrl.u32 %v2792, 16
      %v2918 = vrot.slane %v2916, 4
      %v2919 = vor.u32 %v2918, %v2914
      %v2920 = vrot.slane %v2919, 4
      %v2922 = vshll.u32 %v2793, 16
      %v2924 = vrot.slane %v2922, 5
      %v2925 = vsel %vm1161, %v2920, %v2924
      %v2927 = vshrl.u32 %v2794, 16
      %v2929 = vrot.slane %v2927, 4
      %v2930 = vshll.u32 %v2794, 16
      %v2932 = vrot.slane %v2930, 5
      %v2933 = vor.u32 %v2929, %v2932
      %v2934 = vrot.slane %v2933, 4
      %v2936 = vshll.u32 %v2795, 16
      %v2938 = vrot.slane %v2936, 5
      %v2939 = vsel %vm1161, %v2934, %v2938
      %v2940 = vshrl.u32 %v2795, 16
      %v2942 = vrot.slane %v2940, 4
      %v2943 = vor.u32 %v2942, %v2938
      %v2944 = vrot.slane %v2943, 4
      %v2946 = vshll.u32 %v2796, 16
      %v2948 = vrot.slane %v2946, 5
      %v2949 = vsel %vm1161, %v2944, %v2948
      %v2951 = vshrl.u32 %v2797, 16
      %v2953 = vrot.slane %v2951, 4
      %v2954 = vshll.u32 %v2797, 16
      %v2956 = vrot.slane %v2954, 5
      %v2957 = vor.u32 %v2953, %v2956
      %v2958 = vrot.slane %v2957, 4
      %v2960 = vshll.u32 %v2798, 16
      %v2962 = vrot.slane %v2960, 5
      %v2963 = vsel %vm1161, %v2958, %v2962
      %v2964 = vshrl.u32 %v2798, 16
      %v2966 = vrot.slane %v2964, 4
      %v2967 = vor.u32 %v2966, %v2962
      %v2968 = vrot.slane %v2967, 4
      %v2970 = vshll.u32 %v2799, 16
      %v2972 = vrot.slane %v2970, 5
      %v2973 = vsel %vm1161, %v2968, %v2972
      %v2975 = vshrl.u32 %v2800, 16
      %v2977 = vrot.slane %v2975, 4
      %v2978 = vshll.u32 %v2800, 16
      %v2980 = vrot.slane %v2978, 5
      %v2981 = vor.u32 %v2977, %v2980
      %v2982 = vrot.slane %v2981, 4
      %v2984 = vshll.u32 %v2801, 16
      %v2986 = vrot.slane %v2984, 5
      %v2987 = vsel %vm1161, %v2982, %v2986
      %v2988 = vshrl.u32 %v2801, 16
      %v2990 = vrot.slane %v2988, 4
      %v2991 = vor.u32 %v2990, %v2986
      %v2992 = vrot.slane %v2991, 4
      %v2994 = vshll.u32 %v2802, 16
      %v2996 = vrot.slane %v2994, 5
      %v2997 = vsel %vm1161, %v2992, %v2996
      %v2999 = vshrl.u32 %v2803, 16
      %v3001 = vrot.slane %v2999, 4
      %v3002 = vshll.u32 %v2803, 16
      %v3004 = vrot.slane %v3002, 5
      %v3005 = vor.u32 %v3001, %v3004
      %v3006 = vrot.slane %v3005, 4
      %v3008 = vshll.u32 %v2804, 16
      %v3010 = vrot.slane %v3008, 5
      %v3011 = vsel %vm1161, %v3006, %v3010
      %v3012 = vshrl.u32 %v2804, 16
      %v3014 = vrot.slane %v3012, 4
      %v3015 = vor.u32 %v3014, %v3010
      %v3016 = vrot.slane %v3015, 4
      %v3018 = vshll.u32 %v2805, 16
      %v3020 = vrot.slane %v3018, 5
      %v3021 = vsel %vm1161, %v3016, %v3020
      %v3023 = vshrl.u32 %v2806, 16
      %v3025 = vrot.slane %v3023, 4
      %v3026 = vshll.u32 %v2806, 16
      %v3028 = vrot.slane %v3026, 5
      %v3029 = vor.u32 %v3025, %v3028
      %v3030 = vrot.slane %v3029, 4
      %v3032 = vshll.u32 %v2807, 16
      %v3034 = vrot.slane %v3032, 5
      %v3035 = vsel %vm1161, %v3030, %v3034
      %v3036 = vshrl.u32 %v2807, 16
      %v3038 = vrot.slane %v3036, 4
      %v3039 = vor.u32 %v3038, %v3034
      %v3040 = vrot.slane %v3039, 4
      %v3042 = vshll.u32 %v2808, 16
      %v3044 = vrot.slane %v3042, 5
      %v3045 = vsel %vm1161, %v3040, %v3044
      %v3047 = vshrl.u32 %v2809, 16
      %v3049 = vrot.slane %v3047, 4
      %v3050 = vshll.u32 %v2809, 16
      %v3052 = vrot.slane %v3050, 5
      %v3053 = vor.u32 %v3049, %v3052
      %v3054 = vrot.slane %v3053, 4
      %v3056 = vshll.u32 %v2810, 16
      %v3058 = vrot.slane %v3056, 5
      %v3059 = vsel %vm1161, %v3054, %v3058
      %v3060 = vshrl.u32 %v2810, 16
      %v3062 = vrot.slane %v3060, 4
      %v3063 = vor.u32 %v3062, %v3058
      %v3064 = vrot.slane %v3063, 4
      %v3066 = vshll.u32 %v2811, 16
      %v3068 = vrot.slane %v3066, 5
      %v3069 = vsel %vm1161, %v3064, %v3068
      %v3071 = vshrl.u32 %v2812, 16
      %v3073 = vrot.slane %v3071, 4
      %v3074 = vshll.u32 %v2812, 16
      %v3076 = vrot.slane %v3074, 5
      %v3077 = vor.u32 %v3073, %v3076
      %v3078 = vrot.slane %v3077, 4
      %v3080 = vshll.u32 %v2813, 16
      %v3082 = vrot.slane %v3080, 5
      %v3083 = vsel %vm1161, %v3078, %v3082
      %v3084 = vshrl.u32 %v2813, 16
      %v3086 = vrot.slane %v3084, 4
      %v3087 = vor.u32 %v3086, %v3082
      %v3088 = vrot.slane %v3087, 4
      %v3090 = vshll.u32 %v2814, 16
      %v3092 = vrot.slane %v3090, 5
      %v3093 = vsel %vm1161, %v3088, %v3092
      %v3095 = vshrl.u32 %v2815, 16
      %v3097 = vrot.slane %v3095, 4
      %v3098 = vshll.u32 %v2815, 16
      %v3100 = vrot.slane %v3098, 5
      %v3101 = vor.u32 %v3097, %v3100
      %v3102 = vrot.slane %v3101, 4
      %v3104 = vshll.u32 %v2816, 16
      %v3106 = vrot.slane %v3104, 5
      %v3107 = vsel %vm1161, %v3102, %v3106
      %v3108 = vshrl.u32 %v2816, 16
      %v3110 = vrot.slane %v3108, 4
      %v3111 = vor.u32 %v3110, %v3106
      %v3112 = vrot.slane %v3111, 4
      %v3114 = vshll.u32 %v2817, 16
      %v3116 = vrot.slane %v3114, 5
      %v3117 = vsel %vm1161, %v3112, %v3116
      %v3119 = vshrl.u32 %v2818, 16
      %v3121 = vrot.slane %v3119, 4
      %v3122 = vshll.u32 %v2818, 16
      %v3124 = vrot.slane %v3122, 5
      %v3125 = vor.u32 %v3121, %v3124
      %v3126 = vrot.slane %v3125, 4
      %v3128 = vshll.u32 %v2819, 16
      %v3130 = vrot.slane %v3128, 5
      %v3131 = vsel %vm1161, %v3126, %v3130
      %v3132 = vshrl.u32 %v2819, 16
      %v3134 = vrot.slane %v3132, 4
      %v3135 = vor.u32 %v3134, %v3130
      %v3136 = vrot.slane %v3135, 4
      %v3138 = vshll.u32 %v2820, 16
      %v3140 = vrot.slane %v3138, 5
      %v3141 = vsel %vm1161, %v3136, %v3140
      %v3143 = vshrl.u32 %v2821, 16
      %v3145 = vrot.slane %v3143, 4
      %v3146 = vshll.u32 %v2821, 16
      %v3148 = vrot.slane %v3146, 5
      %v3149 = vor.u32 %v3145, %v3148
      %v3150 = vrot.slane %v3149, 4
      %v3152 = vshll.u32 %v2822, 16
      %v3154 = vrot.slane %v3152, 5
      %v3155 = vsel %vm1161, %v3150, %v3154
      %v3156 = vshrl.u32 %v2822, 16
      %v3158 = vrot.slane %v3156, 4
      %v3159 = vor.u32 %v3158, %v3154
      %v3160 = vrot.slane %v3159, 4
      %v3162 = vshll.u32 %v2823, 16
      %v3164 = vrot.slane %v3162, 5
      %v3165 = vsel %vm1161, %v3160, %v3164
      %v3167 = vshrl.u32 %v2824, 16
      %v3169 = vrot.slane %v3167, 4
      %v3170 = vshll.u32 %v2824, 16
      %v3172 = vrot.slane %v3170, 5
      %v3173 = vor.u32 %v3169, %v3172
      %v3174 = vrot.slane %v3173, 4
      %v3176 = vshll.u32 %v2825, 16
      %v3178 = vrot.slane %v3176, 5
      %v3179 = vsel %vm1161, %v3174, %v3178
      %v3180 = vshrl.u32 %v2825, 16
      %v3182 = vrot.slane %v3180, 4
      %v3183 = vor.u32 %v3182, %v3178
      %v3184 = vrot.slane %v3183, 4
      %v3186 = vshll.u32 %v2826, 16
      %v3188 = vrot.slane %v3186, 5
      %v3189 = vsel %vm1161, %v3184, %v3188
      %v3191 = vshrl.u32 %v2827, 16
      %v3193 = vrot.slane %v3191, 4
      %v3194 = vshll.u32 %v2827, 16
      %v3196 = vrot.slane %v3194, 5
      %v3197 = vor.u32 %v3193, %v3196
      %v3198 = vrot.slane %v3197, 4
      %v3200 = vshll.u32 %v2828, 16
      %v3202 = vrot.slane %v3200, 5
      %v3203 = vsel %vm1161, %v3198, %v3202
      %v3204 = vshrl.u32 %v2828, 16
      %v3206 = vrot.slane %v3204, 4
      %v3207 = vor.u32 %v3206, %v3202
      %v3208 = vrot.slane %v3207, 4
      %v3210 = vshll.u32 %v2829, 16
      %v3212 = vrot.slane %v3210, 5
      %v3213 = vsel %vm1161, %v3208, %v3212
      %3246 = vst [vmem:[#allocation3 + $0x1c] sm:$0xf] %v2843
      %3247 = vst [vmem:[#allocation3 + $0x40] sm:$0xf] %v2853
      %3248 = vst [vmem:[#allocation3 + $0x64] sm:$0xf] %v2867
      %3249 = vst [vmem:[#allocation3 + $0x88] sm:$0xf] %v2877
      %3250 = vst [vmem:[#allocation3 + $0xac] sm:$0xf] %v2891
      %3251 = vst [vmem:[#allocation3 + $0xd0] sm:$0xf] %v2901
      %3252 = vst [vmem:[#allocation3 + $0xf4] sm:$0xf] %v2915
      %3253 = vst [vmem:[#allocation3 + $0x118] sm:$0xf] %v2925
      %3254 = vst [vmem:[#allocation3 + $0x13c] sm:$0xf] %v2939
      %3255 = vst [vmem:[#allocation3 + $0x160] sm:$0xf] %v2949
      %3256 = vst [vmem:[#allocation3 + $0x184] sm:$0xf] %v2963
      %3257 = vst [vmem:[#allocation3 + $0x1a8] sm:$0xf] %v2973
      %3258 = vst [vmem:[#allocation3 + $0x1cc] sm:$0xf] %v2987
      %3259 = vst [vmem:[#allocation3 + $0x1f0] sm:$0xf] %v2997
      %3260 = vst [vmem:[#allocation3 + $0x214] sm:$0xf] %v3011
      %3261 = vst [vmem:[#allocation3 + $0x238] sm:$0xf] %v3021
      %3262 = vst [vmem:[#allocation3 + $0x25c] sm:$0xf] %v3035
      %3263 = vst [vmem:[#allocation3 + $0x280] sm:$0xf] %v3045
      %3264 = vst [vmem:[#allocation3 + $0x2a4] sm:$0xf] %v3059
      %3265 = vst [vmem:[#allocation3 + $0x2c8] sm:$0xf] %v3069
      %3266 = vst [vmem:[#allocation3 + $0x2ec] sm:$0xf] %v3083
      %3267 = vst [vmem:[#allocation3 + $0x310] sm:$0xf] %v3093
      %3268 = vst [vmem:[#allocation3 + $0x334] sm:$0xf] %v3107
      %3269 = vst [vmem:[#allocation3 + $0x358] sm:$0xf] %v3117
      %3270 = vst [vmem:[#allocation3 + $0x37c] sm:$0xf] %v3131
      %3271 = vst [vmem:[#allocation3 + $0x3a0] sm:$0xf] %v3141
      %3272 = vst [vmem:[#allocation3 + $0x3c4] sm:$0xf] %v3155
      %3273 = vst [vmem:[#allocation3 + $0x3e8] sm:$0xf] %v3165
      %3274 = vst [vmem:[#allocation3 + $0x40c] sm:$0xf] %v3179
      %3275 = vst [vmem:[#allocation3 + $0x430] sm:$0xf] %v3189
      %3276 = vst [vmem:[#allocation3 + $0x454] sm:$0xf] %v3203
      %3277 = vst [vmem:[#allocation3 + $0x478] sm:$0xf] %v3213
      %v3278 = vld [vmem:[%s2717] sm:$0xe]
      %v3279 = vld [vmem:[%s2717 + $0x4] sm:$0xf]
      %v3280 = vld [vmem:[%s2717 + $0x8] sm:$0x1]
      %v3281 = vld [vmem:[%s2717 + $0xc] sm:$0xe]
      %v3282 = vld [vmem:[%s2717 + $0x10] sm:$0xf]
      %v3283 = vld [vmem:[%s2717 + $0x14] sm:$0x1]
      %v3284 = vld [vmem:[%s2717 + $0x18] sm:$0xe]
      %v3285 = vld [vmem:[%s2717 + $0x1c] sm:$0xf]
      %v3286 = vld [vmem:[%s2717 + $0x20] sm:$0x1]
      %v3287 = vld [vmem:[%s2717 + $0x24] sm:$0xe]
      %v3288 = vld [vmem:[%s2717 + $0x28] sm:$0xf]
      %v3289 = vld [vmem:[%s2717 + $0x2c] sm:$0x1]
      %v3290 = vld [vmem:[%s2717 + $0x30] sm:$0xe]
      %v3291 = vld [vmem:[%s2717 + $0x34] sm:$0xf]
      %v3292 = vld [vmem:[%s2717 + $0x38] sm:$0x1]
      %v3293 = vld [vmem:[%s2717 + $0x3c] sm:$0xe]
      %v3294 = vld [vmem:[%s2717 + $0x40] sm:$0xf]
      %v3295 = vld [vmem:[%s2717 + $0x44] sm:$0x1]
      %v3296 = vld [vmem:[%s2717 + $0x48] sm:$0xe]
      %v3297 = vld [vmem:[%s2717 + $0x4c] sm:$0xf]
      %v3298 = vld [vmem:[%s2717 + $0x50] sm:$0x1]
      %v3299 = vld [vmem:[%s2717 + $0x54] sm:$0xe]
      %v3300 = vld [vmem:[%s2717 + $0x58] sm:$0xf]
      %v3301 = vld [vmem:[%s2717 + $0x5c] sm:$0x1]
      %v3302 = vld [vmem:[%s2717 + $0x60] sm:$0xe]
      %v3303 = vld [vmem:[%s2717 + $0x64] sm:$0xf]
      %v3304 = vld [vmem:[%s2717 + $0x68] sm:$0x1]
      %v3305 = vld [vmem:[%s2717 + $0x6c] sm:$0xe]
      %v3306 = vld [vmem:[%s2717 + $0x70] sm:$0xf]
      %v3307 = vld [vmem:[%s2717 + $0x74] sm:$0x1]
      %v3308 = vld [vmem:[%s2717 + $0x78] sm:$0xe]
      %v3309 = vld [vmem:[%s2717 + $0x7c] sm:$0xf]
      %v3310 = vld [vmem:[%s2717 + $0x80] sm:$0x1]
      %v3311 = vld [vmem:[%s2717 + $0x84] sm:$0xe]
      %v3312 = vld [vmem:[%s2717 + $0x88] sm:$0xf]
      %v3313 = vld [vmem:[%s2717 + $0x8c] sm:$0x1]
      %v3314 = vld [vmem:[%s2717 + $0x90] sm:$0xe]
      %v3315 = vld [vmem:[%s2717 + $0x94] sm:$0xf]
      %v3316 = vld [vmem:[%s2717 + $0x98] sm:$0x1]
      %v3317 = vld [vmem:[%s2717 + $0x9c] sm:$0xe]
      %v3318 = vld [vmem:[%s2717 + $0xa0] sm:$0xf]
      %v3319 = vld [vmem:[%s2717 + $0xa4] sm:$0x1]
      %v3320 = vld [vmem:[%s2717 + $0xa8] sm:$0xe]
      %v3321 = vld [vmem:[%s2717 + $0xac] sm:$0xf]
      %v3322 = vld [vmem:[%s2717 + $0xb0] sm:$0x1]
      %v3323 = vld [vmem:[%s2717 + $0xb4] sm:$0xe]
      %v3324 = vld [vmem:[%s2717 + $0xb8] sm:$0xf]
      %v3325 = vld [vmem:[%s2717 + $0xbc] sm:$0x1]
      %v3374 = vrot.slane %v3278, 5
      %v3375 = vrot.slane %v3374, 4
      %v3376 = vrot.slane %v3279, 5
      %v3377 = vsel %vm1708, %v3375, %v3376
      %v3378 = vrot.slane %v3376, 4
      %v3379 = vrot.slane %v3280, 5
      %v3380 = vsel %vm1708, %v3378, %v3379
      %v3381 = vrot.slane %v3281, 5
      %v3382 = vrot.slane %v3381, 4
      %v3383 = vrot.slane %v3282, 5
      %v3384 = vsel %vm1708, %v3382, %v3383
      %v3385 = vrot.slane %v3383, 4
      %v3386 = vrot.slane %v3283, 5
      %v3387 = vsel %vm1708, %v3385, %v3386
      %v3388 = vrot.slane %v3284, 5
      %v3389 = vrot.slane %v3388, 4
      %v3390 = vrot.slane %v3285, 5
      %v3391 = vsel %vm1708, %v3389, %v3390
      %v3392 = vrot.slane %v3390, 4
      %v3393 = vrot.slane %v3286, 5
      %v3394 = vsel %vm1708, %v3392, %v3393
      %v3395 = vrot.slane %v3287, 5
      %v3396 = vrot.slane %v3395, 4
      %v3397 = vrot.slane %v3288, 5
      %v3398 = vsel %vm1708, %v3396, %v3397
      %v3399 = vrot.slane %v3397, 4
      %v3400 = vrot.slane %v3289, 5
      %v3401 = vsel %vm1708, %v3399, %v3400
      %v3402 = vrot.slane %v3290, 5
      %v3403 = vrot.slane %v3402, 4
      %v3404 = vrot.slane %v3291, 5
      %v3405 = vsel %vm1708, %v3403, %v3404
      %v3406 = vrot.slane %v3404, 4
      %v3407 = vrot.slane %v3292, 5
      %v3408 = vsel %vm1708, %v3406, %v3407
      %v3409 = vrot.slane %v3293, 5
      %v3410 = vrot.slane %v3409, 4
      %v3411 = vrot.slane %v3294, 5
      %v3412 = vsel %vm1708, %v3410, %v3411
      %v3413 = vrot.slane %v3411, 4
      %v3414 = vrot.slane %v3295, 5
      %v3415 = vsel %vm1708, %v3413, %v3414
      %v3416 = vrot.slane %v3296, 5
      %v3417 = vrot.slane %v3416, 4
      %v3418 = vrot.slane %v3297, 5
      %v3419 = vsel %vm1708, %v3417, %v3418
      %v3420 = vrot.slane %v3418, 4
      %v3421 = vrot.slane %v3298, 5
      %v3422 = vsel %vm1708, %v3420, %v3421
      %v3423 = vrot.slane %v3299, 5
      %v3424 = vrot.slane %v3423, 4
      %v3425 = vrot.slane %v3300, 5
      %v3426 = vsel %vm1708, %v3424, %v3425
      %v3427 = vrot.slane %v3425, 4
      %v3428 = vrot.slane %v3301, 5
      %v3429 = vsel %vm1708, %v3427, %v3428
      %v3430 = vrot.slane %v3302, 5
      %v3431 = vrot.slane %v3430, 4
      %v3432 = vrot.slane %v3303, 5
      %v3433 = vsel %vm1708, %v3431, %v3432
      %v3434 = vrot.slane %v3432, 4
      %v3435 = vrot.slane %v3304, 5
      %v3436 = vsel %vm1708, %v3434, %v3435
      %v3437 = vrot.slane %v3305, 5
      %v3438 = vrot.slane %v3437, 4
      %v3439 = vrot.slane %v3306, 5
      %v3440 = vsel %vm1708, %v3438, %v3439
      %v3441 = vrot.slane %v3439, 4
      %v3442 = vrot.slane %v3307, 5
      %v3443 = vsel %vm1708, %v3441, %v3442
      %v3444 = vrot.slane %v3308, 5
      %v3445 = vrot.slane %v3444, 4
      %v3446 = vrot.slane %v3309, 5
      %v3447 = vsel %vm1708, %v3445, %v3446
      %v3448 = vrot.slane %v3446, 4
      %v3449 = vrot.slane %v3310, 5
      %v3450 = vsel %vm1708, %v3448, %v3449
      %v3451 = vrot.slane %v3311, 5
      %v3452 = vrot.slane %v3451, 4
      %v3453 = vrot.slane %v3312, 5
      %v3454 = vsel %vm1708, %v3452, %v3453
      %v3455 = vrot.slane %v3453, 4
      %v3456 = vrot.slane %v3313, 5
      %v3457 = vsel %vm1708, %v3455, %v3456
      %v3458 = vrot.slane %v3314, 5
      %v3459 = vrot.slane %v3458, 4
      %v3460 = vrot.slane %v3315, 5
      %v3461 = vsel %vm1708, %v3459, %v3460
      %v3462 = vrot.slane %v3460, 4
      %v3463 = vrot.slane %v3316, 5
      %v3464 = vsel %vm1708, %v3462, %v3463
      %v3465 = vrot.slane %v3317, 5
      %v3466 = vrot.slane %v3465, 4
      %v3467 = vrot.slane %v3318, 5
      %v3468 = vsel %vm1708, %v3466, %v3467
      %v3469 = vrot.slane %v3467, 4
      %v3470 = vrot.slane %v3319, 5
      %v3471 = vsel %vm1708, %v3469, %v3470
      %v3472 = vrot.slane %v3320, 5
      %v3473 = vrot.slane %v3472, 4
      %v3474 = vrot.slane %v3321, 5
      %v3475 = vsel %vm1708, %v3473, %v3474
      %v3476 = vrot.slane %v3474, 4
      %v3477 = vrot.slane %v3322, 5
      %v3478 = vsel %vm1708, %v3476, %v3477
      %v3479 = vrot.slane %v3323, 5
      %v3480 = vrot.slane %v3479, 4
      %v3481 = vrot.slane %v3324, 5
      %v3482 = vsel %vm1708, %v3480, %v3481
      %v3483 = vrot.slane %v3481, 4
      %v3484 = vrot.slane %v3325, 5
      %v3485 = vsel %vm1708, %v3483, %v3484
      %3518 = vst [vmem:[#allocation3 + $0x20] sm:$0xf] %v3377
      %3519 = vst [vmem:[#allocation3 + $0x44] sm:$0xf] %v3380
      %3520 = vst [vmem:[#allocation3 + $0x68] sm:$0xf] %v3384
      %3521 = vst [vmem:[#allocation3 + $0x8c] sm:$0xf] %v3387
      %3522 = vst [vmem:[#allocation3 + $0xb0] sm:$0xf] %v3391
      %3523 = vst [vmem:[#allocation3 + $0xd4] sm:$0xf] %v3394
      %3524 = vst [vmem:[#allocation3 + $0xf8] sm:$0xf] %v3398
      %3525 = vst [vmem:[#allocation3 + $0x11c] sm:$0xf] %v3401
      %3526 = vst [vmem:[#allocation3 + $0x140] sm:$0xf] %v3405
      %3527 = vst [vmem:[#allocation3 + $0x164] sm:$0xf] %v3408
      %3528 = vst [vmem:[#allocation3 + $0x188] sm:$0xf] %v3412
      %3529 = vst [vmem:[#allocation3 + $0x1ac] sm:$0xf] %v3415
      %3530 = vst [vmem:[#allocation3 + $0x1d0] sm:$0xf] %v3419
      %3531 = vst [vmem:[#allocation3 + $0x1f4] sm:$0xf] %v3422
      %3532 = vst [vmem:[#allocation3 + $0x218] sm:$0xf] %v3426
      %3533 = vst [vmem:[#allocation3 + $0x23c] sm:$0xf] %v3429
      %3534 = vst [vmem:[#allocation3 + $0x260] sm:$0xf] %v3433
      %3535 = vst [vmem:[#allocation3 + $0x284] sm:$0xf] %v3436
      %3536 = vst [vmem:[#allocation3 + $0x2a8] sm:$0xf] %v3440
      %3537 = vst [vmem:[#allocation3 + $0x2cc] sm:$0xf] %v3443
      %3538 = vst [vmem:[#allocation3 + $0x2f0] sm:$0xf] %v3447
      %3539 = vst [vmem:[#allocation3 + $0x314] sm:$0xf] %v3450
      %3540 = vst [vmem:[#allocation3 + $0x338] sm:$0xf] %v3454
      %3541 = vst [vmem:[#allocation3 + $0x35c] sm:$0xf] %v3457
      %3542 = vst [vmem:[#allocation3 + $0x380] sm:$0xf] %v3461
      %3543 = vst [vmem:[#allocation3 + $0x3a4] sm:$0xf] %v3464
      %3544 = vst [vmem:[#allocation3 + $0x3c8] sm:$0xf] %v3468
      %3545 = vst [vmem:[#allocation3 + $0x3ec] sm:$0xf] %v3471
      %3546 = vst [vmem:[#allocation3 + $0x410] sm:$0xf] %v3475
      %3547 = vst [vmem:[#allocation3 + $0x434] sm:$0xf] %v3478
      %3548 = vst [vmem:[#allocation3 + $0x458] sm:$0xf] %v3482
      %3549 = vst [vmem:[#allocation3 + $0x47c] sm:$0xf] %v3485
      %v3550 = vld [vmem:[#allocation3] sm:$0xff]
      %v3551 = vld [vmem:[#allocation3 + $0x8] sm:$0xff]
      %v3552 = vld [vmem:[#allocation3 + $0x10] sm:$0xff]
      %v3553 = vld [vmem:[#allocation3 + $0x18] sm:$0xff]
      %v3554 = vld [vmem:[#allocation3 + $0x20] sm:$0xf]
      %v3555 = vld [vmem:[#allocation3 + $0x24] sm:$0xff]
      %v3556 = vld [vmem:[#allocation3 + $0x2c] sm:$0xff]
      %v3557 = vld [vmem:[#allocation3 + $0x34] sm:$0xff]
      %v3558 = vld [vmem:[#allocation3 + $0x3c] sm:$0xff]
      %v3559 = vld [vmem:[#allocation3 + $0x44] sm:$0xf]
      %v3560 = vld [vmem:[#allocation3 + $0x48] sm:$0xff]
      %v3561 = vld [vmem:[#allocation3 + $0x50] sm:$0xff]
      %v3562 = vld [vmem:[#allocation3 + $0x58] sm:$0xff]
      %v3563 = vld [vmem:[#allocation3 + $0x60] sm:$0xff]
      %v3564 = vld [vmem:[#allocation3 + $0x68] sm:$0xf]
      %v3565 = vld [vmem:[#allocation3 + $0x6c] sm:$0xff]
      %v3566 = vld [vmem:[#allocation3 + $0x74] sm:$0xff]
      %v3567 = vld [vmem:[#allocation3 + $0x7c] sm:$0xff]
      %v3568 = vld [vmem:[#allocation3 + $0x84] sm:$0xff]
      %v3569 = vld [vmem:[#allocation3 + $0x8c] sm:$0xf]
      %v3570 = vld [vmem:[#allocation3 + $0x90] sm:$0xff]
      %v3571 = vld [vmem:[#allocation3 + $0x98] sm:$0xff]
      %v3572 = vld [vmem:[#allocation3 + $0xa0] sm:$0xff]
      %v3573 = vld [vmem:[#allocation3 + $0xa8] sm:$0xff]
      %v3574 = vld [vmem:[#allocation3 + $0xb0] sm:$0xf]
      %v3575 = vld [vmem:[#allocation3 + $0xb4] sm:$0xff]
      %v3576 = vld [vmem:[#allocation3 + $0xbc] sm:$0xff]
      %v3577 = vld [vmem:[#allocation3 + $0xc4] sm:$0xff]
      %v3578 = vld [vmem:[#allocation3 + $0xcc] sm:$0xff]
      %v3579 = vld [vmem:[#allocation3 + $0xd4] sm:$0xf]
      %v3580 = vld [vmem:[#allocation3 + $0xd8] sm:$0xff]
      %v3581 = vld [vmem:[#allocation3 + $0xe0] sm:$0xff]
      %v3582 = vld [vmem:[#allocation3 + $0xe8] sm:$0xff]
      %v3583 = vld [vmem:[#allocation3 + $0xf0] sm:$0xff]
      %v3584 = vld [vmem:[#allocation3 + $0xf8] sm:$0xf]
      %v3585 = vld [vmem:[#allocation3 + $0xfc] sm:$0xff]
      %v3586 = vld [vmem:[#allocation3 + $0x104] sm:$0xff]
      %v3587 = vld [vmem:[#allocation3 + $0x10c] sm:$0xff]
      %v3588 = vld [vmem:[#allocation3 + $0x114] sm:$0xff]
      %v3589 = vld [vmem:[#allocation3 + $0x11c] sm:$0xf]
      %v3590 = vld [vmem:[#allocation3 + $0x120] sm:$0xff]
      %v3591 = vld [vmem:[#allocation3 + $0x128] sm:$0xff]
      %v3592 = vld [vmem:[#allocation3 + $0x130] sm:$0xff]
      %v3593 = vld [vmem:[#allocation3 + $0x138] sm:$0xff]
      %v3594 = vld [vmem:[#allocation3 + $0x140] sm:$0xf]
      %v3595 = vld [vmem:[#allocation3 + $0x144] sm:$0xff]
      %v3596 = vld [vmem:[#allocation3 + $0x14c] sm:$0xff]
      %v3597 = vld [vmem:[#allocation3 + $0x154] sm:$0xff]
      %v3598 = vld [vmem:[#allocation3 + $0x15c] sm:$0xff]
      %v3599 = vld [vmem:[#allocation3 + $0x164] sm:$0xf]
      %v3600 = vld [vmem:[#allocation3 + $0x168] sm:$0xff]
      %v3601 = vld [vmem:[#allocation3 + $0x170] sm:$0xff]
      %v3602 = vld [vmem:[#allocation3 + $0x178] sm:$0xff]
      %v3603 = vld [vmem:[#allocation3 + $0x180] sm:$0xff]
      %v3604 = vld [vmem:[#allocation3 + $0x188] sm:$0xf]
      %v3605 = vld [vmem:[#allocation3 + $0x18c] sm:$0xff]
      %v3606 = vld [vmem:[#allocation3 + $0x194] sm:$0xff]
      %v3607 = vld [vmem:[#allocation3 + $0x19c] sm:$0xff]
      %v3608 = vld [vmem:[#allocation3 + $0x1a4] sm:$0xff]
      %v3609 = vld [vmem:[#allocation3 + $0x1ac] sm:$0xf]
      %v3610 = vld [vmem:[#allocation3 + $0x1b0] sm:$0xff]
      %v3611 = vld [vmem:[#allocation3 + $0x1b8] sm:$0xff]
      %v3612 = vld [vmem:[#allocation3 + $0x1c0] sm:$0xff]
      %v3613 = vld [vmem:[#allocation3 + $0x1c8] sm:$0xff]
      %v3614 = vld [vmem:[#allocation3 + $0x1d0] sm:$0xf]
      %v3615 = vld [vmem:[#allocation3 + $0x1d4] sm:$0xff]
      %v3616 = vld [vmem:[#allocation3 + $0x1dc] sm:$0xff]
      %v3617 = vld [vmem:[#allocation3 + $0x1e4] sm:$0xff]
      %v3618 = vld [vmem:[#allocation3 + $0x1ec] sm:$0xff]
      %v3619 = vld [vmem:[#allocation3 + $0x1f4] sm:$0xf]
      %v3620 = vld [vmem:[#allocation3 + $0x1f8] sm:$0xff]
      %v3621 = vld [vmem:[#allocation3 + $0x200] sm:$0xff]
      %v3622 = vld [vmem:[#allocation3 + $0x208] sm:$0xff]
      %v3623 = vld [vmem:[#allocation3 + $0x210] sm:$0xff]
      %v3624 = vld [vmem:[#allocation3 + $0x218] sm:$0xf]
      %v3625 = vld [vmem:[#allocation3 + $0x21c] sm:$0xff]
      %v3626 = vld [vmem:[#allocation3 + $0x224] sm:$0xff]
      %v3627 = vld [vmem:[#allocation3 + $0x22c] sm:$0xff]
      %v3628 = vld [vmem:[#allocation3 + $0x234] sm:$0xff]
      %v3629 = vld [vmem:[#allocation3 + $0x23c] sm:$0xf]
      %v3630 = vld [vmem:[#allocation3 + $0x240] sm:$0xff]
      %v3631 = vld [vmem:[#allocation3 + $0x248] sm:$0xff]
      %v3632 = vld [vmem:[#allocation3 + $0x250] sm:$0xff]
      %v3633 = vld [vmem:[#allocation3 + $0x258] sm:$0xff]
      %v3634 = vld [vmem:[#allocation3 + $0x260] sm:$0xf]
      %v3635 = vld [vmem:[#allocation3 + $0x264] sm:$0xff]
      %v3636 = vld [vmem:[#allocation3 + $0x26c] sm:$0xff]
      %v3637 = vld [vmem:[#allocation3 + $0x274] sm:$0xff]
      %v3638 = vld [vmem:[#allocation3 + $0x27c] sm:$0xff]
      %v3639 = vld [vmem:[#allocation3 + $0x284] sm:$0xf]
      %v3640 = vld [vmem:[#allocation3 + $0x288] sm:$0xff]
      %v3641 = vld [vmem:[#allocation3 + $0x290] sm:$0xff]
      %v3642 = vld [vmem:[#allocation3 + $0x298] sm:$0xff]
      %v3643 = vld [vmem:[#allocation3 + $0x2a0] sm:$0xff]
      %v3644 = vld [vmem:[#allocation3 + $0x2a8] sm:$0xf]
      %v3645 = vld [vmem:[#allocation3 + $0x2ac] sm:$0xff]
      %v3646 = vld [vmem:[#allocation3 + $0x2b4] sm:$0xff]
      %v3647 = vld [vmem:[#allocation3 + $0x2bc] sm:$0xff]
      %v3648 = vld [vmem:[#allocation3 + $0x2c4] sm:$0xff]
      %v3649 = vld [vmem:[#allocation3 + $0x2cc] sm:$0xf]
      %v3650 = vld [vmem:[#allocation3 + $0x2d0] sm:$0xff]
      %v3651 = vld [vmem:[#allocation3 + $0x2d8] sm:$0xff]
      %v3652 = vld [vmem:[#allocation3 + $0x2e0] sm:$0xff]
      %v3653 = vld [vmem:[#allocation3 + $0x2e8] sm:$0xff]
      %v3654 = vld [vmem:[#allocation3 + $0x2f0] sm:$0xf]
      %v3655 = vld [vmem:[#allocation3 + $0x2f4] sm:$0xff]
      %v3656 = vld [vmem:[#allocation3 + $0x2fc] sm:$0xff]
      %v3657 = vld [vmem:[#allocation3 + $0x304] sm:$0xff]
      %v3658 = vld [vmem:[#allocation3 + $0x30c] sm:$0xff]
      %v3659 = vld [vmem:[#allocation3 + $0x314] sm:$0xf]
      %v3660 = vld [vmem:[#allocation3 + $0x318] sm:$0xff]
      %v3661 = vld [vmem:[#allocation3 + $0x320] sm:$0xff]
      %v3662 = vld [vmem:[#allocation3 + $0x328] sm:$0xff]
      %v3663 = vld [vmem:[#allocation3 + $0x330] sm:$0xff]
      %v3664 = vld [vmem:[#allocation3 + $0x338] sm:$0xf]
      %v3665 = vld [vmem:[#allocation3 + $0x33c] sm:$0xff]
      %v3666 = vld [vmem:[#allocation3 + $0x344] sm:$0xff]
      %v3667 = vld [vmem:[#allocation3 + $0x34c] sm:$0xff]
      %v3668 = vld [vmem:[#allocation3 + $0x354] sm:$0xff]
      %v3669 = vld [vmem:[#allocation3 + $0x35c] sm:$0xf]
      %v3670 = vld [vmem:[#allocation3 + $0x360] sm:$0xff]
      %v3671 = vld [vmem:[#allocation3 + $0x368] sm:$0xff]
      %v3672 = vld [vmem:[#allocation3 + $0x370] sm:$0xff]
      %v3673 = vld [vmem:[#allocation3 + $0x378] sm:$0xff]
      %v3674 = vld [vmem:[#allocation3 + $0x380] sm:$0xf]
      %v3675 = vld [vmem:[#allocation3 + $0x384] sm:$0xff]
      %v3676 = vld [vmem:[#allocation3 + $0x38c] sm:$0xff]
      %v3677 = vld [vmem:[#allocation3 + $0x394] sm:$0xff]
      %v3678 = vld [vmem:[#allocation3 + $0x39c] sm:$0xff]
      %v3679 = vld [vmem:[#allocation3 + $0x3a4] sm:$0xf]
      %v3680 = vld [vmem:[#allocation3 + $0x3a8] sm:$0xff]
      %v3681 = vld [vmem:[#allocation3 + $0x3b0] sm:$0xff]
      %v3682 = vld [vmem:[#allocation3 + $0x3b8] sm:$0xff]
      %v3683 = vld [vmem:[#allocation3 + $0x3c0] sm:$0xff]
      %v3684 = vld [vmem:[#allocation3 + $0x3c8] sm:$0xf]
      %v3685 = vld [vmem:[#allocation3 + $0x3cc] sm:$0xff]
      %v3686 = vld [vmem:[#allocation3 + $0x3d4] sm:$0xff]
      %v3687 = vld [vmem:[#allocation3 + $0x3dc] sm:$0xff]
      %v3688 = vld [vmem:[#allocation3 + $0x3e4] sm:$0xff]
      %v3689 = vld [vmem:[#allocation3 + $0x3ec] sm:$0xf]
      %v3690 = vld [vmem:[#allocation3 + $0x3f0] sm:$0xff]
      %v3691 = vld [vmem:[#allocation3 + $0x3f8] sm:$0xff]
      %v3692 = vld [vmem:[#allocation3 + $0x400] sm:$0xff]
      %v3693 = vld [vmem:[#allocation3 + $0x408] sm:$0xff]
      %v3694 = vld [vmem:[#allocation3 + $0x410] sm:$0xf]
      %v3695 = vld [vmem:[#allocation3 + $0x414] sm:$0xff]
      %v3696 = vld [vmem:[#allocation3 + $0x41c] sm:$0xff]
      %v3697 = vld [vmem:[#allocation3 + $0x424] sm:$0xff]
      %v3698 = vld [vmem:[#allocation3 + $0x42c] sm:$0xff]
      %v3699 = vld [vmem:[#allocation3 + $0x434] sm:$0xf]
      %v3700 = vld [vmem:[#allocation3 + $0x438] sm:$0xff]
      %v3701 = vld [vmem:[#allocation3 + $0x440] sm:$0xff]
      %v3702 = vld [vmem:[#allocation3 + $0x448] sm:$0xff]
      %v3703 = vld [vmem:[#allocation3 + $0x450] sm:$0xff]
      %v3704 = vld [vmem:[#allocation3 + $0x458] sm:$0xf]
      %v3705 = vld [vmem:[#allocation3 + $0x45c] sm:$0xff]
      %v3706 = vld [vmem:[#allocation3 + $0x464] sm:$0xff]
      %v3707 = vld [vmem:[#allocation3 + $0x46c] sm:$0xff]
      %v3708 = vld [vmem:[#allocation3 + $0x474] sm:$0xff]
      %v3709 = vld [vmem:[#allocation3 + $0x47c] sm:$0xf]
      %v3710 = vld [vmem:[%s3] sm:$0xf]
      %v3711 = vld [vmem:[%s3 + $0x4] sm:$0xf]
      %v3712 = vld [vmem:[%s3 + $0x8] sm:$0xf]
      %v3713 = vld [vmem:[%s3 + $0xc] sm:$0xf]
      %v3714 = vld [vmem:[%s3 + $0x10] sm:$0xf]
      %v3715 = vld [vmem:[%s3 + $0x14] sm:$0xf]
      %v3716 = vld [vmem:[%s3 + $0x18] sm:$0xf]
      %v3717 = vld [vmem:[%s3 + $0x1c] sm:$0xf]
      %v3718 = vld [vmem:[%s3 + $0x20] sm:$0xf]
      %v3719 = vld [vmem:[%s3 + $0x24] sm:$0xf]
      %v3720 = vld [vmem:[%s3 + $0x28] sm:$0xf]
      %v3721 = vld [vmem:[%s3 + $0x2c] sm:$0xf]
      %v3722 = vld [vmem:[%s3 + $0x30] sm:$0xf]
      %v3723 = vld [vmem:[%s3 + $0x34] sm:$0xf]
      %v3724 = vld [vmem:[%s3 + $0x38] sm:$0xf]
      %v3725 = vld [vmem:[%s3 + $0x3c] sm:$0xf]
      %v3726 = vld [vmem:[%s3 + $0x40] sm:$0xf]
      %v3727 = vld [vmem:[%s3 + $0x44] sm:$0xf]
      %v3728 = vld [vmem:[%s3 + $0x48] sm:$0xf]
      %v3729 = vld [vmem:[%s3 + $0x4c] sm:$0xf]
      %v3730 = vld [vmem:[%s3 + $0x50] sm:$0xf]
      %v3731 = vld [vmem:[%s3 + $0x54] sm:$0xf]
      %v3732 = vld [vmem:[%s3 + $0x58] sm:$0xf]
      %v3733 = vld [vmem:[%s3 + $0x5c] sm:$0xf]
      %v3734 = vld [vmem:[%s3 + $0x60] sm:$0xf]
      %v3735 = vld [vmem:[%s3 + $0x64] sm:$0xf]
      %v3736 = vld [vmem:[%s3 + $0x68] sm:$0xf]
      %v3737 = vld [vmem:[%s3 + $0x6c] sm:$0xf]
      %v3738 = vld [vmem:[%s3 + $0x70] sm:$0xf]
      %v3739 = vld [vmem:[%s3 + $0x74] sm:$0xf]
      %v3740 = vld [vmem:[%s3 + $0x78] sm:$0xf]
      %v3741 = vld [vmem:[%s3 + $0x7c] sm:$0xf]
      %v3742 = vld [vmem:[%s3 + $0x80] sm:$0xf]
      %v3743 = vld [vmem:[%s3 + $0x84] sm:$0xf]
      %v3744 = vld [vmem:[%s3 + $0x88] sm:$0xf]
      %v3745 = vld [vmem:[%s3 + $0x8c] sm:$0xf]
      %v3746 = vld [vmem:[%s3 + $0x90] sm:$0xf]
      %v3747 = vld [vmem:[%s3 + $0x94] sm:$0xf]
      %v3748 = vld [vmem:[%s3 + $0x98] sm:$0xf]
      %v3749 = vld [vmem:[%s3 + $0x9c] sm:$0xf]
      %v3750 = vld [vmem:[%s3 + $0xa0] sm:$0xf]
      %v3751 = vld [vmem:[%s3 + $0xa4] sm:$0xf]
      %v3752 = vld [vmem:[%s3 + $0xa8] sm:$0xf]
      %v3753 = vld [vmem:[%s3 + $0xac] sm:$0xf]
      %v3754 = vld [vmem:[%s3 + $0xb0] sm:$0xf]
      %v3755 = vld [vmem:[%s3 + $0xb4] sm:$0xf]
      %v3756 = vld [vmem:[%s3 + $0xb8] sm:$0xf]
      %v3757 = vld [vmem:[%s3 + $0xbc] sm:$0xf]
      %v3758 = vld [vmem:[%s3 + $0xc0] sm:$0xf]
      %v3759 = vld [vmem:[%s3 + $0xc4] sm:$0xf]
      %v3760 = vld [vmem:[%s3 + $0xc8] sm:$0xf]
      %v3761 = vld [vmem:[%s3 + $0xcc] sm:$0xf]
      %v3762 = vld [vmem:[%s3 + $0xd0] sm:$0xf]
      %v3763 = vld [vmem:[%s3 + $0xd4] sm:$0xf]
      %v3764 = vld [vmem:[%s3 + $0xd8] sm:$0xf]
      %v3765 = vld [vmem:[%s3 + $0xdc] sm:$0xf]
      %v3766 = vld [vmem:[%s3 + $0xe0] sm:$0xf]
      %v3767 = vld [vmem:[%s3 + $0xe4] sm:$0xf]
      %v3768 = vld [vmem:[%s3 + $0xe8] sm:$0xf]
      %v3769 = vld [vmem:[%s3 + $0xec] sm:$0xf]
      %v3770 = vld [vmem:[%s3 + $0xf0] sm:$0xf]
      %v3771 = vld [vmem:[%s3 + $0xf4] sm:$0xf]
      %v3772 = vld [vmem:[%s3 + $0xf8] sm:$0xf]
      %v3773 = vld [vmem:[%s3 + $0xfc] sm:$0xf]
      %v3774 = vld [vmem:[%s3 + $0x100] sm:$0xf]
      %v3775 = vld [vmem:[%s3 + $0x104] sm:$0xf]
      %v3776 = vld [vmem:[%s3 + $0x108] sm:$0xf]
      %v3777 = vld [vmem:[%s3 + $0x10c] sm:$0xf]
      %v3778 = vld [vmem:[%s3 + $0x110] sm:$0xf]
      %v3779 = vld [vmem:[%s3 + $0x114] sm:$0xf]
      %v3780 = vld [vmem:[%s3 + $0x118] sm:$0xf]
      %v3781 = vld [vmem:[%s3 + $0x11c] sm:$0xf]
      %v3782 = vld [vmem:[%s3 + $0x120] sm:$0xf]
      %v3783 = vld [vmem:[%s3 + $0x124] sm:$0xf]
      %v3784 = vld [vmem:[%s3 + $0x128] sm:$0xf]
      %v3785 = vld [vmem:[%s3 + $0x12c] sm:$0xf]
      %v3786 = vld [vmem:[%s3 + $0x130] sm:$0xf]
      %v3787 = vld [vmem:[%s3 + $0x134] sm:$0xf]
      %v3788 = vld [vmem:[%s3 + $0x138] sm:$0xf]
      %v3789 = vld [vmem:[%s3 + $0x13c] sm:$0xf]
      %v3790 = vld [vmem:[%s3 + $0x140] sm:$0xf]
      %v3791 = vld [vmem:[%s3 + $0x144] sm:$0xf]
      %v3792 = vld [vmem:[%s3 + $0x148] sm:$0xf]
      %v3793 = vld [vmem:[%s3 + $0x14c] sm:$0xf]
      %v3794 = vld [vmem:[%s3 + $0x150] sm:$0xf]
      %v3795 = vld [vmem:[%s3 + $0x154] sm:$0xf]
      %v3796 = vld [vmem:[%s3 + $0x158] sm:$0xf]
      %v3797 = vld [vmem:[%s3 + $0x15c] sm:$0xf]
      %v3798 = vld [vmem:[%s3 + $0x160] sm:$0xf]
      %v3799 = vld [vmem:[%s3 + $0x164] sm:$0xf]
      %v3800 = vld [vmem:[%s3 + $0x168] sm:$0xf]
      %v3801 = vld [vmem:[%s3 + $0x16c] sm:$0xf]
      %v3802 = vld [vmem:[%s3 + $0x170] sm:$0xf]
      %v3803 = vld [vmem:[%s3 + $0x174] sm:$0xf]
      %v3804 = vld [vmem:[%s3 + $0x178] sm:$0xf]
      %v3805 = vld [vmem:[%s3 + $0x17c] sm:$0xf]
      %v3806 = vld [vmem:[%s3 + $0x180] sm:$0xf]
      %v3807 = vld [vmem:[%s3 + $0x184] sm:$0xf]
      %v3808 = vld [vmem:[%s3 + $0x188] sm:$0xf]
      %v3809 = vld [vmem:[%s3 + $0x18c] sm:$0xf]
      %v3810 = vld [vmem:[%s3 + $0x190] sm:$0xf]
      %v3811 = vld [vmem:[%s3 + $0x194] sm:$0xf]
      %v3812 = vld [vmem:[%s3 + $0x198] sm:$0xf]
      %v3813 = vld [vmem:[%s3 + $0x19c] sm:$0xf]
      %v3814 = vld [vmem:[%s3 + $0x1a0] sm:$0xf]
      %v3815 = vld [vmem:[%s3 + $0x1a4] sm:$0xf]
      %v3816 = vld [vmem:[%s3 + $0x1a8] sm:$0xf]
      %v3817 = vld [vmem:[%s3 + $0x1ac] sm:$0xf]
      %v3818 = vld [vmem:[%s3 + $0x1b0] sm:$0xf]
      %v3819 = vld [vmem:[%s3 + $0x1b4] sm:$0xf]
      %v3820 = vld [vmem:[%s3 + $0x1b8] sm:$0xf]
      %v3821 = vld [vmem:[%s3 + $0x1bc] sm:$0xf]
      %v3822 = vld [vmem:[%s3 + $0x1c0] sm:$0xf]
      %v3823 = vld [vmem:[%s3 + $0x1c4] sm:$0xf]
      %v3824 = vld [vmem:[%s3 + $0x1c8] sm:$0xf]
      %v3825 = vld [vmem:[%s3 + $0x1cc] sm:$0xf]
      %v3826 = vld [vmem:[%s3 + $0x1d0] sm:$0xf]
      %v3827 = vld [vmem:[%s3 + $0x1d4] sm:$0xf]
      %v3828 = vld [vmem:[%s3 + $0x1d8] sm:$0xf]
      %v3829 = vld [vmem:[%s3 + $0x1dc] sm:$0xf]
      %v3830 = vld [vmem:[%s3 + $0x1e0] sm:$0xf]
      %v3831 = vld [vmem:[%s3 + $0x1e4] sm:$0xf]
      %v3832 = vld [vmem:[%s3 + $0x1e8] sm:$0xf]
      %v3833 = vld [vmem:[%s3 + $0x1ec] sm:$0xf]
      %v3834 = vld [vmem:[%s3 + $0x1f0] sm:$0xf]
      %v3835 = vld [vmem:[%s3 + $0x1f4] sm:$0xf]
      %v3836 = vld [vmem:[%s3 + $0x1f8] sm:$0xf]
      %v3837 = vld [vmem:[%s3 + $0x1fc] sm:$0xf]
      %v3838 = vld [vmem:[%s3 + $0x200] sm:$0xf]
      %v3839 = vld [vmem:[%s3 + $0x204] sm:$0xf]
      %v3840 = vld [vmem:[%s3 + $0x208] sm:$0xf]
      %v3841 = vld [vmem:[%s3 + $0x20c] sm:$0xf]
      %v3842 = vld [vmem:[%s3 + $0x210] sm:$0xf]
      %v3843 = vld [vmem:[%s3 + $0x214] sm:$0xf]
      %v3844 = vld [vmem:[%s3 + $0x218] sm:$0xf]
      %v3845 = vld [vmem:[%s3 + $0x21c] sm:$0xf]
      %v3846 = vld [vmem:[%s3 + $0x220] sm:$0xf]
      %v3847 = vld [vmem:[%s3 + $0x224] sm:$0xf]
      %v3848 = vld [vmem:[%s3 + $0x228] sm:$0xf]
      %v3849 = vld [vmem:[%s3 + $0x22c] sm:$0xf]
      %v3850 = vld [vmem:[%s3 + $0x230] sm:$0xf]
      %v3851 = vld [vmem:[%s3 + $0x234] sm:$0xf]
      %v3852 = vld [vmem:[%s3 + $0x238] sm:$0xf]
      %v3853 = vld [vmem:[%s3 + $0x23c] sm:$0xf]
      %v3854 = vld [vmem:[%s4] sm:$0x1]
      %v3856 = vlaneseq
      %v3857 = vshrl.u32 %v3856, 7
      %v3858 = vsub.s32 0, %v3857
      %v3859 = vrot.slane %v3854, %v3858
      %v4021 = vunpack.c.l.b16 %v3550
      %v4022 = vunpack.c.h.b16 %v3550
      %v4023 = vunpack.c.l.b16 %v3551
      %v4024 = vunpack.c.h.b16 %v3551
      %v4025 = vunpack.c.l.b16 %v3552
      %v4026 = vunpack.c.h.b16 %v3552
      %v4027 = vunpack.c.l.b16 %v3553
      %v4028 = vunpack.c.h.b16 %v3553
      %v4029 = vunpack.c.l.b16 %v3554
      %v4030 = vunpack.c.l.b16 %v3555
      %v4031 = vunpack.c.h.b16 %v3555
      %v4032 = vunpack.c.l.b16 %v3556
      %v4033 = vunpack.c.h.b16 %v3556
      %v4034 = vunpack.c.l.b16 %v3557
      %v4035 = vunpack.c.h.b16 %v3557
      %v4036 = vunpack.c.l.b16 %v3558
      %v4037 = vunpack.c.h.b16 %v3558
      %v4038 = vunpack.c.l.b16 %v3559
      %v4039 = vunpack.c.l.b16 %v3560
      %v4040 = vunpack.c.h.b16 %v3560
      %v4041 = vunpack.c.l.b16 %v3561
      %v4042 = vunpack.c.h.b16 %v3561
      %v4043 = vunpack.c.l.b16 %v3562
      %v4044 = vunpack.c.h.b16 %v3562
      %v4045 = vunpack.c.l.b16 %v3563
      %v4046 = vunpack.c.h.b16 %v3563
      %v4047 = vunpack.c.l.b16 %v3564
      %v4048 = vunpack.c.l.b16 %v3565
      %v4049 = vunpack.c.h.b16 %v3565
      %v4050 = vunpack.c.l.b16 %v3566
      %v4051 = vunpack.c.h.b16 %v3566
      %v4052 = vunpack.c.l.b16 %v3567
      %v4053 = vunpack.c.h.b16 %v3567
      %v4054 = vunpack.c.l.b16 %v3568
      %v4055 = vunpack.c.h.b16 %v3568
      %v4056 = vunpack.c.l.b16 %v3569
      %v4057 = vunpack.c.l.b16 %v3570
      %v4058 = vunpack.c.h.b16 %v3570
      %v4059 = vunpack.c.l.b16 %v3571
      %v4060 = vunpack.c.h.b16 %v3571
      %v4061 = vunpack.c.l.b16 %v3572
      %v4062 = vunpack.c.h.b16 %v3572
      %v4063 = vunpack.c.l.b16 %v3573
      %v4064 = vunpack.c.h.b16 %v3573
      %v4065 = vunpack.c.l.b16 %v3574
      %v4066 = vunpack.c.l.b16 %v3575
      %v4067 = vunpack.c.h.b16 %v3575
      %v4068 = vunpack.c.l.b16 %v3576
      %v4069 = vunpack.c.h.b16 %v3576
      %v4070 = vunpack.c.l.b16 %v3577
      %v4071 = vunpack.c.h.b16 %v3577
      %v4072 = vunpack.c.l.b16 %v3578
      %v4073 = vunpack.c.h.b16 %v3578
      %v4074 = vunpack.c.l.b16 %v3579
      %v4075 = vunpack.c.l.b16 %v3580
      %v4076 = vunpack.c.h.b16 %v3580
      %v4077 = vunpack.c.l.b16 %v3581
      %v4078 = vunpack.c.h.b16 %v3581
      %v4079 = vunpack.c.l.b16 %v3582
      %v4080 = vunpack.c.h.b16 %v3582
      %v4081 = vunpack.c.l.b16 %v3583
      %v4082 = vunpack.c.h.b16 %v3583
      %v4083 = vunpack.c.l.b16 %v3584
      %v4084 = vunpack.c.l.b16 %v3585
      %v4085 = vunpack.c.h.b16 %v3585
      %v4086 = vunpack.c.l.b16 %v3586
      %v4087 = vunpack.c.h.b16 %v3586
      %v4088 = vunpack.c.l.b16 %v3587
      %v4089 = vunpack.c.h.b16 %v3587
      %v4090 = vunpack.c.l.b16 %v3588
      %v4091 = vunpack.c.h.b16 %v3588
      %v4092 = vunpack.c.l.b16 %v3589
      %v4093 = vunpack.c.l.b16 %v3590
      %v4094 = vunpack.c.h.b16 %v3590
      %v4095 = vunpack.c.l.b16 %v3591
      %v4096 = vunpack.c.h.b16 %v3591
      %v4097 = vunpack.c.l.b16 %v3592
      %v4098 = vunpack.c.h.b16 %v3592
      %v4099 = vunpack.c.l.b16 %v3593
      %v4100 = vunpack.c.h.b16 %v3593
      %v4101 = vunpack.c.l.b16 %v3594
      %v4102 = vunpack.c.l.b16 %v3595
      %v4103 = vunpack.c.h.b16 %v3595
      %v4104 = vunpack.c.l.b16 %v3596
      %v4105 = vunpack.c.h.b16 %v3596
      %v4106 = vunpack.c.l.b16 %v3597
      %v4107 = vunpack.c.h.b16 %v3597
      %v4108 = vunpack.c.l.b16 %v3598
      %v4109 = vunpack.c.h.b16 %v3598
      %v4110 = vunpack.c.l.b16 %v3599
      %v4111 = vunpack.c.l.b16 %v3600
      %v4112 = vunpack.c.h.b16 %v3600
      %v4113 = vunpack.c.l.b16 %v3601
      %v4114 = vunpack.c.h.b16 %v3601
      %v4115 = vunpack.c.l.b16 %v3602
      %v4116 = vunpack.c.h.b16 %v3602
      %v4117 = vunpack.c.l.b16 %v3603
      %v4118 = vunpack.c.h.b16 %v3603
      %v4119 = vunpack.c.l.b16 %v3604
      %v4120 = vunpack.c.l.b16 %v3605
      %v4121 = vunpack.c.h.b16 %v3605
      %v4122 = vunpack.c.l.b16 %v3606
      %v4123 = vunpack.c.h.b16 %v3606
      %v4124 = vunpack.c.l.b16 %v3607
      %v4125 = vunpack.c.h.b16 %v3607
      %v4126 = vunpack.c.l.b16 %v3608
      %v4127 = vunpack.c.h.b16 %v3608
      %v4128 = vunpack.c.l.b16 %v3609
      %v4129 = vunpack.c.l.b16 %v3610
      %v4130 = vunpack.c.h.b16 %v3610
      %v4131 = vunpack.c.l.b16 %v3611
      %v4132 = vunpack.c.h.b16 %v3611
      %v4133 = vunpack.c.l.b16 %v3612
      %v4134 = vunpack.c.h.b16 %v3612
      %v4135 = vunpack.c.l.b16 %v3613
      %v4136 = vunpack.c.h.b16 %v3613
      %v4137 = vunpack.c.l.b16 %v3614
      %v4138 = vunpack.c.l.b16 %v3615
      %v4139 = vunpack.c.h.b16 %v3615
      %v4140 = vunpack.c.l.b16 %v3616
      %v4141 = vunpack.c.h.b16 %v3616
      %v4142 = vunpack.c.l.b16 %v3617
      %v4143 = vunpack.c.h.b16 %v3617
      %v4144 = vunpack.c.l.b16 %v3618
      %v4145 = vunpack.c.h.b16 %v3618
      %v4146 = vunpack.c.l.b16 %v3619
      %v4147 = vunpack.c.l.b16 %v3620
      %v4148 = vunpack.c.h.b16 %v3620
      %v4149 = vunpack.c.l.b16 %v3621
      %v4150 = vunpack.c.h.b16 %v3621
      %v4151 = vunpack.c.l.b16 %v3622
      %v4152 = vunpack.c.h.b16 %v3622
      %v4153 = vunpack.c.l.b16 %v3623
      %v4154 = vunpack.c.h.b16 %v3623
      %v4155 = vunpack.c.l.b16 %v3624
      %v4156 = vunpack.c.l.b16 %v3625
      %v4157 = vunpack.c.h.b16 %v3625
      %v4158 = vunpack.c.l.b16 %v3626
      %v4159 = vunpack.c.h.b16 %v3626
      %v4160 = vunpack.c.l.b16 %v3627
      %v4161 = vunpack.c.h.b16 %v3627
      %v4162 = vunpack.c.l.b16 %v3628
      %v4163 = vunpack.c.h.b16 %v3628
      %v4164 = vunpack.c.l.b16 %v3629
      %v4165 = vunpack.c.l.b16 %v3630
      %v4166 = vunpack.c.h.b16 %v3630
      %v4167 = vunpack.c.l.b16 %v3631
      %v4168 = vunpack.c.h.b16 %v3631
      %v4169 = vunpack.c.l.b16 %v3632
      %v4170 = vunpack.c.h.b16 %v3632
      %v4171 = vunpack.c.l.b16 %v3633
      %v4172 = vunpack.c.h.b16 %v3633
      %v4173 = vunpack.c.l.b16 %v3634
      %v4174 = vunpack.c.l.b16 %v3635
      %v4175 = vunpack.c.h.b16 %v3635
      %v4176 = vunpack.c.l.b16 %v3636
      %v4177 = vunpack.c.h.b16 %v3636
      %v4178 = vunpack.c.l.b16 %v3637
      %v4179 = vunpack.c.h.b16 %v3637
      %v4180 = vunpack.c.l.b16 %v3638
      %v4181 = vunpack.c.h.b16 %v3638
      %v4182 = vunpack.c.l.b16 %v3639
      %v4183 = vunpack.c.l.b16 %v3640
      %v4184 = vunpack.c.h.b16 %v3640
      %v4185 = vunpack.c.l.b16 %v3641
      %v4186 = vunpack.c.h.b16 %v3641
      %v4187 = vunpack.c.l.b16 %v3642
      %v4188 = vunpack.c.h.b16 %v3642
      %v4189 = vunpack.c.l.b16 %v3643
      %v4190 = vunpack.c.h.b16 %v3643
      %v4191 = vunpack.c.l.b16 %v3644
      %v4192 = vunpack.c.l.b16 %v3645
      %v4193 = vunpack.c.h.b16 %v3645
      %v4194 = vunpack.c.l.b16 %v3646
      %v4195 = vunpack.c.h.b16 %v3646
      %v4196 = vunpack.c.l.b16 %v3647
      %v4197 = vunpack.c.h.b16 %v3647
      %v4198 = vunpack.c.l.b16 %v3648
      %v4199 = vunpack.c.h.b16 %v3648
      %v4200 = vunpack.c.l.b16 %v3649
      %v4201 = vunpack.c.l.b16 %v3650
      %v4202 = vunpack.c.h.b16 %v3650
      %v4203 = vunpack.c.l.b16 %v3651
      %v4204 = vunpack.c.h.b16 %v3651
      %v4205 = vunpack.c.l.b16 %v3652
      %v4206 = vunpack.c.h.b16 %v3652
      %v4207 = vunpack.c.l.b16 %v3653
      %v4208 = vunpack.c.h.b16 %v3653
      %v4209 = vunpack.c.l.b16 %v3654
      %v4210 = vunpack.c.l.b16 %v3655
      %v4211 = vunpack.c.h.b16 %v3655
      %v4212 = vunpack.c.l.b16 %v3656
      %v4213 = vunpack.c.h.b16 %v3656
      %v4214 = vunpack.c.l.b16 %v3657
      %v4215 = vunpack.c.h.b16 %v3657
      %v4216 = vunpack.c.l.b16 %v3658
      %v4217 = vunpack.c.h.b16 %v3658
      %v4218 = vunpack.c.l.b16 %v3659
      %v4219 = vunpack.c.l.b16 %v3660
      %v4220 = vunpack.c.h.b16 %v3660
      %v4221 = vunpack.c.l.b16 %v3661
      %v4222 = vunpack.c.h.b16 %v3661
      %v4223 = vunpack.c.l.b16 %v3662
      %v4224 = vunpack.c.h.b16 %v3662
      %v4225 = vunpack.c.l.b16 %v3663
      %v4226 = vunpack.c.h.b16 %v3663
      %v4227 = vunpack.c.l.b16 %v3664
      %v4228 = vunpack.c.l.b16 %v3665
      %v4229 = vunpack.c.h.b16 %v3665
      %v4230 = vunpack.c.l.b16 %v3666
      %v4231 = vunpack.c.h.b16 %v3666
      %v4232 = vunpack.c.l.b16 %v3667
      %v4233 = vunpack.c.h.b16 %v3667
      %v4234 = vunpack.c.l.b16 %v3668
      %v4235 = vunpack.c.h.b16 %v3668
      %v4236 = vunpack.c.l.b16 %v3669
      %v4237 = vunpack.c.l.b16 %v3670
      %v4238 = vunpack.c.h.b16 %v3670
      %v4239 = vunpack.c.l.b16 %v3671
      %v4240 = vunpack.c.h.b16 %v3671
      %v4241 = vunpack.c.l.b16 %v3672
      %v4242 = vunpack.c.h.b16 %v3672
      %v4243 = vunpack.c.l.b16 %v3673
      %v4244 = vunpack.c.h.b16 %v3673
      %v4245 = vunpack.c.l.b16 %v3674
      %v4246 = vunpack.c.l.b16 %v3675
      %v4247 = vunpack.c.h.b16 %v3675
      %v4248 = vunpack.c.l.b16 %v3676
      %v4249 = vunpack.c.h.b16 %v3676
      %v4250 = vunpack.c.l.b16 %v3677
      %v4251 = vunpack.c.h.b16 %v3677
      %v4252 = vunpack.c.l.b16 %v3678
      %v4253 = vunpack.c.h.b16 %v3678
      %v4254 = vunpack.c.l.b16 %v3679
      %v4255 = vunpack.c.l.b16 %v3680
      %v4256 = vunpack.c.h.b16 %v3680
      %v4257 = vunpack.c.l.b16 %v3681
      %v4258 = vunpack.c.h.b16 %v3681
      %v4259 = vunpack.c.l.b16 %v3682
      %v4260 = vunpack.c.h.b16 %v3682
      %v4261 = vunpack.c.l.b16 %v3683
      %v4262 = vunpack.c.h.b16 %v3683
      %v4263 = vunpack.c.l.b16 %v3684
      %v4264 = vunpack.c.l.b16 %v3685
      %v4265 = vunpack.c.h.b16 %v3685
      %v4266 = vunpack.c.l.b16 %v3686
      %v4267 = vunpack.c.h.b16 %v3686
      %v4268 = vunpack.c.l.b16 %v3687
      %v4269 = vunpack.c.h.b16 %v3687
      %v4270 = vunpack.c.l.b16 %v3688
      %v4271 = vunpack.c.h.b16 %v3688
      %v4272 = vunpack.c.l.b16 %v3689
      %v4273 = vunpack.c.l.b16 %v3690
      %v4274 = vunpack.c.h.b16 %v3690
      %v4275 = vunpack.c.l.b16 %v3691
      %v4276 = vunpack.c.h.b16 %v3691
      %v4277 = vunpack.c.l.b16 %v3692
      %v4278 = vunpack.c.h.b16 %v3692
      %v4279 = vunpack.c.l.b16 %v3693
      %v4280 = vunpack.c.h.b16 %v3693
      %v4281 = vunpack.c.l.b16 %v3694
      %v4282 = vunpack.c.l.b16 %v3695
      %v4283 = vunpack.c.h.b16 %v3695
      %v4284 = vunpack.c.l.b16 %v3696
      %v4285 = vunpack.c.h.b16 %v3696
      %v4286 = vunpack.c.l.b16 %v3697
      %v4287 = vunpack.c.h.b16 %v3697
      %v4288 = vunpack.c.l.b16 %v3698
      %v4289 = vunpack.c.h.b16 %v3698
      %v4290 = vunpack.c.l.b16 %v3699
      %v4291 = vunpack.c.l.b16 %v3700
      %v4292 = vunpack.c.h.b16 %v3700
      %v4293 = vunpack.c.l.b16 %v3701
      %v4294 = vunpack.c.h.b16 %v3701
      %v4295 = vunpack.c.l.b16 %v3702
      %v4296 = vunpack.c.h.b16 %v3702
      %v4297 = vunpack.c.l.b16 %v3703
      %v4298 = vunpack.c.h.b16 %v3703
      %v4299 = vunpack.c.l.b16 %v3704
      %v4300 = vunpack.c.l.b16 %v3705
      %v4301 = vunpack.c.h.b16 %v3705
      %v4302 = vunpack.c.l.b16 %v3706
      %v4303 = vunpack.c.h.b16 %v3706
      %v4304 = vunpack.c.l.b16 %v3707
      %v4305 = vunpack.c.h.b16 %v3707
      %v4306 = vunpack.c.l.b16 %v3708
      %v4307 = vunpack.c.h.b16 %v3708
      %v4308 = vunpack.c.l.b16 %v3709
      %v4309 = vpack.c.b16 %v4030, %v4021
      %v4310 = vpack.c.b16 %v4031, %v4022
      %v4311 = vpack.c.b16 %v4032, %v4023
      %v4312 = vpack.c.b16 %v4033, %v4024
      %v4313 = vpack.c.b16 %v4034, %v4025
      %v4314 = vpack.c.b16 %v4035, %v4026
      %v4315 = vpack.c.b16 %v4036, %v4027
      %v4316 = vpack.c.b16 %v4037, %v4028
      %v4317 = vpack.c.b16 %v4038, %v4029
      %v4318 = vpack.c.b16 %v4048, %v4039
      %v4319 = vpack.c.b16 %v4049, %v4040
      %v4320 = vpack.c.b16 %v4050, %v4041
      %v4321 = vpack.c.b16 %v4051, %v4042
      %v4322 = vpack.c.b16 %v4052, %v4043
      %v4323 = vpack.c.b16 %v4053, %v4044
      %v4324 = vpack.c.b16 %v4054, %v4045
      %v4325 = vpack.c.b16 %v4055, %v4046
      %v4326 = vpack.c.b16 %v4056, %v4047
      %v4327 = vpack.c.b16 %v4066, %v4057
      %v4328 = vpack.c.b16 %v4067, %v4058
      %v4329 = vpack.c.b16 %v4068, %v4059
      %v4330 = vpack.c.b16 %v4069, %v4060
      %v4331 = vpack.c.b16 %v4070, %v4061
      %v4332 = vpack.c.b16 %v4071, %v4062
      %v4333 = vpack.c.b16 %v4072, %v4063
      %v4334 = vpack.c.b16 %v4073, %v4064
      %v4335 = vpack.c.b16 %v4074, %v4065
      %v4336 = vpack.c.b16 %v4084, %v4075
      %v4337 = vpack.c.b16 %v4085, %v4076
      %v4338 = vpack.c.b16 %v4086, %v4077
      %v4339 = vpack.c.b16 %v4087, %v4078
      %v4340 = vpack.c.b16 %v4088, %v4079
      %v4341 = vpack.c.b16 %v4089, %v4080
      %v4342 = vpack.c.b16 %v4090, %v4081
      %v4343 = vpack.c.b16 %v4091, %v4082
      %v4344 = vpack.c.b16 %v4092, %v4083
      %v4345 = vpack.c.b16 %v4102, %v4093
      %v4346 = vpack.c.b16 %v4103, %v4094
      %v4347 = vpack.c.b16 %v4104, %v4095
      %v4348 = vpack.c.b16 %v4105, %v4096
      %v4349 = vpack.c.b16 %v4106, %v4097
      %v4350 = vpack.c.b16 %v4107, %v4098
      %v4351 = vpack.c.b16 %v4108, %v4099
      %v4352 = vpack.c.b16 %v4109, %v4100
      %v4353 = vpack.c.b16 %v4110, %v4101
      %v4354 = vpack.c.b16 %v4120, %v4111
      %v4355 = vpack.c.b16 %v4121, %v4112
      %v4356 = vpack.c.b16 %v4122, %v4113
      %v4357 = vpack.c.b16 %v4123, %v4114
      %v4358 = vpack.c.b16 %v4124, %v4115
      %v4359 = vpack.c.b16 %v4125, %v4116
      %v4360 = vpack.c.b16 %v4126, %v4117
      %v4361 = vpack.c.b16 %v4127, %v4118
      %v4362 = vpack.c.b16 %v4128, %v4119
      %v4363 = vpack.c.b16 %v4138, %v4129
      %v4364 = vpack.c.b16 %v4139, %v4130
      %v4365 = vpack.c.b16 %v4140, %v4131
      %v4366 = vpack.c.b16 %v4141, %v4132
      %v4367 = vpack.c.b16 %v4142, %v4133
      %v4368 = vpack.c.b16 %v4143, %v4134
      %v4369 = vpack.c.b16 %v4144, %v4135
      %v4370 = vpack.c.b16 %v4145, %v4136
      %v4371 = vpack.c.b16 %v4146, %v4137
      %v4372 = vpack.c.b16 %v4156, %v4147
      %v4373 = vpack.c.b16 %v4157, %v4148
      %v4374 = vpack.c.b16 %v4158, %v4149
      %v4375 = vpack.c.b16 %v4159, %v4150
      %v4376 = vpack.c.b16 %v4160, %v4151
      %v4377 = vpack.c.b16 %v4161, %v4152
      %v4378 = vpack.c.b16 %v4162, %v4153
      %v4379 = vpack.c.b16 %v4163, %v4154
      %v4380 = vpack.c.b16 %v4164, %v4155
      %v4381 = vpack.c.b16 %v4174, %v4165
      %v4382 = vpack.c.b16 %v4175, %v4166
      %v4383 = vpack.c.b16 %v4176, %v4167
      %v4384 = vpack.c.b16 %v4177, %v4168
      %v4385 = vpack.c.b16 %v4178, %v4169
      %v4386 = vpack.c.b16 %v4179, %v4170
      %v4387 = vpack.c.b16 %v4180, %v4171
      %v4388 = vpack.c.b16 %v4181, %v4172
      %v4389 = vpack.c.b16 %v4182, %v4173
      %v4390 = vpack.c.b16 %v4192, %v4183
      %v4391 = vpack.c.b16 %v4193, %v4184
      %v4392 = vpack.c.b16 %v4194, %v4185
      %v4393 = vpack.c.b16 %v4195, %v4186
      %v4394 = vpack.c.b16 %v4196, %v4187
      %v4395 = vpack.c.b16 %v4197, %v4188
      %v4396 = vpack.c.b16 %v4198, %v4189
      %v4397 = vpack.c.b16 %v4199, %v4190
      %v4398 = vpack.c.b16 %v4200, %v4191
      %v4399 = vpack.c.b16 %v4210, %v4201
      %v4400 = vpack.c.b16 %v4211, %v4202
      %v4401 = vpack.c.b16 %v4212, %v4203
      %v4402 = vpack.c.b16 %v4213, %v4204
      %v4403 = vpack.c.b16 %v4214, %v4205
      %v4404 = vpack.c.b16 %v4215, %v4206
      %v4405 = vpack.c.b16 %v4216, %v4207
      %v4406 = vpack.c.b16 %v4217, %v4208
      %v4407 = vpack.c.b16 %v4218, %v4209
      %v4408 = vpack.c.b16 %v4228, %v4219
      %v4409 = vpack.c.b16 %v4229, %v4220
      %v4410 = vpack.c.b16 %v4230, %v4221
      %v4411 = vpack.c.b16 %v4231, %v4222
      %v4412 = vpack.c.b16 %v4232, %v4223
      %v4413 = vpack.c.b16 %v4233, %v4224
      %v4414 = vpack.c.b16 %v4234, %v4225
      %v4415 = vpack.c.b16 %v4235, %v4226
      %v4416 = vpack.c.b16 %v4236, %v4227
      %v4417 = vpack.c.b16 %v4246, %v4237
      %v4418 = vpack.c.b16 %v4247, %v4238
      %v4419 = vpack.c.b16 %v4248, %v4239
      %v4420 = vpack.c.b16 %v4249, %v4240
      %v4421 = vpack.c.b16 %v4250, %v4241
      %v4422 = vpack.c.b16 %v4251, %v4242
      %v4423 = vpack.c.b16 %v4252, %v4243
      %v4424 = vpack.c.b16 %v4253, %v4244
      %v4425 = vpack.c.b16 %v4254, %v4245
      %v4426 = vpack.c.b16 %v4264, %v4255
      %v4427 = vpack.c.b16 %v4265, %v4256
      %v4428 = vpack.c.b16 %v4266, %v4257
      %v4429 = vpack.c.b16 %v4267, %v4258
      %v4430 = vpack.c.b16 %v4268, %v4259
      %v4431 = vpack.c.b16 %v4269, %v4260
      %v4432 = vpack.c.b16 %v4270, %v4261
      %v4433 = vpack.c.b16 %v4271, %v4262
      %v4434 = vpack.c.b16 %v4272, %v4263
      %v4435 = vpack.c.b16 %v4282, %v4273
      %v4436 = vpack.c.b16 %v4283, %v4274
      %v4437 = vpack.c.b16 %v4284, %v4275
      %v4438 = vpack.c.b16 %v4285, %v4276
      %v4439 = vpack.c.b16 %v4286, %v4277
      %v4440 = vpack.c.b16 %v4287, %v4278
      %v4441 = vpack.c.b16 %v4288, %v4279
      %v4442 = vpack.c.b16 %v4289, %v4280
      %v4443 = vpack.c.b16 %v4290, %v4281
      %v4444 = vpack.c.b16 %v4300, %v4291
      %v4445 = vpack.c.b16 %v4301, %v4292
      %v4446 = vpack.c.b16 %v4302, %v4293
      %v4447 = vpack.c.b16 %v4303, %v4294
      %v4448 = vpack.c.b16 %v4304, %v4295
      %v4449 = vpack.c.b16 %v4305, %v4296
      %v4450 = vpack.c.b16 %v4306, %v4297
      %v4451 = vpack.c.b16 %v4307, %v4298
      %v4452 = vpack.c.b16 %v4308, %v4299
      %v4741 = vunpack.c.l.b16 %v3710
      %v4742 = vunpack.c.l.b16 %v3711
      %v4743 = vunpack.c.l.b16 %v3712
      %v4744 = vunpack.c.l.b16 %v3713
      %v4745 = vunpack.c.l.b16 %v3714
      %v4746 = vunpack.c.l.b16 %v3715
      %v4747 = vunpack.c.l.b16 %v3716
      %v4748 = vunpack.c.l.b16 %v3717
      %v4749 = vunpack.c.l.b16 %v3718
      %v4750 = vunpack.c.l.b16 %v3719
      %v4751 = vunpack.c.l.b16 %v3720
      %v4752 = vunpack.c.l.b16 %v3721
      %v4753 = vunpack.c.l.b16 %v3722
      %v4754 = vunpack.c.l.b16 %v3723
      %v4755 = vunpack.c.l.b16 %v3724
      %v4756 = vunpack.c.l.b16 %v3725
      %v4757 = vunpack.c.l.b16 %v3726
      %v4758 = vunpack.c.l.b16 %v3727
      %v4759 = vunpack.c.l.b16 %v3728
      %v4760 = vunpack.c.l.b16 %v3729
      %v4761 = vunpack.c.l.b16 %v3730
      %v4762 = vunpack.c.l.b16 %v3731
      %v4763 = vunpack.c.l.b16 %v3732
      %v4764 = vunpack.c.l.b16 %v3733
      %v4765 = vunpack.c.l.b16 %v3734
      %v4766 = vunpack.c.l.b16 %v3735
      %v4767 = vunpack.c.l.b16 %v3736
      %v4768 = vunpack.c.l.b16 %v3737
      %v4769 = vunpack.c.l.b16 %v3738
      %v4770 = vunpack.c.l.b16 %v3739
      %v4771 = vunpack.c.l.b16 %v3740
      %v4772 = vunpack.c.l.b16 %v3741
      %v4773 = vunpack.c.l.b16 %v3742
      %v4774 = vunpack.c.l.b16 %v3743
      %v4775 = vunpack.c.l.b16 %v3744
      %v4776 = vunpack.c.l.b16 %v3745
      %v4777 = vunpack.c.l.b16 %v3746
      %v4778 = vunpack.c.l.b16 %v3747
      %v4779 = vunpack.c.l.b16 %v3748
      %v4780 = vunpack.c.l.b16 %v3749
      %v4781 = vunpack.c.l.b16 %v3750
      %v4782 = vunpack.c.l.b16 %v3751
      %v4783 = vunpack.c.l.b16 %v3752
      %v4784 = vunpack.c.l.b16 %v3753
      %v4785 = vunpack.c.l.b16 %v3754
      %v4786 = vunpack.c.l.b16 %v3755
      %v4787 = vunpack.c.l.b16 %v3756
      %v4788 = vunpack.c.l.b16 %v3757
      %v4789 = vunpack.c.l.b16 %v3758
      %v4790 = vunpack.c.l.b16 %v3759
      %v4791 = vunpack.c.l.b16 %v3760
      %v4792 = vunpack.c.l.b16 %v3761
      %v4793 = vunpack.c.l.b16 %v3762
      %v4794 = vunpack.c.l.b16 %v3763
      %v4795 = vunpack.c.l.b16 %v3764
      %v4796 = vunpack.c.l.b16 %v3765
      %v4797 = vunpack.c.l.b16 %v3766
      %v4798 = vunpack.c.l.b16 %v3767
      %v4799 = vunpack.c.l.b16 %v3768
      %v4800 = vunpack.c.l.b16 %v3769
      %v4801 = vunpack.c.l.b16 %v3770
      %v4802 = vunpack.c.l.b16 %v3771
      %v4803 = vunpack.c.l.b16 %v3772
      %v4804 = vunpack.c.l.b16 %v3773
      %v4805 = vunpack.c.l.b16 %v3774
      %v4806 = vunpack.c.l.b16 %v3775
      %v4807 = vunpack.c.l.b16 %v3776
      %v4808 = vunpack.c.l.b16 %v3777
      %v4809 = vunpack.c.l.b16 %v3778
      %v4810 = vunpack.c.l.b16 %v3779
      %v4811 = vunpack.c.l.b16 %v3780
      %v4812 = vunpack.c.l.b16 %v3781
      %v4813 = vunpack.c.l.b16 %v3782
      %v4814 = vunpack.c.l.b16 %v3783
      %v4815 = vunpack.c.l.b16 %v3784
      %v4816 = vunpack.c.l.b16 %v3785
      %v4817 = vunpack.c.l.b16 %v3786
      %v4818 = vunpack.c.l.b16 %v3787
      %v4819 = vunpack.c.l.b16 %v3788
      %v4820 = vunpack.c.l.b16 %v3789
      %v4821 = vunpack.c.l.b16 %v3790
      %v4822 = vunpack.c.l.b16 %v3791
      %v4823 = vunpack.c.l.b16 %v3792
      %v4824 = vunpack.c.l.b16 %v3793
      %v4825 = vunpack.c.l.b16 %v3794
      %v4826 = vunpack.c.l.b16 %v3795
      %v4827 = vunpack.c.l.b16 %v3796
      %v4828 = vunpack.c.l.b16 %v3797
      %v4829 = vunpack.c.l.b16 %v3798
      %v4830 = vunpack.c.l.b16 %v3799
      %v4831 = vunpack.c.l.b16 %v3800
      %v4832 = vunpack.c.l.b16 %v3801
      %v4833 = vunpack.c.l.b16 %v3802
      %v4834 = vunpack.c.l.b16 %v3803
      %v4835 = vunpack.c.l.b16 %v3804
      %v4836 = vunpack.c.l.b16 %v3805
      %v4837 = vunpack.c.l.b16 %v3806
      %v4838 = vunpack.c.l.b16 %v3807
      %v4839 = vunpack.c.l.b16 %v3808
      %v4840 = vunpack.c.l.b16 %v3809
      %v4841 = vunpack.c.l.b16 %v3810
      %v4842 = vunpack.c.l.b16 %v3811
      %v4843 = vunpack.c.l.b16 %v3812
      %v4844 = vunpack.c.l.b16 %v3813
      %v4845 = vunpack.c.l.b16 %v3814
      %v4846 = vunpack.c.l.b16 %v3815
      %v4847 = vunpack.c.l.b16 %v3816
      %v4848 = vunpack.c.l.b16 %v3817
      %v4849 = vunpack.c.l.b16 %v3818
      %v4850 = vunpack.c.l.b16 %v3819
      %v4851 = vunpack.c.l.b16 %v3820
      %v4852 = vunpack.c.l.b16 %v3821
      %v4853 = vunpack.c.l.b16 %v3822
      %v4854 = vunpack.c.l.b16 %v3823
      %v4855 = vunpack.c.l.b16 %v3824
      %v4856 = vunpack.c.l.b16 %v3825
      %v4857 = vunpack.c.l.b16 %v3826
      %v4858 = vunpack.c.l.b16 %v3827
      %v4859 = vunpack.c.l.b16 %v3828
      %v4860 = vunpack.c.l.b16 %v3829
      %v4861 = vunpack.c.l.b16 %v3830
      %v4862 = vunpack.c.l.b16 %v3831
      %v4863 = vunpack.c.l.b16 %v3832
      %v4864 = vunpack.c.l.b16 %v3833
      %v4865 = vunpack.c.l.b16 %v3834
      %v4866 = vunpack.c.l.b16 %v3835
      %v4867 = vunpack.c.l.b16 %v3836
      %v4868 = vunpack.c.l.b16 %v3837
      %v4869 = vunpack.c.l.b16 %v3838
      %v4870 = vunpack.c.l.b16 %v3839
      %v4871 = vunpack.c.l.b16 %v3840
      %v4872 = vunpack.c.l.b16 %v3841
      %v4873 = vunpack.c.l.b16 %v3842
      %v4874 = vunpack.c.l.b16 %v3843
      %v4875 = vunpack.c.l.b16 %v3844
      %v4876 = vunpack.c.l.b16 %v3845
      %v4877 = vunpack.c.l.b16 %v3846
      %v4878 = vunpack.c.l.b16 %v3847
      %v4879 = vunpack.c.l.b16 %v3848
      %v4880 = vunpack.c.l.b16 %v3849
      %v4881 = vunpack.c.l.b16 %v3850
      %v4882 = vunpack.c.l.b16 %v3851
      %v4883 = vunpack.c.l.b16 %v3852
      %v4884 = vunpack.c.l.b16 %v3853
      %v4885 = vpack.c.b16 %v4742, %v4741
      %v4886 = vpack.c.b16 %v4744, %v4743
      %v4887 = vpack.c.b16 %v4746, %v4745
      %v4888 = vpack.c.b16 %v4748, %v4747
      %v4889 = vpack.c.b16 %v4750, %v4749
      %v4890 = vpack.c.b16 %v4752, %v4751
      %v4891 = vpack.c.b16 %v4754, %v4753
      %v4892 = vpack.c.b16 %v4756, %v4755
      %v4893 = vpack.c.b16 %v4758, %v4757
      %v4894 = vpack.c.b16 %v4760, %v4759
      %v4895 = vpack.c.b16 %v4762, %v4761
      %v4896 = vpack.c.b16 %v4764, %v4763
      %v4897 = vpack.c.b16 %v4766, %v4765
      %v4898 = vpack.c.b16 %v4768, %v4767
      %v4899 = vpack.c.b16 %v4770, %v4769
      %v4900 = vpack.c.b16 %v4772, %v4771
      %v4901 = vpack.c.b16 %v4774, %v4773
      %v4902 = vpack.c.b16 %v4776, %v4775
      %v4903 = vpack.c.b16 %v4778, %v4777
      %v4904 = vpack.c.b16 %v4780, %v4779
      %v4905 = vpack.c.b16 %v4782, %v4781
      %v4906 = vpack.c.b16 %v4784, %v4783
      %v4907 = vpack.c.b16 %v4786, %v4785
      %v4908 = vpack.c.b16 %v4788, %v4787
      %v4909 = vpack.c.b16 %v4790, %v4789
      %v4910 = vpack.c.b16 %v4792, %v4791
      %v4911 = vpack.c.b16 %v4794, %v4793
      %v4912 = vpack.c.b16 %v4796, %v4795
      %v4913 = vpack.c.b16 %v4798, %v4797
      %v4914 = vpack.c.b16 %v4800, %v4799
      %v4915 = vpack.c.b16 %v4802, %v4801
      %v4916 = vpack.c.b16 %v4804, %v4803
      %v4917 = vpack.c.b16 %v4806, %v4805
      %v4918 = vpack.c.b16 %v4808, %v4807
      %v4919 = vpack.c.b16 %v4810, %v4809
      %v4920 = vpack.c.b16 %v4812, %v4811
      %v4921 = vpack.c.b16 %v4814, %v4813
      %v4922 = vpack.c.b16 %v4816, %v4815
      %v4923 = vpack.c.b16 %v4818, %v4817
      %v4924 = vpack.c.b16 %v4820, %v4819
      %v4925 = vpack.c.b16 %v4822, %v4821
      %v4926 = vpack.c.b16 %v4824, %v4823
      %v4927 = vpack.c.b16 %v4826, %v4825
      %v4928 = vpack.c.b16 %v4828, %v4827
      %v4929 = vpack.c.b16 %v4830, %v4829
      %v4930 = vpack.c.b16 %v4832, %v4831
      %v4931 = vpack.c.b16 %v4834, %v4833
      %v4932 = vpack.c.b16 %v4836, %v4835
      %v4933 = vpack.c.b16 %v4838, %v4837
      %v4934 = vpack.c.b16 %v4840, %v4839
      %v4935 = vpack.c.b16 %v4842, %v4841
      %v4936 = vpack.c.b16 %v4844, %v4843
      %v4937 = vpack.c.b16 %v4846, %v4845
      %v4938 = vpack.c.b16 %v4848, %v4847
      %v4939 = vpack.c.b16 %v4850, %v4849
      %v4940 = vpack.c.b16 %v4852, %v4851
      %v4941 = vpack.c.b16 %v4854, %v4853
      %v4942 = vpack.c.b16 %v4856, %v4855
      %v4943 = vpack.c.b16 %v4858, %v4857
      %v4944 = vpack.c.b16 %v4860, %v4859
      %v4945 = vpack.c.b16 %v4862, %v4861
      %v4946 = vpack.c.b16 %v4864, %v4863
      %v4947 = vpack.c.b16 %v4866, %v4865
      %v4948 = vpack.c.b16 %v4868, %v4867
      %v4949 = vpack.c.b16 %v4870, %v4869
      %v4950 = vpack.c.b16 %v4872, %v4871
      %v4951 = vpack.c.b16 %v4874, %v4873
      %v4952 = vpack.c.b16 %v4876, %v4875
      %v4953 = vpack.c.b16 %v4878, %v4877
      %v4954 = vpack.c.b16 %v4880, %v4879
      %v4955 = vpack.c.b16 %v4882, %v4881
      %v4956 = vpack.c.b16 %v4884, %v4883
      %5029 = vmatprep.subr.bf16.mxu0 0
      %5030 = vmatpush1.bf16.msra.mxu0 %v4892
      %5031 = vmatprep.subr.bf16.mxu0 0
      %5032 = vmatpush1.bf16.msra.mxu0 %v4891
      %5033 = vmatprep.subr.bf16.mxu0 0
      %5034 = vmatpush1.bf16.msra.mxu0 %v4890
      %5035 = vmatprep.subr.bf16.mxu0 0
      %5036 = vmatpush1.bf16.msra.mxu0 %v4889
      %5037 = vmatprep.subr.bf16.mxu0 0
      %5038 = vmatpush1.bf16.msra.mxu0 %v4888
      %5039 = vmatprep.subr.bf16.mxu0 0
      %5040 = vmatpush1.bf16.msra.mxu0 %v4887
      %5041 = vmatprep.subr.bf16.mxu0 0
      %5042 = vmatpush1.bf16.msra.mxu0 %v4886
      %5043 = vmatprep.subr.bf16.mxu0 0
      %5044 = vmatpush1.bf16.msra.mxu0 %v4885
      %5045 = vmatprep.subr.bf16.mxu0 0
      %5046 = vmatpush2.bf16.msra.mxu0 %v4900
      %5047 = vmatprep.subr.bf16.mxu0 0
      %5048 = vmatpush2.bf16.msra.mxu0 %v4899
      %5049 = vmatprep.subr.bf16.mxu0 0
      %5050 = vmatpush2.bf16.msra.mxu0 %v4898
      %5051 = vmatprep.subr.bf16.mxu0 0
      %5052 = vmatpush2.bf16.msra.mxu0 %v4897
      %5053 = vmatprep.subr.bf16.mxu0 0
      %5054 = vmatpush2.bf16.msra.mxu0 %v4896
      %5055 = vmatprep.subr.bf16.mxu0 0
      %5056 = vmatpush2.bf16.msra.mxu0 %v4895
      %5057 = vmatprep.subr.bf16.mxu0 0
      %5058 = vmatpush2.bf16.msra.mxu0 %v4894
      %5059 = vmatprep.subr.bf16.mxu0 0
      %5060 = vmatpush2.bf16.msra.mxu0 %v4893
      %5061 = vmatprep.mubr.bf16.mxu0 %v4310
      %5062 = vmatmul.mubr.bf16.gmra.mxu0 %v4309
      %v5063 = vpop.f32.mrf.mxu0
      %v5064 = vadd.f32 %v3859, %v5063
      %v5065 = vpop.f32.mrf.mxu0
      %v5066 = vpop.f32.mrf.mxu0
      %v5067 = vadd.f32 %v3859, %v5066
      %v5068 = vpop.f32.mrf.mxu0
      %5069 = vmatprep.mubr.bf16.mxu0 %v4319
      %5070 = vmatmul.mubr.bf16.gmra.mxu0 %v4318
      %v5071 = vpop.f32.mrf.mxu0
      %v5072 = vadd.f32 %v3859, %v5071
      %v5073 = vpop.f32.mrf.mxu0
      %v5074 = vpop.f32.mrf.mxu0
      %v5075 = vadd.f32 %v3859, %v5074
      %v5076 = vpop.f32.mrf.mxu0
      %5077 = vmatprep.mubr.bf16.mxu0 %v4328
      %5078 = vmatmul.mubr.bf16.gmra.mxu0 %v4327
      %v5079 = vpop.f32.mrf.mxu0
      %v5080 = vadd.f32 %v3859, %v5079
      %v5081 = vpop.f32.mrf.mxu0
      %v5082 = vpop.f32.mrf.mxu0
      %v5083 = vadd.f32 %v3859, %v5082
      %v5084 = vpop.f32.mrf.mxu0
      %5085 = vmatprep.mubr.bf16.mxu0 %v4337
      %5086 = vmatmul.mubr.bf16.gmra.mxu0 %v4336
      %v5087 = vpop.f32.mrf.mxu0
      %v5088 = vadd.f32 %v3859, %v5087
      %v5089 = vpop.f32.mrf.mxu0
      %v5090 = vpop.f32.mrf.mxu0
      %v5091 = vadd.f32 %v3859, %v5090
      %v5092 = vpop.f32.mrf.mxu0
      %5093 = vmatprep.mubr.bf16.mxu0 %v4346
      %5094 = vmatmul.mubr.bf16.gmra.mxu0 %v4345
      %v5095 = vpop.f32.mrf.mxu0
      %v5096 = vadd.f32 %v3859, %v5095
      %v5097 = vpop.f32.mrf.mxu0
      %v5098 = vpop.f32.mrf.mxu0
      %v5099 = vadd.f32 %v3859, %v5098
      %v5100 = vpop.f32.mrf.mxu0
      %5101 = vmatprep.mubr.bf16.mxu0 %v4355
      %5102 = vmatmul.mubr.bf16.gmra.mxu0 %v4354
      %v5103 = vpop.f32.mrf.mxu0
      %v5104 = vadd.f32 %v3859, %v5103
      %v5105 = vpop.f32.mrf.mxu0
      %v5106 = vpop.f32.mrf.mxu0
      %v5107 = vadd.f32 %v3859, %v5106
      %v5108 = vpop.f32.mrf.mxu0
      %5109 = vmatprep.mubr.bf16.mxu0 %v4364
      %5110 = vmatmul.mubr.bf16.gmra.mxu0 %v4363
      %v5111 = vpop.f32.mrf.mxu0
      %v5112 = vadd.f32 %v3859, %v5111
      %v5113 = vpop.f32.mrf.mxu0
      %v5114 = vpop.f32.mrf.mxu0
      %v5115 = vadd.f32 %v3859, %v5114
      %v5116 = vpop.f32.mrf.mxu0
      %5117 = vmatprep.mubr.bf16.mxu0 %v4373
      %5118 = vmatmul.mubr.bf16.gmra.mxu0 %v4372
      %v5119 = vpop.f32.mrf.mxu0
      %v5120 = vadd.f32 %v3859, %v5119
      %v5121 = vpop.f32.mrf.mxu0
      %v5122 = vpop.f32.mrf.mxu0
      %v5123 = vadd.f32 %v3859, %v5122
      %v5124 = vpop.f32.mrf.mxu0
      %5125 = vmatprep.mubr.bf16.mxu0 %v4382
      %5126 = vmatmul.mubr.bf16.gmra.mxu0 %v4381
      %v5127 = vpop.f32.mrf.mxu0
      %v5128 = vadd.f32 %v3859, %v5127
      %v5129 = vpop.f32.mrf.mxu0
      %v5130 = vpop.f32.mrf.mxu0
      %v5131 = vadd.f32 %v3859, %v5130
      %v5132 = vpop.f32.mrf.mxu0
      %5133 = vmatprep.mubr.bf16.mxu0 %v4391
      %5134 = vmatmul.mubr.bf16.gmra.mxu0 %v4390
      %v5135 = vpop.f32.mrf.mxu0
      %v5136 = vadd.f32 %v3859, %v5135
      %v5137 = vpop.f32.mrf.mxu0
      %v5138 = vpop.f32.mrf.mxu0
      %v5139 = vadd.f32 %v3859, %v5138
      %v5140 = vpop.f32.mrf.mxu0
      %5141 = vmatprep.mubr.bf16.mxu0 %v4400
      %5142 = vmatmul.mubr.bf16.gmra.mxu0 %v4399
      %v5143 = vpop.f32.mrf.mxu0
      %v5144 = vadd.f32 %v3859, %v5143
      %v5145 = vpop.f32.mrf.mxu0
      %v5146 = vpop.f32.mrf.mxu0
      %v5147 = vadd.f32 %v3859, %v5146
      %v5148 = vpop.f32.mrf.mxu0
      %5149 = vmatprep.mubr.bf16.mxu0 %v4409
      %5150 = vmatmul.mubr.bf16.gmra.mxu0 %v4408
      %v5151 = vpop.f32.mrf.mxu0
      %v5152 = vadd.f32 %v3859, %v5151
      %v5153 = vpop.f32.mrf.mxu0
      %v5154 = vpop.f32.mrf.mxu0
      %v5155 = vadd.f32 %v3859, %v5154
      %v5156 = vpop.f32.mrf.mxu0
      %5157 = vmatprep.mubr.bf16.mxu0 %v4418
      %5158 = vmatmul.mubr.bf16.gmra.mxu0 %v4417
      %v5159 = vpop.f32.mrf.mxu0
      %v5160 = vadd.f32 %v3859, %v5159
      %v5161 = vpop.f32.mrf.mxu0
      %v5162 = vpop.f32.mrf.mxu0
      %v5163 = vadd.f32 %v3859, %v5162
      %v5164 = vpop.f32.mrf.mxu0
      %5165 = vmatprep.mubr.bf16.mxu0 %v4427
      %5166 = vmatmul.mubr.bf16.gmra.mxu0 %v4426
      %v5167 = vpop.f32.mrf.mxu0
      %v5168 = vadd.f32 %v3859, %v5167
      %v5169 = vpop.f32.mrf.mxu0
      %v5170 = vpop.f32.mrf.mxu0
      %v5171 = vadd.f32 %v3859, %v5170
      %v5172 = vpop.f32.mrf.mxu0
      %5173 = vmatprep.mubr.bf16.mxu0 %v4436
      %5174 = vmatmul.mubr.bf16.gmra.mxu0 %v4435
      %v5175 = vpop.f32.mrf.mxu0
      %v5176 = vadd.f32 %v3859, %v5175
      %v5177 = vpop.f32.mrf.mxu0
      %v5178 = vpop.f32.mrf.mxu0
      %v5179 = vadd.f32 %v3859, %v5178
      %v5180 = vpop.f32.mrf.mxu0
      %5181 = vmatprep.mubr.bf16.mxu0 %v4445
      %5182 = vmatmul.mubr.bf16.gmra.mxu0 %v4444
      %v5183 = vpop.f32.mrf.mxu0
      %v5184 = vadd.f32 %v3859, %v5183
      %v5185 = vpop.f32.mrf.mxu0
      %v5186 = vpop.f32.mrf.mxu0
      %v5187 = vadd.f32 %v3859, %v5186
      %v5188 = vpop.f32.mrf.mxu0
      %5189 = vdwg.mxu0
      %5190 = vmatprep.subr.bf16.mxu0 0
      %5191 = vmatpush1.bf16.msra.mxu0 %v4908
      %5192 = vmatprep.subr.bf16.mxu0 0
      %5193 = vmatpush1.bf16.msra.mxu0 %v4907
      %5194 = vmatprep.subr.bf16.mxu0 0
      %5195 = vmatpush1.bf16.msra.mxu0 %v4906
      %5196 = vmatprep.subr.bf16.mxu0 0
      %5197 = vmatpush1.bf16.msra.mxu0 %v4905
      %5198 = vmatprep.subr.bf16.mxu0 0
      %5199 = vmatpush1.bf16.msra.mxu0 %v4904
      %5200 = vmatprep.subr.bf16.mxu0 0
      %5201 = vmatpush1.bf16.msra.mxu0 %v4903
      %5202 = vmatprep.subr.bf16.mxu0 0
      %5203 = vmatpush1.bf16.msra.mxu0 %v4902
      %5204 = vmatprep.subr.bf16.mxu0 0
      %5205 = vmatpush1.bf16.msra.mxu0 %v4901
      %5206 = vmatprep.subr.bf16.mxu0 0
      %5207 = vmatpush2.bf16.msra.mxu0 %v4916
      %5208 = vmatprep.subr.bf16.mxu0 0
      %5209 = vmatpush2.bf16.msra.mxu0 %v4915
      %5210 = vmatprep.subr.bf16.mxu0 0
      %5211 = vmatpush2.bf16.msra.mxu0 %v4914
      %5212 = vmatprep.subr.bf16.mxu0 0
      %5213 = vmatpush2.bf16.msra.mxu0 %v4913
      %5214 = vmatprep.subr.bf16.mxu0 0
      %5215 = vmatpush2.bf16.msra.mxu0 %v4912
      %5216 = vmatprep.subr.bf16.mxu0 0
      %5217 = vmatpush2.bf16.msra.mxu0 %v4911
      %5218 = vmatprep.subr.bf16.mxu0 0
      %5219 = vmatpush2.bf16.msra.mxu0 %v4910
      %5220 = vmatprep.subr.bf16.mxu0 0
      %5221 = vmatpush2.bf16.msra.mxu0 %v4909
      %5222 = vmatprep.mubr.bf16.mxu0 %v4312
      %5223 = vmatmul.mubr.bf16.gmra.mxu0 %v4311
      %v5224 = vpop.f32.mrf.mxu0
      %v5225 = vadd.f32 %v5064, %v5224
      %v5226 = vpop.f32.mrf.mxu0
      %v5227 = vpop.f32.mrf.mxu0
      %v5228 = vadd.f32 %v5067, %v5227
      %v5229 = vpop.f32.mrf.mxu0
      %5230 = vmatprep.mubr.bf16.mxu0 %v4321
      %5231 = vmatmul.mubr.bf16.gmra.mxu0 %v4320
      %v5232 = vpop.f32.mrf.mxu0
      %v5233 = vadd.f32 %v5072, %v5232
      %v5234 = vpop.f32.mrf.mxu0
      %v5235 = vpop.f32.mrf.mxu0
      %v5236 = vadd.f32 %v5075, %v5235
      %v5237 = vpop.f32.mrf.mxu0
      %5238 = vmatprep.mubr.bf16.mxu0 %v4330
      %5239 = vmatmul.mubr.bf16.gmra.mxu0 %v4329
      %v5240 = vpop.f32.mrf.mxu0
      %v5241 = vadd.f32 %v5080, %v5240
      %v5242 = vpop.f32.mrf.mxu0
      %v5243 = vpop.f32.mrf.mxu0
      %v5244 = vadd.f32 %v5083, %v5243
      %v5245 = vpop.f32.mrf.mxu0
      %5246 = vmatprep.mubr.bf16.mxu0 %v4339
      %5247 = vmatmul.mubr.bf16.gmra.mxu0 %v4338
      %v5248 = vpop.f32.mrf.mxu0
      %v5249 = vadd.f32 %v5088, %v5248
      %v5250 = vpop.f32.mrf.mxu0
      %v5251 = vpop.f32.mrf.mxu0
      %v5252 = vadd.f32 %v5091, %v5251
      %v5253 = vpop.f32.mrf.mxu0
      %5254 = vmatprep.mubr.bf16.mxu0 %v4348
      %5255 = vmatmul.mubr.bf16.gmra.mxu0 %v4347
      %v5256 = vpop.f32.mrf.mxu0
      %v5257 = vadd.f32 %v5096, %v5256
      %v5258 = vpop.f32.mrf.mxu0
      %v5259 = vpop.f32.mrf.mxu0
      %v5260 = vadd.f32 %v5099, %v5259
      %v5261 = vpop.f32.mrf.mxu0
      %5262 = vmatprep.mubr.bf16.mxu0 %v4357
      %5263 = vmatmul.mubr.bf16.gmra.mxu0 %v4356
      %v5264 = vpop.f32.mrf.mxu0
      %v5265 = vadd.f32 %v5104, %v5264
      %v5266 = vpop.f32.mrf.mxu0
      %v5267 = vpop.f32.mrf.mxu0
      %v5268 = vadd.f32 %v5107, %v5267
      %v5269 = vpop.f32.mrf.mxu0
      %5270 = vmatprep.mubr.bf16.mxu0 %v4366
      %5271 = vmatmul.mubr.bf16.gmra.mxu0 %v4365
      %v5272 = vpop.f32.mrf.mxu0
      %v5273 = vadd.f32 %v5112, %v5272
      %v5274 = vpop.f32.mrf.mxu0
      %v5275 = vpop.f32.mrf.mxu0
      %v5276 = vadd.f32 %v5115, %v5275
      %v5277 = vpop.f32.mrf.mxu0
      %5278 = vmatprep.mubr.bf16.mxu0 %v4375
      %5279 = vmatmul.mubr.bf16.gmra.mxu0 %v4374
      %v5280 = vpop.f32.mrf.mxu0
      %v5281 = vadd.f32 %v5120, %v5280
      %v5282 = vpop.f32.mrf.mxu0
      %v5283 = vpop.f32.mrf.mxu0
      %v5284 = vadd.f32 %v5123, %v5283
      %v5285 = vpop.f32.mrf.mxu0
      %5286 = vmatprep.mubr.bf16.mxu0 %v4384
      %5287 = vmatmul.mubr.bf16.gmra.mxu0 %v4383
      %v5288 = vpop.f32.mrf.mxu0
      %v5289 = vadd.f32 %v5128, %v5288
      %v5290 = vpop.f32.mrf.mxu0
      %v5291 = vpop.f32.mrf.mxu0
      %v5292 = vadd.f32 %v5131, %v5291
      %v5293 = vpop.f32.mrf.mxu0
      %5294 = vmatprep.mubr.bf16.mxu0 %v4393
      %5295 = vmatmul.mubr.bf16.gmra.mxu0 %v4392
      %v5296 = vpop.f32.mrf.mxu0
      %v5297 = vadd.f32 %v5136, %v5296
      %v5298 = vpop.f32.mrf.mxu0
      %v5299 = vpop.f32.mrf.mxu0
      %v5300 = vadd.f32 %v5139, %v5299
      %v5301 = vpop.f32.mrf.mxu0
      %5302 = vmatprep.mubr.bf16.mxu0 %v4402
      %5303 = vmatmul.mubr.bf16.gmra.mxu0 %v4401
      %v5304 = vpop.f32.mrf.mxu0
      %v5305 = vadd.f32 %v5144, %v5304
      %v5306 = vpop.f32.mrf.mxu0
      %v5307 = vpop.f32.mrf.mxu0
      %v5308 = vadd.f32 %v5147, %v5307
      %v5309 = vpop.f32.mrf.mxu0
      %5310 = vmatprep.mubr.bf16.mxu0 %v4411
      %5311 = vmatmul.mubr.bf16.gmra.mxu0 %v4410
      %v5312 = vpop.f32.mrf.mxu0
      %v5313 = vadd.f32 %v5152, %v5312
      %v5314 = vpop.f32.mrf.mxu0
      %v5315 = vpop.f32.mrf.mxu0
      %v5316 = vadd.f32 %v5155, %v5315
      %v5317 = vpop.f32.mrf.mxu0
      %5318 = vmatprep.mubr.bf16.mxu0 %v4420
      %5319 = vmatmul.mubr.bf16.gmra.mxu0 %v4419
      %v5320 = vpop.f32.mrf.mxu0
      %v5321 = vadd.f32 %v5160, %v5320
      %v5322 = vpop.f32.mrf.mxu0
      %v5323 = vpop.f32.mrf.mxu0
      %v5324 = vadd.f32 %v5163, %v5323
      %v5325 = vpop.f32.mrf.mxu0
      %5326 = vmatprep.mubr.bf16.mxu0 %v4429
      %5327 = vmatmul.mubr.bf16.gmra.mxu0 %v4428
      %v5328 = vpop.f32.mrf.mxu0
      %v5329 = vadd.f32 %v5168, %v5328
      %v5330 = vpop.f32.mrf.mxu0
      %v5331 = vpop.f32.mrf.mxu0
      %v5332 = vadd.f32 %v5171, %v5331
      %v5333 = vpop.f32.mrf.mxu0
      %5334 = vmatprep.mubr.bf16.mxu0 %v4438
      %5335 = vmatmul.mubr.bf16.gmra.mxu0 %v4437
      %v5336 = vpop.f32.mrf.mxu0
      %v5337 = vadd.f32 %v5176, %v5336
      %v5338 = vpop.f32.mrf.mxu0
      %v5339 = vpop.f32.mrf.mxu0
      %v5340 = vadd.f32 %v5179, %v5339
      %v5341 = vpop.f32.mrf.mxu0
      %5342 = vmatprep.mubr.bf16.mxu0 %v4447
      %5343 = vmatmul.mubr.bf16.gmra.mxu0 %v4446
      %v5344 = vpop.f32.mrf.mxu0
      %v5345 = vadd.f32 %v5184, %v5344
      %v5346 = vpop.f32.mrf.mxu0
      %v5347 = vpop.f32.mrf.mxu0
      %v5348 = vadd.f32 %v5187, %v5347
      %v5349 = vpop.f32.mrf.mxu0
      %5350 = vdwg.mxu0
      %5351 = vmatprep.subr.bf16.mxu0 0
      %5352 = vmatpush1.bf16.msra.mxu0 %v4924
      %5353 = vmatprep.subr.bf16.mxu0 0
      %5354 = vmatpush1.bf16.msra.mxu0 %v4923
      %5355 = vmatprep.subr.bf16.mxu0 0
      %5356 = vmatpush1.bf16.msra.mxu0 %v4922
      %5357 = vmatprep.subr.bf16.mxu0 0
      %5358 = vmatpush1.bf16.msra.mxu0 %v4921
      %5359 = vmatprep.subr.bf16.mxu0 0
      %5360 = vmatpush1.bf16.msra.mxu0 %v4920
      %5361 = vmatprep.subr.bf16.mxu0 0
      %5362 = vmatpush1.bf16.msra.mxu0 %v4919
      %5363 = vmatprep.subr.bf16.mxu0 0
      %5364 = vmatpush1.bf16.msra.mxu0 %v4918
      %5365 = vmatprep.subr.bf16.mxu0 0
      %5366 = vmatpush1.bf16.msra.mxu0 %v4917
      %5367 = vmatprep.subr.bf16.mxu0 0
      %5368 = vmatpush2.bf16.msra.mxu0 %v4932
      %5369 = vmatprep.subr.bf16.mxu0 0
      %5370 = vmatpush2.bf16.msra.mxu0 %v4931
      %5371 = vmatprep.subr.bf16.mxu0 0
      %5372 = vmatpush2.bf16.msra.mxu0 %v4930
      %5373 = vmatprep.subr.bf16.mxu0 0
      %5374 = vmatpush2.bf16.msra.mxu0 %v4929
      %5375 = vmatprep.subr.bf16.mxu0 0
      %5376 = vmatpush2.bf16.msra.mxu0 %v4928
      %5377 = vmatprep.subr.bf16.mxu0 0
      %5378 = vmatpush2.bf16.msra.mxu0 %v4927
      %5379 = vmatprep.subr.bf16.mxu0 0
      %5380 = vmatpush2.bf16.msra.mxu0 %v4926
      %5381 = vmatprep.subr.bf16.mxu0 0
      %5382 = vmatpush2.bf16.msra.mxu0 %v4925
      %5383 = vmatprep.mubr.bf16.mxu0 %v4314
      %5384 = vmatmul.mubr.bf16.gmra.mxu0 %v4313
      %v5385 = vpop.f32.mrf.mxu0
      %v5386 = vadd.f32 %v5225, %v5385
      %v5387 = vpop.f32.mrf.mxu0
      %v5388 = vpop.f32.mrf.mxu0
      %v5389 = vadd.f32 %v5228, %v5388
      %v5390 = vpop.f32.mrf.mxu0
      %5391 = vmatprep.mubr.bf16.mxu0 %v4323
      %5392 = vmatmul.mubr.bf16.gmra.mxu0 %v4322
      %v5393 = vpop.f32.mrf.mxu0
      %v5394 = vadd.f32 %v5233, %v5393
      %v5395 = vpop.f32.mrf.mxu0
      %v5396 = vpop.f32.mrf.mxu0
      %v5397 = vadd.f32 %v5236, %v5396
      %v5398 = vpop.f32.mrf.mxu0
      %5399 = vmatprep.mubr.bf16.mxu0 %v4332
      %5400 = vmatmul.mubr.bf16.gmra.mxu0 %v4331
      %v5401 = vpop.f32.mrf.mxu0
      %v5402 = vadd.f32 %v5241, %v5401
      %v5403 = vpop.f32.mrf.mxu0
      %v5404 = vpop.f32.mrf.mxu0
      %v5405 = vadd.f32 %v5244, %v5404
      %v5406 = vpop.f32.mrf.mxu0
      %5407 = vmatprep.mubr.bf16.mxu0 %v4341
      %5408 = vmatmul.mubr.bf16.gmra.mxu0 %v4340
      %v5409 = vpop.f32.mrf.mxu0
      %v5410 = vadd.f32 %v5249, %v5409
      %v5411 = vpop.f32.mrf.mxu0
      %v5412 = vpop.f32.mrf.mxu0
      %v5413 = vadd.f32 %v5252, %v5412
      %v5414 = vpop.f32.mrf.mxu0
      %5415 = vmatprep.mubr.bf16.mxu0 %v4350
      %5416 = vmatmul.mubr.bf16.gmra.mxu0 %v4349
      %v5417 = vpop.f32.mrf.mxu0
      %v5418 = vadd.f32 %v5257, %v5417
      %v5419 = vpop.f32.mrf.mxu0
      %v5420 = vpop.f32.mrf.mxu0
      %v5421 = vadd.f32 %v5260, %v5420
      %v5422 = vpop.f32.mrf.mxu0
      %5423 = vmatprep.mubr.bf16.mxu0 %v4359
      %5424 = vmatmul.mubr.bf16.gmra.mxu0 %v4358
      %v5425 = vpop.f32.mrf.mxu0
      %v5426 = vadd.f32 %v5265, %v5425
      %v5427 = vpop.f32.mrf.mxu0
      %v5428 = vpop.f32.mrf.mxu0
      %v5429 = vadd.f32 %v5268, %v5428
      %v5430 = vpop.f32.mrf.mxu0
      %5431 = vmatprep.mubr.bf16.mxu0 %v4368
      %5432 = vmatmul.mubr.bf16.gmra.mxu0 %v4367
      %v5433 = vpop.f32.mrf.mxu0
      %v5434 = vadd.f32 %v5273, %v5433
      %v5435 = vpop.f32.mrf.mxu0
      %v5436 = vpop.f32.mrf.mxu0
      %v5437 = vadd.f32 %v5276, %v5436
      %v5438 = vpop.f32.mrf.mxu0
      %5439 = vmatprep.mubr.bf16.mxu0 %v4377
      %5440 = vmatmul.mubr.bf16.gmra.mxu0 %v4376
      %v5441 = vpop.f32.mrf.mxu0
      %v5442 = vadd.f32 %v5281, %v5441
      %v5443 = vpop.f32.mrf.mxu0
      %v5444 = vpop.f32.mrf.mxu0
      %v5445 = vadd.f32 %v5284, %v5444
      %v5446 = vpop.f32.mrf.mxu0
      %5447 = vmatprep.mubr.bf16.mxu0 %v4386
      %5448 = vmatmul.mubr.bf16.gmra.mxu0 %v4385
      %v5449 = vpop.f32.mrf.mxu0
      %v5450 = vadd.f32 %v5289, %v5449
      %v5451 = vpop.f32.mrf.mxu0
      %v5452 = vpop.f32.mrf.mxu0
      %v5453 = vadd.f32 %v5292, %v5452
      %v5454 = vpop.f32.mrf.mxu0
      %5455 = vmatprep.mubr.bf16.mxu0 %v4395
      %5456 = vmatmul.mubr.bf16.gmra.mxu0 %v4394
      %v5457 = vpop.f32.mrf.mxu0
      %v5458 = vadd.f32 %v5297, %v5457
      %v5459 = vpop.f32.mrf.mxu0
      %v5460 = vpop.f32.mrf.mxu0
      %v5461 = vadd.f32 %v5300, %v5460
      %v5462 = vpop.f32.mrf.mxu0
      %5463 = vmatprep.mubr.bf16.mxu0 %v4404
      %5464 = vmatmul.mubr.bf16.gmra.mxu0 %v4403
      %v5465 = vpop.f32.mrf.mxu0
      %v5466 = vadd.f32 %v5305, %v5465
      %v5467 = vpop.f32.mrf.mxu0
      %v5468 = vpop.f32.mrf.mxu0
      %v5469 = vadd.f32 %v5308, %v5468
      %v5470 = vpop.f32.mrf.mxu0
      %5471 = vmatprep.mubr.bf16.mxu0 %v4413
      %5472 = vmatmul.mubr.bf16.gmra.mxu0 %v4412
      %v5473 = vpop.f32.mrf.mxu0
      %v5474 = vadd.f32 %v5313, %v5473
      %v5475 = vpop.f32.mrf.mxu0
      %v5476 = vpop.f32.mrf.mxu0
      %v5477 = vadd.f32 %v5316, %v5476
      %v5478 = vpop.f32.mrf.mxu0
      %5479 = vmatprep.mubr.bf16.mxu0 %v4422
      %5480 = vmatmul.mubr.bf16.gmra.mxu0 %v4421
      %v5481 = vpop.f32.mrf.mxu0
      %v5482 = vadd.f32 %v5321, %v5481
      %v5483 = vpop.f32.mrf.mxu0
      %v5484 = vpop.f32.mrf.mxu0
      %v5485 = vadd.f32 %v5324, %v5484
      %v5486 = vpop.f32.mrf.mxu0
      %5487 = vmatprep.mubr.bf16.mxu0 %v4431
      %5488 = vmatmul.mubr.bf16.gmra.mxu0 %v4430
      %v5489 = vpop.f32.mrf.mxu0
      %v5490 = vadd.f32 %v5329, %v5489
      %v5491 = vpop.f32.mrf.mxu0
      %v5492 = vpop.f32.mrf.mxu0
      %v5493 = vadd.f32 %v5332, %v5492
      %v5494 = vpop.f32.mrf.mxu0
      %5495 = vmatprep.mubr.bf16.mxu0 %v4440
      %5496 = vmatmul.mubr.bf16.gmra.mxu0 %v4439
      %v5497 = vpop.f32.mrf.mxu0
      %v5498 = vadd.f32 %v5337, %v5497
      %v5499 = vpop.f32.mrf.mxu0
      %v5500 = vpop.f32.mrf.mxu0
      %v5501 = vadd.f32 %v5340, %v5500
      %v5502 = vpop.f32.mrf.mxu0
      %5503 = vmatprep.mubr.bf16.mxu0 %v4449
      %5504 = vmatmul.mubr.bf16.gmra.mxu0 %v4448
      %v5505 = vpop.f32.mrf.mxu0
      %v5506 = vadd.f32 %v5345, %v5505
      %v5507 = vpop.f32.mrf.mxu0
      %v5508 = vpop.f32.mrf.mxu0
      %v5509 = vadd.f32 %v5348, %v5508
      %v5510 = vpop.f32.mrf.mxu0
      %5511 = vdwg.mxu0
      %5512 = vmatprep.subr.bf16.mxu0 0
      %5513 = vmatpush1.bf16.msra.mxu0 %v4940
      %5514 = vmatprep.subr.bf16.mxu0 0
      %5515 = vmatpush1.bf16.msra.mxu0 %v4939
      %5516 = vmatprep.subr.bf16.mxu0 0
      %5517 = vmatpush1.bf16.msra.mxu0 %v4938
      %5518 = vmatprep.subr.bf16.mxu0 0
      %5519 = vmatpush1.bf16.msra.mxu0 %v4937
      %5520 = vmatprep.subr.bf16.mxu0 0
      %5521 = vmatpush1.bf16.msra.mxu0 %v4936
      %5522 = vmatprep.subr.bf16.mxu0 0
      %5523 = vmatpush1.bf16.msra.mxu0 %v4935
      %5524 = vmatprep.subr.bf16.mxu0 0
      %5525 = vmatpush1.bf16.msra.mxu0 %v4934
      %5526 = vmatprep.subr.bf16.mxu0 0
      %5527 = vmatpush1.bf16.msra.mxu0 %v4933
      %5528 = vmatprep.subr.bf16.mxu0 0
      %5529 = vmatpush2.bf16.msra.mxu0 %v4948
      %5530 = vmatprep.subr.bf16.mxu0 0
      %5531 = vmatpush2.bf16.msra.mxu0 %v4947
      %5532 = vmatprep.subr.bf16.mxu0 0
      %5533 = vmatpush2.bf16.msra.mxu0 %v4946
      %5534 = vmatprep.subr.bf16.mxu0 0
      %5535 = vmatpush2.bf16.msra.mxu0 %v4945
      %5536 = vmatprep.subr.bf16.mxu0 0
      %5537 = vmatpush2.bf16.msra.mxu0 %v4944
      %5538 = vmatprep.subr.bf16.mxu0 0
      %5539 = vmatpush2.bf16.msra.mxu0 %v4943
      %5540 = vmatprep.subr.bf16.mxu0 0
      %5541 = vmatpush2.bf16.msra.mxu0 %v4942
      %5542 = vmatprep.subr.bf16.mxu0 0
      %5543 = vmatpush2.bf16.msra.mxu0 %v4941
      %5544 = vmatprep.mubr.bf16.mxu0 %v4316
      %5545 = vmatmul.mubr.bf16.gmra.mxu0 %v4315
      %v5546 = vpop.f32.mrf.mxu0
      %v5547 = vadd.f32 %v5386, %v5546
      %v5548 = vpop.f32.mrf.mxu0
      %v5549 = vpop.f32.mrf.mxu0
      %v5550 = vadd.f32 %v5389, %v5549
      %v5551 = vpop.f32.mrf.mxu0
      %5552 = vmatprep.mubr.bf16.mxu0 %v4325
      %5553 = vmatmul.mubr.bf16.gmra.mxu0 %v4324
      %v5554 = vpop.f32.mrf.mxu0
      %v5555 = vadd.f32 %v5394, %v5554
      %v5556 = vpop.f32.mrf.mxu0
      %v5557 = vpop.f32.mrf.mxu0
      %v5558 = vadd.f32 %v5397, %v5557
      %v5559 = vpop.f32.mrf.mxu0
      %5560 = vmatprep.mubr.bf16.mxu0 %v4334
      %5561 = vmatmul.mubr.bf16.gmra.mxu0 %v4333
      %v5562 = vpop.f32.mrf.mxu0
      %v5563 = vadd.f32 %v5402, %v5562
      %v5564 = vpop.f32.mrf.mxu0
      %v5565 = vpop.f32.mrf.mxu0
      %v5566 = vadd.f32 %v5405, %v5565
      %v5567 = vpop.f32.mrf.mxu0
      %5568 = vmatprep.mubr.bf16.mxu0 %v4343
      %5569 = vmatmul.mubr.bf16.gmra.mxu0 %v4342
      %v5570 = vpop.f32.mrf.mxu0
      %v5571 = vadd.f32 %v5410, %v5570
      %v5572 = vpop.f32.mrf.mxu0
      %v5573 = vpop.f32.mrf.mxu0
      %v5574 = vadd.f32 %v5413, %v5573
      %v5575 = vpop.f32.mrf.mxu0
      %5576 = vmatprep.mubr.bf16.mxu0 %v4352
      %5577 = vmatmul.mubr.bf16.gmra.mxu0 %v4351
      %v5578 = vpop.f32.mrf.mxu0
      %v5579 = vadd.f32 %v5418, %v5578
      %v5580 = vpop.f32.mrf.mxu0
      %v5581 = vpop.f32.mrf.mxu0
      %v5582 = vadd.f32 %v5421, %v5581
      %v5583 = vpop.f32.mrf.mxu0
      %5584 = vmatprep.mubr.bf16.mxu0 %v4361
      %5585 = vmatmul.mubr.bf16.gmra.mxu0 %v4360
      %v5586 = vpop.f32.mrf.mxu0
      %v5587 = vadd.f32 %v5426, %v5586
      %v5588 = vpop.f32.mrf.mxu0
      %v5589 = vpop.f32.mrf.mxu0
      %v5590 = vadd.f32 %v5429, %v5589
      %v5591 = vpop.f32.mrf.mxu0
      %5592 = vmatprep.mubr.bf16.mxu0 %v4370
      %5593 = vmatmul.mubr.bf16.gmra.mxu0 %v4369
      %v5594 = vpop.f32.mrf.mxu0
      %v5595 = vadd.f32 %v5434, %v5594
      %v5596 = vpop.f32.mrf.mxu0
      %v5597 = vpop.f32.mrf.mxu0
      %v5598 = vadd.f32 %v5437, %v5597
      %v5599 = vpop.f32.mrf.mxu0
      %5600 = vmatprep.mubr.bf16.mxu0 %v4379
      %5601 = vmatmul.mubr.bf16.gmra.mxu0 %v4378
      %v5602 = vpop.f32.mrf.mxu0
      %v5603 = vadd.f32 %v5442, %v5602
      %v5604 = vpop.f32.mrf.mxu0
      %v5605 = vpop.f32.mrf.mxu0
      %v5606 = vadd.f32 %v5445, %v5605
      %v5607 = vpop.f32.mrf.mxu0
      %5608 = vmatprep.mubr.bf16.mxu0 %v4388
      %5609 = vmatmul.mubr.bf16.gmra.mxu0 %v4387
      %v5610 = vpop.f32.mrf.mxu0
      %v5611 = vadd.f32 %v5450, %v5610
      %v5612 = vpop.f32.mrf.mxu0
      %v5613 = vpop.f32.mrf.mxu0
      %v5614 = vadd.f32 %v5453, %v5613
      %v5615 = vpop.f32.mrf.mxu0
      %5616 = vmatprep.mubr.bf16.mxu0 %v4397
      %5617 = vmatmul.mubr.bf16.gmra.mxu0 %v4396
      %v5618 = vpop.f32.mrf.mxu0
      %v5619 = vadd.f32 %v5458, %v5618
      %v5620 = vpop.f32.mrf.mxu0
      %v5621 = vpop.f32.mrf.mxu0
      %v5622 = vadd.f32 %v5461, %v5621
      %v5623 = vpop.f32.mrf.mxu0
      %5624 = vmatprep.mubr.bf16.mxu0 %v4406
      %5625 = vmatmul.mubr.bf16.gmra.mxu0 %v4405
      %v5626 = vpop.f32.mrf.mxu0
      %v5627 = vadd.f32 %v5466, %v5626
      %v5628 = vpop.f32.mrf.mxu0
      %v5629 = vpop.f32.mrf.mxu0
      %v5630 = vadd.f32 %v5469, %v5629
      %v5631 = vpop.f32.mrf.mxu0
      %5632 = vmatprep.mubr.bf16.mxu0 %v4415
      %5633 = vmatmul.mubr.bf16.gmra.mxu0 %v4414
      %v5634 = vpop.f32.mrf.mxu0
      %v5635 = vadd.f32 %v5474, %v5634
      %v5636 = vpop.f32.mrf.mxu0
      %v5637 = vpop.f32.mrf.mxu0
      %v5638 = vadd.f32 %v5477, %v5637
      %v5639 = vpop.f32.mrf.mxu0
      %5640 = vmatprep.mubr.bf16.mxu0 %v4424
      %5641 = vmatmul.mubr.bf16.gmra.mxu0 %v4423
      %v5642 = vpop.f32.mrf.mxu0
      %v5643 = vadd.f32 %v5482, %v5642
      %v5644 = vpop.f32.mrf.mxu0
      %v5645 = vpop.f32.mrf.mxu0
      %v5646 = vadd.f32 %v5485, %v5645
      %v5647 = vpop.f32.mrf.mxu0
      %5648 = vmatprep.mubr.bf16.mxu0 %v4433
      %5649 = vmatmul.mubr.bf16.gmra.mxu0 %v4432
      %v5650 = vpop.f32.mrf.mxu0
      %v5651 = vadd.f32 %v5490, %v5650
      %v5652 = vpop.f32.mrf.mxu0
      %v5653 = vpop.f32.mrf.mxu0
      %v5654 = vadd.f32 %v5493, %v5653
      %v5655 = vpop.f32.mrf.mxu0
      %5656 = vmatprep.mubr.bf16.mxu0 %v4442
      %5657 = vmatmul.mubr.bf16.gmra.mxu0 %v4441
      %v5658 = vpop.f32.mrf.mxu0
      %v5659 = vadd.f32 %v5498, %v5658
      %v5660 = vpop.f32.mrf.mxu0
      %v5661 = vpop.f32.mrf.mxu0
      %v5662 = vadd.f32 %v5501, %v5661
      %v5663 = vpop.f32.mrf.mxu0
      %5664 = vmatprep.mubr.bf16.mxu0 %v4451
      %5665 = vmatmul.mubr.bf16.gmra.mxu0 %v4450
      %v5666 = vpop.f32.mrf.mxu0
      %v5667 = vadd.f32 %v5506, %v5666
      %v5668 = vpop.f32.mrf.mxu0
      %v5669 = vpop.f32.mrf.mxu0
      %v5670 = vadd.f32 %v5509, %v5669
      %v5671 = vpop.f32.mrf.mxu0
      %5672 = vdwg.mxu0
      %5673 = vmatprep.subr.bf16.mxu0 0
      %5674 = vmatpush1.bf16.msra.mxu0 %v4956
      %5675 = vmatprep.subr.bf16.mxu0 0
      %5676 = vmatpush1.bf16.msra.mxu0 %v4955
      %5677 = vmatprep.subr.bf16.mxu0 0
      %5678 = vmatpush1.bf16.msra.mxu0 %v4954
      %5679 = vmatprep.subr.bf16.mxu0 0
      %5680 = vmatpush1.bf16.msra.mxu0 %v4953
      %5681 = vmatprep.subr.bf16.mxu0 0
      %5682 = vmatpush1.bf16.msra.mxu0 %v4952
      %5683 = vmatprep.subr.bf16.mxu0 0
      %5684 = vmatpush1.bf16.msra.mxu0 %v4951
      %5685 = vmatprep.subr.bf16.mxu0 0
      %5686 = vmatpush1.bf16.msra.mxu0 %v4950
      %5687 = vmatprep.subr.bf16.mxu0 0
      %5688 = vmatpush1.bf16.msra.mxu0 %v4949
      %5689 = vmatprep.subr.bf16.mxu0 0
      %5690 = vmatpush2.bf16.msra.mxu0 0
      %5691 = vmatprep.subr.bf16.mxu0 0
      %5692 = vmatpush2.bf16.msra.mxu0 0
      %5693 = vmatprep.subr.bf16.mxu0 0
      %5694 = vmatpush2.bf16.msra.mxu0 0
      %5695 = vmatprep.subr.bf16.mxu0 0
      %5696 = vmatpush2.bf16.msra.mxu0 0
      %5697 = vmatprep.subr.bf16.mxu0 0
      %5698 = vmatpush2.bf16.msra.mxu0 0
      %5699 = vmatprep.subr.bf16.mxu0 0
      %5700 = vmatpush2.bf16.msra.mxu0 0
      %5701 = vmatprep.subr.bf16.mxu0 0
      %5702 = vmatpush2.bf16.msra.mxu0 0
      %5703 = vmatprep.subr.bf16.mxu0 0
      %5704 = vmatpush2.bf16.msra.mxu0 0
      %5705 = vmatprep.mubr.bf16.mxu0 0
      %5706 = vmatmul.mubr.bf16.gmra.mxu0 %v4317
      %v5707 = vpop.f32.mrf.mxu0
      %v5708 = vadd.f32 %v5547, %v5707
      %v5709 = vpop.f32.mrf.mxu0
      %v5710 = vpop.f32.mrf.mxu0
      %v5711 = vadd.f32 %v5550, %v5710
      %v5712 = vpop.f32.mrf.mxu0
      %5713 = vmatprep.mubr.bf16.mxu0 0
      %5714 = vmatmul.mubr.bf16.gmra.mxu0 %v4326
      %v5715 = vpop.f32.mrf.mxu0
      %v5716 = vadd.f32 %v5555, %v5715
      %v5717 = vpop.f32.mrf.mxu0
      %v5718 = vpop.f32.mrf.mxu0
      %v5719 = vadd.f32 %v5558, %v5718
      %v5720 = vpop.f32.mrf.mxu0
      %5721 = vmatprep.mubr.bf16.mxu0 0
      %5722 = vmatmul.mubr.bf16.gmra.mxu0 %v4335
      %v5723 = vpop.f32.mrf.mxu0
      %v5724 = vadd.f32 %v5563, %v5723
      %v5725 = vpop.f32.mrf.mxu0
      %v5726 = vpop.f32.mrf.mxu0
      %v5727 = vadd.f32 %v5566, %v5726
      %v5728 = vpop.f32.mrf.mxu0
      %5729 = vmatprep.mubr.bf16.mxu0 0
      %5730 = vmatmul.mubr.bf16.gmra.mxu0 %v4344
      %v5731 = vpop.f32.mrf.mxu0
      %v5732 = vadd.f32 %v5571, %v5731
      %v5733 = vpop.f32.mrf.mxu0
      %v5734 = vpop.f32.mrf.mxu0
      %v5735 = vadd.f32 %v5574, %v5734
      %v5736 = vpop.f32.mrf.mxu0
      %5737 = vmatprep.mubr.bf16.mxu0 0
      %5738 = vmatmul.mubr.bf16.gmra.mxu0 %v4353
      %v5739 = vpop.f32.mrf.mxu0
      %v5740 = vadd.f32 %v5579, %v5739
      %v5741 = vpop.f32.mrf.mxu0
      %v5742 = vpop.f32.mrf.mxu0
      %v5743 = vadd.f32 %v5582, %v5742
      %v5744 = vpop.f32.mrf.mxu0
      %5745 = vmatprep.mubr.bf16.mxu0 0
      %5746 = vmatmul.mubr.bf16.gmra.mxu0 %v4362
      %v5747 = vpop.f32.mrf.mxu0
      %v5748 = vadd.f32 %v5587, %v5747
      %v5749 = vpop.f32.mrf.mxu0
      %v5750 = vpop.f32.mrf.mxu0
      %v5751 = vadd.f32 %v5590, %v5750
      %v5752 = vpop.f32.mrf.mxu0
      %5753 = vmatprep.mubr.bf16.mxu0 0
      %5754 = vmatmul.mubr.bf16.gmra.mxu0 %v4371
      %v5755 = vpop.f32.mrf.mxu0
      %v5756 = vadd.f32 %v5595, %v5755
      %v5757 = vpop.f32.mrf.mxu0
      %v5758 = vpop.f32.mrf.mxu0
      %v5759 = vadd.f32 %v5598, %v5758
      %v5760 = vpop.f32.mrf.mxu0
      %5761 = vmatprep.mubr.bf16.mxu0 0
      %5762 = vmatmul.mubr.bf16.gmra.mxu0 %v4380
      %v5763 = vpop.f32.mrf.mxu0
      %v5764 = vadd.f32 %v5603, %v5763
      %v5765 = vpop.f32.mrf.mxu0
      %v5766 = vpop.f32.mrf.mxu0
      %v5767 = vadd.f32 %v5606, %v5766
      %v5768 = vpop.f32.mrf.mxu0
      %5769 = vmatprep.mubr.bf16.mxu0 0
      %5770 = vmatmul.mubr.bf16.gmra.mxu0 %v4389
      %v5771 = vpop.f32.mrf.mxu0
      %v5772 = vadd.f32 %v5611, %v5771
      %v5773 = vpop.f32.mrf.mxu0
      %v5774 = vpop.f32.mrf.mxu0
      %v5775 = vadd.f32 %v5614, %v5774
      %v5776 = vpop.f32.mrf.mxu0
      %5777 = vmatprep.mubr.bf16.mxu0 0
      %5778 = vmatmul.mubr.bf16.gmra.mxu0 %v4398
      %v5779 = vpop.f32.mrf.mxu0
      %v5780 = vadd.f32 %v5619, %v5779
      %v5781 = vpop.f32.mrf.mxu0
      %v5782 = vpop.f32.mrf.mxu0
      %v5783 = vadd.f32 %v5622, %v5782
      %v5784 = vpop.f32.mrf.mxu0
      %5785 = vmatprep.mubr.bf16.mxu0 0
      %5786 = vmatmul.mubr.bf16.gmra.mxu0 %v4407
      %v5787 = vpop.f32.mrf.mxu0
      %v5788 = vadd.f32 %v5627, %v5787
      %v5789 = vpop.f32.mrf.mxu0
      %v5790 = vpop.f32.mrf.mxu0
      %v5791 = vadd.f32 %v5630, %v5790
      %v5792 = vpop.f32.mrf.mxu0
      %5793 = vmatprep.mubr.bf16.mxu0 0
      %5794 = vmatmul.mubr.bf16.gmra.mxu0 %v4416
      %v5795 = vpop.f32.mrf.mxu0
      %v5796 = vadd.f32 %v5635, %v5795
      %v5797 = vpop.f32.mrf.mxu0
      %v5798 = vpop.f32.mrf.mxu0
      %v5799 = vadd.f32 %v5638, %v5798
      %v5800 = vpop.f32.mrf.mxu0
      %5801 = vmatprep.mubr.bf16.mxu0 0
      %5802 = vmatmul.mubr.bf16.gmra.mxu0 %v4425
      %v5803 = vpop.f32.mrf.mxu0
      %v5804 = vadd.f32 %v5643, %v5803
      %v5805 = vpop.f32.mrf.mxu0
      %v5806 = vpop.f32.mrf.mxu0
      %v5807 = vadd.f32 %v5646, %v5806
      %v5808 = vpop.f32.mrf.mxu0
      %5809 = vmatprep.mubr.bf16.mxu0 0
      %5810 = vmatmul.mubr.bf16.gmra.mxu0 %v4434
      %v5811 = vpop.f32.mrf.mxu0
      %v5812 = vadd.f32 %v5651, %v5811
      %v5813 = vpop.f32.mrf.mxu0
      %v5814 = vpop.f32.mrf.mxu0
      %v5815 = vadd.f32 %v5654, %v5814
      %v5816 = vpop.f32.mrf.mxu0
      %5817 = vmatprep.mubr.bf16.mxu0 0
      %5818 = vmatmul.mubr.bf16.gmra.mxu0 %v4443
      %v5819 = vpop.f32.mrf.mxu0
      %v5820 = vadd.f32 %v5659, %v5819
      %v5821 = vpop.f32.mrf.mxu0
      %v5822 = vpop.f32.mrf.mxu0
      %v5823 = vadd.f32 %v5662, %v5822
      %v5824 = vpop.f32.mrf.mxu0
      %5825 = vmatprep.mubr.bf16.mxu0 0
      %5826 = vmatmul.mubr.bf16.gmra.mxu0 %v4452
      %v5827 = vpop.f32.mrf.mxu0
      %v5828 = vadd.f32 %v5667, %v5827
      %v5829 = vpop.f32.mrf.mxu0
      %v5830 = vpop.f32.mrf.mxu0
      %v5831 = vadd.f32 %v5670, %v5830
      %v5832 = vpop.f32.mrf.mxu0
      %5833 = vdwg.mxu0
      %v5834 = vadd.f32 %v5708, %v5711
      %v5835 = vadd.f32 %v5834, %v5716
      %v5836 = vadd.f32 %v5835, %v5719
      %v5837 = vadd.f32 %v5836, %v5724
      %v5838 = vadd.f32 %v5837, %v5727
      %v5839 = vadd.f32 %v5838, %v5732
      %v5840 = vadd.f32 %v5839, %v5735
      %v5841 = vadd.f32 %v5840, %v5740
      %v5842 = vadd.f32 %v5841, %v5743
      %v5843 = vadd.f32 %v5842, %v5748
      %v5844 = vadd.f32 %v5843, %v5751
      %v5845 = vadd.f32 %v5844, %v5756
      %v5846 = vadd.f32 %v5845, %v5759
      %v5847 = vadd.f32 %v5846, %v5764
      %v5848 = vadd.f32 %v5847, %v5767
      %v5849 = vadd.f32 %v5848, %v5772
      %v5850 = vadd.f32 %v5849, %v5775
      %v5851 = vadd.f32 %v5850, %v5780
      %v5852 = vadd.f32 %v5851, %v5783
      %v5853 = vadd.f32 %v5852, %v5788
      %v5854 = vadd.f32 %v5853, %v5791
      %v5855 = vadd.f32 %v5854, %v5796
      %v5856 = vadd.f32 %v5855, %v5799
      %v5857 = vadd.f32 %v5856, %v5804
      %v5858 = vadd.f32 %v5857, %v5807
      %v5859 = vadd.f32 %v5858, %v5812
      %v5860 = vadd.f32 %v5859, %v5815
      %v5861 = vadd.f32 %v5860, %v5820
      %v5862 = vadd.f32 %v5861, %v5823
      %v5863 = vadd.f32 %v5862, %v5828
      %v5864 = vadd.f32 %v5863, %v5831
      %v5865 = vrot.slane %v5864, 4
      %v5866 = vadd.f32 %v5864, %v5865
      %v5867 = vrot.slane %v5866, 2
      %v5868 = vadd.f32 %v5866, %v5867
      %v5869 = vrot.slane %v5868, 1
      %v5870 = vadd.f32 %v5868, %v5869
      %5871 = vst [vmem:[%s262] sm:$0x1] %v5870
      %v5872 = vmul.f32 %v5708, %v5708
      %v5873 = vmul.f32 %v5711, %v5711
      %v5874 = vmul.f32 %v5716, %v5716
      %v5875 = vmul.f32 %v5719, %v5719
      %v5876 = vmul.f32 %v5724, %v5724
      %v5877 = vmul.f32 %v5727, %v5727
      %v5878 = vmul.f32 %v5732, %v5732
      %v5879 = vmul.f32 %v5735, %v5735
      %v5880 = vmul.f32 %v5740, %v5740
      %v5881 = vmul.f32 %v5743, %v5743
      %v5882 = vmul.f32 %v5748, %v5748
      %v5883 = vmul.f32 %v5751, %v5751
      %v5884 = vmul.f32 %v5756, %v5756
      %v5885 = vmul.f32 %v5759, %v5759
      %v5886 = vmul.f32 %v5764, %v5764
      %v5887 = vmul.f32 %v5767, %v5767
      %v5888 = vmul.f32 %v5772, %v5772
      %v5889 = vmul.f32 %v5775, %v5775
      %v5890 = vmul.f32 %v5780, %v5780
      %v5891 = vmul.f32 %v5783, %v5783
      %v5892 = vmul.f32 %v5788, %v5788
      %v5893 = vmul.f32 %v5791, %v5791
      %v5894 = vmul.f32 %v5796, %v5796
      %v5895 = vmul.f32 %v5799, %v5799
      %v5896 = vmul.f32 %v5804, %v5804
      %v5897 = vmul.f32 %v5807, %v5807
      %v5898 = vmul.f32 %v5812, %v5812
      %v5899 = vmul.f32 %v5815, %v5815
      %v5900 = vmul.f32 %v5820, %v5820
      %v5901 = vmul.f32 %v5823, %v5823
      %v5902 = vmul.f32 %v5828, %v5828
      %v5903 = vmul.f32 %v5831, %v5831
      %v5904 = vadd.f32 %v5872, %v5873
      %v5905 = vadd.f32 %v5904, %v5874
      %v5906 = vadd.f32 %v5905, %v5875
      %v5907 = vadd.f32 %v5906, %v5876
      %v5908 = vadd.f32 %v5907, %v5877
      %v5909 = vadd.f32 %v5908, %v5878
      %v5910 = vadd.f32 %v5909, %v5879
      %v5911 = vadd.f32 %v5910, %v5880
      %v5912 = vadd.f32 %v5911, %v5881
      %v5913 = vadd.f32 %v5912, %v5882
      %v5914 = vadd.f32 %v5913, %v5883
      %v5915 = vadd.f32 %v5914, %v5884
      %v5916 = vadd.f32 %v5915, %v5885
      %v5917 = vadd.f32 %v5916, %v5886
      %v5918 = vadd.f32 %v5917, %v5887
      %v5919 = vadd.f32 %v5918, %v5888
      %v5920 = vadd.f32 %v5919, %v5889
      %v5921 = vadd.f32 %v5920, %v5890
      %v5922 = vadd.f32 %v5921, %v5891
      %v5923 = vadd.f32 %v5922, %v5892
      %v5924 = vadd.f32 %v5923, %v5893
      %v5925 = vadd.f32 %v5924, %v5894
      %v5926 = vadd.f32 %v5925, %v5895
      %v5927 = vadd.f32 %v5926, %v5896
      %v5928 = vadd.f32 %v5927, %v5897
      %v5929 = vadd.f32 %v5928, %v5898
      %v5930 = vadd.f32 %v5929, %v5899
      %v5931 = vadd.f32 %v5930, %v5900
      %v5932 = vadd.f32 %v5931, %v5901
      %v5933 = vadd.f32 %v5932, %v5902
      %v5934 = vadd.f32 %v5933, %v5903
      %v5935 = vrot.slane %v5934, 4
      %v5936 = vadd.f32 %v5934, %v5935
      %v5937 = vrot.slane %v5936, 2
      %v5938 = vadd.f32 %v5936, %v5937
      %v5939 = vrot.slane %v5938, 1
      %v5940 = vadd.f32 %v5938, %v5939
      %5941 = vst [vmem:[%s262 + $0x1] sm:$0x1] %v5940
      %5942 = vst [vmem:[%s258] sm:$0xff] %v5708
      %5943 = vst [vmem:[%s258 + $0x8] sm:$0xff] %v5711
      %5944 = vst [vmem:[%s258 + $0x10] sm:$0xff] %v5716
      %5945 = vst [vmem:[%s258 + $0x18] sm:$0xff] %v5719
      %5946 = vst [vmem:[%s258 + $0x20] sm:$0xff] %v5724
      %5947 = vst [vmem:[%s258 + $0x28] sm:$0xff] %v5727
      %5948 = vst [vmem:[%s258 + $0x30] sm:$0xff] %v5732
      %5949 = vst [vmem:[%s258 + $0x38] sm:$0xff] %v5735
      %5950 = vst [vmem:[%s258 + $0x40] sm:$0xff] %v5740
      %5951 = vst [vmem:[%s258 + $0x48] sm:$0xff] %v5743
      %5952 = vst [vmem:[%s258 + $0x50] sm:$0xff] %v5748
      %5953 = vst [vmem:[%s258 + $0x58] sm:$0xff] %v5751
      %5954 = vst [vmem:[%s258 + $0x60] sm:$0xff] %v5756
      %5955 = vst [vmem:[%s258 + $0x68] sm:$0xff] %v5759
      %5956 = vst [vmem:[%s258 + $0x70] sm:$0xff] %v5764
      %5957 = vst [vmem:[%s258 + $0x78] sm:$0xff] %v5767
      %5958 = vst [vmem:[%s258 + $0x80] sm:$0xff] %v5772
      %5959 = vst [vmem:[%s258 + $0x88] sm:$0xff] %v5775
      %5960 = vst [vmem:[%s258 + $0x90] sm:$0xff] %v5780
      %5961 = vst [vmem:[%s258 + $0x98] sm:$0xff] %v5783
      %5962 = vst [vmem:[%s258 + $0xa0] sm:$0xff] %v5788
      %5963 = vst [vmem:[%s258 + $0xa8] sm:$0xff] %v5791
      %5964 = vst [vmem:[%s258 + $0xb0] sm:$0xff] %v5796
      %5965 = vst [vmem:[%s258 + $0xb8] sm:$0xff] %v5799
      %5966 = vst [vmem:[%s258 + $0xc0] sm:$0xff] %v5804
      %5967 = vst [vmem:[%s258 + $0xc8] sm:$0xff] %v5807
      %5968 = vst [vmem:[%s258 + $0xd0] sm:$0xff] %v5812
      %5969 = vst [vmem:[%s258 + $0xd8] sm:$0xff] %v5815
      %5970 = vst [vmem:[%s258 + $0xe0] sm:$0xff] %v5820
      %5971 = vst [vmem:[%s258 + $0xe8] sm:$0xff] %v5823
      %5972 = vst [vmem:[%s258 + $0xf0] sm:$0xff] %v5828
      %5973 = vst [vmem:[%s258 + $0xf8] sm:$0xff] %v5831
      %p5974 = scmp.lt.s32.totalorder %s18, 1
      %s5975 = scalar_select %p5974, %s18, 1
      %s5976 = smul.addr %s5975, 32
      %s5977 = smul.addr %s5976, 8
      %s5978 = scalar_lea.vmem %s5, %s5977
      %p5979 = scmp.lt.s32.totalorder %s18, 1
      %s5980 = scalar_select %p5979, %s18, 1
      %s5981 = smul.addr %s5980, 2
      %s5982 = scalar_lea.vmem %s6, %s5981
      // Predicated region
      $region41: #{double_conv_block.4} parent=39 // pred_check
        %p5983 = pneg %p146
      $region42: #{double_conv_block.4} parent=39 // pred_check_branch
        %5985 = sbr.rel (%p5983) target = $region44
      $region43: #{double_conv_block.4} parent=39 // pred_region
        _
      $region44: #{double_conv_block.4} parent=39 // pred_fallthru
        _
      // Predicated region
      $region45: #{double_conv_block.4} parent=39 // pred_check
        %p5986 = pneg %p172
      $region46: #{double_conv_block.4} parent=39 // pred_check_branch
        %5988 = sbr.rel (%p5986) target = $region48
      $region47: #{double_conv_block.4} parent=39 // pred_region
        _
      $region48: #{double_conv_block.4} parent=39 // pred_fallthru
        _
    $region40: #{double_conv_block.4} parent=5 // pred_fallthru
      _
    %p5989 = scmp.le.s32.totalorder 2, %s13
    // Predicated region
    $region49: #{double_conv_block.4} parent=5 // pred_check
      %p5990 = pneg %p5989
    $region50: #{double_conv_block.4} parent=5 // pred_check_branch
      %5992 = sbr.rel (%p5990) target = $region52
    $region51: #{double_conv_block.4} parent=5 // pred_region
      %s5993 = ssub.s32 %s13, 2
      // Predicated region
      $region53: #{double_conv_block.4} parent=51 // pred_check
        %p5994 = pneg %p152
      $region54: #{double_conv_block.4} parent=51 // pred_check_branch
        %5996 = sbr.rel (%p5994) target = $region56
      $region55: #{double_conv_block.4} parent=51 // pred_region
        %p5997 = scmp.lt.s32.totalorder %s19, 1
        %s5998 = scalar_select %p5997, %s19, 1
        %s5999 = smul.addr %s5998, 32
        %s6000 = smul.addr %s5999, 8
        %s6001 = scalar_lea.vmem %s5, %s6000
      $region56: #{double_conv_block.4} parent=51 // pred_fallthru
        _
      // Predicated region
      $region57: #{double_conv_block.4} parent=51 // pred_check
        %p6002 = pneg %p178
      $region58: #{double_conv_block.4} parent=51 // pred_check_branch
        %6004 = sbr.rel (%p6002) target = $region60
      $region59: #{double_conv_block.4} parent=51 // pred_region
        %p6005 = scmp.lt.s32.totalorder %s19, 1
        %s6006 = scalar_select %p6005, %s19, 1
        %s6007 = smul.addr %s6006, 2
        %s6008 = scalar_lea.vmem %s6, %s6007
      $region60: #{double_conv_block.4} parent=51 // pred_fallthru
        _
    $region52: #{double_conv_block.4} parent=5 // pred_fallthru
      _
  $region6: #{double_conv_block.4} parent=0 // loop_footer
    %s17 = sadd.s32 1, %s13
  $region7: #{double_conv_block.4} parent=0 // loop_footer_branch
    %12 = sbr.rel target = $region3
  $region8: #{double_conv_block.4} parent=0 // loop_exit
    _

</llo_original>
